<compile_context>
chip_gen: v7x
topology: tpu7x:2x2x1
jax: 0.10.0
libtpu: 0.0.40
codegen_flags: <defaults>
</compile_context>

<pallas_src>
import jax
import jax.numpy as jnp
from jax import lax
from jax.experimental import pallas as pl
from jax.experimental.pallas import tpu as pltpu


def _lstm_kernel(xw_ref, uh_ref, hseq_ref, hfin_ref, cfin_ref, h_sc, c_sc):
    # grid = (batch_tiles ["parallel"], time_chunks ["arbitrary"])
    s = pl.program_id(1)
    H = h_sc.shape[-1]
    t_block = hseq_ref.shape[0]

    @pl.when(s == 0)
    def _():
        h_sc[...] = jnp.zeros_like(h_sc)
        c_sc[...] = jnp.zeros_like(c_sc)

    def step(t, carry):
        h, c = carry
        # Pre-gates xW_t were computed outside the recurrence; only the
        # recurrent h @ Uh term stays on the serial critical path.
        # uh_ref is read at the dot site (not hoisted) so the bf16 weight is
        # not kept live in vregs across the unrolled loop.
        gates = xw_ref[t] + jnp.dot(
            h.astype(jnp.bfloat16), uh_ref[...],
            preferred_element_type=jnp.float32)

        f = jax.nn.sigmoid(gates[:, 0 * H:1 * H])
        i = jax.nn.sigmoid(gates[:, 1 * H:2 * H])
        o = jax.nn.sigmoid(gates[:, 2 * H:3 * H])
        g = jnp.tanh(gates[:, 3 * H:4 * H])

        c_new = f * c + i * g
        h_new = o * jnp.tanh(c_new)

        hseq_ref[t] = h_new.astype(hseq_ref.dtype)
        return h_new, c_new

    h_fin, c_fin = lax.fori_loop(
        0, t_block, step, (h_sc[...], c_sc[...]), unroll=True)

    h_sc[...] = h_fin
    c_sc[...] = c_fin

    @pl.when(s == pl.num_programs(1) - 1)
    def _():
        hfin_ref[...] = h_fin.astype(hfin_ref.dtype)
        cfin_ref[...] = c_fin.astype(cfin_ref.dtype)


def _pick_b_tile(batch):
    """v7x has 2 TensorCores/chip -> one independent recurrence chain per core.
    v5e/v6e have a single TC -> whole batch as one MXU-filling chain."""
    try:
        kind = jax.devices()[0].device_kind.lower()
    except Exception:  # pragma: no cover - defensive, default to full batch
        kind = ""
    if "v7" in kind:
        half = batch // 2
        if batch % 2 == 0 and half >= 8 and half % 8 == 0:
            return half
    return batch


def lstm_forward(x, Wx, Uh, b, *, t_block=None, b_tile=None):
    """x: (S, B, I) f32. Returns (h_seq (S,B,H), (h (B,H), c (B,H)))."""
    S, B, I = x.shape
    H = Uh.shape[0]
    if t_block is None:
        t_block = S                       # whole sequence per grid step
    if b_tile is None:
        b_tile = _pick_b_tile(B)
    assert S % t_block == 0 and B % b_tile == 0 and b_tile % 8 == 0

    # Hoisted input projection: one large matmul (bf16 inputs, f32 accumulate),
    # completely off the sequential path.
    xw = (jnp.dot(x.reshape(S * B, I).astype(jnp.bfloat16),
                  Wx.astype(jnp.bfloat16),
                  preferred_element_type=jnp.float32)
          + b.reshape(1, 4 * H).astype(jnp.float32)).reshape(S, B, 4 * H)

    uh_bf16 = Uh.astype(jnp.bfloat16)

    h_seq, h_fin, c_fin = pl.pallas_call(
        _lstm_kernel,
        out_shape=(
            jax.ShapeDtypeStruct((S, B, H), jnp.float32),
            jax.ShapeDtypeStruct((B, H), jnp.float32),
            jax.ShapeDtypeStruct((B, H), jnp.float32),
        ),
        grid_spec=pltpu.PrefetchScalarGridSpec(
            num_scalar_prefetch=0,
            grid=(B // b_tile, S // t_block),
            in_specs=[
                pl.BlockSpec((t_block, b_tile, 4 * H),
                             lambda bi, s: (s, bi, 0)),
                pl.BlockSpec((H, 4 * H), lambda bi, s: (0, 0)),
            ],
            out_specs=[
                pl.BlockSpec((t_block, b_tile, H), lambda bi, s: (s, bi, 0)),
                pl.BlockSpec((b_tile, H), lambda bi, s: (bi, 0)),
                pl.BlockSpec((b_tile, H), lambda bi, s: (bi, 0)),
            ],
            scratch_shapes=[
                pltpu.VMEM((b_tile, H), jnp.float32),   # h carry
                pltpu.VMEM((b_tile, H), jnp.float32),   # c carry
            ],
        ),
        compiler_params=pltpu.CompilerParams(
            dimension_semantics=("parallel", "arbitrary"),
            vmem_limit_bytes=32 * 1024 * 1024,
        ),
    )(xw, uh_bf16)

    return h_seq, (h_fin, c_fin)


def rnn_classifier_forward(x, params):
    """Full RNN_Classifier forward: LSTM over the sequence, last hidden -> fc."""
    h_seq, (h_fin, c_fin) = lstm_forward(
        x, params["Wx"], params["Uh"], params["b"])
    # Tiny (B,128)x(128,10) head kept in plain JAX: a 10-wide lane output would
    # only trigger masked stores inside a kernel.
    logits = jnp.dot(h_fin, params["W_fc"]) + params["b_fc"]
    return logits, h_seq, (h_fin, c_fin)


def lstm_reference(x, Wx, Uh, b):
    """Pure-JAX reference mirroring the PyTorch per-step loop
    (same bf16-matmul / f32-accumulate precision as the kernel)."""
    S, B, I = x.shape
    H = Uh.shape[0]
    Wx_b = Wx.astype(jnp.bfloat16)
    Uh_b = Uh.astype(jnp.bfloat16)
    h = jnp.zeros((B, H), jnp.float32)
    c = jnp.zeros((B, H), jnp.float32)
    hs = []
    for t in range(S):
        gates = (jnp.dot(x[t].astype(jnp.bfloat16), Wx_b,
                         preferred_element_type=jnp.float32)
                 + jnp.dot(h.astype(jnp.bfloat16), Uh_b,
                           preferred_element_type=jnp.float32)
                 + b)
        f = jax.nn.sigmoid(gates[:, 0 * H:1 * H])
        i = jax.nn.sigmoid(gates[:, 1 * H:2 * H])
        o = jax.nn.sigmoid(gates[:, 2 * H:3 * H])
        g = jnp.tanh(gates[:, 3 * H:4 * H])
        c = f * c + i * g
        h = o * jnp.tanh(c)
        hs.append(h)
    return jnp.stack(hs), (h, c)


if __name__ == "__main__":
    # Shapes consistent with the module defaults (input_size=28, hidden=128,
    # classes=10); MNIST-style seq_len=28; batch=16 (two sublane-aligned tiles).
    seq_len, batch, input_size, hidden, classes = 28, 16, 28, 128, 10

    key = jax.random.PRNGKey(0)
    kx, kw, ku, kb, kf, kfb = jax.random.split(key, 6)

    bound_w = 1.0 / (input_size ** 0.5)
    bound_u = 1.0 / (hidden ** 0.5)
    params = {
        "Wx": jax.random.uniform(kw, (input_size, 4 * hidden), jnp.float32,
                                 -bound_w, bound_w),
        "Uh": jax.random.uniform(ku, (hidden, 4 * hidden), jnp.float32,
                                 -bound_u, bound_u),
        "b": jax.random.uniform(kb, (4 * hidden,), jnp.float32,
                                -bound_u, bound_u),
        "W_fc": jax.random.uniform(kf, (hidden, classes), jnp.float32,
                                   -bound_u, bound_u),
        "b_fc": jax.random.uniform(kfb, (classes,), jnp.float32,
                                   -bound_u, bound_u),
    }
    x = jax.random.normal(kx, (seq_len, batch, input_size), jnp.float32)

    logits, h_seq, (h_fin, c_fin) = rnn_classifier_forward(x, params)
    jax.block_until_ready((logits, h_seq, h_fin, c_fin))

    h_seq_ref, (h_ref, c_ref) = lstm_reference(
        x, params["Wx"], params["Uh"], params["b"])
    logits_ref = jnp.dot(h_ref, params["W_fc"]) + params["b_fc"]

    assert jnp.allclose(h_seq, h_seq_ref, atol=1e-4, rtol=1e-4)
    assert jnp.allclose(h_fin, h_ref, atol=1e-4, rtol=1e-4)
    assert jnp.allclose(c_fin, c_ref, atol=1e-4, rtol=1e-4)
    assert jnp.allclose(logits, logits_ref, atol=1e-4, rtol=1e-4)

    print("KERNEL_OK")
</pallas_src>

<mosaic_0001>
module attributes {stable_mosaic.version = 11 : i64} {
  func.func @_lstm_kernel(%arg0: i32, %arg1: i32, %arg2: memref<28x16x512xf32, #tpu.memory_space<vmem>>, %arg3: memref<128x512xbf16, #tpu.memory_space<vmem>>, %arg4: memref<28x16x128xf32, #tpu.memory_space<vmem>>, %arg5: memref<16x128xf32, #tpu.memory_space<vmem>>, %arg6: memref<16x128xf32, #tpu.memory_space<vmem>>, %arg7: memref<16x128xf32, #tpu.memory_space<vmem>>, %arg8: memref<16x128xf32, #tpu.memory_space<vmem>>) attributes {dimension_semantics = [#tpu.dimension_semantics<parallel>, #tpu.dimension_semantics<arbitrary>], iteration_bounds = array<i64: 1, 1>, scalar_prefetch = 0 : i64, scratch_operands = 2 : i64, tpu.core_type = #tpu.core_type<tc>, window_params = [{transform_indices = @transform_0, window_bounds = array<i64: 28, 16, 512>}, {pipeline_mode = #tpu.pipeline_mode<synchronous>, transform_indices = @transform_1, window_bounds = array<i64: 128, 512>}, {transform_indices = @transform_2, window_bounds = array<i64: 28, 16, 128>}, {transform_indices = @transform_3, window_bounds = array<i64: 16, 128>}, {transform_indices = @transform_4, window_bounds = array<i64: 16, 128>}]} {
    %c0_i32 = arith.constant 0 : i32
    %0 = arith.cmpi eq, %arg1, %c0_i32 : i32
    %1 = arith.extui %0 : i1 to i32
    %c0_i32_0 = arith.constant 0 : i32
    %2 = arith.cmpi ne, %1, %c0_i32_0 : i32
    scf.if %2 {
      %cst_290 = arith.constant 0.000000e+00 : f32
      %1018 = vector.broadcast %cst_290 : f32 to vector<16x128xf32>
      %c0_291 = arith.constant 0 : index
      %c0_292 = arith.constant 0 : index
      %1019 = vector.load %arg7[%c0_291, %c0_292] : memref<16x128xf32, #tpu.memory_space<vmem>>, vector<16x128xf32>
      tpu.vector_store %arg7[%c0_291, %c0_292], %1018 {strides = array<i32>} : memref<16x128xf32, #tpu.memory_space<vmem>>, vector<16x128xf32>,
      %cst_293 = arith.constant 0.000000e+00 : f32
      %1020 = vector.broadcast %cst_293 : f32 to vector<16x128xf32>
      %c0_294 = arith.constant 0 : index
      %c0_295 = arith.constant 0 : index
      %1021 = vector.load %arg8[%c0_294, %c0_295] : memref<16x128xf32, #tpu.memory_space<vmem>>, vector<16x128xf32>
      tpu.vector_store %arg8[%c0_294, %c0_295], %1020 {strides = array<i32>} : memref<16x128xf32, #tpu.memory_space<vmem>>, vector<16x128xf32>,
    } else {
    }
    %c0 = arith.constant 0 : index
    %c0_1 = arith.constant 0 : index
    %3 = vector.load %arg7[%c0, %c0_1] : memref<16x128xf32, #tpu.memory_space<vmem>>, vector<16x128xf32>
    %c0_2 = arith.constant 0 : index
    %c0_3 = arith.constant 0 : index
    %4 = vector.load %arg8[%c0_2, %c0_3] : memref<16x128xf32, #tpu.memory_space<vmem>>, vector<16x128xf32>
    %c0_i32_4 = arith.constant 0 : i32
    %5 = arith.index_cast %c0_i32_4 : i32 to index
    %c0_5 = arith.constant 0 : index
    %c0_6 = arith.constant 0 : index
    %6 = vector.load %arg2[%5, %c0_5, %c0_6] : memref<28x16x512xf32, #tpu.memory_space<vmem>>, vector<1x16x512xf32>
    %7 = vector.shape_cast %6 : vector<1x16x512xf32> to vector<16x512xf32>
    %8 = arith.truncf %3 : vector<16x128xf32> to vector<16x128xbf16>
    %c0_7 = arith.constant 0 : index
    %c0_8 = arith.constant 0 : index
    %9 = vector.load %arg3[%c0_7, %c0_8] : memref<128x512xbf16, #tpu.memory_space<vmem>>, vector<128x512xbf16>
    %cst = arith.constant dense<0.000000e+00> : vector<16x512xf32>
    %10 = tpu.matmul %8, %9, %cst {dimension_numbers = #tpu.dot_dimension_numbers<[1], [0], [0], [1], [0, 0, 1, 1], [], []>} : vector<16x128xbf16>, vector<128x512xbf16>, vector<16x512xf32> -> vector<16x512xf32>
    %11 = arith.addf %7, %10 : vector<16x512xf32>
    %12 = vector.extract_strided_slice %11 {offsets = [0, 0], sizes = [16, 128], strides = [1, 1]} : vector<16x512xf32> to vector<16x128xf32>
    %13 = arith.negf %12 : vector<16x128xf32>
    %14 = math.exp %13 : vector<16x128xf32>
    %cst_9 = arith.constant 1.000000e+00 : f32
    %15 = vector.broadcast %cst_9 : f32 to vector<16x128xf32>
    %16 = arith.addf %15, %14 : vector<16x128xf32>
    %17 = arith.divf %15, %16 : vector<16x128xf32>
    %18 = vector.extract_strided_slice %11 {offsets = [0, 128], sizes = [16, 128], strides = [1, 1]} : vector<16x512xf32> to vector<16x128xf32>
    %19 = arith.negf %18 : vector<16x128xf32>
    %20 = math.exp %19 : vector<16x128xf32>
    %cst_10 = arith.constant 1.000000e+00 : f32
    %21 = vector.broadcast %cst_10 : f32 to vector<16x128xf32>
    %22 = arith.addf %21, %20 : vector<16x128xf32>
    %23 = arith.divf %21, %22 : vector<16x128xf32>
    %24 = vector.extract_strided_slice %11 {offsets = [0, 256], sizes = [16, 128], strides = [1, 1]} : vector<16x512xf32> to vector<16x128xf32>
    %25 = arith.negf %24 : vector<16x128xf32>
    %26 = math.exp %25 : vector<16x128xf32>
    %cst_11 = arith.constant 1.000000e+00 : f32
    %27 = vector.broadcast %cst_11 : f32 to vector<16x128xf32>
    %28 = arith.addf %27, %26 : vector<16x128xf32>
    %29 = arith.divf %27, %28 : vector<16x128xf32>
    %30 = vector.extract_strided_slice %11 {offsets = [0, 384], sizes = [16, 128], strides = [1, 1]} : vector<16x512xf32> to vector<16x128xf32>
    %31 = math.tanh %30 : vector<16x128xf32>
    %32 = arith.mulf %17, %4 : vector<16x128xf32>
    %33 = arith.mulf %23, %31 : vector<16x128xf32>
    %34 = arith.addf %32, %33 : vector<16x128xf32>
    %35 = math.tanh %34 : vector<16x128xf32>
    %36 = arith.mulf %29, %35 : vector<16x128xf32>
    %37 = arith.index_cast %c0_i32_4 : i32 to index
    %c0_12 = arith.constant 0 : index
    %c0_13 = arith.constant 0 : index
    %38 = vector.load %arg4[%37, %c0_12, %c0_13] : memref<28x16x128xf32, #tpu.memory_space<vmem>>, vector<1x16x128xf32>
    %39 = vector.shape_cast %38 : vector<1x16x128xf32> to vector<16x128xf32>
    %40 = vector.shape_cast %36 : vector<16x128xf32> to vector<1x16x128xf32>
    tpu.vector_store %arg4[%37, %c0_12, %c0_13], %40 {strides = array<i32>} : memref<28x16x128xf32, #tpu.memory_space<vmem>>, vector<1x16x128xf32>,
    %c1_i32 = arith.constant 1 : i32
    %41 = arith.index_cast %c1_i32 : i32 to index
    %c0_14 = arith.constant 0 : index
    %c0_15 = arith.constant 0 : index
    %42 = vector.load %arg2[%41, %c0_14, %c0_15] : memref<28x16x512xf32, #tpu.memory_space<vmem>>, vector<1x16x512xf32>
    %43 = vector.shape_cast %42 : vector<1x16x512xf32> to vector<16x512xf32>
    %44 = arith.truncf %36 : vector<16x128xf32> to vector<16x128xbf16>
    %c0_16 = arith.constant 0 : index
    %c0_17 = arith.constant 0 : index
    %45 = vector.load %arg3[%c0_16, %c0_17] : memref<128x512xbf16, #tpu.memory_space<vmem>>, vector<128x512xbf16>
    %cst_18 = arith.constant dense<0.000000e+00> : vector<16x512xf32>
    %46 = tpu.matmul %44, %45, %cst_18 {dimension_numbers = #tpu.dot_dimension_numbers<[1], [0], [0], [1], [0, 0, 1, 1], [], []>} : vector<16x128xbf16>, vector<128x512xbf16>, vector<16x512xf32> -> vector<16x512xf32>
    %47 = arith.addf %43, %46 : vector<16x512xf32>
    %48 = vector.extract_strided_slice %47 {offsets = [0, 0], sizes = [16, 128], strides = [1, 1]} : vector<16x512xf32> to vector<16x128xf32>
    %49 = arith.negf %48 : vector<16x128xf32>
    %50 = math.exp %49 : vector<16x128xf32>
    %cst_19 = arith.constant 1.000000e+00 : f32
    %51 = vector.broadcast %cst_19 : f32 to vector<16x128xf32>
    %52 = arith.addf %51, %50 : vector<16x128xf32>
    %53 = arith.divf %51, %52 : vector<16x128xf32>
    %54 = vector.extract_strided_slice %47 {offsets = [0, 128], sizes = [16, 128], strides = [1, 1]} : vector<16x512xf32> to vector<16x128xf32>
    %55 = arith.negf %54 : vector<16x128xf32>
    %56 = math.exp %55 : vector<16x128xf32>
    %cst_20 = arith.constant 1.000000e+00 : f32
    %57 = vector.broadcast %cst_20 : f32 to vector<16x128xf32>
    %58 = arith.addf %57, %56 : vector<16x128xf32>
    %59 = arith.divf %57, %58 : vector<16x128xf32>
    %60 = vector.extract_strided_slice %47 {offsets = [0, 256], sizes = [16, 128], strides = [1, 1]} : vector<16x512xf32> to vector<16x128xf32>
    %61 = arith.negf %60 : vector<16x128xf32>
    %62 = math.exp %61 : vector<16x128xf32>
    %cst_21 = arith.constant 1.000000e+00 : f32
    %63 = vector.broadcast %cst_21 : f32 to vector<16x128xf32>
    %64 = arith.addf %63, %62 : vector<16x128xf32>
    %65 = arith.divf %63, %64 : vector<16x128xf32>
    %66 = vector.extract_strided_slice %47 {offsets = [0, 384], sizes = [16, 128], strides = [1, 1]} : vector<16x512xf32> to vector<16x128xf32>
    %67 = math.tanh %66 : vector<16x128xf32>
    %68 = arith.mulf %53, %34 : vector<16x128xf32>
    %69 = arith.mulf %59, %67 : vector<16x128xf32>
    %70 = arith.addf %68, %69 : vector<16x128xf32>
    %71 = math.tanh %70 : vector<16x128xf32>
    %72 = arith.mulf %65, %71 : vector<16x128xf32>
    %73 = arith.index_cast %c1_i32 : i32 to index
    %c0_22 = arith.constant 0 : index
    %c0_23 = arith.constant 0 : index
    %74 = vector.load %arg4[%73, %c0_22, %c0_23] : memref<28x16x128xf32, #tpu.memory_space<vmem>>, vector<1x16x128xf32>
    %75 = vector.shape_cast %74 : vector<1x16x128xf32> to vector<16x128xf32>
    %76 = vector.shape_cast %72 : vector<16x128xf32> to vector<1x16x128xf32>
    tpu.vector_store %arg4[%73, %c0_22, %c0_23], %76 {strides = array<i32>} : memref<28x16x128xf32, #tpu.memory_space<vmem>>, vector<1x16x128xf32>,
    %c2_i32 = arith.constant 2 : i32
    %77 = arith.index_cast %c2_i32 : i32 to index
    %c0_24 = arith.constant 0 : index
    %c0_25 = arith.constant 0 : index
    %78 = vector.load %arg2[%77, %c0_24, %c0_25] : memref<28x16x512xf32, #tpu.memory_space<vmem>>, vector<1x16x512xf32>
    %79 = vector.shape_cast %78 : vector<1x16x512xf32> to vector<16x512xf32>
    %80 = arith.truncf %72 : vector<16x128xf32> to vector<16x128xbf16>
    %c0_26 = arith.constant 0 : index
    %c0_27 = arith.constant 0 : index
    %81 = vector.load %arg3[%c0_26, %c0_27] : memref<128x512xbf16, #tpu.memory_space<vmem>>, vector<128x512xbf16>
    %cst_28 = arith.constant dense<0.000000e+00> : vector<16x512xf32>
    %82 = tpu.matmul %80, %81, %cst_28 {dimension_numbers = #tpu.dot_dimension_numbers<[1], [0], [0], [1], [0, 0, 1, 1], [], []>} : vector<16x128xbf16>, vector<128x512xbf16>, vector<16x512xf32> -> vector<16x512xf32>
    %83 = arith.addf %79, %82 : vector<16x512xf32>
    %84 = vector.extract_strided_slice %83 {offsets = [0, 0], sizes = [16, 128], strides = [1, 1]} : vector<16x512xf32> to vector<16x128xf32>
    %85 = arith.negf %84 : vector<16x128xf32>
    %86 = math.exp %85 : vector<16x128xf32>
    %cst_29 = arith.constant 1.000000e+00 : f32
    %87 = vector.broadcast %cst_29 : f32 to vector<16x128xf32>
    %88 = arith.addf %87, %86 : vector<16x128xf32>
    %89 = arith.divf %87, %88 : vector<16x128xf32>
    %90 = vector.extract_strided_slice %83 {offsets = [0, 128], sizes = [16, 128], strides = [1, 1]} : vector<16x512xf32> to vector<16x128xf32>
    %91 = arith.negf %90 : vector<16x128xf32>
    %92 = math.exp %91 : vector<16x128xf32>
    %cst_30 = arith.constant 1.000000e+00 : f32
    %93 = vector.broadcast %cst_30 : f32 to vector<16x128xf32>
    %94 = arith.addf %93, %92 : vector<16x128xf32>
    %95 = arith.divf %93, %94 : vector<16x128xf32>
    %96 = vector.extract_strided_slice %83 {offsets = [0, 256], sizes = [16, 128], strides = [1, 1]} : vector<16x512xf32> to vector<16x128xf32>
    %97 = arith.negf %96 : vector<16x128xf32>
    %98 = math.exp %97 : vector<16x128xf32>
    %cst_31 = arith.constant 1.000000e+00 : f32
    %99 = vector.broadcast %cst_31 : f32 to vector<16x128xf32>
    %100 = arith.addf %99, %98 : vector<16x128xf32>
    %101 = arith.divf %99, %100 : vector<16x128xf32>
    %102 = vector.extract_strided_slice %83 {offsets = [0, 384], sizes = [16, 128], strides = [1, 1]} : vector<16x512xf32> to vector<16x128xf32>
    %103 = math.tanh %102 : vector<16x128xf32>
    %104 = arith.mulf %89, %70 : vector<16x128xf32>
    %105 = arith.mulf %95, %103 : vector<16x128xf32>
    %106 = arith.addf %104, %105 : vector<16x128xf32>
    %107 = math.tanh %106 : vector<16x128xf32>
    %108 = arith.mulf %101, %107 : vector<16x128xf32>
    %109 = arith.index_cast %c2_i32 : i32 to index
    %c0_32 = arith.constant 0 : index
    %c0_33 = arith.constant 0 : index
    %110 = vector.load %arg4[%109, %c0_32, %c0_33] : memref<28x16x128xf32, #tpu.memory_space<vmem>>, vector<1x16x128xf32>
    %111 = vector.shape_cast %110 : vector<1x16x128xf32> to vector<16x128xf32>
    %112 = vector.shape_cast %108 : vector<16x128xf32> to vector<1x16x128xf32>
    tpu.vector_store %arg4[%109, %c0_32, %c0_33], %112 {strides = array<i32>} : memref<28x16x128xf32, #tpu.memory_space<vmem>>, vector<1x16x128xf32>,
    %c3_i32 = arith.constant 3 : i32
    %113 = arith.index_cast %c3_i32 : i32 to index
    %c0_34 = arith.constant 0 : index
    %c0_35 = arith.constant 0 : index
    %114 = vector.load %arg2[%113, %c0_34, %c0_35] : memref<28x16x512xf32, #tpu.memory_space<vmem>>, vector<1x16x512xf32>
    %115 = vector.shape_cast %114 : vector<1x16x512xf32> to vector<16x512xf32>
    %116 = arith.truncf %108 : vector<16x128xf32> to vector<16x128xbf16>
    %c0_36 = arith.constant 0 : index
    %c0_37 = arith.constant 0 : index
    %117 = vector.load %arg3[%c0_36, %c0_37] : memref<128x512xbf16, #tpu.memory_space<vmem>>, vector<128x512xbf16>
    %cst_38 = arith.constant dense<0.000000e+00> : vector<16x512xf32>
    %118 = tpu.matmul %116, %117, %cst_38 {dimension_numbers = #tpu.dot_dimension_numbers<[1], [0], [0], [1], [0, 0, 1, 1], [], []>} : vector<16x128xbf16>, vector<128x512xbf16>, vector<16x512xf32> -> vector<16x512xf32>
    %119 = arith.addf %115, %118 : vector<16x512xf32>
    %120 = vector.extract_strided_slice %119 {offsets = [0, 0], sizes = [16, 128], strides = [1, 1]} : vector<16x512xf32> to vector<16x128xf32>
    %121 = arith.negf %120 : vector<16x128xf32>
    %122 = math.exp %121 : vector<16x128xf32>
    %cst_39 = arith.constant 1.000000e+00 : f32
    %123 = vector.broadcast %cst_39 : f32 to vector<16x128xf32>
    %124 = arith.addf %123, %122 : vector<16x128xf32>
    %125 = arith.divf %123, %124 : vector<16x128xf32>
    %126 = vector.extract_strided_slice %119 {offsets = [0, 128], sizes = [16, 128], strides = [1, 1]} : vector<16x512xf32> to vector<16x128xf32>
    %127 = arith.negf %126 : vector<16x128xf32>
    %128 = math.exp %127 : vector<16x128xf32>
    %cst_40 = arith.constant 1.000000e+00 : f32
    %129 = vector.broadcast %cst_40 : f32 to vector<16x128xf32>
    %130 = arith.addf %129, %128 : vector<16x128xf32>
    %131 = arith.divf %129, %130 : vector<16x128xf32>
    %132 = vector.extract_strided_slice %119 {offsets = [0, 256], sizes = [16, 128], strides = [1, 1]} : vector<16x512xf32> to vector<16x128xf32>
    %133 = arith.negf %132 : vector<16x128xf32>
    %134 = math.exp %133 : vector<16x128xf32>
    %cst_41 = arith.constant 1.000000e+00 : f32
    %135 = vector.broadcast %cst_41 : f32 to vector<16x128xf32>
    %136 = arith.addf %135, %134 : vector<16x128xf32>
    %137 = arith.divf %135, %136 : vector<16x128xf32>
    %138 = vector.extract_strided_slice %119 {offsets = [0, 384], sizes = [16, 128], strides = [1, 1]} : vector<16x512xf32> to vector<16x128xf32>
    %139 = math.tanh %138 : vector<16x128xf32>
    %140 = arith.mulf %125, %106 : vector<16x128xf32>
    %141 = arith.mulf %131, %139 : vector<16x128xf32>
    %142 = arith.addf %140, %141 : vector<16x128xf32>
    %143 = math.tanh %142 : vector<16x128xf32>
    %144 = arith.mulf %137, %143 : vector<16x128xf32>
    %145 = arith.index_cast %c3_i32 : i32 to index
    %c0_42 = arith.constant 0 : index
    %c0_43 = arith.constant 0 : index
    %146 = vector.load %arg4[%145, %c0_42, %c0_43] : memref<28x16x128xf32, #tpu.memory_space<vmem>>, vector<1x16x128xf32>
    %147 = vector.shape_cast %146 : vector<1x16x128xf32> to vector<16x128xf32>
    %148 = vector.shape_cast %144 : vector<16x128xf32> to vector<1x16x128xf32>
    tpu.vector_store %arg4[%145, %c0_42, %c0_43], %148 {strides = array<i32>} : memref<28x16x128xf32, #tpu.memory_space<vmem>>, vector<1x16x128xf32>,
    %c4_i32 = arith.constant 4 : i32
    %149 = arith.index_cast %c4_i32 : i32 to index
    %c0_44 = arith.constant 0 : index
    %c0_45 = arith.constant 0 : index
    %150 = vector.load %arg2[%149, %c0_44, %c0_45] : memref<28x16x512xf32, #tpu.memory_space<vmem>>, vector<1x16x512xf32>
    %151 = vector.shape_cast %150 : vector<1x16x512xf32> to vector<16x512xf32>
    %152 = arith.truncf %144 : vector<16x128xf32> to vector<16x128xbf16>
    %c0_46 = arith.constant 0 : index
    %c0_47 = arith.constant 0 : index
    %153 = vector.load %arg3[%c0_46, %c0_47] : memref<128x512xbf16, #tpu.memory_space<vmem>>, vector<128x512xbf16>
    %cst_48 = arith.constant dense<0.000000e+00> : vector<16x512xf32>
    %154 = tpu.matmul %152, %153, %cst_48 {dimension_numbers = #tpu.dot_dimension_numbers<[1], [0], [0], [1], [0, 0, 1, 1], [], []>} : vector<16x128xbf16>, vector<128x512xbf16>, vector<16x512xf32> -> vector<16x512xf32>
    %155 = arith.addf %151, %154 : vector<16x512xf32>
    %156 = vector.extract_strided_slice %155 {offsets = [0, 0], sizes = [16, 128], strides = [1, 1]} : vector<16x512xf32> to vector<16x128xf32>
    %157 = arith.negf %156 : vector<16x128xf32>
    %158 = math.exp %157 : vector<16x128xf32>
    %cst_49 = arith.constant 1.000000e+00 : f32
    %159 = vector.broadcast %cst_49 : f32 to vector<16x128xf32>
    %160 = arith.addf %159, %158 : vector<16x128xf32>
    %161 = arith.divf %159, %160 : vector<16x128xf32>
    %162 = vector.extract_strided_slice %155 {offsets = [0, 128], sizes = [16, 128], strides = [1, 1]} : vector<16x512xf32> to vector<16x128xf32>
    %163 = arith.negf %162 : vector<16x128xf32>
    %164 = math.exp %163 : vector<16x128xf32>
    %cst_50 = arith.constant 1.000000e+00 : f32
    %165 = vector.broadcast %cst_50 : f32 to vector<16x128xf32>
    %166 = arith.addf %165, %164 : vector<16x128xf32>
    %167 = arith.divf %165, %166 : vector<16x128xf32>
    %168 = vector.extract_strided_slice %155 {offsets = [0, 256], sizes = [16, 128], strides = [1, 1]} : vector<16x512xf32> to vector<16x128xf32>
    %169 = arith.negf %168 : vector<16x128xf32>
    %170 = math.exp %169 : vector<16x128xf32>
    %cst_51 = arith.constant 1.000000e+00 : f32
    %171 = vector.broadcast %cst_51 : f32 to vector<16x128xf32>
    %172 = arith.addf %171, %170 : vector<16x128xf32>
    %173 = arith.divf %171, %172 : vector<16x128xf32>
    %174 = vector.extract_strided_slice %155 {offsets = [0, 384], sizes = [16, 128], strides = [1, 1]} : vector<16x512xf32> to vector<16x128xf32>
    %175 = math.tanh %174 : vector<16x128xf32>
    %176 = arith.mulf %161, %142 : vector<16x128xf32>
    %177 = arith.mulf %167, %175 : vector<16x128xf32>
    %178 = arith.addf %176, %177 : vector<16x128xf32>
    %179 = math.tanh %178 : vector<16x128xf32>
    %180 = arith.mulf %173, %179 : vector<16x128xf32>
    %181 = arith.index_cast %c4_i32 : i32 to index
    %c0_52 = arith.constant 0 : index
    %c0_53 = arith.constant 0 : index
    %182 = vector.load %arg4[%181, %c0_52, %c0_53] : memref<28x16x128xf32, #tpu.memory_space<vmem>>, vector<1x16x128xf32>
    %183 = vector.shape_cast %182 : vector<1x16x128xf32> to vector<16x128xf32>
    %184 = vector.shape_cast %180 : vector<16x128xf32> to vector<1x16x128xf32>
    tpu.vector_store %arg4[%181, %c0_52, %c0_53], %184 {strides = array<i32>} : memref<28x16x128xf32, #tpu.memory_space<vmem>>, vector<1x16x128xf32>,
    %c5_i32 = arith.constant 5 : i32
    %185 = arith.index_cast %c5_i32 : i32 to index
    %c0_54 = arith.constant 0 : index
    %c0_55 = arith.constant 0 : index
    %186 = vector.load %arg2[%185, %c0_54, %c0_55] : memref<28x16x512xf32, #tpu.memory_space<vmem>>, vector<1x16x512xf32>
    %187 = vector.shape_cast %186 : vector<1x16x512xf32> to vector<16x512xf32>
    %188 = arith.truncf %180 : vector<16x128xf32> to vector<16x128xbf16>
    %c0_56 = arith.constant 0 : index
    %c0_57 = arith.constant 0 : index
    %189 = vector.load %arg3[%c0_56, %c0_57] : memref<128x512xbf16, #tpu.memory_space<vmem>>, vector<128x512xbf16>
    %cst_58 = arith.constant dense<0.000000e+00> : vector<16x512xf32>
    %190 = tpu.matmul %188, %189, %cst_58 {dimension_numbers = #tpu.dot_dimension_numbers<[1], [0], [0], [1], [0, 0, 1, 1], [], []>} : vector<16x128xbf16>, vector<128x512xbf16>, vector<16x512xf32> -> vector<16x512xf32>
    %191 = arith.addf %187, %190 : vector<16x512xf32>
    %192 = vector.extract_strided_slice %191 {offsets = [0, 0], sizes = [16, 128], strides = [1, 1]} : vector<16x512xf32> to vector<16x128xf32>
    %193 = arith.negf %192 : vector<16x128xf32>
    %194 = math.exp %193 : vector<16x128xf32>
    %cst_59 = arith.constant 1.000000e+00 : f32
    %195 = vector.broadcast %cst_59 : f32 to vector<16x128xf32>
    %196 = arith.addf %195, %194 : vector<16x128xf32>
    %197 = arith.divf %195, %196 : vector<16x128xf32>
    %198 = vector.extract_strided_slice %191 {offsets = [0, 128], sizes = [16, 128], strides = [1, 1]} : vector<16x512xf32> to vector<16x128xf32>
    %199 = arith.negf %198 : vector<16x128xf32>
    %200 = math.exp %199 : vector<16x128xf32>
    %cst_60 = arith.constant 1.000000e+00 : f32
    %201 = vector.broadcast %cst_60 : f32 to vector<16x128xf32>
    %202 = arith.addf %201, %200 : vector<16x128xf32>
    %203 = arith.divf %201, %202 : vector<16x128xf32>
    %204 = vector.extract_strided_slice %191 {offsets = [0, 256], sizes = [16, 128], strides = [1, 1]} : vector<16x512xf32> to vector<16x128xf32>
    %205 = arith.negf %204 : vector<16x128xf32>
    %206 = math.exp %205 : vector<16x128xf32>
    %cst_61 = arith.constant 1.000000e+00 : f32
    %207 = vector.broadcast %cst_61 : f32 to vector<16x128xf32>
    %208 = arith.addf %207, %206 : vector<16x128xf32>
    %209 = arith.divf %207, %208 : vector<16x128xf32>
    %210 = vector.extract_strided_slice %191 {offsets = [0, 384], sizes = [16, 128], strides = [1, 1]} : vector<16x512xf32> to vector<16x128xf32>
    %211 = math.tanh %210 : vector<16x128xf32>
    %212 = arith.mulf %197, %178 : vector<16x128xf32>
    %213 = arith.mulf %203, %211 : vector<16x128xf32>
    %214 = arith.addf %212, %213 : vector<16x128xf32>
    %215 = math.tanh %214 : vector<16x128xf32>
    %216 = arith.mulf %209, %215 : vector<16x128xf32>
    %217 = arith.index_cast %c5_i32 : i32 to index
    %c0_62 = arith.constant 0 : index
    %c0_63 = arith.constant 0 : index
    %218 = vector.load %arg4[%217, %c0_62, %c0_63] : memref<28x16x128xf32, #tpu.memory_space<vmem>>, vector<1x16x128xf32>
    %219 = vector.shape_cast %218 : vector<1x16x128xf32> to vector<16x128xf32>
    %220 = vector.shape_cast %216 : vector<16x128xf32> to vector<1x16x128xf32>
    tpu.vector_store %arg4[%217, %c0_62, %c0_63], %220 {strides = array<i32>} : memref<28x16x128xf32, #tpu.memory_space<vmem>>, vector<1x16x128xf32>,
    %c6_i32 = arith.constant 6 : i32
    %221 = arith.index_cast %c6_i32 : i32 to index
    %c0_64 = arith.constant 0 : index
    %c0_65 = arith.constant 0 : index
    %222 = vector.load %arg2[%221, %c0_64, %c0_65] : memref<28x16x512xf32, #tpu.memory_space<vmem>>, vector<1x16x512xf32>
    %223 = vector.shape_cast %222 : vector<1x16x512xf32> to vector<16x512xf32>
    %224 = arith.truncf %216 : vector<16x128xf32> to vector<16x128xbf16>
    %c0_66 = arith.constant 0 : index
    %c0_67 = arith.constant 0 : index
    %225 = vector.load %arg3[%c0_66, %c0_67] : memref<128x512xbf16, #tpu.memory_space<vmem>>, vector<128x512xbf16>
    %cst_68 = arith.constant dense<0.000000e+00> : vector<16x512xf32>
    %226 = tpu.matmul %224, %225, %cst_68 {dimension_numbers = #tpu.dot_dimension_numbers<[1], [0], [0], [1], [0, 0, 1, 1], [], []>} : vector<16x128xbf16>, vector<128x512xbf16>, vector<16x512xf32> -> vector<16x512xf32>
    %227 = arith.addf %223, %226 : vector<16x512xf32>
    %228 = vector.extract_strided_slice %227 {offsets = [0, 0], sizes = [16, 128], strides = [1, 1]} : vector<16x512xf32> to vector<16x128xf32>
    %229 = arith.negf %228 : vector<16x128xf32>
    %230 = math.exp %229 : vector<16x128xf32>
    %cst_69 = arith.constant 1.000000e+00 : f32
    %231 = vector.broadcast %cst_69 : f32 to vector<16x128xf32>
    %232 = arith.addf %231, %230 : vector<16x128xf32>
    %233 = arith.divf %231, %232 : vector<16x128xf32>
    %234 = vector.extract_strided_slice %227 {offsets = [0, 128], sizes = [16, 128], strides = [1, 1]} : vector<16x512xf32> to vector<16x128xf32>
    %235 = arith.negf %234 : vector<16x128xf32>
    %236 = math.exp %235 : vector<16x128xf32>
    %cst_70 = arith.constant 1.000000e+00 : f32
    %237 = vector.broadcast %cst_70 : f32 to vector<16x128xf32>
    %238 = arith.addf %237, %236 : vector<16x128xf32>
    %239 = arith.divf %237, %238 : vector<16x128xf32>
    %240 = vector.extract_strided_slice %227 {offsets = [0, 256], sizes = [16, 128], strides = [1, 1]} : vector<16x512xf32> to vector<16x128xf32>
    %241 = arith.negf %240 : vector<16x128xf32>
    %242 = math.exp %241 : vector<16x128xf32>
    %cst_71 = arith.constant 1.000000e+00 : f32
    %243 = vector.broadcast %cst_71 : f32 to vector<16x128xf32>
    %244 = arith.addf %243, %242 : vector<16x128xf32>
    %245 = arith.divf %243, %244 : vector<16x128xf32>
    %246 = vector.extract_strided_slice %227 {offsets = [0, 384], sizes = [16, 128], strides = [1, 1]} : vector<16x512xf32> to vector<16x128xf32>
    %247 = math.tanh %246 : vector<16x128xf32>
    %248 = arith.mulf %233, %214 : vector<16x128xf32>
    %249 = arith.mulf %239, %247 : vector<16x128xf32>
    %250 = arith.addf %248, %249 : vector<16x128xf32>
    %251 = math.tanh %250 : vector<16x128xf32>
    %252 = arith.mulf %245, %251 : vector<16x128xf32>
    %253 = arith.index_cast %c6_i32 : i32 to index
    %c0_72 = arith.constant 0 : index
    %c0_73 = arith.constant 0 : index
    %254 = vector.load %arg4[%253, %c0_72, %c0_73] : memref<28x16x128xf32, #tpu.memory_space<vmem>>, vector<1x16x128xf32>
    %255 = vector.shape_cast %254 : vector<1x16x128xf32> to vector<16x128xf32>
    %256 = vector.shape_cast %252 : vector<16x128xf32> to vector<1x16x128xf32>
    tpu.vector_store %arg4[%253, %c0_72, %c0_73], %256 {strides = array<i32>} : memref<28x16x128xf32, #tpu.memory_space<vmem>>, vector<1x16x128xf32>,
    %c7_i32 = arith.constant 7 : i32
    %257 = arith.index_cast %c7_i32 : i32 to index
    %c0_74 = arith.constant 0 : index
    %c0_75 = arith.constant 0 : index
    %258 = vector.load %arg2[%257, %c0_74, %c0_75] : memref<28x16x512xf32, #tpu.memory_space<vmem>>, vector<1x16x512xf32>
    %259 = vector.shape_cast %258 : vector<1x16x512xf32> to vector<16x512xf32>
    %260 = arith.truncf %252 : vector<16x128xf32> to vector<16x128xbf16>
    %c0_76 = arith.constant 0 : index
    %c0_77 = arith.constant 0 : index
    %261 = vector.load %arg3[%c0_76, %c0_77] : memref<128x512xbf16, #tpu.memory_space<vmem>>, vector<128x512xbf16>
    %cst_78 = arith.constant dense<0.000000e+00> : vector<16x512xf32>
    %262 = tpu.matmul %260, %261, %cst_78 {dimension_numbers = #tpu.dot_dimension_numbers<[1], [0], [0], [1], [0, 0, 1, 1], [], []>} : vector<16x128xbf16>, vector<128x512xbf16>, vector<16x512xf32> -> vector<16x512xf32>
    %263 = arith.addf %259, %262 : vector<16x512xf32>
    %264 = vector.extract_strided_slice %263 {offsets = [0, 0], sizes = [16, 128], strides = [1, 1]} : vector<16x512xf32> to vector<16x128xf32>
    %265 = arith.negf %264 : vector<16x128xf32>
    %266 = math.exp %265 : vector<16x128xf32>
    %cst_79 = arith.constant 1.000000e+00 : f32
    %267 = vector.broadcast %cst_79 : f32 to vector<16x128xf32>
    %268 = arith.addf %267, %266 : vector<16x128xf32>
    %269 = arith.divf %267, %268 : vector<16x128xf32>
    %270 = vector.extract_strided_slice %263 {offsets = [0, 128], sizes = [16, 128], strides = [1, 1]} : vector<16x512xf32> to vector<16x128xf32>
    %271 = arith.negf %270 : vector<16x128xf32>
    %272 = math.exp %271 : vector<16x128xf32>
    %cst_80 = arith.constant 1.000000e+00 : f32
    %273 = vector.broadcast %cst_80 : f32 to vector<16x128xf32>
    %274 = arith.addf %273, %272 : vector<16x128xf32>
    %275 = arith.divf %273, %274 : vector<16x128xf32>
    %276 = vector.extract_strided_slice %263 {offsets = [0, 256], sizes = [16, 128], strides = [1, 1]} : vector<16x512xf32> to vector<16x128xf32>
    %277 = arith.negf %276 : vector<16x128xf32>
    %278 = math.exp %277 : vector<16x128xf32>
    %cst_81 = arith.constant 1.000000e+00 : f32
    %279 = vector.broadcast %cst_81 : f32 to vector<16x128xf32>
    %280 = arith.addf %279, %278 : vector<16x128xf32>
    %281 = arith.divf %279, %280 : vector<16x128xf32>
    %282 = vector.extract_strided_slice %263 {offsets = [0, 384], sizes = [16, 128], strides = [1, 1]} : vector<16x512xf32> to vector<16x128xf32>
    %283 = math.tanh %282 : vector<16x128xf32>
    %284 = arith.mulf %269, %250 : vector<16x128xf32>
    %285 = arith.mulf %275, %283 : vector<16x128xf32>
    %286 = arith.addf %284, %285 : vector<16x128xf32>
    %287 = math.tanh %286 : vector<16x128xf32>
    %288 = arith.mulf %281, %287 : vector<16x128xf32>
    %289 = arith.index_cast %c7_i32 : i32 to index
    %c0_82 = arith.constant 0 : index
    %c0_83 = arith.constant 0 : index
    %290 = vector.load %arg4[%289, %c0_82, %c0_83] : memref<28x16x128xf32, #tpu.memory_space<vmem>>, vector<1x16x128xf32>
    %291 = vector.shape_cast %290 : vector<1x16x128xf32> to vector<16x128xf32>
    %292 = vector.shape_cast %288 : vector<16x128xf32> to vector<1x16x128xf32>
    tpu.vector_store %arg4[%289, %c0_82, %c0_83], %292 {strides = array<i32>} : memref<28x16x128xf32, #tpu.memory_space<vmem>>, vector<1x16x128xf32>,
    %c8_i32 = arith.constant 8 : i32
    %293 = arith.index_cast %c8_i32 : i32 to index
    %c0_84 = arith.constant 0 : index
    %c0_85 = arith.constant 0 : index
    %294 = vector.load %arg2[%293, %c0_84, %c0_85] : memref<28x16x512xf32, #tpu.memory_space<vmem>>, vector<1x16x512xf32>
    %295 = vector.shape_cast %294 : vector<1x16x512xf32> to vector<16x512xf32>
    %296 = arith.truncf %288 : vector<16x128xf32> to vector<16x128xbf16>
    %c0_86 = arith.constant 0 : index
    %c0_87 = arith.constant 0 : index
    %297 = vector.load %arg3[%c0_86, %c0_87] : memref<128x512xbf16, #tpu.memory_space<vmem>>, vector<128x512xbf16>
    %cst_88 = arith.constant dense<0.000000e+00> : vector<16x512xf32>
    %298 = tpu.matmul %296, %297, %cst_88 {dimension_numbers = #tpu.dot_dimension_numbers<[1], [0], [0], [1], [0, 0, 1, 1], [], []>} : vector<16x128xbf16>, vector<128x512xbf16>, vector<16x512xf32> -> vector<16x512xf32>
    %299 = arith.addf %295, %298 : vector<16x512xf32>
    %300 = vector.extract_strided_slice %299 {offsets = [0, 0], sizes = [16, 128], strides = [1, 1]} : vector<16x512xf32> to vector<16x128xf32>
    %301 = arith.negf %300 : vector<16x128xf32>
    %302 = math.exp %301 : vector<16x128xf32>
    %cst_89 = arith.constant 1.000000e+00 : f32
    %303 = vector.broadcast %cst_89 : f32 to vector<16x128xf32>
    %304 = arith.addf %303, %302 : vector<16x128xf32>
    %305 = arith.divf %303, %304 : vector<16x128xf32>
    %306 = vector.extract_strided_slice %299 {offsets = [0, 128], sizes = [16, 128], strides = [1, 1]} : vector<16x512xf32> to vector<16x128xf32>
    %307 = arith.negf %306 : vector<16x128xf32>
    %308 = math.exp %307 : vector<16x128xf32>
    %cst_90 = arith.constant 1.000000e+00 : f32
    %309 = vector.broadcast %cst_90 : f32 to vector<16x128xf32>
    %310 = arith.addf %309, %308 : vector<16x128xf32>
    %311 = arith.divf %309, %310 : vector<16x128xf32>
    %312 = vector.extract_strided_slice %299 {offsets = [0, 256], sizes = [16, 128], strides = [1, 1]} : vector<16x512xf32> to vector<16x128xf32>
    %313 = arith.negf %312 : vector<16x128xf32>
    %314 = math.exp %313 : vector<16x128xf32>
    %cst_91 = arith.constant 1.000000e+00 : f32
    %315 = vector.broadcast %cst_91 : f32 to vector<16x128xf32>
    %316 = arith.addf %315, %314 : vector<16x128xf32>
    %317 = arith.divf %315, %316 : vector<16x128xf32>
    %318 = vector.extract_strided_slice %299 {offsets = [0, 384], sizes = [16, 128], strides = [1, 1]} : vector<16x512xf32> to vector<16x128xf32>
    %319 = math.tanh %318 : vector<16x128xf32>
    %320 = arith.mulf %305, %286 : vector<16x128xf32>
    %321 = arith.mulf %311, %319 : vector<16x128xf32>
    %322 = arith.addf %320, %321 : vector<16x128xf32>
    %323 = math.tanh %322 : vector<16x128xf32>
    %324 = arith.mulf %317, %323 : vector<16x128xf32>
    %325 = arith.index_cast %c8_i32 : i32 to index
    %c0_92 = arith.constant 0 : index
    %c0_93 = arith.constant 0 : index
    %326 = vector.load %arg4[%325, %c0_92, %c0_93] : memref<28x16x128xf32, #tpu.memory_space<vmem>>, vector<1x16x128xf32>
    %327 = vector.shape_cast %326 : vector<1x16x128xf32> to vector<16x128xf32>
    %328 = vector.shape_cast %324 : vector<16x128xf32> to vector<1x16x128xf32>
    tpu.vector_store %arg4[%325, %c0_92, %c0_93], %328 {strides = array<i32>} : memref<28x16x128xf32, #tpu.memory_space<vmem>>, vector<1x16x128xf32>,
    %c9_i32 = arith.constant 9 : i32
    %329 = arith.index_cast %c9_i32 : i32 to index
    %c0_94 = arith.constant 0 : index
    %c0_95 = arith.constant 0 : index
    %330 = vector.load %arg2[%329, %c0_94, %c0_95] : memref<28x16x512xf32, #tpu.memory_space<vmem>>, vector<1x16x512xf32>
    %331 = vector.shape_cast %330 : vector<1x16x512xf32> to vector<16x512xf32>
    %332 = arith.truncf %324 : vector<16x128xf32> to vector<16x128xbf16>
    %c0_96 = arith.constant 0 : index
    %c0_97 = arith.constant 0 : index
    %333 = vector.load %arg3[%c0_96, %c0_97] : memref<128x512xbf16, #tpu.memory_space<vmem>>, vector<128x512xbf16>
    %cst_98 = arith.constant dense<0.000000e+00> : vector<16x512xf32>
    %334 = tpu.matmul %332, %333, %cst_98 {dimension_numbers = #tpu.dot_dimension_numbers<[1], [0], [0], [1], [0, 0, 1, 1], [], []>} : vector<16x128xbf16>, vector<128x512xbf16>, vector<16x512xf32> -> vector<16x512xf32>
    %335 = arith.addf %331, %334 : vector<16x512xf32>
    %336 = vector.extract_strided_slice %335 {offsets = [0, 0], sizes = [16, 128], strides = [1, 1]} : vector<16x512xf32> to vector<16x128xf32>
    %337 = arith.negf %336 : vector<16x128xf32>
    %338 = math.exp %337 : vector<16x128xf32>
    %cst_99 = arith.constant 1.000000e+00 : f32
    %339 = vector.broadcast %cst_99 : f32 to vector<16x128xf32>
    %340 = arith.addf %339, %338 : vector<16x128xf32>
    %341 = arith.divf %339, %340 : vector<16x128xf32>
    %342 = vector.extract_strided_slice %335 {offsets = [0, 128], sizes = [16, 128], strides = [1, 1]} : vector<16x512xf32> to vector<16x128xf32>
    %343 = arith.negf %342 : vector<16x128xf32>
    %344 = math.exp %343 : vector<16x128xf32>
    %cst_100 = arith.constant 1.000000e+00 : f32
    %345 = vector.broadcast %cst_100 : f32 to vector<16x128xf32>
    %346 = arith.addf %345, %344 : vector<16x128xf32>
    %347 = arith.divf %345, %346 : vector<16x128xf32>
    %348 = vector.extract_strided_slice %335 {offsets = [0, 256], sizes = [16, 128], strides = [1, 1]} : vector<16x512xf32> to vector<16x128xf32>
    %349 = arith.negf %348 : vector<16x128xf32>
    %350 = math.exp %349 : vector<16x128xf32>
    %cst_101 = arith.constant 1.000000e+00 : f32
    %351 = vector.broadcast %cst_101 : f32 to vector<16x128xf32>
    %352 = arith.addf %351, %350 : vector<16x128xf32>
    %353 = arith.divf %351, %352 : vector<16x128xf32>
    %354 = vector.extract_strided_slice %335 {offsets = [0, 384], sizes = [16, 128], strides = [1, 1]} : vector<16x512xf32> to vector<16x128xf32>
    %355 = math.tanh %354 : vector<16x128xf32>
    %356 = arith.mulf %341, %322 : vector<16x128xf32>
    %357 = arith.mulf %347, %355 : vector<16x128xf32>
    %358 = arith.addf %356, %357 : vector<16x128xf32>
    %359 = math.tanh %358 : vector<16x128xf32>
    %360 = arith.mulf %353, %359 : vector<16x128xf32>
    %361 = arith.index_cast %c9_i32 : i32 to index
    %c0_102 = arith.constant 0 : index
    %c0_103 = arith.constant 0 : index
    %362 = vector.load %arg4[%361, %c0_102, %c0_103] : memref<28x16x128xf32, #tpu.memory_space<vmem>>, vector<1x16x128xf32>
    %363 = vector.shape_cast %362 : vector<1x16x128xf32> to vector<16x128xf32>
    %364 = vector.shape_cast %360 : vector<16x128xf32> to vector<1x16x128xf32>
    tpu.vector_store %arg4[%361, %c0_102, %c0_103], %364 {strides = array<i32>} : memref<28x16x128xf32, #tpu.memory_space<vmem>>, vector<1x16x128xf32>,
    %c10_i32 = arith.constant 10 : i32
    %365 = arith.index_cast %c10_i32 : i32 to index
    %c0_104 = arith.constant 0 : index
    %c0_105 = arith.constant 0 : index
    %366 = vector.load %arg2[%365, %c0_104, %c0_105] : memref<28x16x512xf32, #tpu.memory_space<vmem>>, vector<1x16x512xf32>
    %367 = vector.shape_cast %366 : vector<1x16x512xf32> to vector<16x512xf32>
    %368 = arith.truncf %360 : vector<16x128xf32> to vector<16x128xbf16>
    %c0_106 = arith.constant 0 : index
    %c0_107 = arith.constant 0 : index
    %369 = vector.load %arg3[%c0_106, %c0_107] : memref<128x512xbf16, #tpu.memory_space<vmem>>, vector<128x512xbf16>
    %cst_108 = arith.constant dense<0.000000e+00> : vector<16x512xf32>
    %370 = tpu.matmul %368, %369, %cst_108 {dimension_numbers = #tpu.dot_dimension_numbers<[1], [0], [0], [1], [0, 0, 1, 1], [], []>} : vector<16x128xbf16>, vector<128x512xbf16>, vector<16x512xf32> -> vector<16x512xf32>
    %371 = arith.addf %367, %370 : vector<16x512xf32>
    %372 = vector.extract_strided_slice %371 {offsets = [0, 0], sizes = [16, 128], strides = [1, 1]} : vector<16x512xf32> to vector<16x128xf32>
    %373 = arith.negf %372 : vector<16x128xf32>
    %374 = math.exp %373 : vector<16x128xf32>
    %cst_109 = arith.constant 1.000000e+00 : f32
    %375 = vector.broadcast %cst_109 : f32 to vector<16x128xf32>
    %376 = arith.addf %375, %374 : vector<16x128xf32>
    %377 = arith.divf %375, %376 : vector<16x128xf32>
    %378 = vector.extract_strided_slice %371 {offsets = [0, 128], sizes = [16, 128], strides = [1, 1]} : vector<16x512xf32> to vector<16x128xf32>
    %379 = arith.negf %378 : vector<16x128xf32>
    %380 = math.exp %379 : vector<16x128xf32>
    %cst_110 = arith.constant 1.000000e+00 : f32
    %381 = vector.broadcast %cst_110 : f32 to vector<16x128xf32>
    %382 = arith.addf %381, %380 : vector<16x128xf32>
    %383 = arith.divf %381, %382 : vector<16x128xf32>
    %384 = vector.extract_strided_slice %371 {offsets = [0, 256], sizes = [16, 128], strides = [1, 1]} : vector<16x512xf32> to vector<16x128xf32>
    %385 = arith.negf %384 : vector<16x128xf32>
    %386 = math.exp %385 : vector<16x128xf32>
    %cst_111 = arith.constant 1.000000e+00 : f32
    %387 = vector.broadcast %cst_111 : f32 to vector<16x128xf32>
    %388 = arith.addf %387, %386 : vector<16x128xf32>
    %389 = arith.divf %387, %388 : vector<16x128xf32>
    %390 = vector.extract_strided_slice %371 {offsets = [0, 384], sizes = [16, 128], strides = [1, 1]} : vector<16x512xf32> to vector<16x128xf32>
    %391 = math.tanh %390 : vector<16x128xf32>
    %392 = arith.mulf %377, %358 : vector<16x128xf32>
    %393 = arith.mulf %383, %391 : vector<16x128xf32>
    %394 = arith.addf %392, %393 : vector<16x128xf32>
    %395 = math.tanh %394 : vector<16x128xf32>
    %396 = arith.mulf %389, %395 : vector<16x128xf32>
    %397 = arith.index_cast %c10_i32 : i32 to index
    %c0_112 = arith.constant 0 : index
    %c0_113 = arith.constant 0 : index
    %398 = vector.load %arg4[%397, %c0_112, %c0_113] : memref<28x16x128xf32, #tpu.memory_space<vmem>>, vector<1x16x128xf32>
    %399 = vector.shape_cast %398 : vector<1x16x128xf32> to vector<16x128xf32>
    %400 = vector.shape_cast %396 : vector<16x128xf32> to vector<1x16x128xf32>
    tpu.vector_store %arg4[%397, %c0_112, %c0_113], %400 {strides = array<i32>} : memref<28x16x128xf32, #tpu.memory_space<vmem>>, vector<1x16x128xf32>,
    %c11_i32 = arith.constant 11 : i32
    %401 = arith.index_cast %c11_i32 : i32 to index
    %c0_114 = arith.constant 0 : index
    %c0_115 = arith.constant 0 : index
    %402 = vector.load %arg2[%401, %c0_114, %c0_115] : memref<28x16x512xf32, #tpu.memory_space<vmem>>, vector<1x16x512xf32>
    %403 = vector.shape_cast %402 : vector<1x16x512xf32> to vector<16x512xf32>
    %404 = arith.truncf %396 : vector<16x128xf32> to vector<16x128xbf16>
    %c0_116 = arith.constant 0 : index
    %c0_117 = arith.constant 0 : index
    %405 = vector.load %arg3[%c0_116, %c0_117] : memref<128x512xbf16, #tpu.memory_space<vmem>>, vector<128x512xbf16>
    %cst_118 = arith.constant dense<0.000000e+00> : vector<16x512xf32>
    %406 = tpu.matmul %404, %405, %cst_118 {dimension_numbers = #tpu.dot_dimension_numbers<[1], [0], [0], [1], [0, 0, 1, 1], [], []>} : vector<16x128xbf16>, vector<128x512xbf16>, vector<16x512xf32> -> vector<16x512xf32>
    %407 = arith.addf %403, %406 : vector<16x512xf32>
    %408 = vector.extract_strided_slice %407 {offsets = [0, 0], sizes = [16, 128], strides = [1, 1]} : vector<16x512xf32> to vector<16x128xf32>
    %409 = arith.negf %408 : vector<16x128xf32>
    %410 = math.exp %409 : vector<16x128xf32>
    %cst_119 = arith.constant 1.000000e+00 : f32
    %411 = vector.broadcast %cst_119 : f32 to vector<16x128xf32>
    %412 = arith.addf %411, %410 : vector<16x128xf32>
    %413 = arith.divf %411, %412 : vector<16x128xf32>
    %414 = vector.extract_strided_slice %407 {offsets = [0, 128], sizes = [16, 128], strides = [1, 1]} : vector<16x512xf32> to vector<16x128xf32>
    %415 = arith.negf %414 : vector<16x128xf32>
    %416 = math.exp %415 : vector<16x128xf32>
    %cst_120 = arith.constant 1.000000e+00 : f32
    %417 = vector.broadcast %cst_120 : f32 to vector<16x128xf32>
    %418 = arith.addf %417, %416 : vector<16x128xf32>
    %419 = arith.divf %417, %418 : vector<16x128xf32>
    %420 = vector.extract_strided_slice %407 {offsets = [0, 256], sizes = [16, 128], strides = [1, 1]} : vector<16x512xf32> to vector<16x128xf32>
    %421 = arith.negf %420 : vector<16x128xf32>
    %422 = math.exp %421 : vector<16x128xf32>
    %cst_121 = arith.constant 1.000000e+00 : f32
    %423 = vector.broadcast %cst_121 : f32 to vector<16x128xf32>
    %424 = arith.addf %423, %422 : vector<16x128xf32>
    %425 = arith.divf %423, %424 : vector<16x128xf32>
    %426 = vector.extract_strided_slice %407 {offsets = [0, 384], sizes = [16, 128], strides = [1, 1]} : vector<16x512xf32> to vector<16x128xf32>
    %427 = math.tanh %426 : vector<16x128xf32>
    %428 = arith.mulf %413, %394 : vector<16x128xf32>
    %429 = arith.mulf %419, %427 : vector<16x128xf32>
    %430 = arith.addf %428, %429 : vector<16x128xf32>
    %431 = math.tanh %430 : vector<16x128xf32>
    %432 = arith.mulf %425, %431 : vector<16x128xf32>
    %433 = arith.index_cast %c11_i32 : i32 to index
    %c0_122 = arith.constant 0 : index
    %c0_123 = arith.constant 0 : index
    %434 = vector.load %arg4[%433, %c0_122, %c0_123] : memref<28x16x128xf32, #tpu.memory_space<vmem>>, vector<1x16x128xf32>
    %435 = vector.shape_cast %434 : vector<1x16x128xf32> to vector<16x128xf32>
    %436 = vector.shape_cast %432 : vector<16x128xf32> to vector<1x16x128xf32>
    tpu.vector_store %arg4[%433, %c0_122, %c0_123], %436 {strides = array<i32>} : memref<28x16x128xf32, #tpu.memory_space<vmem>>, vector<1x16x128xf32>,
    %c12_i32 = arith.constant 12 : i32
    %437 = arith.index_cast %c12_i32 : i32 to index
    %c0_124 = arith.constant 0 : index
    %c0_125 = arith.constant 0 : index
    %438 = vector.load %arg2[%437, %c0_124, %c0_125] : memref<28x16x512xf32, #tpu.memory_space<vmem>>, vector<1x16x512xf32>
    %439 = vector.shape_cast %438 : vector<1x16x512xf32> to vector<16x512xf32>
    %440 = arith.truncf %432 : vector<16x128xf32> to vector<16x128xbf16>
    %c0_126 = arith.constant 0 : index
    %c0_127 = arith.constant 0 : index
    %441 = vector.load %arg3[%c0_126, %c0_127] : memref<128x512xbf16, #tpu.memory_space<vmem>>, vector<128x512xbf16>
    %cst_128 = arith.constant dense<0.000000e+00> : vector<16x512xf32>
    %442 = tpu.matmul %440, %441, %cst_128 {dimension_numbers = #tpu.dot_dimension_numbers<[1], [0], [0], [1], [0, 0, 1, 1], [], []>} : vector<16x128xbf16>, vector<128x512xbf16>, vector<16x512xf32> -> vector<16x512xf32>
    %443 = arith.addf %439, %442 : vector<16x512xf32>
    %444 = vector.extract_strided_slice %443 {offsets = [0, 0], sizes = [16, 128], strides = [1, 1]} : vector<16x512xf32> to vector<16x128xf32>
    %445 = arith.negf %444 : vector<16x128xf32>
    %446 = math.exp %445 : vector<16x128xf32>
    %cst_129 = arith.constant 1.000000e+00 : f32
    %447 = vector.broadcast %cst_129 : f32 to vector<16x128xf32>
    %448 = arith.addf %447, %446 : vector<16x128xf32>
    %449 = arith.divf %447, %448 : vector<16x128xf32>
    %450 = vector.extract_strided_slice %443 {offsets = [0, 128], sizes = [16, 128], strides = [1, 1]} : vector<16x512xf32> to vector<16x128xf32>
    %451 = arith.negf %450 : vector<16x128xf32>
    %452 = math.exp %451 : vector<16x128xf32>
    %cst_130 = arith.constant 1.000000e+00 : f32
    %453 = vector.broadcast %cst_130 : f32 to vector<16x128xf32>
    %454 = arith.addf %453, %452 : vector<16x128xf32>
    %455 = arith.divf %453, %454 : vector<16x128xf32>
    %456 = vector.extract_strided_slice %443 {offsets = [0, 256], sizes = [16, 128], strides = [1, 1]} : vector<16x512xf32> to vector<16x128xf32>
    %457 = arith.negf %456 : vector<16x128xf32>
    %458 = math.exp %457 : vector<16x128xf32>
    %cst_131 = arith.constant 1.000000e+00 : f32
    %459 = vector.broadcast %cst_131 : f32 to vector<16x128xf32>
    %460 = arith.addf %459, %458 : vector<16x128xf32>
    %461 = arith.divf %459, %460 : vector<16x128xf32>
    %462 = vector.extract_strided_slice %443 {offsets = [0, 384], sizes = [16, 128], strides = [1, 1]} : vector<16x512xf32> to vector<16x128xf32>
    %463 = math.tanh %462 : vector<16x128xf32>
    %464 = arith.mulf %449, %430 : vector<16x128xf32>
    %465 = arith.mulf %455, %463 : vector<16x128xf32>
    %466 = arith.addf %464, %465 : vector<16x128xf32>
    %467 = math.tanh %466 : vector<16x128xf32>
    %468 = arith.mulf %461, %467 : vector<16x128xf32>
    %469 = arith.index_cast %c12_i32 : i32 to index
    %c0_132 = arith.constant 0 : index
    %c0_133 = arith.constant 0 : index
    %470 = vector.load %arg4[%469, %c0_132, %c0_133] : memref<28x16x128xf32, #tpu.memory_space<vmem>>, vector<1x16x128xf32>
    %471 = vector.shape_cast %470 : vector<1x16x128xf32> to vector<16x128xf32>
    %472 = vector.shape_cast %468 : vector<16x128xf32> to vector<1x16x128xf32>
    tpu.vector_store %arg4[%469, %c0_132, %c0_133], %472 {strides = array<i32>} : memref<28x16x128xf32, #tpu.memory_space<vmem>>, vector<1x16x128xf32>,
    %c13_i32 = arith.constant 13 : i32
    %473 = arith.index_cast %c13_i32 : i32 to index
    %c0_134 = arith.constant 0 : index
    %c0_135 = arith.constant 0 : index
    %474 = vector.load %arg2[%473, %c0_134, %c0_135] : memref<28x16x512xf32, #tpu.memory_space<vmem>>, vector<1x16x512xf32>
    %475 = vector.shape_cast %474 : vector<1x16x512xf32> to vector<16x512xf32>
    %476 = arith.truncf %468 : vector<16x128xf32> to vector<16x128xbf16>
    %c0_136 = arith.constant 0 : index
    %c0_137 = arith.constant 0 : index
    %477 = vector.load %arg3[%c0_136, %c0_137] : memref<128x512xbf16, #tpu.memory_space<vmem>>, vector<128x512xbf16>
    %cst_138 = arith.constant dense<0.000000e+00> : vector<16x512xf32>
    %478 = tpu.matmul %476, %477, %cst_138 {dimension_numbers = #tpu.dot_dimension_numbers<[1], [0], [0], [1], [0, 0, 1, 1], [], []>} : vector<16x128xbf16>, vector<128x512xbf16>, vector<16x512xf32> -> vector<16x512xf32>
    %479 = arith.addf %475, %478 : vector<16x512xf32>
    %480 = vector.extract_strided_slice %479 {offsets = [0, 0], sizes = [16, 128], strides = [1, 1]} : vector<16x512xf32> to vector<16x128xf32>
    %481 = arith.negf %480 : vector<16x128xf32>
    %482 = math.exp %481 : vector<16x128xf32>
    %cst_139 = arith.constant 1.000000e+00 : f32
    %483 = vector.broadcast %cst_139 : f32 to vector<16x128xf32>
    %484 = arith.addf %483, %482 : vector<16x128xf32>
    %485 = arith.divf %483, %484 : vector<16x128xf32>
    %486 = vector.extract_strided_slice %479 {offsets = [0, 128], sizes = [16, 128], strides = [1, 1]} : vector<16x512xf32> to vector<16x128xf32>
    %487 = arith.negf %486 : vector<16x128xf32>
    %488 = math.exp %487 : vector<16x128xf32>
    %cst_140 = arith.constant 1.000000e+00 : f32
    %489 = vector.broadcast %cst_140 : f32 to vector<16x128xf32>
    %490 = arith.addf %489, %488 : vector<16x128xf32>
    %491 = arith.divf %489, %490 : vector<16x128xf32>
    %492 = vector.extract_strided_slice %479 {offsets = [0, 256], sizes = [16, 128], strides = [1, 1]} : vector<16x512xf32> to vector<16x128xf32>
    %493 = arith.negf %492 : vector<16x128xf32>
    %494 = math.exp %493 : vector<16x128xf32>
    %cst_141 = arith.constant 1.000000e+00 : f32
    %495 = vector.broadcast %cst_141 : f32 to vector<16x128xf32>
    %496 = arith.addf %495, %494 : vector<16x128xf32>
    %497 = arith.divf %495, %496 : vector<16x128xf32>
    %498 = vector.extract_strided_slice %479 {offsets = [0, 384], sizes = [16, 128], strides = [1, 1]} : vector<16x512xf32> to vector<16x128xf32>
    %499 = math.tanh %498 : vector<16x128xf32>
    %500 = arith.mulf %485, %466 : vector<16x128xf32>
    %501 = arith.mulf %491, %499 : vector<16x128xf32>
    %502 = arith.addf %500, %501 : vector<16x128xf32>
    %503 = math.tanh %502 : vector<16x128xf32>
    %504 = arith.mulf %497, %503 : vector<16x128xf32>
    %505 = arith.index_cast %c13_i32 : i32 to index
    %c0_142 = arith.constant 0 : index
    %c0_143 = arith.constant 0 : index
    %506 = vector.load %arg4[%505, %c0_142, %c0_143] : memref<28x16x128xf32, #tpu.memory_space<vmem>>, vector<1x16x128xf32>
    %507 = vector.shape_cast %506 : vector<1x16x128xf32> to vector<16x128xf32>
    %508 = vector.shape_cast %504 : vector<16x128xf32> to vector<1x16x128xf32>
    tpu.vector_store %arg4[%505, %c0_142, %c0_143], %508 {strides = array<i32>} : memref<28x16x128xf32, #tpu.memory_space<vmem>>, vector<1x16x128xf32>,
    %c14_i32 = arith.constant 14 : i32
    %509 = arith.index_cast %c14_i32 : i32 to index
    %c0_144 = arith.constant 0 : index
    %c0_145 = arith.constant 0 : index
    %510 = vector.load %arg2[%509, %c0_144, %c0_145] : memref<28x16x512xf32, #tpu.memory_space<vmem>>, vector<1x16x512xf32>
    %511 = vector.shape_cast %510 : vector<1x16x512xf32> to vector<16x512xf32>
    %512 = arith.truncf %504 : vector<16x128xf32> to vector<16x128xbf16>
    %c0_146 = arith.constant 0 : index
    %c0_147 = arith.constant 0 : index
    %513 = vector.load %arg3[%c0_146, %c0_147] : memref<128x512xbf16, #tpu.memory_space<vmem>>, vector<128x512xbf16>
    %cst_148 = arith.constant dense<0.000000e+00> : vector<16x512xf32>
    %514 = tpu.matmul %512, %513, %cst_148 {dimension_numbers = #tpu.dot_dimension_numbers<[1], [0], [0], [1], [0, 0, 1, 1], [], []>} : vector<16x128xbf16>, vector<128x512xbf16>, vector<16x512xf32> -> vector<16x512xf32>
    %515 = arith.addf %511, %514 : vector<16x512xf32>
    %516 = vector.extract_strided_slice %515 {offsets = [0, 0], sizes = [16, 128], strides = [1, 1]} : vector<16x512xf32> to vector<16x128xf32>
    %517 = arith.negf %516 : vector<16x128xf32>
    %518 = math.exp %517 : vector<16x128xf32>
    %cst_149 = arith.constant 1.000000e+00 : f32
    %519 = vector.broadcast %cst_149 : f32 to vector<16x128xf32>
    %520 = arith.addf %519, %518 : vector<16x128xf32>
    %521 = arith.divf %519, %520 : vector<16x128xf32>
    %522 = vector.extract_strided_slice %515 {offsets = [0, 128], sizes = [16, 128], strides = [1, 1]} : vector<16x512xf32> to vector<16x128xf32>
    %523 = arith.negf %522 : vector<16x128xf32>
    %524 = math.exp %523 : vector<16x128xf32>
    %cst_150 = arith.constant 1.000000e+00 : f32
    %525 = vector.broadcast %cst_150 : f32 to vector<16x128xf32>
    %526 = arith.addf %525, %524 : vector<16x128xf32>
    %527 = arith.divf %525, %526 : vector<16x128xf32>
    %528 = vector.extract_strided_slice %515 {offsets = [0, 256], sizes = [16, 128], strides = [1, 1]} : vector<16x512xf32> to vector<16x128xf32>
    %529 = arith.negf %528 : vector<16x128xf32>
    %530 = math.exp %529 : vector<16x128xf32>
    %cst_151 = arith.constant 1.000000e+00 : f32
    %531 = vector.broadcast %cst_151 : f32 to vector<16x128xf32>
    %532 = arith.addf %531, %530 : vector<16x128xf32>
    %533 = arith.divf %531, %532 : vector<16x128xf32>
    %534 = vector.extract_strided_slice %515 {offsets = [0, 384], sizes = [16, 128], strides = [1, 1]} : vector<16x512xf32> to vector<16x128xf32>
    %535 = math.tanh %534 : vector<16x128xf32>
    %536 = arith.mulf %521, %502 : vector<16x128xf32>
    %537 = arith.mulf %527, %535 : vector<16x128xf32>
    %538 = arith.addf %536, %537 : vector<16x128xf32>
    %539 = math.tanh %538 : vector<16x128xf32>
    %540 = arith.mulf %533, %539 : vector<16x128xf32>
    %541 = arith.index_cast %c14_i32 : i32 to index
    %c0_152 = arith.constant 0 : index
    %c0_153 = arith.constant 0 : index
    %542 = vector.load %arg4[%541, %c0_152, %c0_153] : memref<28x16x128xf32, #tpu.memory_space<vmem>>, vector<1x16x128xf32>
    %543 = vector.shape_cast %542 : vector<1x16x128xf32> to vector<16x128xf32>
    %544 = vector.shape_cast %540 : vector<16x128xf32> to vector<1x16x128xf32>
    tpu.vector_store %arg4[%541, %c0_152, %c0_153], %544 {strides = array<i32>} : memref<28x16x128xf32, #tpu.memory_space<vmem>>, vector<1x16x128xf32>,
    %c15_i32 = arith.constant 15 : i32
    %545 = arith.index_cast %c15_i32 : i32 to index
    %c0_154 = arith.constant 0 : index
    %c0_155 = arith.constant 0 : index
    %546 = vector.load %arg2[%545, %c0_154, %c0_155] : memref<28x16x512xf32, #tpu.memory_space<vmem>>, vector<1x16x512xf32>
    %547 = vector.shape_cast %546 : vector<1x16x512xf32> to vector<16x512xf32>
    %548 = arith.truncf %540 : vector<16x128xf32> to vector<16x128xbf16>
    %c0_156 = arith.constant 0 : index
    %c0_157 = arith.constant 0 : index
    %549 = vector.load %arg3[%c0_156, %c0_157] : memref<128x512xbf16, #tpu.memory_space<vmem>>, vector<128x512xbf16>
    %cst_158 = arith.constant dense<0.000000e+00> : vector<16x512xf32>
    %550 = tpu.matmul %548, %549, %cst_158 {dimension_numbers = #tpu.dot_dimension_numbers<[1], [0], [0], [1], [0, 0, 1, 1], [], []>} : vector<16x128xbf16>, vector<128x512xbf16>, vector<16x512xf32> -> vector<16x512xf32>
    %551 = arith.addf %547, %550 : vector<16x512xf32>
    %552 = vector.extract_strided_slice %551 {offsets = [0, 0], sizes = [16, 128], strides = [1, 1]} : vector<16x512xf32> to vector<16x128xf32>
    %553 = arith.negf %552 : vector<16x128xf32>
    %554 = math.exp %553 : vector<16x128xf32>
    %cst_159 = arith.constant 1.000000e+00 : f32
    %555 = vector.broadcast %cst_159 : f32 to vector<16x128xf32>
    %556 = arith.addf %555, %554 : vector<16x128xf32>
    %557 = arith.divf %555, %556 : vector<16x128xf32>
    %558 = vector.extract_strided_slice %551 {offsets = [0, 128], sizes = [16, 128], strides = [1, 1]} : vector<16x512xf32> to vector<16x128xf32>
    %559 = arith.negf %558 : vector<16x128xf32>
    %560 = math.exp %559 : vector<16x128xf32>
    %cst_160 = arith.constant 1.000000e+00 : f32
    %561 = vector.broadcast %cst_160 : f32 to vector<16x128xf32>
    %562 = arith.addf %561, %560 : vector<16x128xf32>
    %563 = arith.divf %561, %562 : vector<16x128xf32>
    %564 = vector.extract_strided_slice %551 {offsets = [0, 256], sizes = [16, 128], strides = [1, 1]} : vector<16x512xf32> to vector<16x128xf32>
    %565 = arith.negf %564 : vector<16x128xf32>
    %566 = math.exp %565 : vector<16x128xf32>
    %cst_161 = arith.constant 1.000000e+00 : f32
    %567 = vector.broadcast %cst_161 : f32 to vector<16x128xf32>
    %568 = arith.addf %567, %566 : vector<16x128xf32>
    %569 = arith.divf %567, %568 : vector<16x128xf32>
    %570 = vector.extract_strided_slice %551 {offsets = [0, 384], sizes = [16, 128], strides = [1, 1]} : vector<16x512xf32> to vector<16x128xf32>
    %571 = math.tanh %570 : vector<16x128xf32>
    %572 = arith.mulf %557, %538 : vector<16x128xf32>
    %573 = arith.mulf %563, %571 : vector<16x128xf32>
    %574 = arith.addf %572, %573 : vector<16x128xf32>
    %575 = math.tanh %574 : vector<16x128xf32>
    %576 = arith.mulf %569, %575 : vector<16x128xf32>
    %577 = arith.index_cast %c15_i32 : i32 to index
    %c0_162 = arith.constant 0 : index
    %c0_163 = arith.constant 0 : index
    %578 = vector.load %arg4[%577, %c0_162, %c0_163] : memref<28x16x128xf32, #tpu.memory_space<vmem>>, vector<1x16x128xf32>
    %579 = vector.shape_cast %578 : vector<1x16x128xf32> to vector<16x128xf32>
    %580 = vector.shape_cast %576 : vector<16x128xf32> to vector<1x16x128xf32>
    tpu.vector_store %arg4[%577, %c0_162, %c0_163], %580 {strides = array<i32>} : memref<28x16x128xf32, #tpu.memory_space<vmem>>, vector<1x16x128xf32>,
    %c16_i32 = arith.constant 16 : i32
    %581 = arith.index_cast %c16_i32 : i32 to index
    %c0_164 = arith.constant 0 : index
    %c0_165 = arith.constant 0 : index
    %582 = vector.load %arg2[%581, %c0_164, %c0_165] : memref<28x16x512xf32, #tpu.memory_space<vmem>>, vector<1x16x512xf32>
    %583 = vector.shape_cast %582 : vector<1x16x512xf32> to vector<16x512xf32>
    %584 = arith.truncf %576 : vector<16x128xf32> to vector<16x128xbf16>
    %c0_166 = arith.constant 0 : index
    %c0_167 = arith.constant 0 : index
    %585 = vector.load %arg3[%c0_166, %c0_167] : memref<128x512xbf16, #tpu.memory_space<vmem>>, vector<128x512xbf16>
    %cst_168 = arith.constant dense<0.000000e+00> : vector<16x512xf32>
    %586 = tpu.matmul %584, %585, %cst_168 {dimension_numbers = #tpu.dot_dimension_numbers<[1], [0], [0], [1], [0, 0, 1, 1], [], []>} : vector<16x128xbf16>, vector<128x512xbf16>, vector<16x512xf32> -> vector<16x512xf32>
    %587 = arith.addf %583, %586 : vector<16x512xf32>
    %588 = vector.extract_strided_slice %587 {offsets = [0, 0], sizes = [16, 128], strides = [1, 1]} : vector<16x512xf32> to vector<16x128xf32>
    %589 = arith.negf %588 : vector<16x128xf32>
    %590 = math.exp %589 : vector<16x128xf32>
    %cst_169 = arith.constant 1.000000e+00 : f32
    %591 = vector.broadcast %cst_169 : f32 to vector<16x128xf32>
    %592 = arith.addf %591, %590 : vector<16x128xf32>
    %593 = arith.divf %591, %592 : vector<16x128xf32>
    %594 = vector.extract_strided_slice %587 {offsets = [0, 128], sizes = [16, 128], strides = [1, 1]} : vector<16x512xf32> to vector<16x128xf32>
    %595 = arith.negf %594 : vector<16x128xf32>
    %596 = math.exp %595 : vector<16x128xf32>
    %cst_170 = arith.constant 1.000000e+00 : f32
    %597 = vector.broadcast %cst_170 : f32 to vector<16x128xf32>
    %598 = arith.addf %597, %596 : vector<16x128xf32>
    %599 = arith.divf %597, %598 : vector<16x128xf32>
    %600 = vector.extract_strided_slice %587 {offsets = [0, 256], sizes = [16, 128], strides = [1, 1]} : vector<16x512xf32> to vector<16x128xf32>
    %601 = arith.negf %600 : vector<16x128xf32>
    %602 = math.exp %601 : vector<16x128xf32>
    %cst_171 = arith.constant 1.000000e+00 : f32
    %603 = vector.broadcast %cst_171 : f32 to vector<16x128xf32>
    %604 = arith.addf %603, %602 : vector<16x128xf32>
    %605 = arith.divf %603, %604 : vector<16x128xf32>
    %606 = vector.extract_strided_slice %587 {offsets = [0, 384], sizes = [16, 128], strides = [1, 1]} : vector<16x512xf32> to vector<16x128xf32>
    %607 = math.tanh %606 : vector<16x128xf32>
    %608 = arith.mulf %593, %574 : vector<16x128xf32>
    %609 = arith.mulf %599, %607 : vector<16x128xf32>
    %610 = arith.addf %608, %609 : vector<16x128xf32>
    %611 = math.tanh %610 : vector<16x128xf32>
    %612 = arith.mulf %605, %611 : vector<16x128xf32>
    %613 = arith.index_cast %c16_i32 : i32 to index
    %c0_172 = arith.constant 0 : index
    %c0_173 = arith.constant 0 : index
    %614 = vector.load %arg4[%613, %c0_172, %c0_173] : memref<28x16x128xf32, #tpu.memory_space<vmem>>, vector<1x16x128xf32>
    %615 = vector.shape_cast %614 : vector<1x16x128xf32> to vector<16x128xf32>
    %616 = vector.shape_cast %612 : vector<16x128xf32> to vector<1x16x128xf32>
    tpu.vector_store %arg4[%613, %c0_172, %c0_173], %616 {strides = array<i32>} : memref<28x16x128xf32, #tpu.memory_space<vmem>>, vector<1x16x128xf32>,
    %c17_i32 = arith.constant 17 : i32
    %617 = arith.index_cast %c17_i32 : i32 to index
    %c0_174 = arith.constant 0 : index
    %c0_175 = arith.constant 0 : index
    %618 = vector.load %arg2[%617, %c0_174, %c0_175] : memref<28x16x512xf32, #tpu.memory_space<vmem>>, vector<1x16x512xf32>
    %619 = vector.shape_cast %618 : vector<1x16x512xf32> to vector<16x512xf32>
    %620 = arith.truncf %612 : vector<16x128xf32> to vector<16x128xbf16>
    %c0_176 = arith.constant 0 : index
    %c0_177 = arith.constant 0 : index
    %621 = vector.load %arg3[%c0_176, %c0_177] : memref<128x512xbf16, #tpu.memory_space<vmem>>, vector<128x512xbf16>
    %cst_178 = arith.constant dense<0.000000e+00> : vector<16x512xf32>
    %622 = tpu.matmul %620, %621, %cst_178 {dimension_numbers = #tpu.dot_dimension_numbers<[1], [0], [0], [1], [0, 0, 1, 1], [], []>} : vector<16x128xbf16>, vector<128x512xbf16>, vector<16x512xf32> -> vector<16x512xf32>
    %623 = arith.addf %619, %622 : vector<16x512xf32>
    %624 = vector.extract_strided_slice %623 {offsets = [0, 0], sizes = [16, 128], strides = [1, 1]} : vector<16x512xf32> to vector<16x128xf32>
    %625 = arith.negf %624 : vector<16x128xf32>
    %626 = math.exp %625 : vector<16x128xf32>
    %cst_179 = arith.constant 1.000000e+00 : f32
    %627 = vector.broadcast %cst_179 : f32 to vector<16x128xf32>
    %628 = arith.addf %627, %626 : vector<16x128xf32>
    %629 = arith.divf %627, %628 : vector<16x128xf32>
    %630 = vector.extract_strided_slice %623 {offsets = [0, 128], sizes = [16, 128], strides = [1, 1]} : vector<16x512xf32> to vector<16x128xf32>
    %631 = arith.negf %630 : vector<16x128xf32>
    %632 = math.exp %631 : vector<16x128xf32>
    %cst_180 = arith.constant 1.000000e+00 : f32
    %633 = vector.broadcast %cst_180 : f32 to vector<16x128xf32>
    %634 = arith.addf %633, %632 : vector<16x128xf32>
    %635 = arith.divf %633, %634 : vector<16x128xf32>
    %636 = vector.extract_strided_slice %623 {offsets = [0, 256], sizes = [16, 128], strides = [1, 1]} : vector<16x512xf32> to vector<16x128xf32>
    %637 = arith.negf %636 : vector<16x128xf32>
    %638 = math.exp %637 : vector<16x128xf32>
    %cst_181 = arith.constant 1.000000e+00 : f32
    %639 = vector.broadcast %cst_181 : f32 to vector<16x128xf32>
    %640 = arith.addf %639, %638 : vector<16x128xf32>
    %641 = arith.divf %639, %640 : vector<16x128xf32>
    %642 = vector.extract_strided_slice %623 {offsets = [0, 384], sizes = [16, 128], strides = [1, 1]} : vector<16x512xf32> to vector<16x128xf32>
    %643 = math.tanh %642 : vector<16x128xf32>
    %644 = arith.mulf %629, %610 : vector<16x128xf32>
    %645 = arith.mulf %635, %643 : vector<16x128xf32>
    %646 = arith.addf %644, %645 : vector<16x128xf32>
    %647 = math.tanh %646 : vector<16x128xf32>
    %648 = arith.mulf %641, %647 : vector<16x128xf32>
    %649 = arith.index_cast %c17_i32 : i32 to index
    %c0_182 = arith.constant 0 : index
    %c0_183 = arith.constant 0 : index
    %650 = vector.load %arg4[%649, %c0_182, %c0_183] : memref<28x16x128xf32, #tpu.memory_space<vmem>>, vector<1x16x128xf32>
    %651 = vector.shape_cast %650 : vector<1x16x128xf32> to vector<16x128xf32>
    %652 = vector.shape_cast %648 : vector<16x128xf32> to vector<1x16x128xf32>
    tpu.vector_store %arg4[%649, %c0_182, %c0_183], %652 {strides = array<i32>} : memref<28x16x128xf32, #tpu.memory_space<vmem>>, vector<1x16x128xf32>,
    %c18_i32 = arith.constant 18 : i32
    %653 = arith.index_cast %c18_i32 : i32 to index
    %c0_184 = arith.constant 0 : index
    %c0_185 = arith.constant 0 : index
    %654 = vector.load %arg2[%653, %c0_184, %c0_185] : memref<28x16x512xf32, #tpu.memory_space<vmem>>, vector<1x16x512xf32>
    %655 = vector.shape_cast %654 : vector<1x16x512xf32> to vector<16x512xf32>
    %656 = arith.truncf %648 : vector<16x128xf32> to vector<16x128xbf16>
    %c0_186 = arith.constant 0 : index
    %c0_187 = arith.constant 0 : index
    %657 = vector.load %arg3[%c0_186, %c0_187] : memref<128x512xbf16, #tpu.memory_space<vmem>>, vector<128x512xbf16>
    %cst_188 = arith.constant dense<0.000000e+00> : vector<16x512xf32>
    %658 = tpu.matmul %656, %657, %cst_188 {dimension_numbers = #tpu.dot_dimension_numbers<[1], [0], [0], [1], [0, 0, 1, 1], [], []>} : vector<16x128xbf16>, vector<128x512xbf16>, vector<16x512xf32> -> vector<16x512xf32>
    %659 = arith.addf %655, %658 : vector<16x512xf32>
    %660 = vector.extract_strided_slice %659 {offsets = [0, 0], sizes = [16, 128], strides = [1, 1]} : vector<16x512xf32> to vector<16x128xf32>
    %661 = arith.negf %660 : vector<16x128xf32>
    %662 = math.exp %661 : vector<16x128xf32>
    %cst_189 = arith.constant 1.000000e+00 : f32
    %663 = vector.broadcast %cst_189 : f32 to vector<16x128xf32>
    %664 = arith.addf %663, %662 : vector<16x128xf32>
    %665 = arith.divf %663, %664 : vector<16x128xf32>
    %666 = vector.extract_strided_slice %659 {offsets = [0, 128], sizes = [16, 128], strides = [1, 1]} : vector<16x512xf32> to vector<16x128xf32>
    %667 = arith.negf %666 : vector<16x128xf32>
    %668 = math.exp %667 : vector<16x128xf32>
    %cst_190 = arith.constant 1.000000e+00 : f32
    %669 = vector.broadcast %cst_190 : f32 to vector<16x128xf32>
    %670 = arith.addf %669, %668 : vector<16x128xf32>
    %671 = arith.divf %669, %670 : vector<16x128xf32>
    %672 = vector.extract_strided_slice %659 {offsets = [0, 256], sizes = [16, 128], strides = [1, 1]} : vector<16x512xf32> to vector<16x128xf32>
    %673 = arith.negf %672 : vector<16x128xf32>
    %674 = math.exp %673 : vector<16x128xf32>
    %cst_191 = arith.constant 1.000000e+00 : f32
    %675 = vector.broadcast %cst_191 : f32 to vector<16x128xf32>
    %676 = arith.addf %675, %674 : vector<16x128xf32>
    %677 = arith.divf %675, %676 : vector<16x128xf32>
    %678 = vector.extract_strided_slice %659 {offsets = [0, 384], sizes = [16, 128], strides = [1, 1]} : vector<16x512xf32> to vector<16x128xf32>
    %679 = math.tanh %678 : vector<16x128xf32>
    %680 = arith.mulf %665, %646 : vector<16x128xf32>
    %681 = arith.mulf %671, %679 : vector<16x128xf32>
    %682 = arith.addf %680, %681 : vector<16x128xf32>
    %683 = math.tanh %682 : vector<16x128xf32>
    %684 = arith.mulf %677, %683 : vector<16x128xf32>
    %685 = arith.index_cast %c18_i32 : i32 to index
    %c0_192 = arith.constant 0 : index
    %c0_193 = arith.constant 0 : index
    %686 = vector.load %arg4[%685, %c0_192, %c0_193] : memref<28x16x128xf32, #tpu.memory_space<vmem>>, vector<1x16x128xf32>
    %687 = vector.shape_cast %686 : vector<1x16x128xf32> to vector<16x128xf32>
    %688 = vector.shape_cast %684 : vector<16x128xf32> to vector<1x16x128xf32>
    tpu.vector_store %arg4[%685, %c0_192, %c0_193], %688 {strides = array<i32>} : memref<28x16x128xf32, #tpu.memory_space<vmem>>, vector<1x16x128xf32>,
    %c19_i32 = arith.constant 19 : i32
    %689 = arith.index_cast %c19_i32 : i32 to index
    %c0_194 = arith.constant 0 : index
    %c0_195 = arith.constant 0 : index
    %690 = vector.load %arg2[%689, %c0_194, %c0_195] : memref<28x16x512xf32, #tpu.memory_space<vmem>>, vector<1x16x512xf32>
    %691 = vector.shape_cast %690 : vector<1x16x512xf32> to vector<16x512xf32>
    %692 = arith.truncf %684 : vector<16x128xf32> to vector<16x128xbf16>
    %c0_196 = arith.constant 0 : index
    %c0_197 = arith.constant 0 : index
    %693 = vector.load %arg3[%c0_196, %c0_197] : memref<128x512xbf16, #tpu.memory_space<vmem>>, vector<128x512xbf16>
    %cst_198 = arith.constant dense<0.000000e+00> : vector<16x512xf32>
    %694 = tpu.matmul %692, %693, %cst_198 {dimension_numbers = #tpu.dot_dimension_numbers<[1], [0], [0], [1], [0, 0, 1, 1], [], []>} : vector<16x128xbf16>, vector<128x512xbf16>, vector<16x512xf32> -> vector<16x512xf32>
    %695 = arith.addf %691, %694 : vector<16x512xf32>
    %696 = vector.extract_strided_slice %695 {offsets = [0, 0], sizes = [16, 128], strides = [1, 1]} : vector<16x512xf32> to vector<16x128xf32>
    %697 = arith.negf %696 : vector<16x128xf32>
    %698 = math.exp %697 : vector<16x128xf32>
    %cst_199 = arith.constant 1.000000e+00 : f32
    %699 = vector.broadcast %cst_199 : f32 to vector<16x128xf32>
    %700 = arith.addf %699, %698 : vector<16x128xf32>
    %701 = arith.divf %699, %700 : vector<16x128xf32>
    %702 = vector.extract_strided_slice %695 {offsets = [0, 128], sizes = [16, 128], strides = [1, 1]} : vector<16x512xf32> to vector<16x128xf32>
    %703 = arith.negf %702 : vector<16x128xf32>
    %704 = math.exp %703 : vector<16x128xf32>
    %cst_200 = arith.constant 1.000000e+00 : f32
    %705 = vector.broadcast %cst_200 : f32 to vector<16x128xf32>
    %706 = arith.addf %705, %704 : vector<16x128xf32>
    %707 = arith.divf %705, %706 : vector<16x128xf32>
    %708 = vector.extract_strided_slice %695 {offsets = [0, 256], sizes = [16, 128], strides = [1, 1]} : vector<16x512xf32> to vector<16x128xf32>
    %709 = arith.negf %708 : vector<16x128xf32>
    %710 = math.exp %709 : vector<16x128xf32>
    %cst_201 = arith.constant 1.000000e+00 : f32
    %711 = vector.broadcast %cst_201 : f32 to vector<16x128xf32>
    %712 = arith.addf %711, %710 : vector<16x128xf32>
    %713 = arith.divf %711, %712 : vector<16x128xf32>
    %714 = vector.extract_strided_slice %695 {offsets = [0, 384], sizes = [16, 128], strides = [1, 1]} : vector<16x512xf32> to vector<16x128xf32>
    %715 = math.tanh %714 : vector<16x128xf32>
    %716 = arith.mulf %701, %682 : vector<16x128xf32>
    %717 = arith.mulf %707, %715 : vector<16x128xf32>
    %718 = arith.addf %716, %717 : vector<16x128xf32>
    %719 = math.tanh %718 : vector<16x128xf32>
    %720 = arith.mulf %713, %719 : vector<16x128xf32>
    %721 = arith.index_cast %c19_i32 : i32 to index
    %c0_202 = arith.constant 0 : index
    %c0_203 = arith.constant 0 : index
    %722 = vector.load %arg4[%721, %c0_202, %c0_203] : memref<28x16x128xf32, #tpu.memory_space<vmem>>, vector<1x16x128xf32>
    %723 = vector.shape_cast %722 : vector<1x16x128xf32> to vector<16x128xf32>
    %724 = vector.shape_cast %720 : vector<16x128xf32> to vector<1x16x128xf32>
    tpu.vector_store %arg4[%721, %c0_202, %c0_203], %724 {strides = array<i32>} : memref<28x16x128xf32, #tpu.memory_space<vmem>>, vector<1x16x128xf32>,
    %c20_i32 = arith.constant 20 : i32
    %725 = arith.index_cast %c20_i32 : i32 to index
    %c0_204 = arith.constant 0 : index
    %c0_205 = arith.constant 0 : index
    %726 = vector.load %arg2[%725, %c0_204, %c0_205] : memref<28x16x512xf32, #tpu.memory_space<vmem>>, vector<1x16x512xf32>
    %727 = vector.shape_cast %726 : vector<1x16x512xf32> to vector<16x512xf32>
    %728 = arith.truncf %720 : vector<16x128xf32> to vector<16x128xbf16>
    %c0_206 = arith.constant 0 : index
    %c0_207 = arith.constant 0 : index
    %729 = vector.load %arg3[%c0_206, %c0_207] : memref<128x512xbf16, #tpu.memory_space<vmem>>, vector<128x512xbf16>
    %cst_208 = arith.constant dense<0.000000e+00> : vector<16x512xf32>
    %730 = tpu.matmul %728, %729, %cst_208 {dimension_numbers = #tpu.dot_dimension_numbers<[1], [0], [0], [1], [0, 0, 1, 1], [], []>} : vector<16x128xbf16>, vector<128x512xbf16>, vector<16x512xf32> -> vector<16x512xf32>
    %731 = arith.addf %727, %730 : vector<16x512xf32>
    %732 = vector.extract_strided_slice %731 {offsets = [0, 0], sizes = [16, 128], strides = [1, 1]} : vector<16x512xf32> to vector<16x128xf32>
    %733 = arith.negf %732 : vector<16x128xf32>
    %734 = math.exp %733 : vector<16x128xf32>
    %cst_209 = arith.constant 1.000000e+00 : f32
    %735 = vector.broadcast %cst_209 : f32 to vector<16x128xf32>
    %736 = arith.addf %735, %734 : vector<16x128xf32>
    %737 = arith.divf %735, %736 : vector<16x128xf32>
    %738 = vector.extract_strided_slice %731 {offsets = [0, 128], sizes = [16, 128], strides = [1, 1]} : vector<16x512xf32> to vector<16x128xf32>
    %739 = arith.negf %738 : vector<16x128xf32>
    %740 = math.exp %739 : vector<16x128xf32>
    %cst_210 = arith.constant 1.000000e+00 : f32
    %741 = vector.broadcast %cst_210 : f32 to vector<16x128xf32>
    %742 = arith.addf %741, %740 : vector<16x128xf32>
    %743 = arith.divf %741, %742 : vector<16x128xf32>
    %744 = vector.extract_strided_slice %731 {offsets = [0, 256], sizes = [16, 128], strides = [1, 1]} : vector<16x512xf32> to vector<16x128xf32>
    %745 = arith.negf %744 : vector<16x128xf32>
    %746 = math.exp %745 : vector<16x128xf32>
    %cst_211 = arith.constant 1.000000e+00 : f32
    %747 = vector.broadcast %cst_211 : f32 to vector<16x128xf32>
    %748 = arith.addf %747, %746 : vector<16x128xf32>
    %749 = arith.divf %747, %748 : vector<16x128xf32>
    %750 = vector.extract_strided_slice %731 {offsets = [0, 384], sizes = [16, 128], strides = [1, 1]} : vector<16x512xf32> to vector<16x128xf32>
    %751 = math.tanh %750 : vector<16x128xf32>
    %752 = arith.mulf %737, %718 : vector<16x128xf32>
    %753 = arith.mulf %743, %751 : vector<16x128xf32>
    %754 = arith.addf %752, %753 : vector<16x128xf32>
    %755 = math.tanh %754 : vector<16x128xf32>
    %756 = arith.mulf %749, %755 : vector<16x128xf32>
    %757 = arith.index_cast %c20_i32 : i32 to index
    %c0_212 = arith.constant 0 : index
    %c0_213 = arith.constant 0 : index
    %758 = vector.load %arg4[%757, %c0_212, %c0_213] : memref<28x16x128xf32, #tpu.memory_space<vmem>>, vector<1x16x128xf32>
    %759 = vector.shape_cast %758 : vector<1x16x128xf32> to vector<16x128xf32>
    %760 = vector.shape_cast %756 : vector<16x128xf32> to vector<1x16x128xf32>
    tpu.vector_store %arg4[%757, %c0_212, %c0_213], %760 {strides = array<i32>} : memref<28x16x128xf32, #tpu.memory_space<vmem>>, vector<1x16x128xf32>,
    %c21_i32 = arith.constant 21 : i32
    %761 = arith.index_cast %c21_i32 : i32 to index
    %c0_214 = arith.constant 0 : index
    %c0_215 = arith.constant 0 : index
    %762 = vector.load %arg2[%761, %c0_214, %c0_215] : memref<28x16x512xf32, #tpu.memory_space<vmem>>, vector<1x16x512xf32>
    %763 = vector.shape_cast %762 : vector<1x16x512xf32> to vector<16x512xf32>
    %764 = arith.truncf %756 : vector<16x128xf32> to vector<16x128xbf16>
    %c0_216 = arith.constant 0 : index
    %c0_217 = arith.constant 0 : index
    %765 = vector.load %arg3[%c0_216, %c0_217] : memref<128x512xbf16, #tpu.memory_space<vmem>>, vector<128x512xbf16>
    %cst_218 = arith.constant dense<0.000000e+00> : vector<16x512xf32>
    %766 = tpu.matmul %764, %765, %cst_218 {dimension_numbers = #tpu.dot_dimension_numbers<[1], [0], [0], [1], [0, 0, 1, 1], [], []>} : vector<16x128xbf16>, vector<128x512xbf16>, vector<16x512xf32> -> vector<16x512xf32>
    %767 = arith.addf %763, %766 : vector<16x512xf32>
    %768 = vector.extract_strided_slice %767 {offsets = [0, 0], sizes = [16, 128], strides = [1, 1]} : vector<16x512xf32> to vector<16x128xf32>
    %769 = arith.negf %768 : vector<16x128xf32>
    %770 = math.exp %769 : vector<16x128xf32>
    %cst_219 = arith.constant 1.000000e+00 : f32
    %771 = vector.broadcast %cst_219 : f32 to vector<16x128xf32>
    %772 = arith.addf %771, %770 : vector<16x128xf32>
    %773 = arith.divf %771, %772 : vector<16x128xf32>
    %774 = vector.extract_strided_slice %767 {offsets = [0, 128], sizes = [16, 128], strides = [1, 1]} : vector<16x512xf32> to vector<16x128xf32>
    %775 = arith.negf %774 : vector<16x128xf32>
    %776 = math.exp %775 : vector<16x128xf32>
    %cst_220 = arith.constant 1.000000e+00 : f32
    %777 = vector.broadcast %cst_220 : f32 to vector<16x128xf32>
    %778 = arith.addf %777, %776 : vector<16x128xf32>
    %779 = arith.divf %777, %778 : vector<16x128xf32>
    %780 = vector.extract_strided_slice %767 {offsets = [0, 256], sizes = [16, 128], strides = [1, 1]} : vector<16x512xf32> to vector<16x128xf32>
    %781 = arith.negf %780 : vector<16x128xf32>
    %782 = math.exp %781 : vector<16x128xf32>
    %cst_221 = arith.constant 1.000000e+00 : f32
    %783 = vector.broadcast %cst_221 : f32 to vector<16x128xf32>
    %784 = arith.addf %783, %782 : vector<16x128xf32>
    %785 = arith.divf %783, %784 : vector<16x128xf32>
    %786 = vector.extract_strided_slice %767 {offsets = [0, 384], sizes = [16, 128], strides = [1, 1]} : vector<16x512xf32> to vector<16x128xf32>
    %787 = math.tanh %786 : vector<16x128xf32>
    %788 = arith.mulf %773, %754 : vector<16x128xf32>
    %789 = arith.mulf %779, %787 : vector<16x128xf32>
    %790 = arith.addf %788, %789 : vector<16x128xf32>
    %791 = math.tanh %790 : vector<16x128xf32>
    %792 = arith.mulf %785, %791 : vector<16x128xf32>
    %793 = arith.index_cast %c21_i32 : i32 to index
    %c0_222 = arith.constant 0 : index
    %c0_223 = arith.constant 0 : index
    %794 = vector.load %arg4[%793, %c0_222, %c0_223] : memref<28x16x128xf32, #tpu.memory_space<vmem>>, vector<1x16x128xf32>
    %795 = vector.shape_cast %794 : vector<1x16x128xf32> to vector<16x128xf32>
    %796 = vector.shape_cast %792 : vector<16x128xf32> to vector<1x16x128xf32>
    tpu.vector_store %arg4[%793, %c0_222, %c0_223], %796 {strides = array<i32>} : memref<28x16x128xf32, #tpu.memory_space<vmem>>, vector<1x16x128xf32>,
    %c22_i32 = arith.constant 22 : i32
    %797 = arith.index_cast %c22_i32 : i32 to index
    %c0_224 = arith.constant 0 : index
    %c0_225 = arith.constant 0 : index
    %798 = vector.load %arg2[%797, %c0_224, %c0_225] : memref<28x16x512xf32, #tpu.memory_space<vmem>>, vector<1x16x512xf32>
    %799 = vector.shape_cast %798 : vector<1x16x512xf32> to vector<16x512xf32>
    %800 = arith.truncf %792 : vector<16x128xf32> to vector<16x128xbf16>
    %c0_226 = arith.constant 0 : index
    %c0_227 = arith.constant 0 : index
    %801 = vector.load %arg3[%c0_226, %c0_227] : memref<128x512xbf16, #tpu.memory_space<vmem>>, vector<128x512xbf16>
    %cst_228 = arith.constant dense<0.000000e+00> : vector<16x512xf32>
    %802 = tpu.matmul %800, %801, %cst_228 {dimension_numbers = #tpu.dot_dimension_numbers<[1], [0], [0], [1], [0, 0, 1, 1], [], []>} : vector<16x128xbf16>, vector<128x512xbf16>, vector<16x512xf32> -> vector<16x512xf32>
    %803 = arith.addf %799, %802 : vector<16x512xf32>
    %804 = vector.extract_strided_slice %803 {offsets = [0, 0], sizes = [16, 128], strides = [1, 1]} : vector<16x512xf32> to vector<16x128xf32>
    %805 = arith.negf %804 : vector<16x128xf32>
    %806 = math.exp %805 : vector<16x128xf32>
    %cst_229 = arith.constant 1.000000e+00 : f32
    %807 = vector.broadcast %cst_229 : f32 to vector<16x128xf32>
    %808 = arith.addf %807, %806 : vector<16x128xf32>
    %809 = arith.divf %807, %808 : vector<16x128xf32>
    %810 = vector.extract_strided_slice %803 {offsets = [0, 128], sizes = [16, 128], strides = [1, 1]} : vector<16x512xf32> to vector<16x128xf32>
    %811 = arith.negf %810 : vector<16x128xf32>
    %812 = math.exp %811 : vector<16x128xf32>
    %cst_230 = arith.constant 1.000000e+00 : f32
    %813 = vector.broadcast %cst_230 : f32 to vector<16x128xf32>
    %814 = arith.addf %813, %812 : vector<16x128xf32>
    %815 = arith.divf %813, %814 : vector<16x128xf32>
    %816 = vector.extract_strided_slice %803 {offsets = [0, 256], sizes = [16, 128], strides = [1, 1]} : vector<16x512xf32> to vector<16x128xf32>
    %817 = arith.negf %816 : vector<16x128xf32>
    %818 = math.exp %817 : vector<16x128xf32>
    %cst_231 = arith.constant 1.000000e+00 : f32
    %819 = vector.broadcast %cst_231 : f32 to vector<16x128xf32>
    %820 = arith.addf %819, %818 : vector<16x128xf32>
    %821 = arith.divf %819, %820 : vector<16x128xf32>
    %822 = vector.extract_strided_slice %803 {offsets = [0, 384], sizes = [16, 128], strides = [1, 1]} : vector<16x512xf32> to vector<16x128xf32>
    %823 = math.tanh %822 : vector<16x128xf32>
    %824 = arith.mulf %809, %790 : vector<16x128xf32>
    %825 = arith.mulf %815, %823 : vector<16x128xf32>
    %826 = arith.addf %824, %825 : vector<16x128xf32>
    %827 = math.tanh %826 : vector<16x128xf32>
    %828 = arith.mulf %821, %827 : vector<16x128xf32>
    %829 = arith.index_cast %c22_i32 : i32 to index
    %c0_232 = arith.constant 0 : index
    %c0_233 = arith.constant 0 : index
    %830 = vector.load %arg4[%829, %c0_232, %c0_233] : memref<28x16x128xf32, #tpu.memory_space<vmem>>, vector<1x16x128xf32>
    %831 = vector.shape_cast %830 : vector<1x16x128xf32> to vector<16x128xf32>
    %832 = vector.shape_cast %828 : vector<16x128xf32> to vector<1x16x128xf32>
    tpu.vector_store %arg4[%829, %c0_232, %c0_233], %832 {strides = array<i32>} : memref<28x16x128xf32, #tpu.memory_space<vmem>>, vector<1x16x128xf32>,
    %c23_i32 = arith.constant 23 : i32
    %833 = arith.index_cast %c23_i32 : i32 to index
    %c0_234 = arith.constant 0 : index
    %c0_235 = arith.constant 0 : index
    %834 = vector.load %arg2[%833, %c0_234, %c0_235] : memref<28x16x512xf32, #tpu.memory_space<vmem>>, vector<1x16x512xf32>
    %835 = vector.shape_cast %834 : vector<1x16x512xf32> to vector<16x512xf32>
    %836 = arith.truncf %828 : vector<16x128xf32> to vector<16x128xbf16>
    %c0_236 = arith.constant 0 : index
    %c0_237 = arith.constant 0 : index
    %837 = vector.load %arg3[%c0_236, %c0_237] : memref<128x512xbf16, #tpu.memory_space<vmem>>, vector<128x512xbf16>
    %cst_238 = arith.constant dense<0.000000e+00> : vector<16x512xf32>
    %838 = tpu.matmul %836, %837, %cst_238 {dimension_numbers = #tpu.dot_dimension_numbers<[1], [0], [0], [1], [0, 0, 1, 1], [], []>} : vector<16x128xbf16>, vector<128x512xbf16>, vector<16x512xf32> -> vector<16x512xf32>
    %839 = arith.addf %835, %838 : vector<16x512xf32>
    %840 = vector.extract_strided_slice %839 {offsets = [0, 0], sizes = [16, 128], strides = [1, 1]} : vector<16x512xf32> to vector<16x128xf32>
    %841 = arith.negf %840 : vector<16x128xf32>
    %842 = math.exp %841 : vector<16x128xf32>
    %cst_239 = arith.constant 1.000000e+00 : f32
    %843 = vector.broadcast %cst_239 : f32 to vector<16x128xf32>
    %844 = arith.addf %843, %842 : vector<16x128xf32>
    %845 = arith.divf %843, %844 : vector<16x128xf32>
    %846 = vector.extract_strided_slice %839 {offsets = [0, 128], sizes = [16, 128], strides = [1, 1]} : vector<16x512xf32> to vector<16x128xf32>
    %847 = arith.negf %846 : vector<16x128xf32>
    %848 = math.exp %847 : vector<16x128xf32>
    %cst_240 = arith.constant 1.000000e+00 : f32
    %849 = vector.broadcast %cst_240 : f32 to vector<16x128xf32>
    %850 = arith.addf %849, %848 : vector<16x128xf32>
    %851 = arith.divf %849, %850 : vector<16x128xf32>
    %852 = vector.extract_strided_slice %839 {offsets = [0, 256], sizes = [16, 128], strides = [1, 1]} : vector<16x512xf32> to vector<16x128xf32>
    %853 = arith.negf %852 : vector<16x128xf32>
    %854 = math.exp %853 : vector<16x128xf32>
    %cst_241 = arith.constant 1.000000e+00 : f32
    %855 = vector.broadcast %cst_241 : f32 to vector<16x128xf32>
    %856 = arith.addf %855, %854 : vector<16x128xf32>
    %857 = arith.divf %855, %856 : vector<16x128xf32>
    %858 = vector.extract_strided_slice %839 {offsets = [0, 384], sizes = [16, 128], strides = [1, 1]} : vector<16x512xf32> to vector<16x128xf32>
    %859 = math.tanh %858 : vector<16x128xf32>
    %860 = arith.mulf %845, %826 : vector<16x128xf32>
    %861 = arith.mulf %851, %859 : vector<16x128xf32>
    %862 = arith.addf %860, %861 : vector<16x128xf32>
    %863 = math.tanh %862 : vector<16x128xf32>
    %864 = arith.mulf %857, %863 : vector<16x128xf32>
    %865 = arith.index_cast %c23_i32 : i32 to index
    %c0_242 = arith.constant 0 : index
    %c0_243 = arith.constant 0 : index
    %866 = vector.load %arg4[%865, %c0_242, %c0_243] : memref<28x16x128xf32, #tpu.memory_space<vmem>>, vector<1x16x128xf32>
    %867 = vector.shape_cast %866 : vector<1x16x128xf32> to vector<16x128xf32>
    %868 = vector.shape_cast %864 : vector<16x128xf32> to vector<1x16x128xf32>
    tpu.vector_store %arg4[%865, %c0_242, %c0_243], %868 {strides = array<i32>} : memref<28x16x128xf32, #tpu.memory_space<vmem>>, vector<1x16x128xf32>,
    %c24_i32 = arith.constant 24 : i32
    %869 = arith.index_cast %c24_i32 : i32 to index
    %c0_244 = arith.constant 0 : index
    %c0_245 = arith.constant 0 : index
    %870 = vector.load %arg2[%869, %c0_244, %c0_245] : memref<28x16x512xf32, #tpu.memory_space<vmem>>, vector<1x16x512xf32>
    %871 = vector.shape_cast %870 : vector<1x16x512xf32> to vector<16x512xf32>
    %872 = arith.truncf %864 : vector<16x128xf32> to vector<16x128xbf16>
    %c0_246 = arith.constant 0 : index
    %c0_247 = arith.constant 0 : index
    %873 = vector.load %arg3[%c0_246, %c0_247] : memref<128x512xbf16, #tpu.memory_space<vmem>>, vector<128x512xbf16>
    %cst_248 = arith.constant dense<0.000000e+00> : vector<16x512xf32>
    %874 = tpu.matmul %872, %873, %cst_248 {dimension_numbers = #tpu.dot_dimension_numbers<[1], [0], [0], [1], [0, 0, 1, 1], [], []>} : vector<16x128xbf16>, vector<128x512xbf16>, vector<16x512xf32> -> vector<16x512xf32>
    %875 = arith.addf %871, %874 : vector<16x512xf32>
    %876 = vector.extract_strided_slice %875 {offsets = [0, 0], sizes = [16, 128], strides = [1, 1]} : vector<16x512xf32> to vector<16x128xf32>
    %877 = arith.negf %876 : vector<16x128xf32>
    %878 = math.exp %877 : vector<16x128xf32>
    %cst_249 = arith.constant 1.000000e+00 : f32
    %879 = vector.broadcast %cst_249 : f32 to vector<16x128xf32>
    %880 = arith.addf %879, %878 : vector<16x128xf32>
    %881 = arith.divf %879, %880 : vector<16x128xf32>
    %882 = vector.extract_strided_slice %875 {offsets = [0, 128], sizes = [16, 128], strides = [1, 1]} : vector<16x512xf32> to vector<16x128xf32>
    %883 = arith.negf %882 : vector<16x128xf32>
    %884 = math.exp %883 : vector<16x128xf32>
    %cst_250 = arith.constant 1.000000e+00 : f32
    %885 = vector.broadcast %cst_250 : f32 to vector<16x128xf32>
    %886 = arith.addf %885, %884 : vector<16x128xf32>
    %887 = arith.divf %885, %886 : vector<16x128xf32>
    %888 = vector.extract_strided_slice %875 {offsets = [0, 256], sizes = [16, 128], strides = [1, 1]} : vector<16x512xf32> to vector<16x128xf32>
    %889 = arith.negf %888 : vector<16x128xf32>
    %890 = math.exp %889 : vector<16x128xf32>
    %cst_251 = arith.constant 1.000000e+00 : f32
    %891 = vector.broadcast %cst_251 : f32 to vector<16x128xf32>
    %892 = arith.addf %891, %890 : vector<16x128xf32>
    %893 = arith.divf %891, %892 : vector<16x128xf32>
    %894 = vector.extract_strided_slice %875 {offsets = [0, 384], sizes = [16, 128], strides = [1, 1]} : vector<16x512xf32> to vector<16x128xf32>
    %895 = math.tanh %894 : vector<16x128xf32>
    %896 = arith.mulf %881, %862 : vector<16x128xf32>
    %897 = arith.mulf %887, %895 : vector<16x128xf32>
    %898 = arith.addf %896, %897 : vector<16x128xf32>
    %899 = math.tanh %898 : vector<16x128xf32>
    %900 = arith.mulf %893, %899 : vector<16x128xf32>
    %901 = arith.index_cast %c24_i32 : i32 to index
    %c0_252 = arith.constant 0 : index
    %c0_253 = arith.constant 0 : index
    %902 = vector.load %arg4[%901, %c0_252, %c0_253] : memref<28x16x128xf32, #tpu.memory_space<vmem>>, vector<1x16x128xf32>
    %903 = vector.shape_cast %902 : vector<1x16x128xf32> to vector<16x128xf32>
    %904 = vector.shape_cast %900 : vector<16x128xf32> to vector<1x16x128xf32>
    tpu.vector_store %arg4[%901, %c0_252, %c0_253], %904 {strides = array<i32>} : memref<28x16x128xf32, #tpu.memory_space<vmem>>, vector<1x16x128xf32>,
    %c25_i32 = arith.constant 25 : i32
    %905 = arith.index_cast %c25_i32 : i32 to index
    %c0_254 = arith.constant 0 : index
    %c0_255 = arith.constant 0 : index
    %906 = vector.load %arg2[%905, %c0_254, %c0_255] : memref<28x16x512xf32, #tpu.memory_space<vmem>>, vector<1x16x512xf32>
    %907 = vector.shape_cast %906 : vector<1x16x512xf32> to vector<16x512xf32>
    %908 = arith.truncf %900 : vector<16x128xf32> to vector<16x128xbf16>
    %c0_256 = arith.constant 0 : index
    %c0_257 = arith.constant 0 : index
    %909 = vector.load %arg3[%c0_256, %c0_257] : memref<128x512xbf16, #tpu.memory_space<vmem>>, vector<128x512xbf16>
    %cst_258 = arith.constant dense<0.000000e+00> : vector<16x512xf32>
    %910 = tpu.matmul %908, %909, %cst_258 {dimension_numbers = #tpu.dot_dimension_numbers<[1], [0], [0], [1], [0, 0, 1, 1], [], []>} : vector<16x128xbf16>, vector<128x512xbf16>, vector<16x512xf32> -> vector<16x512xf32>
    %911 = arith.addf %907, %910 : vector<16x512xf32>
    %912 = vector.extract_strided_slice %911 {offsets = [0, 0], sizes = [16, 128], strides = [1, 1]} : vector<16x512xf32> to vector<16x128xf32>
    %913 = arith.negf %912 : vector<16x128xf32>
    %914 = math.exp %913 : vector<16x128xf32>
    %cst_259 = arith.constant 1.000000e+00 : f32
    %915 = vector.broadcast %cst_259 : f32 to vector<16x128xf32>
    %916 = arith.addf %915, %914 : vector<16x128xf32>
    %917 = arith.divf %915, %916 : vector<16x128xf32>
    %918 = vector.extract_strided_slice %911 {offsets = [0, 128], sizes = [16, 128], strides = [1, 1]} : vector<16x512xf32> to vector<16x128xf32>
    %919 = arith.negf %918 : vector<16x128xf32>
    %920 = math.exp %919 : vector<16x128xf32>
    %cst_260 = arith.constant 1.000000e+00 : f32
    %921 = vector.broadcast %cst_260 : f32 to vector<16x128xf32>
    %922 = arith.addf %921, %920 : vector<16x128xf32>
    %923 = arith.divf %921, %922 : vector<16x128xf32>
    %924 = vector.extract_strided_slice %911 {offsets = [0, 256], sizes = [16, 128], strides = [1, 1]} : vector<16x512xf32> to vector<16x128xf32>
    %925 = arith.negf %924 : vector<16x128xf32>
    %926 = math.exp %925 : vector<16x128xf32>
    %cst_261 = arith.constant 1.000000e+00 : f32
    %927 = vector.broadcast %cst_261 : f32 to vector<16x128xf32>
    %928 = arith.addf %927, %926 : vector<16x128xf32>
    %929 = arith.divf %927, %928 : vector<16x128xf32>
    %930 = vector.extract_strided_slice %911 {offsets = [0, 384], sizes = [16, 128], strides = [1, 1]} : vector<16x512xf32> to vector<16x128xf32>
    %931 = math.tanh %930 : vector<16x128xf32>
    %932 = arith.mulf %917, %898 : vector<16x128xf32>
    %933 = arith.mulf %923, %931 : vector<16x128xf32>
    %934 = arith.addf %932, %933 : vector<16x128xf32>
    %935 = math.tanh %934 : vector<16x128xf32>
    %936 = arith.mulf %929, %935 : vector<16x128xf32>
    %937 = arith.index_cast %c25_i32 : i32 to index
    %c0_262 = arith.constant 0 : index
    %c0_263 = arith.constant 0 : index
    %938 = vector.load %arg4[%937, %c0_262, %c0_263] : memref<28x16x128xf32, #tpu.memory_space<vmem>>, vector<1x16x128xf32>
    %939 = vector.shape_cast %938 : vector<1x16x128xf32> to vector<16x128xf32>
    %940 = vector.shape_cast %936 : vector<16x128xf32> to vector<1x16x128xf32>
    tpu.vector_store %arg4[%937, %c0_262, %c0_263], %940 {strides = array<i32>} : memref<28x16x128xf32, #tpu.memory_space<vmem>>, vector<1x16x128xf32>,
    %c26_i32 = arith.constant 26 : i32
    %941 = arith.index_cast %c26_i32 : i32 to index
    %c0_264 = arith.constant 0 : index
    %c0_265 = arith.constant 0 : index
    %942 = vector.load %arg2[%941, %c0_264, %c0_265] : memref<28x16x512xf32, #tpu.memory_space<vmem>>, vector<1x16x512xf32>
    %943 = vector.shape_cast %942 : vector<1x16x512xf32> to vector<16x512xf32>
    %944 = arith.truncf %936 : vector<16x128xf32> to vector<16x128xbf16>
    %c0_266 = arith.constant 0 : index
    %c0_267 = arith.constant 0 : index
    %945 = vector.load %arg3[%c0_266, %c0_267] : memref<128x512xbf16, #tpu.memory_space<vmem>>, vector<128x512xbf16>
    %cst_268 = arith.constant dense<0.000000e+00> : vector<16x512xf32>
    %946 = tpu.matmul %944, %945, %cst_268 {dimension_numbers = #tpu.dot_dimension_numbers<[1], [0], [0], [1], [0, 0, 1, 1], [], []>} : vector<16x128xbf16>, vector<128x512xbf16>, vector<16x512xf32> -> vector<16x512xf32>
    %947 = arith.addf %943, %946 : vector<16x512xf32>
    %948 = vector.extract_strided_slice %947 {offsets = [0, 0], sizes = [16, 128], strides = [1, 1]} : vector<16x512xf32> to vector<16x128xf32>
    %949 = arith.negf %948 : vector<16x128xf32>
    %950 = math.exp %949 : vector<16x128xf32>
    %cst_269 = arith.constant 1.000000e+00 : f32
    %951 = vector.broadcast %cst_269 : f32 to vector<16x128xf32>
    %952 = arith.addf %951, %950 : vector<16x128xf32>
    %953 = arith.divf %951, %952 : vector<16x128xf32>
    %954 = vector.extract_strided_slice %947 {offsets = [0, 128], sizes = [16, 128], strides = [1, 1]} : vector<16x512xf32> to vector<16x128xf32>
    %955 = arith.negf %954 : vector<16x128xf32>
    %956 = math.exp %955 : vector<16x128xf32>
    %cst_270 = arith.constant 1.000000e+00 : f32
    %957 = vector.broadcast %cst_270 : f32 to vector<16x128xf32>
    %958 = arith.addf %957, %956 : vector<16x128xf32>
    %959 = arith.divf %957, %958 : vector<16x128xf32>
    %960 = vector.extract_strided_slice %947 {offsets = [0, 256], sizes = [16, 128], strides = [1, 1]} : vector<16x512xf32> to vector<16x128xf32>
    %961 = arith.negf %960 : vector<16x128xf32>
    %962 = math.exp %961 : vector<16x128xf32>
    %cst_271 = arith.constant 1.000000e+00 : f32
    %963 = vector.broadcast %cst_271 : f32 to vector<16x128xf32>
    %964 = arith.addf %963, %962 : vector<16x128xf32>
    %965 = arith.divf %963, %964 : vector<16x128xf32>
    %966 = vector.extract_strided_slice %947 {offsets = [0, 384], sizes = [16, 128], strides = [1, 1]} : vector<16x512xf32> to vector<16x128xf32>
    %967 = math.tanh %966 : vector<16x128xf32>
    %968 = arith.mulf %953, %934 : vector<16x128xf32>
    %969 = arith.mulf %959, %967 : vector<16x128xf32>
    %970 = arith.addf %968, %969 : vector<16x128xf32>
    %971 = math.tanh %970 : vector<16x128xf32>
    %972 = arith.mulf %965, %971 : vector<16x128xf32>
    %973 = arith.index_cast %c26_i32 : i32 to index
    %c0_272 = arith.constant 0 : index
    %c0_273 = arith.constant 0 : index
    %974 = vector.load %arg4[%973, %c0_272, %c0_273] : memref<28x16x128xf32, #tpu.memory_space<vmem>>, vector<1x16x128xf32>
    %975 = vector.shape_cast %974 : vector<1x16x128xf32> to vector<16x128xf32>
    %976 = vector.shape_cast %972 : vector<16x128xf32> to vector<1x16x128xf32>
    tpu.vector_store %arg4[%973, %c0_272, %c0_273], %976 {strides = array<i32>} : memref<28x16x128xf32, #tpu.memory_space<vmem>>, vector<1x16x128xf32>,
    %c27_i32 = arith.constant 27 : i32
    %977 = arith.index_cast %c27_i32 : i32 to index
    %c0_274 = arith.constant 0 : index
    %c0_275 = arith.constant 0 : index
    %978 = vector.load %arg2[%977, %c0_274, %c0_275] : memref<28x16x512xf32, #tpu.memory_space<vmem>>, vector<1x16x512xf32>
    %979 = vector.shape_cast %978 : vector<1x16x512xf32> to vector<16x512xf32>
    %980 = arith.truncf %972 : vector<16x128xf32> to vector<16x128xbf16>
    %c0_276 = arith.constant 0 : index
    %c0_277 = arith.constant 0 : index
    %981 = vector.load %arg3[%c0_276, %c0_277] : memref<128x512xbf16, #tpu.memory_space<vmem>>, vector<128x512xbf16>
    %cst_278 = arith.constant dense<0.000000e+00> : vector<16x512xf32>
    %982 = tpu.matmul %980, %981, %cst_278 {dimension_numbers = #tpu.dot_dimension_numbers<[1], [0], [0], [1], [0, 0, 1, 1], [], []>} : vector<16x128xbf16>, vector<128x512xbf16>, vector<16x512xf32> -> vector<16x512xf32>
    %983 = arith.addf %979, %982 : vector<16x512xf32>
    %984 = vector.extract_strided_slice %983 {offsets = [0, 0], sizes = [16, 128], strides = [1, 1]} : vector<16x512xf32> to vector<16x128xf32>
    %985 = arith.negf %984 : vector<16x128xf32>
    %986 = math.exp %985 : vector<16x128xf32>
    %cst_279 = arith.constant 1.000000e+00 : f32
    %987 = vector.broadcast %cst_279 : f32 to vector<16x128xf32>
    %988 = arith.addf %987, %986 : vector<16x128xf32>
    %989 = arith.divf %987, %988 : vector<16x128xf32>
    %990 = vector.extract_strided_slice %983 {offsets = [0, 128], sizes = [16, 128], strides = [1, 1]} : vector<16x512xf32> to vector<16x128xf32>
    %991 = arith.negf %990 : vector<16x128xf32>
    %992 = math.exp %991 : vector<16x128xf32>
    %cst_280 = arith.constant 1.000000e+00 : f32
    %993 = vector.broadcast %cst_280 : f32 to vector<16x128xf32>
    %994 = arith.addf %993, %992 : vector<16x128xf32>
    %995 = arith.divf %993, %994 : vector<16x128xf32>
    %996 = vector.extract_strided_slice %983 {offsets = [0, 256], sizes = [16, 128], strides = [1, 1]} : vector<16x512xf32> to vector<16x128xf32>
    %997 = arith.negf %996 : vector<16x128xf32>
    %998 = math.exp %997 : vector<16x128xf32>
    %cst_281 = arith.constant 1.000000e+00 : f32
    %999 = vector.broadcast %cst_281 : f32 to vector<16x128xf32>
    %1000 = arith.addf %999, %998 : vector<16x128xf32>
    %1001 = arith.divf %999, %1000 : vector<16x128xf32>
    %1002 = vector.extract_strided_slice %983 {offsets = [0, 384], sizes = [16, 128], strides = [1, 1]} : vector<16x512xf32> to vector<16x128xf32>
    %1003 = math.tanh %1002 : vector<16x128xf32>
    %1004 = arith.mulf %989, %970 : vector<16x128xf32>
    %1005 = arith.mulf %995, %1003 : vector<16x128xf32>
    %1006 = arith.addf %1004, %1005 : vector<16x128xf32>
    %1007 = math.tanh %1006 : vector<16x128xf32>
    %1008 = arith.mulf %1001, %1007 : vector<16x128xf32>
    %1009 = arith.index_cast %c27_i32 : i32 to index
    %c0_282 = arith.constant 0 : index
    %c0_283 = arith.constant 0 : index
    %1010 = vector.load %arg4[%1009, %c0_282, %c0_283] : memref<28x16x128xf32, #tpu.memory_space<vmem>>, vector<1x16x128xf32>
    %1011 = vector.shape_cast %1010 : vector<1x16x128xf32> to vector<16x128xf32>
    %1012 = vector.shape_cast %1008 : vector<16x128xf32> to vector<1x16x128xf32>
    tpu.vector_store %arg4[%1009, %c0_282, %c0_283], %1012 {strides = array<i32>} : memref<28x16x128xf32, #tpu.memory_space<vmem>>, vector<1x16x128xf32>,
    %c28_i32 = arith.constant 28 : i32
    %c0_284 = arith.constant 0 : index
    %c0_285 = arith.constant 0 : index
    %1013 = vector.load %arg7[%c0_284, %c0_285] : memref<16x128xf32, #tpu.memory_space<vmem>>, vector<16x128xf32>
    tpu.vector_store %arg7[%c0_284, %c0_285], %1008 {strides = array<i32>} : memref<16x128xf32, #tpu.memory_space<vmem>>, vector<16x128xf32>,
    %c0_286 = arith.constant 0 : index
    %c0_287 = arith.constant 0 : index
    %1014 = vector.load %arg8[%c0_286, %c0_287] : memref<16x128xf32, #tpu.memory_space<vmem>>, vector<16x128xf32>
    tpu.vector_store %arg8[%c0_286, %c0_287], %1006 {strides = array<i32>} : memref<16x128xf32, #tpu.memory_space<vmem>>, vector<16x128xf32>,
    %c0_i32_288 = arith.constant 0 : i32
    %1015 = arith.cmpi eq, %arg1, %c0_i32_288 : i32
    %1016 = arith.extui %1015 : i1 to i32
    %c0_i32_289 = arith.constant 0 : i32
    %1017 = arith.cmpi ne, %1016, %c0_i32_289 : i32
    scf.if %1017 {
      %c0_290 = arith.constant 0 : index
      %c0_291 = arith.constant 0 : index
      %1018 = vector.load %arg5[%c0_290, %c0_291] : memref<16x128xf32, #tpu.memory_space<vmem>>, vector<16x128xf32>
      tpu.vector_store %arg5[%c0_290, %c0_291], %1008 {strides = array<i32>} : memref<16x128xf32, #tpu.memory_space<vmem>>, vector<16x128xf32>,
      %c0_292 = arith.constant 0 : index
      %c0_293 = arith.constant 0 : index
      %1019 = vector.load %arg6[%c0_292, %c0_293] : memref<16x128xf32, #tpu.memory_space<vmem>>, vector<16x128xf32>
      tpu.vector_store %arg6[%c0_292, %c0_293], %1006 {strides = array<i32>} : memref<16x128xf32, #tpu.memory_space<vmem>>, vector<16x128xf32>,
    } else {
    }
    return
  }
  func.func @transform_0(%arg0: i32, %arg1: i32) -> (i32, i32, i32) {
    %c0_i32 = arith.constant 0 : i32
    %c0_i32_0 = arith.constant 0 : i32
    return %arg1, %arg0, %c0_i32 : i32, i32, i32
  }
  func.func @transform_1(%arg0: i32, %arg1: i32) -> (i32, i32) {
    %c0_i32 = arith.constant 0 : i32
    %c0_i32_0 = arith.constant 0 : i32
    %c0_i32_1 = arith.constant 0 : i32
    return %c0_i32, %c0_i32_0 : i32, i32
  }
  func.func @transform_2(%arg0: i32, %arg1: i32) -> (i32, i32, i32) {
    %c0_i32 = arith.constant 0 : i32
    %c0_i32_0 = arith.constant 0 : i32
    return %arg1, %arg0, %c0_i32 : i32, i32, i32
  }
  func.func @transform_3(%arg0: i32, %arg1: i32) -> (i32, i32) {
    %c0_i32 = arith.constant 0 : i32
    %c0_i32_0 = arith.constant 0 : i32
    return %arg0, %c0_i32 : i32, i32
  }
  func.func @transform_4(%arg0: i32, %arg1: i32) -> (i32, i32) {
    %c0_i32 = arith.constant 0 : i32
    %c0_i32_0 = arith.constant 0 : i32
    return %arg0, %c0_i32 : i32, i32
  }
}

</mosaic_0001>

<llo_original>
// kernel: tpu_custom_call.1
$region0: #{tpu_custom_call.1}
  #allocation0 [shape = 'u32[]', space=smem, size = 0x4, offset = 0x4, fixed_abs, tag = 'smem constant byte address 0x4 - core index']
  #allocation1 [shape = 'u32[144,128]{1,0:T(1,128)}', space=vmem, size = 0x12000, scoped, tag = 'internal scratch']
  #allocation2 [shape = 'f32[16,128]{1,0:T(8,128)}', space=vmem, size = 0x2000, scoped, tag = 'scratch operand']
  #allocation3 [shape = 'f32[16,128]{1,0:T(8,128)}', space=vmem, size = 0x2000, scoped, tag = 'scratch operand']
  %s0 = inlined_call_operand.hbm [shape: f32[28,16,512], index: 0, kind: input, shape index: {}]
  %s1 = inlined_call_operand.hbm [shape: bf16[128,512], index: 1, kind: input, shape index: {}]
  %s2 = inlined_call_operand.hbm [shape: f32[28,16,128], index: 2, kind: output, shape index: {0}]
  %s3 = inlined_call_operand.hbm [shape: f32[16,128], index: 3, kind: output, shape index: {1}]
  %s4 = inlined_call_operand.hbm [shape: f32[16,128], index: 4, kind: output, shape index: {2}]
  %5 = xla_tuple %s2, %s3, %s4
  %s6 = sld [smem:[#allocation0]]
  $region50: #{tpu_custom_call.1} parent=0
    _
  %s8 = ssub.s32 1, %s6
  %s9 = scalar_select 0, %s8, %s6
  $region1: #{tpu_custom_call.1} parent=0
    #allocation4 [shape = 'u8[917504]{0}', space=vmem, size = 0xe0000, scoped, tag = 'input window, operand 0, single buffered']
    #allocation5 [shape = 's32[1]{0}', space=sflag, size = 0x4, scoped, tag = 'scoped memory for tpu_custom_call.1']
    #allocation6 [shape = 's32[1]{0}', space=sflag, size = 0x4, scoped, tag = 'scoped memory for tpu_custom_call.1']
    #allocation7 [shape = 'u8[131072]{0}', space=vmem, size = 0x20000, scoped, tag = 'input window, operand 1, single buffered']
    #allocation8 [shape = 's32[1]{0}', space=sflag, size = 0x4, scoped, tag = 'scoped memory for tpu_custom_call.1']
    #allocation9 [shape = 'u8[229376]{0}', space=vmem, size = 0x38000, scoped, tag = 'output window, operand 0, single buffered']
    #allocation10 [shape = 'u8[8192]{0}', space=vmem, size = 0x2000, scoped, tag = 'output window, operand 1, single buffered']
    #allocation11 [shape = 's32[1]{0}', space=sflag, size = 0x4, scoped, tag = 'scoped memory for tpu_custom_call.1']
    #allocation12 [shape = 'u8[8192]{0}', space=vmem, size = 0x2000, scoped, tag = 'output window, operand 2, single buffered']
    %10 = vsyncpa [#allocation5], 0
    %11 = vsyncpa [#allocation8], 0
    %12 = vsyncpa [#allocation6], 0
    %13 = vsyncpa [#allocation11], 0
    // Predicated region
    $region2: #{tpu_custom_call.1} parent=1 // pred_check
      _
    $region3: #{tpu_custom_call.1} parent=1 // pred_check_branch
      %15 = sbr.rel (0) target = $region5
    $region4: #{tpu_custom_call.1} parent=1 // pred_region
      %s17 = ssub.s32 28672, 28672
      %18 = vsyncadd [#allocation5], %s17
      %s19 = sshll.u32 [#allocation4], 4
      %s20 = int_to_ptr.vmem [resolvable:$true] %s19
      %25 = dma.hbm_to_vmem [thread:$0]  %s0, 28672, %s20, [#allocation5], 512, 512, 32
    $region5: #{tpu_custom_call.1} parent=1 // pred_fallthru
      _
    // Predicated region
    $region6: #{tpu_custom_call.1} parent=1 // pred_check
      _
    $region7: #{tpu_custom_call.1} parent=1 // pred_check_branch
      %27 = sbr.rel (0) target = $region9
    $region8: #{tpu_custom_call.1} parent=1 // pred_region
      %s29 = ssub.s32 4096, 4096
      %30 = vsyncadd [#allocation8], %s29
      %s31 = sshll.u32 [#allocation7], 4
      %s32 = int_to_ptr.vmem [resolvable:$true] %s31
      %37 = dma.hbm_to_vmem [thread:$0]  %s1, 4096, %s32, [#allocation8], 256, 256, 16
    $region9: #{tpu_custom_call.1} parent=1 // pred_fallthru
      _
    // Predicated region
    $region10: #{tpu_custom_call.1} parent=1 // pred_check
      _
    $region11: #{tpu_custom_call.1} parent=1 // pred_check_branch
      %39 = sbr.rel (0) target = $region13
    $region12: #{tpu_custom_call.1} parent=1 // pred_region
      %40 = dma.done [#allocation5], 28672
    $region13: #{tpu_custom_call.1} parent=1 // pred_fallthru
      _
    // Predicated region
    $region14: #{tpu_custom_call.1} parent=1 // pred_check
      _
    $region15: #{tpu_custom_call.1} parent=1 // pred_check_branch
      %42 = sbr.rel (0) target = $region17
    $region16: #{tpu_custom_call.1} parent=1 // pred_region
      %43 = dma.done [#allocation8], 4096
    $region17: #{tpu_custom_call.1} parent=1 // pred_fallthru
      _
    %p45 = scmp.eq.s32.totalorder 0, 0
    // Predicated region
    $region18: #{tpu_custom_call.1} parent=1 // pred_check
      %p46 = pneg %p45
    $region19: #{tpu_custom_call.1} parent=1 // pred_check_branch
      %48 = sbr.rel (%p46) target = $region21
    $region20: #{tpu_custom_call.1} parent=1 // pred_region
      %49 = vst [vmem:[#allocation2] sm:$0xff] 0.0
      %50 = vst [vmem:[#allocation2 + $0x8] sm:$0xff] 0.0
      %51 = vst [vmem:[#allocation3] sm:$0xff] 0.0
      %52 = vst [vmem:[#allocation3 + $0x8] sm:$0xff] 0.0
    $region21: #{tpu_custom_call.1} parent=1 // pred_fallthru
      _
    %v53 = vld [vmem:[#allocation2] sm:$0xff]
    %v54 = vld [vmem:[#allocation2 + $0x8] sm:$0xff]
    %v55 = vld [vmem:[#allocation3] sm:$0xff]
    %v56 = vld [vmem:[#allocation3 + $0x8] sm:$0xff]
    %v57 = vld [vmem:[#allocation4] sm:$0xff]
    %v58 = vld [vmem:[#allocation4 + $0x8] sm:$0xff]
    %v59 = vld [vmem:[#allocation4 + $0x10] sm:$0xff]
    %v60 = vld [vmem:[#allocation4 + $0x18] sm:$0xff]
    %v61 = vld [vmem:[#allocation4 + $0x20] sm:$0xff]
    %v62 = vld [vmem:[#allocation4 + $0x28] sm:$0xff]
    %v63 = vld [vmem:[#allocation4 + $0x30] sm:$0xff]
    %v64 = vld [vmem:[#allocation4 + $0x38] sm:$0xff]
    %v65 = vpack.c.bf16 %v54, %v53
    %v66 = vld [vmem:[#allocation7] sm:$0xff]
    %v67 = vld [vmem:[#allocation7 + $0x8] sm:$0xff]
    %v68 = vld [vmem:[#allocation7 + $0x10] sm:$0xff]
    %v69 = vld [vmem:[#allocation7 + $0x18] sm:$0xff]
    %v70 = vld [vmem:[#allocation7 + $0x20] sm:$0xff]
    %v71 = vld [vmem:[#allocation7 + $0x28] sm:$0xff]
    %v72 = vld [vmem:[#allocation7 + $0x30] sm:$0xff]
    %v73 = vld [vmem:[#allocation7 + $0x38] sm:$0xff]
    %v74 = vld [vmem:[#allocation7 + $0x40] sm:$0xff]
    %v75 = vld [vmem:[#allocation7 + $0x48] sm:$0xff]
    %v76 = vld [vmem:[#allocation7 + $0x50] sm:$0xff]
    %v77 = vld [vmem:[#allocation7 + $0x58] sm:$0xff]
    %v78 = vld [vmem:[#allocation7 + $0x60] sm:$0xff]
    %v79 = vld [vmem:[#allocation7 + $0x68] sm:$0xff]
    %v80 = vld [vmem:[#allocation7 + $0x70] sm:$0xff]
    %v81 = vld [vmem:[#allocation7 + $0x78] sm:$0xff]
    %v82 = vld [vmem:[#allocation7 + $0x80] sm:$0xff]
    %v83 = vld [vmem:[#allocation7 + $0x88] sm:$0xff]
    %v84 = vld [vmem:[#allocation7 + $0x90] sm:$0xff]
    %v85 = vld [vmem:[#allocation7 + $0x98] sm:$0xff]
    %v86 = vld [vmem:[#allocation7 + $0xa0] sm:$0xff]
    %v87 = vld [vmem:[#allocation7 + $0xa8] sm:$0xff]
    %v88 = vld [vmem:[#allocation7 + $0xb0] sm:$0xff]
    %v89 = vld [vmem:[#allocation7 + $0xb8] sm:$0xff]
    %v90 = vld [vmem:[#allocation7 + $0xc0] sm:$0xff]
    %v91 = vld [vmem:[#allocation7 + $0xc8] sm:$0xff]
    %v92 = vld [vmem:[#allocation7 + $0xd0] sm:$0xff]
    %v93 = vld [vmem:[#allocation7 + $0xd8] sm:$0xff]
    %v94 = vld [vmem:[#allocation7 + $0xe0] sm:$0xff]
    %v95 = vld [vmem:[#allocation7 + $0xe8] sm:$0xff]
    %v96 = vld [vmem:[#allocation7 + $0xf0] sm:$0xff]
    %v97 = vld [vmem:[#allocation7 + $0xf8] sm:$0xff]
    %v130 = vunpack.c.l.b16 %v66
    %v131 = vunpack.c.h.b16 %v66
    %v132 = vunpack.c.l.b16 %v67
    %v133 = vunpack.c.h.b16 %v67
    %v134 = vunpack.c.l.b16 %v68
    %v135 = vunpack.c.h.b16 %v68
    %v136 = vunpack.c.l.b16 %v69
    %v137 = vunpack.c.h.b16 %v69
    %v138 = vunpack.c.l.b16 %v70
    %v139 = vunpack.c.h.b16 %v70
    %v140 = vunpack.c.l.b16 %v71
    %v141 = vunpack.c.h.b16 %v71
    %v142 = vunpack.c.l.b16 %v72
    %v143 = vunpack.c.h.b16 %v72
    %v144 = vunpack.c.l.b16 %v73
    %v145 = vunpack.c.h.b16 %v73
    %v146 = vunpack.c.l.b16 %v74
    %v147 = vunpack.c.h.b16 %v74
    %v148 = vunpack.c.l.b16 %v75
    %v149 = vunpack.c.h.b16 %v75
    %v150 = vunpack.c.l.b16 %v76
    %v151 = vunpack.c.h.b16 %v76
    %v152 = vunpack.c.l.b16 %v77
    %v153 = vunpack.c.h.b16 %v77
    %v154 = vunpack.c.l.b16 %v78
    %v155 = vunpack.c.h.b16 %v78
    %v156 = vunpack.c.l.b16 %v79
    %v157 = vunpack.c.h.b16 %v79
    %v158 = vunpack.c.l.b16 %v80
    %v159 = vunpack.c.h.b16 %v80
    %v160 = vunpack.c.l.b16 %v81
    %v161 = vunpack.c.h.b16 %v81
    %v162 = vunpack.c.l.b16 %v82
    %v163 = vunpack.c.h.b16 %v82
    %v164 = vunpack.c.l.b16 %v83
    %v165 = vunpack.c.h.b16 %v83
    %v166 = vunpack.c.l.b16 %v84
    %v167 = vunpack.c.h.b16 %v84
    %v168 = vunpack.c.l.b16 %v85
    %v169 = vunpack.c.h.b16 %v85
    %v170 = vunpack.c.l.b16 %v86
    %v171 = vunpack.c.h.b16 %v86
    %v172 = vunpack.c.l.b16 %v87
    %v173 = vunpack.c.h.b16 %v87
    %v174 = vunpack.c.l.b16 %v88
    %v175 = vunpack.c.h.b16 %v88
    %v176 = vunpack.c.l.b16 %v89
    %v177 = vunpack.c.h.b16 %v89
    %v178 = vunpack.c.l.b16 %v90
    %v179 = vunpack.c.h.b16 %v90
    %v180 = vunpack.c.l.b16 %v91
    %v181 = vunpack.c.h.b16 %v91
    %v182 = vunpack.c.l.b16 %v92
    %v183 = vunpack.c.h.b16 %v92
    %v184 = vunpack.c.l.b16 %v93
    %v185 = vunpack.c.h.b16 %v93
    %v186 = vunpack.c.l.b16 %v94
    %v187 = vunpack.c.h.b16 %v94
    %v188 = vunpack.c.l.b16 %v95
    %v189 = vunpack.c.h.b16 %v95
    %v190 = vunpack.c.l.b16 %v96
    %v191 = vunpack.c.h.b16 %v96
    %v192 = vunpack.c.l.b16 %v97
    %v193 = vunpack.c.h.b16 %v97
    %v194 = vpack.c.b16 %v134, %v130
    %v195 = vpack.c.b16 %v135, %v131
    %v196 = vpack.c.b16 %v136, %v132
    %v197 = vpack.c.b16 %v137, %v133
    %v198 = vpack.c.b16 %v142, %v138
    %v199 = vpack.c.b16 %v143, %v139
    %v200 = vpack.c.b16 %v144, %v140
    %v201 = vpack.c.b16 %v145, %v141
    %v202 = vpack.c.b16 %v150, %v146
    %v203 = vpack.c.b16 %v151, %v147
    %v204 = vpack.c.b16 %v152, %v148
    %v205 = vpack.c.b16 %v153, %v149
    %v206 = vpack.c.b16 %v158, %v154
    %v207 = vpack.c.b16 %v159, %v155
    %v208 = vpack.c.b16 %v160, %v156
    %v209 = vpack.c.b16 %v161, %v157
    %v210 = vpack.c.b16 %v166, %v162
    %v211 = vpack.c.b16 %v167, %v163
    %v212 = vpack.c.b16 %v168, %v164
    %v213 = vpack.c.b16 %v169, %v165
    %v214 = vpack.c.b16 %v174, %v170
    %v215 = vpack.c.b16 %v175, %v171
    %v216 = vpack.c.b16 %v176, %v172
    %v217 = vpack.c.b16 %v177, %v173
    %v218 = vpack.c.b16 %v182, %v178
    %v219 = vpack.c.b16 %v183, %v179
    %v220 = vpack.c.b16 %v184, %v180
    %v221 = vpack.c.b16 %v185, %v181
    %v222 = vpack.c.b16 %v190, %v186
    %v223 = vpack.c.b16 %v191, %v187
    %v224 = vpack.c.b16 %v192, %v188
    %v225 = vpack.c.b16 %v193, %v189
    %258 = vmatprep.subr.bf16.mxu0 %v195
    %259 = vmatpush1.bf16.msra.mxu0 %v194
    %260 = vmatprep.subr.bf16.mxu0 %v199
    %261 = vmatpush1.bf16.msra.mxu0 %v198
    %262 = vmatprep.subr.bf16.mxu0 %v203
    %263 = vmatpush1.bf16.msra.mxu0 %v202
    %264 = vmatprep.subr.bf16.mxu0 %v207
    %265 = vmatpush1.bf16.msra.mxu0 %v206
    %266 = vmatprep.subr.bf16.mxu0 %v211
    %267 = vmatpush1.bf16.msra.mxu0 %v210
    %268 = vmatprep.subr.bf16.mxu0 %v215
    %269 = vmatpush1.bf16.msra.mxu0 %v214
    %270 = vmatprep.subr.bf16.mxu0 %v219
    %271 = vmatpush1.bf16.msra.mxu0 %v218
    %272 = vmatprep.subr.bf16.mxu0 %v223
    %273 = vmatpush1.bf16.msra.mxu0 %v222
    %274 = vmatprep.subr.bf16.mxu0 0
    %275 = vmatpush1.bf16.msra.mxu0 0
    %276 = vmatprep.subr.bf16.mxu0 0
    %277 = vmatpush1.bf16.msra.mxu0 0
    %278 = vmatprep.subr.bf16.mxu0 0
    %279 = vmatpush1.bf16.msra.mxu0 0
    %280 = vmatprep.subr.bf16.mxu0 0
    %281 = vmatpush1.bf16.msra.mxu0 0
    %282 = vmatprep.subr.bf16.mxu0 0
    %283 = vmatpush1.bf16.msra.mxu0 0
    %284 = vmatprep.subr.bf16.mxu0 0
    %285 = vmatpush1.bf16.msra.mxu0 0
    %286 = vmatprep.subr.bf16.mxu0 0
    %287 = vmatpush1.bf16.msra.mxu0 0
    %288 = vmatprep.subr.bf16.mxu0 0
    %289 = vmatpush1.bf16.msra.mxu0 0
    %290 = vmatprep.mubr.bf16.mxu0 0
    %291 = vmatmul.mubr.bf16.gmra.mrb[0].mxu0 %v65
    %v292 = vpop.f32.mrb[0].mxu0
    %v293 = vadd.f32 0.0, %v292
    %v294 = vpop.f32.mrb[0].mxu0
    %v295 = vadd.f32 0.0, %v294
    %v296 = vpop.f32.mrb[0].mxu0
    %v297 = vadd.f32 0.0, %v296
    %v298 = vpop.f32.mrb[0].mxu0
    %v299 = vadd.f32 0.0, %v298
    %300 = vdwg.mxu0
    %301 = vmatprep.subr.bf16.mxu0 %v197
    %302 = vmatpush1.bf16.msra.mxu0 %v196
    %303 = vmatprep.subr.bf16.mxu0 %v201
    %304 = vmatpush1.bf16.msra.mxu0 %v200
    %305 = vmatprep.subr.bf16.mxu0 %v205
    %306 = vmatpush1.bf16.msra.mxu0 %v204
    %307 = vmatprep.subr.bf16.mxu0 %v209
    %308 = vmatpush1.bf16.msra.mxu0 %v208
    %309 = vmatprep.subr.bf16.mxu0 %v213
    %310 = vmatpush1.bf16.msra.mxu0 %v212
    %311 = vmatprep.subr.bf16.mxu0 %v217
    %312 = vmatpush1.bf16.msra.mxu0 %v216
    %313 = vmatprep.subr.bf16.mxu0 %v221
    %314 = vmatpush1.bf16.msra.mxu0 %v220
    %315 = vmatprep.subr.bf16.mxu0 %v225
    %316 = vmatpush1.bf16.msra.mxu0 %v224
    %317 = vmatprep.subr.bf16.mxu0 0
    %318 = vmatpush1.bf16.msra.mxu0 0
    %319 = vmatprep.subr.bf16.mxu0 0
    %320 = vmatpush1.bf16.msra.mxu0 0
    %321 = vmatprep.subr.bf16.mxu0 0
    %322 = vmatpush1.bf16.msra.mxu0 0
    %323 = vmatprep.subr.bf16.mxu0 0
    %324 = vmatpush1.bf16.msra.mxu0 0
    %325 = vmatprep.subr.bf16.mxu0 0
    %326 = vmatpush1.bf16.msra.mxu0 0
    %327 = vmatprep.subr.bf16.mxu0 0
    %328 = vmatpush1.bf16.msra.mxu0 0
    %329 = vmatprep.subr.bf16.mxu0 0
    %330 = vmatpush1.bf16.msra.mxu0 0
    %331 = vmatprep.subr.bf16.mxu0 0
    %332 = vmatpush1.bf16.msra.mxu0 0
    %333 = vmatprep.mubr.bf16.mxu0 0
    %334 = vmatmul.mubr.bf16.gmra.mrb[0].mxu0 %v65
    %v335 = vpop.f32.mrb[0].mxu0
    %v336 = vadd.f32 0.0, %v335
    %v337 = vpop.f32.mrb[0].mxu0
    %v338 = vadd.f32 0.0, %v337
    %v339 = vpop.f32.mrb[0].mxu0
    %v340 = vadd.f32 0.0, %v339
    %v341 = vpop.f32.mrb[0].mxu0
    %v342 = vadd.f32 0.0, %v341
    %343 = vdwg.mxu0
    %v344 = vadd.f32 %v57, %v293
    %v345 = vadd.f32 %v58, %v295
    %v346 = vadd.f32 %v59, %v336
    %v347 = vadd.f32 %v60, %v338
    %v348 = vadd.f32 %v61, %v297
    %v349 = vadd.f32 %v62, %v299
    %v350 = vadd.f32 %v63, %v340
    %v351 = vadd.f32 %v64, %v342
    %v352 = vxor.u32 %v344, 2147483648
    %v353 = vxor.u32 %v348, 2147483648
    %v354 = vmul.f32 %v352, 1.442695
    %v355 = vpow.pop %v354
    %v356 = vmul.f32 %v353, 1.442695
    %v357 = vpow.pop %v356
    %v358 = vadd.f32 %v355, 1.0
    %v359 = vadd.f32 %v357, 1.0
    %v360 = vrcp.pop %v358
    %v361 = vmul.f32 1.0, %v360
    %v362 = vrcp.pop %v359
    %v363 = vmul.f32 1.0, %v362
    %v364 = vxor.u32 %v345, 2147483648
    %v365 = vxor.u32 %v349, 2147483648
    %v366 = vmul.f32 %v364, 1.442695
    %v367 = vpow.pop %v366
    %v368 = vmul.f32 %v365, 1.442695
    %v369 = vpow.pop %v368
    %v370 = vadd.f32 %v367, 1.0
    %v371 = vadd.f32 %v369, 1.0
    %v372 = vrcp.pop %v370
    %v373 = vmul.f32 1.0, %v372
    %v374 = vrcp.pop %v371
    %v375 = vmul.f32 1.0, %v374
    %v376 = vxor.u32 %v346, 2147483648
    %v377 = vxor.u32 %v350, 2147483648
    %v378 = vmul.f32 %v376, 1.442695
    %v379 = vpow.pop %v378
    %v380 = vmul.f32 %v377, 1.442695
    %v381 = vpow.pop %v380
    %v382 = vadd.f32 %v379, 1.0
    %v383 = vadd.f32 %v381, 1.0
    %v384 = vrcp.pop %v382
    %v385 = vmul.f32 1.0, %v384
    %v386 = vrcp.pop %v383
    %v387 = vmul.f32 1.0, %v386
    %v388 = vtanh.pop %v347
    %v389 = vtanh.pop %v351
    %v390 = vmul.f32 %v361, %v55
    %v391 = vmul.f32 %v363, %v56
    %v392 = vmul.f32 %v373, %v388
    %v393 = vmul.f32 %v375, %v389
    %v394 = vadd.f32 %v390, %v392
    %v395 = vadd.f32 %v391, %v393
    %v396 = vtanh.pop %v394
    %v397 = vtanh.pop %v395
    %v398 = vmul.f32 %v385, %v396
    %v399 = vmul.f32 %v387, %v397
    %400 = vst [vmem:[#allocation9] sm:$0xff] %v398
    %401 = vst [vmem:[#allocation9 + $0x8] sm:$0xff] %v399
    %s402 = scalar_lea.vmem [#allocation4], 64
    %v403 = vld [vmem:[%s402] sm:$0xff]
    %v404 = vld [vmem:[%s402 + $0x8] sm:$0xff]
    %v405 = vld [vmem:[%s402 + $0x10] sm:$0xff]
    %v406 = vld [vmem:[%s402 + $0x18] sm:$0xff]
    %v407 = vld [vmem:[%s402 + $0x20] sm:$0xff]
    %v408 = vld [vmem:[%s402 + $0x28] sm:$0xff]
    %v409 = vld [vmem:[%s402 + $0x30] sm:$0xff]
    %v410 = vld [vmem:[%s402 + $0x38] sm:$0xff]
    %v411 = vpack.c.bf16 %v399, %v398
    %v412 = vld [vmem:[#allocation7] sm:$0xff]
    %v413 = vld [vmem:[#allocation7 + $0x8] sm:$0xff]
    %v414 = vld [vmem:[#allocation7 + $0x10] sm:$0xff]
    %v415 = vld [vmem:[#allocation7 + $0x18] sm:$0xff]
    %v416 = vld [vmem:[#allocation7 + $0x20] sm:$0xff]
    %v417 = vld [vmem:[#allocation7 + $0x28] sm:$0xff]
    %v418 = vld [vmem:[#allocation7 + $0x30] sm:$0xff]
    %v419 = vld [vmem:[#allocation7 + $0x38] sm:$0xff]
    %v420 = vld [vmem:[#allocation7 + $0x40] sm:$0xff]
    %v421 = vld [vmem:[#allocation7 + $0x48] sm:$0xff]
    %v422 = vld [vmem:[#allocation7 + $0x50] sm:$0xff]
    %v423 = vld [vmem:[#allocation7 + $0x58] sm:$0xff]
    %v424 = vld [vmem:[#allocation7 + $0x60] sm:$0xff]
    %v425 = vld [vmem:[#allocation7 + $0x68] sm:$0xff]
    %v426 = vld [vmem:[#allocation7 + $0x70] sm:$0xff]
    %v427 = vld [vmem:[#allocation7 + $0x78] sm:$0xff]
    %v428 = vld [vmem:[#allocation7 + $0x80] sm:$0xff]
    %v429 = vld [vmem:[#allocation7 + $0x88] sm:$0xff]
    %v430 = vld [vmem:[#allocation7 + $0x90] sm:$0xff]
    %v431 = vld [vmem:[#allocation7 + $0x98] sm:$0xff]
    %v432 = vld [vmem:[#allocation7 + $0xa0] sm:$0xff]
    %v433 = vld [vmem:[#allocation7 + $0xa8] sm:$0xff]
    %v434 = vld [vmem:[#allocation7 + $0xb0] sm:$0xff]
    %v435 = vld [vmem:[#allocation7 + $0xb8] sm:$0xff]
    %v436 = vld [vmem:[#allocation7 + $0xc0] sm:$0xff]
    %v437 = vld [vmem:[#allocation7 + $0xc8] sm:$0xff]
    %v438 = vld [vmem:[#allocation7 + $0xd0] sm:$0xff]
    %v439 = vld [vmem:[#allocation7 + $0xd8] sm:$0xff]
    %v440 = vld [vmem:[#allocation7 + $0xe0] sm:$0xff]
    %v441 = vld [vmem:[#allocation7 + $0xe8] sm:$0xff]
    %v442 = vld [vmem:[#allocation7 + $0xf0] sm:$0xff]
    %v443 = vld [vmem:[#allocation7 + $0xf8] sm:$0xff]
    %v476 = vunpack.c.l.b16 %v412
    %v477 = vunpack.c.h.b16 %v412
    %v478 = vunpack.c.l.b16 %v413
    %v479 = vunpack.c.h.b16 %v413
    %v480 = vunpack.c.l.b16 %v414
    %v481 = vunpack.c.h.b16 %v414
    %v482 = vunpack.c.l.b16 %v415
    %v483 = vunpack.c.h.b16 %v415
    %v484 = vunpack.c.l.b16 %v416
    %v485 = vunpack.c.h.b16 %v416
    %v486 = vunpack.c.l.b16 %v417
    %v487 = vunpack.c.h.b16 %v417
    %v488 = vunpack.c.l.b16 %v418
    %v489 = vunpack.c.h.b16 %v418
    %v490 = vunpack.c.l.b16 %v419
    %v491 = vunpack.c.h.b16 %v419
    %v492 = vunpack.c.l.b16 %v420
    %v493 = vunpack.c.h.b16 %v420
    %v494 = vunpack.c.l.b16 %v421
    %v495 = vunpack.c.h.b16 %v421
    %v496 = vunpack.c.l.b16 %v422
    %v497 = vunpack.c.h.b16 %v422
    %v498 = vunpack.c.l.b16 %v423
    %v499 = vunpack.c.h.b16 %v423
    %v500 = vunpack.c.l.b16 %v424
    %v501 = vunpack.c.h.b16 %v424
    %v502 = vunpack.c.l.b16 %v425
    %v503 = vunpack.c.h.b16 %v425
    %v504 = vunpack.c.l.b16 %v426
    %v505 = vunpack.c.h.b16 %v426
    %v506 = vunpack.c.l.b16 %v427
    %v507 = vunpack.c.h.b16 %v427
    %v508 = vunpack.c.l.b16 %v428
    %v509 = vunpack.c.h.b16 %v428
    %v510 = vunpack.c.l.b16 %v429
    %v511 = vunpack.c.h.b16 %v429
    %v512 = vunpack.c.l.b16 %v430
    %v513 = vunpack.c.h.b16 %v430
    %v514 = vunpack.c.l.b16 %v431
    %v515 = vunpack.c.h.b16 %v431
    %v516 = vunpack.c.l.b16 %v432
    %v517 = vunpack.c.h.b16 %v432
    %v518 = vunpack.c.l.b16 %v433
    %v519 = vunpack.c.h.b16 %v433
    %v520 = vunpack.c.l.b16 %v434
    %v521 = vunpack.c.h.b16 %v434
    %v522 = vunpack.c.l.b16 %v435
    %v523 = vunpack.c.h.b16 %v435
    %v524 = vunpack.c.l.b16 %v436
    %v525 = vunpack.c.h.b16 %v436
    %v526 = vunpack.c.l.b16 %v437
    %v527 = vunpack.c.h.b16 %v437
    %v528 = vunpack.c.l.b16 %v438
    %v529 = vunpack.c.h.b16 %v438
    %v530 = vunpack.c.l.b16 %v439
    %v531 = vunpack.c.h.b16 %v439
    %v532 = vunpack.c.l.b16 %v440
    %v533 = vunpack.c.h.b16 %v440
    %v534 = vunpack.c.l.b16 %v441
    %v535 = vunpack.c.h.b16 %v441
    %v536 = vunpack.c.l.b16 %v442
    %v537 = vunpack.c.h.b16 %v442
    %v538 = vunpack.c.l.b16 %v443
    %v539 = vunpack.c.h.b16 %v443
    %v540 = vpack.c.b16 %v480, %v476
    %v541 = vpack.c.b16 %v481, %v477
    %v542 = vpack.c.b16 %v482, %v478
    %v543 = vpack.c.b16 %v483, %v479
    %v544 = vpack.c.b16 %v488, %v484
    %v545 = vpack.c.b16 %v489, %v485
    %v546 = vpack.c.b16 %v490, %v486
    %v547 = vpack.c.b16 %v491, %v487
    %v548 = vpack.c.b16 %v496, %v492
    %v549 = vpack.c.b16 %v497, %v493
    %v550 = vpack.c.b16 %v498, %v494
    %v551 = vpack.c.b16 %v499, %v495
    %v552 = vpack.c.b16 %v504, %v500
    %v553 = vpack.c.b16 %v505, %v501
    %v554 = vpack.c.b16 %v506, %v502
    %v555 = vpack.c.b16 %v507, %v503
    %v556 = vpack.c.b16 %v512, %v508
    %v557 = vpack.c.b16 %v513, %v509
    %v558 = vpack.c.b16 %v514, %v510
    %v559 = vpack.c.b16 %v515, %v511
    %v560 = vpack.c.b16 %v520, %v516
    %v561 = vpack.c.b16 %v521, %v517
    %v562 = vpack.c.b16 %v522, %v518
    %v563 = vpack.c.b16 %v523, %v519
    %v564 = vpack.c.b16 %v528, %v524
    %v565 = vpack.c.b16 %v529, %v525
    %v566 = vpack.c.b16 %v530, %v526
    %v567 = vpack.c.b16 %v531, %v527
    %v568 = vpack.c.b16 %v536, %v532
    %v569 = vpack.c.b16 %v537, %v533
    %v570 = vpack.c.b16 %v538, %v534
    %v571 = vpack.c.b16 %v539, %v535
    %604 = vmatprep.subr.bf16.mxu0 %v541
    %605 = vmatpush1.bf16.msra.mxu0 %v540
    %606 = vmatprep.subr.bf16.mxu0 %v545
    %607 = vmatpush1.bf16.msra.mxu0 %v544
    %608 = vmatprep.subr.bf16.mxu0 %v549
    %609 = vmatpush1.bf16.msra.mxu0 %v548
    %610 = vmatprep.subr.bf16.mxu0 %v553
    %611 = vmatpush1.bf16.msra.mxu0 %v552
    %612 = vmatprep.subr.bf16.mxu0 %v557
    %613 = vmatpush1.bf16.msra.mxu0 %v556
    %614 = vmatprep.subr.bf16.mxu0 %v561
    %615 = vmatpush1.bf16.msra.mxu0 %v560
    %616 = vmatprep.subr.bf16.mxu0 %v565
    %617 = vmatpush1.bf16.msra.mxu0 %v564
    %618 = vmatprep.subr.bf16.mxu0 %v569
    %619 = vmatpush1.bf16.msra.mxu0 %v568
    %620 = vmatprep.subr.bf16.mxu0 0
    %621 = vmatpush1.bf16.msra.mxu0 0
    %622 = vmatprep.subr.bf16.mxu0 0
    %623 = vmatpush1.bf16.msra.mxu0 0
    %624 = vmatprep.subr.bf16.mxu0 0
    %625 = vmatpush1.bf16.msra.mxu0 0
    %626 = vmatprep.subr.bf16.mxu0 0
    %627 = vmatpush1.bf16.msra.mxu0 0
    %628 = vmatprep.subr.bf16.mxu0 0
    %629 = vmatpush1.bf16.msra.mxu0 0
    %630 = vmatprep.subr.bf16.mxu0 0
    %631 = vmatpush1.bf16.msra.mxu0 0
    %632 = vmatprep.subr.bf16.mxu0 0
    %633 = vmatpush1.bf16.msra.mxu0 0
    %634 = vmatprep.subr.bf16.mxu0 0
    %635 = vmatpush1.bf16.msra.mxu0 0
    %636 = vmatprep.mubr.bf16.mxu0 0
    %637 = vmatmul.mubr.bf16.gmra.mrb[0].mxu0 %v411
    %v638 = vpop.f32.mrb[0].mxu0
    %v639 = vadd.f32 0.0, %v638
    %v640 = vpop.f32.mrb[0].mxu0
    %v641 = vadd.f32 0.0, %v640
    %v642 = vpop.f32.mrb[0].mxu0
    %v643 = vadd.f32 0.0, %v642
    %v644 = vpop.f32.mrb[0].mxu0
    %v645 = vadd.f32 0.0, %v644
    %646 = vdwg.mxu0
    %647 = vmatprep.subr.bf16.mxu0 %v543
    %648 = vmatpush1.bf16.msra.mxu0 %v542
    %649 = vmatprep.subr.bf16.mxu0 %v547
    %650 = vmatpush1.bf16.msra.mxu0 %v546
    %651 = vmatprep.subr.bf16.mxu0 %v551
    %652 = vmatpush1.bf16.msra.mxu0 %v550
    %653 = vmatprep.subr.bf16.mxu0 %v555
    %654 = vmatpush1.bf16.msra.mxu0 %v554
    %655 = vmatprep.subr.bf16.mxu0 %v559
    %656 = vmatpush1.bf16.msra.mxu0 %v558
    %657 = vmatprep.subr.bf16.mxu0 %v563
    %658 = vmatpush1.bf16.msra.mxu0 %v562
    %659 = vmatprep.subr.bf16.mxu0 %v567
    %660 = vmatpush1.bf16.msra.mxu0 %v566
    %661 = vmatprep.subr.bf16.mxu0 %v571
    %662 = vmatpush1.bf16.msra.mxu0 %v570
    %663 = vmatprep.subr.bf16.mxu0 0
    %664 = vmatpush1.bf16.msra.mxu0 0
    %665 = vmatprep.subr.bf16.mxu0 0
    %666 = vmatpush1.bf16.msra.mxu0 0
    %667 = vmatprep.subr.bf16.mxu0 0
    %668 = vmatpush1.bf16.msra.mxu0 0
    %669 = vmatprep.subr.bf16.mxu0 0
    %670 = vmatpush1.bf16.msra.mxu0 0
    %671 = vmatprep.subr.bf16.mxu0 0
    %672 = vmatpush1.bf16.msra.mxu0 0
    %673 = vmatprep.subr.bf16.mxu0 0
    %674 = vmatpush1.bf16.msra.mxu0 0
    %675 = vmatprep.subr.bf16.mxu0 0
    %676 = vmatpush1.bf16.msra.mxu0 0
    %677 = vmatprep.subr.bf16.mxu0 0
    %678 = vmatpush1.bf16.msra.mxu0 0
    %679 = vmatprep.mubr.bf16.mxu0 0
    %680 = vmatmul.mubr.bf16.gmra.mrb[0].mxu0 %v411
    %v681 = vpop.f32.mrb[0].mxu0
    %v682 = vadd.f32 0.0, %v681
    %v683 = vpop.f32.mrb[0].mxu0
    %v684 = vadd.f32 0.0, %v683
    %v685 = vpop.f32.mrb[0].mxu0
    %v686 = vadd.f32 0.0, %v685
    %v687 = vpop.f32.mrb[0].mxu0
    %v688 = vadd.f32 0.0, %v687
    %689 = vdwg.mxu0
    %v690 = vadd.f32 %v403, %v639
    %v691 = vadd.f32 %v404, %v641
    %v692 = vadd.f32 %v405, %v682
    %v693 = vadd.f32 %v406, %v684
    %v694 = vadd.f32 %v407, %v643
    %v695 = vadd.f32 %v408, %v645
    %v696 = vadd.f32 %v409, %v686
    %v697 = vadd.f32 %v410, %v688
    %v698 = vxor.u32 %v690, 2147483648
    %v699 = vxor.u32 %v694, 2147483648
    %v700 = vmul.f32 %v698, 1.442695
    %v701 = vpow.pop %v700
    %v702 = vmul.f32 %v699, 1.442695
    %v703 = vpow.pop %v702
    %v704 = vadd.f32 %v701, 1.0
    %v705 = vadd.f32 %v703, 1.0
    %v706 = vrcp.pop %v704
    %v707 = vmul.f32 1.0, %v706
    %v708 = vrcp.pop %v705
    %v709 = vmul.f32 1.0, %v708
    %v710 = vxor.u32 %v691, 2147483648
    %v711 = vxor.u32 %v695, 2147483648
    %v712 = vmul.f32 %v710, 1.442695
    %v713 = vpow.pop %v712
    %v714 = vmul.f32 %v711, 1.442695
    %v715 = vpow.pop %v714
    %v716 = vadd.f32 %v713, 1.0
    %v717 = vadd.f32 %v715, 1.0
    %v718 = vrcp.pop %v716
    %v719 = vmul.f32 1.0, %v718
    %v720 = vrcp.pop %v717
    %v721 = vmul.f32 1.0, %v720
    %v722 = vxor.u32 %v692, 2147483648
    %v723 = vxor.u32 %v696, 2147483648
    %v724 = vmul.f32 %v722, 1.442695
    %v725 = vpow.pop %v724
    %v726 = vmul.f32 %v723, 1.442695
    %v727 = vpow.pop %v726
    %v728 = vadd.f32 %v725, 1.0
    %v729 = vadd.f32 %v727, 1.0
    %v730 = vrcp.pop %v728
    %v731 = vmul.f32 1.0, %v730
    %v732 = vrcp.pop %v729
    %v733 = vmul.f32 1.0, %v732
    %v734 = vtanh.pop %v693
    %v735 = vtanh.pop %v697
    %v736 = vmul.f32 %v707, %v394
    %v737 = vmul.f32 %v709, %v395
    %v738 = vmul.f32 %v719, %v734
    %v739 = vmul.f32 %v721, %v735
    %v740 = vadd.f32 %v736, %v738
    %v741 = vadd.f32 %v737, %v739
    %v742 = vtanh.pop %v740
    %v743 = vtanh.pop %v741
    %v744 = vmul.f32 %v731, %v742
    %v745 = vmul.f32 %v733, %v743
    %s746 = scalar_lea.vmem [#allocation9], 16
    %747 = vst [vmem:[%s746] sm:$0xff] %v744
    %748 = vst [vmem:[%s746 + $0x8] sm:$0xff] %v745
    %s749 = scalar_lea.vmem [#allocation4], 128
    %v750 = vld [vmem:[%s749] sm:$0xff]
    %v751 = vld [vmem:[%s749 + $0x8] sm:$0xff]
    %v752 = vld [vmem:[%s749 + $0x10] sm:$0xff]
    %v753 = vld [vmem:[%s749 + $0x18] sm:$0xff]
    %v754 = vld [vmem:[%s749 + $0x20] sm:$0xff]
    %v755 = vld [vmem:[%s749 + $0x28] sm:$0xff]
    %v756 = vld [vmem:[%s749 + $0x30] sm:$0xff]
    %v757 = vld [vmem:[%s749 + $0x38] sm:$0xff]
    %v758 = vpack.c.bf16 %v745, %v744
    %v759 = vld [vmem:[#allocation7] sm:$0xff]
    %v760 = vld [vmem:[#allocation7 + $0x8] sm:$0xff]
    %v761 = vld [vmem:[#allocation7 + $0x10] sm:$0xff]
    %v762 = vld [vmem:[#allocation7 + $0x18] sm:$0xff]
    %v763 = vld [vmem:[#allocation7 + $0x20] sm:$0xff]
    %v764 = vld [vmem:[#allocation7 + $0x28] sm:$0xff]
    %v765 = vld [vmem:[#allocation7 + $0x30] sm:$0xff]
    %v766 = vld [vmem:[#allocation7 + $0x38] sm:$0xff]
    %v767 = vld [vmem:[#allocation7 + $0x40] sm:$0xff]
    %v768 = vld [vmem:[#allocation7 + $0x48] sm:$0xff]
    %v769 = vld [vmem:[#allocation7 + $0x50] sm:$0xff]
    %v770 = vld [vmem:[#allocation7 + $0x58] sm:$0xff]
    %v771 = vld [vmem:[#allocation7 + $0x60] sm:$0xff]
    %v772 = vld [vmem:[#allocation7 + $0x68] sm:$0xff]
    %v773 = vld [vmem:[#allocation7 + $0x70] sm:$0xff]
    %v774 = vld [vmem:[#allocation7 + $0x78] sm:$0xff]
    %v775 = vld [vmem:[#allocation7 + $0x80] sm:$0xff]
    %v776 = vld [vmem:[#allocation7 + $0x88] sm:$0xff]
    %v777 = vld [vmem:[#allocation7 + $0x90] sm:$0xff]
    %v778 = vld [vmem:[#allocation7 + $0x98] sm:$0xff]
    %v779 = vld [vmem:[#allocation7 + $0xa0] sm:$0xff]
    %v780 = vld [vmem:[#allocation7 + $0xa8] sm:$0xff]
    %v781 = vld [vmem:[#allocation7 + $0xb0] sm:$0xff]
    %v782 = vld [vmem:[#allocation7 + $0xb8] sm:$0xff]
    %v783 = vld [vmem:[#allocation7 + $0xc0] sm:$0xff]
    %v784 = vld [vmem:[#allocation7 + $0xc8] sm:$0xff]
    %v785 = vld [vmem:[#allocation7 + $0xd0] sm:$0xff]
    %v786 = vld [vmem:[#allocation7 + $0xd8] sm:$0xff]
    %v787 = vld [vmem:[#allocation7 + $0xe0] sm:$0xff]
    %v788 = vld [vmem:[#allocation7 + $0xe8] sm:$0xff]
    %v789 = vld [vmem:[#allocation7 + $0xf0] sm:$0xff]
    %v790 = vld [vmem:[#allocation7 + $0xf8] sm:$0xff]
    %v823 = vunpack.c.l.b16 %v759
    %v824 = vunpack.c.h.b16 %v759
    %v825 = vunpack.c.l.b16 %v760
    %v826 = vunpack.c.h.b16 %v760
    %v827 = vunpack.c.l.b16 %v761
    %v828 = vunpack.c.h.b16 %v761
    %v829 = vunpack.c.l.b16 %v762
    %v830 = vunpack.c.h.b16 %v762
    %v831 = vunpack.c.l.b16 %v763
    %v832 = vunpack.c.h.b16 %v763
    %v833 = vunpack.c.l.b16 %v764
    %v834 = vunpack.c.h.b16 %v764
    %v835 = vunpack.c.l.b16 %v765
    %v836 = vunpack.c.h.b16 %v765
    %v837 = vunpack.c.l.b16 %v766
    %v838 = vunpack.c.h.b16 %v766
    %v839 = vunpack.c.l.b16 %v767
    %v840 = vunpack.c.h.b16 %v767
    %v841 = vunpack.c.l.b16 %v768
    %v842 = vunpack.c.h.b16 %v768
    %v843 = vunpack.c.l.b16 %v769
    %v844 = vunpack.c.h.b16 %v769
    %v845 = vunpack.c.l.b16 %v770
    %v846 = vunpack.c.h.b16 %v770
    %v847 = vunpack.c.l.b16 %v771
    %v848 = vunpack.c.h.b16 %v771
    %v849 = vunpack.c.l.b16 %v772
    %v850 = vunpack.c.h.b16 %v772
    %v851 = vunpack.c.l.b16 %v773
    %v852 = vunpack.c.h.b16 %v773
    %v853 = vunpack.c.l.b16 %v774
    %v854 = vunpack.c.h.b16 %v774
    %v855 = vunpack.c.l.b16 %v775
    %v856 = vunpack.c.h.b16 %v775
    %v857 = vunpack.c.l.b16 %v776
    %v858 = vunpack.c.h.b16 %v776
    %v859 = vunpack.c.l.b16 %v777
    %v860 = vunpack.c.h.b16 %v777
    %v861 = vunpack.c.l.b16 %v778
    %v862 = vunpack.c.h.b16 %v778
    %v863 = vunpack.c.l.b16 %v779
    %v864 = vunpack.c.h.b16 %v779
    %v865 = vunpack.c.l.b16 %v780
    %v866 = vunpack.c.h.b16 %v780
    %v867 = vunpack.c.l.b16 %v781
    %v868 = vunpack.c.h.b16 %v781
    %v869 = vunpack.c.l.b16 %v782
    %v870 = vunpack.c.h.b16 %v782
    %v871 = vunpack.c.l.b16 %v783
    %v872 = vunpack.c.h.b16 %v783
    %v873 = vunpack.c.l.b16 %v784
    %v874 = vunpack.c.h.b16 %v784
    %v875 = vunpack.c.l.b16 %v785
    %v876 = vunpack.c.h.b16 %v785
    %v877 = vunpack.c.l.b16 %v786
    %v878 = vunpack.c.h.b16 %v786
    %v879 = vunpack.c.l.b16 %v787
    %v880 = vunpack.c.h.b16 %v787
    %v881 = vunpack.c.l.b16 %v788
    %v882 = vunpack.c.h.b16 %v788
    %v883 = vunpack.c.l.b16 %v789
    %v884 = vunpack.c.h.b16 %v789
    %v885 = vunpack.c.l.b16 %v790
    %v886 = vunpack.c.h.b16 %v790
    %v887 = vpack.c.b16 %v827, %v823
    %v888 = vpack.c.b16 %v828, %v824
    %v889 = vpack.c.b16 %v829, %v825
    %v890 = vpack.c.b16 %v830, %v826
    %v891 = vpack.c.b16 %v835, %v831
    %v892 = vpack.c.b16 %v836, %v832
    %v893 = vpack.c.b16 %v837, %v833
    %v894 = vpack.c.b16 %v838, %v834
    %v895 = vpack.c.b16 %v843, %v839
    %v896 = vpack.c.b16 %v844, %v840
    %v897 = vpack.c.b16 %v845, %v841
    %v898 = vpack.c.b16 %v846, %v842
    %v899 = vpack.c.b16 %v851, %v847
    %v900 = vpack.c.b16 %v852, %v848
    %v901 = vpack.c.b16 %v853, %v849
    %v902 = vpack.c.b16 %v854, %v850
    %v903 = vpack.c.b16 %v859, %v855
    %v904 = vpack.c.b16 %v860, %v856
    %v905 = vpack.c.b16 %v861, %v857
    %v906 = vpack.c.b16 %v862, %v858
    %v907 = vpack.c.b16 %v867, %v863
    %v908 = vpack.c.b16 %v868, %v864
    %v909 = vpack.c.b16 %v869, %v865
    %v910 = vpack.c.b16 %v870, %v866
    %v911 = vpack.c.b16 %v875, %v871
    %v912 = vpack.c.b16 %v876, %v872
    %v913 = vpack.c.b16 %v877, %v873
    %v914 = vpack.c.b16 %v878, %v874
    %v915 = vpack.c.b16 %v883, %v879
    %v916 = vpack.c.b16 %v884, %v880
    %v917 = vpack.c.b16 %v885, %v881
    %v918 = vpack.c.b16 %v886, %v882
    %951 = vmatprep.subr.bf16.mxu0 %v888
    %952 = vmatpush1.bf16.msra.mxu0 %v887
    %953 = vmatprep.subr.bf16.mxu0 %v892
    %954 = vmatpush1.bf16.msra.mxu0 %v891
    %955 = vmatprep.subr.bf16.mxu0 %v896
    %956 = vmatpush1.bf16.msra.mxu0 %v895
    %957 = vmatprep.subr.bf16.mxu0 %v900
    %958 = vmatpush1.bf16.msra.mxu0 %v899
    %959 = vmatprep.subr.bf16.mxu0 %v904
    %960 = vmatpush1.bf16.msra.mxu0 %v903
    %961 = vmatprep.subr.bf16.mxu0 %v908
    %962 = vmatpush1.bf16.msra.mxu0 %v907
    %963 = vmatprep.subr.bf16.mxu0 %v912
    %964 = vmatpush1.bf16.msra.mxu0 %v911
    %965 = vmatprep.subr.bf16.mxu0 %v916
    %966 = vmatpush1.bf16.msra.mxu0 %v915
    %967 = vmatprep.subr.bf16.mxu0 0
    %968 = vmatpush1.bf16.msra.mxu0 0
    %969 = vmatprep.subr.bf16.mxu0 0
    %970 = vmatpush1.bf16.msra.mxu0 0
    %971 = vmatprep.subr.bf16.mxu0 0
    %972 = vmatpush1.bf16.msra.mxu0 0
    %973 = vmatprep.subr.bf16.mxu0 0
    %974 = vmatpush1.bf16.msra.mxu0 0
    %975 = vmatprep.subr.bf16.mxu0 0
    %976 = vmatpush1.bf16.msra.mxu0 0
    %977 = vmatprep.subr.bf16.mxu0 0
    %978 = vmatpush1.bf16.msra.mxu0 0
    %979 = vmatprep.subr.bf16.mxu0 0
    %980 = vmatpush1.bf16.msra.mxu0 0
    %981 = vmatprep.subr.bf16.mxu0 0
    %982 = vmatpush1.bf16.msra.mxu0 0
    %983 = vmatprep.mubr.bf16.mxu0 0
    %984 = vmatmul.mubr.bf16.gmra.mrb[0].mxu0 %v758
    %v985 = vpop.f32.mrb[0].mxu0
    %v986 = vadd.f32 0.0, %v985
    %v987 = vpop.f32.mrb[0].mxu0
    %v988 = vadd.f32 0.0, %v987
    %v989 = vpop.f32.mrb[0].mxu0
    %v990 = vadd.f32 0.0, %v989
    %v991 = vpop.f32.mrb[0].mxu0
    %v992 = vadd.f32 0.0, %v991
    %993 = vdwg.mxu0
    %994 = vmatprep.subr.bf16.mxu0 %v890
    %995 = vmatpush1.bf16.msra.mxu0 %v889
    %996 = vmatprep.subr.bf16.mxu0 %v894
    %997 = vmatpush1.bf16.msra.mxu0 %v893
    %998 = vmatprep.subr.bf16.mxu0 %v898
    %999 = vmatpush1.bf16.msra.mxu0 %v897
    %1000 = vmatprep.subr.bf16.mxu0 %v902
    %1001 = vmatpush1.bf16.msra.mxu0 %v901
    %1002 = vmatprep.subr.bf16.mxu0 %v906
    %1003 = vmatpush1.bf16.msra.mxu0 %v905
    %1004 = vmatprep.subr.bf16.mxu0 %v910
    %1005 = vmatpush1.bf16.msra.mxu0 %v909
    %1006 = vmatprep.subr.bf16.mxu0 %v914
    %1007 = vmatpush1.bf16.msra.mxu0 %v913
    %1008 = vmatprep.subr.bf16.mxu0 %v918
    %1009 = vmatpush1.bf16.msra.mxu0 %v917
    %1010 = vmatprep.subr.bf16.mxu0 0
    %1011 = vmatpush1.bf16.msra.mxu0 0
    %1012 = vmatprep.subr.bf16.mxu0 0
    %1013 = vmatpush1.bf16.msra.mxu0 0
    %1014 = vmatprep.subr.bf16.mxu0 0
    %1015 = vmatpush1.bf16.msra.mxu0 0
    %1016 = vmatprep.subr.bf16.mxu0 0
    %1017 = vmatpush1.bf16.msra.mxu0 0
    %1018 = vmatprep.subr.bf16.mxu0 0
    %1019 = vmatpush1.bf16.msra.mxu0 0
    %1020 = vmatprep.subr.bf16.mxu0 0
    %1021 = vmatpush1.bf16.msra.mxu0 0
    %1022 = vmatprep.subr.bf16.mxu0 0
    %1023 = vmatpush1.bf16.msra.mxu0 0
    %1024 = vmatprep.subr.bf16.mxu0 0
    %1025 = vmatpush1.bf16.msra.mxu0 0
    %1026 = vmatprep.mubr.bf16.mxu0 0
    %1027 = vmatmul.mubr.bf16.gmra.mrb[0].mxu0 %v758
    %v1028 = vpop.f32.mrb[0].mxu0
    %v1029 = vadd.f32 0.0, %v1028
    %v1030 = vpop.f32.mrb[0].mxu0
    %v1031 = vadd.f32 0.0, %v1030
    %v1032 = vpop.f32.mrb[0].mxu0
    %v1033 = vadd.f32 0.0, %v1032
    %v1034 = vpop.f32.mrb[0].mxu0
    %v1035 = vadd.f32 0.0, %v1034
    %1036 = vdwg.mxu0
    %v1037 = vadd.f32 %v750, %v986
    %v1038 = vadd.f32 %v751, %v988
    %v1039 = vadd.f32 %v752, %v1029
    %v1040 = vadd.f32 %v753, %v1031
    %v1041 = vadd.f32 %v754, %v990
    %v1042 = vadd.f32 %v755, %v992
    %v1043 = vadd.f32 %v756, %v1033
    %v1044 = vadd.f32 %v757, %v1035
    %v1045 = vxor.u32 %v1037, 2147483648
    %v1046 = vxor.u32 %v1041, 2147483648
    %v1047 = vmul.f32 %v1045, 1.442695
    %v1048 = vpow.pop %v1047
    %v1049 = vmul.f32 %v1046, 1.442695
    %v1050 = vpow.pop %v1049
    %v1051 = vadd.f32 %v1048, 1.0
    %v1052 = vadd.f32 %v1050, 1.0
    %v1053 = vrcp.pop %v1051
    %v1054 = vmul.f32 1.0, %v1053
    %v1055 = vrcp.pop %v1052
    %v1056 = vmul.f32 1.0, %v1055
    %v1057 = vxor.u32 %v1038, 2147483648
    %v1058 = vxor.u32 %v1042, 2147483648
    %v1059 = vmul.f32 %v1057, 1.442695
    %v1060 = vpow.pop %v1059
    %v1061 = vmul.f32 %v1058, 1.442695
    %v1062 = vpow.pop %v1061
    %v1063 = vadd.f32 %v1060, 1.0
    %v1064 = vadd.f32 %v1062, 1.0
    %v1065 = vrcp.pop %v1063
    %v1066 = vmul.f32 1.0, %v1065
    %v1067 = vrcp.pop %v1064
    %v1068 = vmul.f32 1.0, %v1067
    %v1069 = vxor.u32 %v1039, 2147483648
    %v1070 = vxor.u32 %v1043, 2147483648
    %v1071 = vmul.f32 %v1069, 1.442695
    %v1072 = vpow.pop %v1071
    %v1073 = vmul.f32 %v1070, 1.442695
    %v1074 = vpow.pop %v1073
    %v1075 = vadd.f32 %v1072, 1.0
    %v1076 = vadd.f32 %v1074, 1.0
    %v1077 = vrcp.pop %v1075
    %v1078 = vmul.f32 1.0, %v1077
    %v1079 = vrcp.pop %v1076
    %v1080 = vmul.f32 1.0, %v1079
    %v1081 = vtanh.pop %v1040
    %v1082 = vtanh.pop %v1044
    %v1083 = vmul.f32 %v1054, %v740
    %v1084 = vmul.f32 %v1056, %v741
    %v1085 = vmul.f32 %v1066, %v1081
    %v1086 = vmul.f32 %v1068, %v1082
    %v1087 = vadd.f32 %v1083, %v1085
    %v1088 = vadd.f32 %v1084, %v1086
    %v1089 = vtanh.pop %v1087
    %v1090 = vtanh.pop %v1088
    %v1091 = vmul.f32 %v1078, %v1089
    %v1092 = vmul.f32 %v1080, %v1090
    %s1093 = scalar_lea.vmem [#allocation9], 32
    %1094 = vst [vmem:[%s1093] sm:$0xff] %v1091
    %1095 = vst [vmem:[%s1093 + $0x8] sm:$0xff] %v1092
    %s1096 = scalar_lea.vmem [#allocation4], 192
    %v1097 = vld [vmem:[%s1096] sm:$0xff]
    %v1098 = vld [vmem:[%s1096 + $0x8] sm:$0xff]
    %v1099 = vld [vmem:[%s1096 + $0x10] sm:$0xff]
    %v1100 = vld [vmem:[%s1096 + $0x18] sm:$0xff]
    %v1101 = vld [vmem:[%s1096 + $0x20] sm:$0xff]
    %v1102 = vld [vmem:[%s1096 + $0x28] sm:$0xff]
    %v1103 = vld [vmem:[%s1096 + $0x30] sm:$0xff]
    %v1104 = vld [vmem:[%s1096 + $0x38] sm:$0xff]
    %v1105 = vpack.c.bf16 %v1092, %v1091
    %v1106 = vld [vmem:[#allocation7] sm:$0xff]
    %v1107 = vld [vmem:[#allocation7 + $0x8] sm:$0xff]
    %v1108 = vld [vmem:[#allocation7 + $0x10] sm:$0xff]
    %v1109 = vld [vmem:[#allocation7 + $0x18] sm:$0xff]
    %v1110 = vld [vmem:[#allocation7 + $0x20] sm:$0xff]
    %v1111 = vld [vmem:[#allocation7 + $0x28] sm:$0xff]
    %v1112 = vld [vmem:[#allocation7 + $0x30] sm:$0xff]
    %v1113 = vld [vmem:[#allocation7 + $0x38] sm:$0xff]
    %v1114 = vld [vmem:[#allocation7 + $0x40] sm:$0xff]
    %v1115 = vld [vmem:[#allocation7 + $0x48] sm:$0xff]
    %v1116 = vld [vmem:[#allocation7 + $0x50] sm:$0xff]
    %v1117 = vld [vmem:[#allocation7 + $0x58] sm:$0xff]
    %v1118 = vld [vmem:[#allocation7 + $0x60] sm:$0xff]
    %v1119 = vld [vmem:[#allocation7 + $0x68] sm:$0xff]
    %v1120 = vld [vmem:[#allocation7 + $0x70] sm:$0xff]
    %v1121 = vld [vmem:[#allocation7 + $0x78] sm:$0xff]
    %v1122 = vld [vmem:[#allocation7 + $0x80] sm:$0xff]
    %v1123 = vld [vmem:[#allocation7 + $0x88] sm:$0xff]
    %v1124 = vld [vmem:[#allocation7 + $0x90] sm:$0xff]
    %v1125 = vld [vmem:[#allocation7 + $0x98] sm:$0xff]
    %v1126 = vld [vmem:[#allocation7 + $0xa0] sm:$0xff]
    %v1127 = vld [vmem:[#allocation7 + $0xa8] sm:$0xff]
    %v1128 = vld [vmem:[#allocation7 + $0xb0] sm:$0xff]
    %v1129 = vld [vmem:[#allocation7 + $0xb8] sm:$0xff]
    %v1130 = vld [vmem:[#allocation7 + $0xc0] sm:$0xff]
    %v1131 = vld [vmem:[#allocation7 + $0xc8] sm:$0xff]
    %v1132 = vld [vmem:[#allocation7 + $0xd0] sm:$0xff]
    %v1133 = vld [vmem:[#allocation7 + $0xd8] sm:$0xff]
    %v1134 = vld [vmem:[#allocation7 + $0xe0] sm:$0xff]
    %v1135 = vld [vmem:[#allocation7 + $0xe8] sm:$0xff]
    %v1136 = vld [vmem:[#allocation7 + $0xf0] sm:$0xff]
    %v1137 = vld [vmem:[#allocation7 + $0xf8] sm:$0xff]
    %v1170 = vunpack.c.l.b16 %v1106
    %v1171 = vunpack.c.h.b16 %v1106
    %v1172 = vunpack.c.l.b16 %v1107
    %v1173 = vunpack.c.h.b16 %v1107
    %v1174 = vunpack.c.l.b16 %v1108
    %v1175 = vunpack.c.h.b16 %v1108
    %v1176 = vunpack.c.l.b16 %v1109
    %v1177 = vunpack.c.h.b16 %v1109
    %v1178 = vunpack.c.l.b16 %v1110
    %v1179 = vunpack.c.h.b16 %v1110
    %v1180 = vunpack.c.l.b16 %v1111
    %v1181 = vunpack.c.h.b16 %v1111
    %v1182 = vunpack.c.l.b16 %v1112
    %v1183 = vunpack.c.h.b16 %v1112
    %v1184 = vunpack.c.l.b16 %v1113
    %v1185 = vunpack.c.h.b16 %v1113
    %v1186 = vunpack.c.l.b16 %v1114
    %v1187 = vunpack.c.h.b16 %v1114
    %v1188 = vunpack.c.l.b16 %v1115
    %v1189 = vunpack.c.h.b16 %v1115
    %v1190 = vunpack.c.l.b16 %v1116
    %v1191 = vunpack.c.h.b16 %v1116
    %v1192 = vunpack.c.l.b16 %v1117
    %v1193 = vunpack.c.h.b16 %v1117
    %v1194 = vunpack.c.l.b16 %v1118
    %v1195 = vunpack.c.h.b16 %v1118
    %v1196 = vunpack.c.l.b16 %v1119
    %v1197 = vunpack.c.h.b16 %v1119
    %v1198 = vunpack.c.l.b16 %v1120
    %v1199 = vunpack.c.h.b16 %v1120
    %v1200 = vunpack.c.l.b16 %v1121
    %v1201 = vunpack.c.h.b16 %v1121
    %v1202 = vunpack.c.l.b16 %v1122
    %v1203 = vunpack.c.h.b16 %v1122
    %v1204 = vunpack.c.l.b16 %v1123
    %v1205 = vunpack.c.h.b16 %v1123
    %v1206 = vunpack.c.l.b16 %v1124
    %v1207 = vunpack.c.h.b16 %v1124
    %v1208 = vunpack.c.l.b16 %v1125
    %v1209 = vunpack.c.h.b16 %v1125
    %v1210 = vunpack.c.l.b16 %v1126
    %v1211 = vunpack.c.h.b16 %v1126
    %v1212 = vunpack.c.l.b16 %v1127
    %v1213 = vunpack.c.h.b16 %v1127
    %v1214 = vunpack.c.l.b16 %v1128
    %v1215 = vunpack.c.h.b16 %v1128
    %v1216 = vunpack.c.l.b16 %v1129
    %v1217 = vunpack.c.h.b16 %v1129
    %v1218 = vunpack.c.l.b16 %v1130
    %v1219 = vunpack.c.h.b16 %v1130
    %v1220 = vunpack.c.l.b16 %v1131
    %v1221 = vunpack.c.h.b16 %v1131
    %v1222 = vunpack.c.l.b16 %v1132
    %v1223 = vunpack.c.h.b16 %v1132
    %v1224 = vunpack.c.l.b16 %v1133
    %v1225 = vunpack.c.h.b16 %v1133
    %v1226 = vunpack.c.l.b16 %v1134
    %v1227 = vunpack.c.h.b16 %v1134
    %v1228 = vunpack.c.l.b16 %v1135
    %v1229 = vunpack.c.h.b16 %v1135
    %v1230 = vunpack.c.l.b16 %v1136
    %v1231 = vunpack.c.h.b16 %v1136
    %v1232 = vunpack.c.l.b16 %v1137
    %v1233 = vunpack.c.h.b16 %v1137
    %v1234 = vpack.c.b16 %v1174, %v1170
    %v1235 = vpack.c.b16 %v1175, %v1171
    %v1236 = vpack.c.b16 %v1176, %v1172
    %v1237 = vpack.c.b16 %v1177, %v1173
    %v1238 = vpack.c.b16 %v1182, %v1178
    %v1239 = vpack.c.b16 %v1183, %v1179
    %v1240 = vpack.c.b16 %v1184, %v1180
    %v1241 = vpack.c.b16 %v1185, %v1181
    %v1242 = vpack.c.b16 %v1190, %v1186
    %v1243 = vpack.c.b16 %v1191, %v1187
    %v1244 = vpack.c.b16 %v1192, %v1188
    %v1245 = vpack.c.b16 %v1193, %v1189
    %v1246 = vpack.c.b16 %v1198, %v1194
    %v1247 = vpack.c.b16 %v1199, %v1195
    %v1248 = vpack.c.b16 %v1200, %v1196
    %v1249 = vpack.c.b16 %v1201, %v1197
    %v1250 = vpack.c.b16 %v1206, %v1202
    %v1251 = vpack.c.b16 %v1207, %v1203
    %v1252 = vpack.c.b16 %v1208, %v1204
    %v1253 = vpack.c.b16 %v1209, %v1205
    %v1254 = vpack.c.b16 %v1214, %v1210
    %v1255 = vpack.c.b16 %v1215, %v1211
    %v1256 = vpack.c.b16 %v1216, %v1212
    %v1257 = vpack.c.b16 %v1217, %v1213
    %v1258 = vpack.c.b16 %v1222, %v1218
    %v1259 = vpack.c.b16 %v1223, %v1219
    %v1260 = vpack.c.b16 %v1224, %v1220
    %v1261 = vpack.c.b16 %v1225, %v1221
    %v1262 = vpack.c.b16 %v1230, %v1226
    %v1263 = vpack.c.b16 %v1231, %v1227
    %v1264 = vpack.c.b16 %v1232, %v1228
    %v1265 = vpack.c.b16 %v1233, %v1229
    %1298 = vmatprep.subr.bf16.mxu0 %v1235
    %1299 = vmatpush1.bf16.msra.mxu0 %v1234
    %1300 = vmatprep.subr.bf16.mxu0 %v1239
    %1301 = vmatpush1.bf16.msra.mxu0 %v1238
    %1302 = vmatprep.subr.bf16.mxu0 %v1243
    %1303 = vmatpush1.bf16.msra.mxu0 %v1242
    %1304 = vmatprep.subr.bf16.mxu0 %v1247
    %1305 = vmatpush1.bf16.msra.mxu0 %v1246
    %1306 = vmatprep.subr.bf16.mxu0 %v1251
    %1307 = vmatpush1.bf16.msra.mxu0 %v1250
    %1308 = vmatprep.subr.bf16.mxu0 %v1255
    %1309 = vmatpush1.bf16.msra.mxu0 %v1254
    %1310 = vmatprep.subr.bf16.mxu0 %v1259
    %1311 = vmatpush1.bf16.msra.mxu0 %v1258
    %1312 = vmatprep.subr.bf16.mxu0 %v1263
    %1313 = vmatpush1.bf16.msra.mxu0 %v1262
    %1314 = vmatprep.subr.bf16.mxu0 0
    %1315 = vmatpush1.bf16.msra.mxu0 0
    %1316 = vmatprep.subr.bf16.mxu0 0
    %1317 = vmatpush1.bf16.msra.mxu0 0
    %1318 = vmatprep.subr.bf16.mxu0 0
    %1319 = vmatpush1.bf16.msra.mxu0 0
    %1320 = vmatprep.subr.bf16.mxu0 0
    %1321 = vmatpush1.bf16.msra.mxu0 0
    %1322 = vmatprep.subr.bf16.mxu0 0
    %1323 = vmatpush1.bf16.msra.mxu0 0
    %1324 = vmatprep.subr.bf16.mxu0 0
    %1325 = vmatpush1.bf16.msra.mxu0 0
    %1326 = vmatprep.subr.bf16.mxu0 0
    %1327 = vmatpush1.bf16.msra.mxu0 0
    %1328 = vmatprep.subr.bf16.mxu0 0
    %1329 = vmatpush1.bf16.msra.mxu0 0
    %1330 = vmatprep.mubr.bf16.mxu0 0
    %1331 = vmatmul.mubr.bf16.gmra.mrb[0].mxu0 %v1105
    %v1332 = vpop.f32.mrb[0].mxu0
    %v1333 = vadd.f32 0.0, %v1332
    %v1334 = vpop.f32.mrb[0].mxu0
    %v1335 = vadd.f32 0.0, %v1334
    %v1336 = vpop.f32.mrb[0].mxu0
    %v1337 = vadd.f32 0.0, %v1336
    %v1338 = vpop.f32.mrb[0].mxu0
    %v1339 = vadd.f32 0.0, %v1338
    %1340 = vdwg.mxu0
    %1341 = vmatprep.subr.bf16.mxu0 %v1237
    %1342 = vmatpush1.bf16.msra.mxu0 %v1236
    %1343 = vmatprep.subr.bf16.mxu0 %v1241
    %1344 = vmatpush1.bf16.msra.mxu0 %v1240
    %1345 = vmatprep.subr.bf16.mxu0 %v1245
    %1346 = vmatpush1.bf16.msra.mxu0 %v1244
    %1347 = vmatprep.subr.bf16.mxu0 %v1249
    %1348 = vmatpush1.bf16.msra.mxu0 %v1248
    %1349 = vmatprep.subr.bf16.mxu0 %v1253
    %1350 = vmatpush1.bf16.msra.mxu0 %v1252
    %1351 = vmatprep.subr.bf16.mxu0 %v1257
    %1352 = vmatpush1.bf16.msra.mxu0 %v1256
    %1353 = vmatprep.subr.bf16.mxu0 %v1261
    %1354 = vmatpush1.bf16.msra.mxu0 %v1260
    %1355 = vmatprep.subr.bf16.mxu0 %v1265
    %1356 = vmatpush1.bf16.msra.mxu0 %v1264
    %1357 = vmatprep.subr.bf16.mxu0 0
    %1358 = vmatpush1.bf16.msra.mxu0 0
    %1359 = vmatprep.subr.bf16.mxu0 0
    %1360 = vmatpush1.bf16.msra.mxu0 0
    %1361 = vmatprep.subr.bf16.mxu0 0
    %1362 = vmatpush1.bf16.msra.mxu0 0
    %1363 = vmatprep.subr.bf16.mxu0 0
    %1364 = vmatpush1.bf16.msra.mxu0 0
    %1365 = vmatprep.subr.bf16.mxu0 0
    %1366 = vmatpush1.bf16.msra.mxu0 0
    %1367 = vmatprep.subr.bf16.mxu0 0
    %1368 = vmatpush1.bf16.msra.mxu0 0
    %1369 = vmatprep.subr.bf16.mxu0 0
    %1370 = vmatpush1.bf16.msra.mxu0 0
    %1371 = vmatprep.subr.bf16.mxu0 0
    %1372 = vmatpush1.bf16.msra.mxu0 0
    %1373 = vmatprep.mubr.bf16.mxu0 0
    %1374 = vmatmul.mubr.bf16.gmra.mrb[0].mxu0 %v1105
    %v1375 = vpop.f32.mrb[0].mxu0
    %v1376 = vadd.f32 0.0, %v1375
    %v1377 = vpop.f32.mrb[0].mxu0
    %v1378 = vadd.f32 0.0, %v1377
    %v1379 = vpop.f32.mrb[0].mxu0
    %v1380 = vadd.f32 0.0, %v1379
    %v1381 = vpop.f32.mrb[0].mxu0
    %v1382 = vadd.f32 0.0, %v1381
    %1383 = vdwg.mxu0
    %v1384 = vadd.f32 %v1097, %v1333
    %v1385 = vadd.f32 %v1098, %v1335
    %v1386 = vadd.f32 %v1099, %v1376
    %v1387 = vadd.f32 %v1100, %v1378
    %v1388 = vadd.f32 %v1101, %v1337
    %v1389 = vadd.f32 %v1102, %v1339
    %v1390 = vadd.f32 %v1103, %v1380
    %v1391 = vadd.f32 %v1104, %v1382
    %v1392 = vxor.u32 %v1384, 2147483648
    %v1393 = vxor.u32 %v1388, 2147483648
    %v1394 = vmul.f32 %v1392, 1.442695
    %v1395 = vpow.pop %v1394
    %v1396 = vmul.f32 %v1393, 1.442695
    %v1397 = vpow.pop %v1396
    %v1398 = vadd.f32 %v1395, 1.0
    %v1399 = vadd.f32 %v1397, 1.0
    %v1400 = vrcp.pop %v1398
    %v1401 = vmul.f32 1.0, %v1400
    %v1402 = vrcp.pop %v1399
    %v1403 = vmul.f32 1.0, %v1402
    %v1404 = vxor.u32 %v1385, 2147483648
    %v1405 = vxor.u32 %v1389, 2147483648
    %v1406 = vmul.f32 %v1404, 1.442695
    %v1407 = vpow.pop %v1406
    %v1408 = vmul.f32 %v1405, 1.442695
    %v1409 = vpow.pop %v1408
    %v1410 = vadd.f32 %v1407, 1.0
    %v1411 = vadd.f32 %v1409, 1.0
    %v1412 = vrcp.pop %v1410
    %v1413 = vmul.f32 1.0, %v1412
    %v1414 = vrcp.pop %v1411
    %v1415 = vmul.f32 1.0, %v1414
    %v1416 = vxor.u32 %v1386, 2147483648
    %v1417 = vxor.u32 %v1390, 2147483648
    %v1418 = vmul.f32 %v1416, 1.442695
    %v1419 = vpow.pop %v1418
    %v1420 = vmul.f32 %v1417, 1.442695
    %v1421 = vpow.pop %v1420
    %v1422 = vadd.f32 %v1419, 1.0
    %v1423 = vadd.f32 %v1421, 1.0
    %v1424 = vrcp.pop %v1422
    %v1425 = vmul.f32 1.0, %v1424
    %v1426 = vrcp.pop %v1423
    %v1427 = vmul.f32 1.0, %v1426
    %v1428 = vtanh.pop %v1387
    %v1429 = vtanh.pop %v1391
    %v1430 = vmul.f32 %v1401, %v1087
    %v1431 = vmul.f32 %v1403, %v1088
    %v1432 = vmul.f32 %v1413, %v1428
    %v1433 = vmul.f32 %v1415, %v1429
    %v1434 = vadd.f32 %v1430, %v1432
    %v1435 = vadd.f32 %v1431, %v1433
    %v1436 = vtanh.pop %v1434
    %v1437 = vtanh.pop %v1435
    %v1438 = vmul.f32 %v1425, %v1436
    %v1439 = vmul.f32 %v1427, %v1437
    %s1440 = scalar_lea.vmem [#allocation9], 48
    %1441 = vst [vmem:[%s1440] sm:$0xff] %v1438
    %1442 = vst [vmem:[%s1440 + $0x8] sm:$0xff] %v1439
    %s1443 = scalar_lea.vmem [#allocation4], 256
    %v1444 = vld [vmem:[%s1443] sm:$0xff]
    %v1445 = vld [vmem:[%s1443 + $0x8] sm:$0xff]
    %v1446 = vld [vmem:[%s1443 + $0x10] sm:$0xff]
    %v1447 = vld [vmem:[%s1443 + $0x18] sm:$0xff]
    %v1448 = vld [vmem:[%s1443 + $0x20] sm:$0xff]
    %v1449 = vld [vmem:[%s1443 + $0x28] sm:$0xff]
    %v1450 = vld [vmem:[%s1443 + $0x30] sm:$0xff]
    %v1451 = vld [vmem:[%s1443 + $0x38] sm:$0xff]
    %v1452 = vpack.c.bf16 %v1439, %v1438
    %v1453 = vld [vmem:[#allocation7] sm:$0xff]
    %v1454 = vld [vmem:[#allocation7 + $0x8] sm:$0xff]
    %v1455 = vld [vmem:[#allocation7 + $0x10] sm:$0xff]
    %v1456 = vld [vmem:[#allocation7 + $0x18] sm:$0xff]
    %v1457 = vld [vmem:[#allocation7 + $0x20] sm:$0xff]
    %v1458 = vld [vmem:[#allocation7 + $0x28] sm:$0xff]
    %v1459 = vld [vmem:[#allocation7 + $0x30] sm:$0xff]
    %v1460 = vld [vmem:[#allocation7 + $0x38] sm:$0xff]
    %v1461 = vld [vmem:[#allocation7 + $0x40] sm:$0xff]
    %v1462 = vld [vmem:[#allocation7 + $0x48] sm:$0xff]
    %v1463 = vld [vmem:[#allocation7 + $0x50] sm:$0xff]
    %v1464 = vld [vmem:[#allocation7 + $0x58] sm:$0xff]
    %v1465 = vld [vmem:[#allocation7 + $0x60] sm:$0xff]
    %v1466 = vld [vmem:[#allocation7 + $0x68] sm:$0xff]
    %v1467 = vld [vmem:[#allocation7 + $0x70] sm:$0xff]
    %v1468 = vld [vmem:[#allocation7 + $0x78] sm:$0xff]
    %v1469 = vld [vmem:[#allocation7 + $0x80] sm:$0xff]
    %v1470 = vld [vmem:[#allocation7 + $0x88] sm:$0xff]
    %v1471 = vld [vmem:[#allocation7 + $0x90] sm:$0xff]
    %v1472 = vld [vmem:[#allocation7 + $0x98] sm:$0xff]
    %v1473 = vld [vmem:[#allocation7 + $0xa0] sm:$0xff]
    %v1474 = vld [vmem:[#allocation7 + $0xa8] sm:$0xff]
    %v1475 = vld [vmem:[#allocation7 + $0xb0] sm:$0xff]
    %v1476 = vld [vmem:[#allocation7 + $0xb8] sm:$0xff]
    %v1477 = vld [vmem:[#allocation7 + $0xc0] sm:$0xff]
    %v1478 = vld [vmem:[#allocation7 + $0xc8] sm:$0xff]
    %v1479 = vld [vmem:[#allocation7 + $0xd0] sm:$0xff]
    %v1480 = vld [vmem:[#allocation7 + $0xd8] sm:$0xff]
    %v1481 = vld [vmem:[#allocation7 + $0xe0] sm:$0xff]
    %v1482 = vld [vmem:[#allocation7 + $0xe8] sm:$0xff]
    %v1483 = vld [vmem:[#allocation7 + $0xf0] sm:$0xff]
    %v1484 = vld [vmem:[#allocation7 + $0xf8] sm:$0xff]
    %v1517 = vunpack.c.l.b16 %v1453
    %v1518 = vunpack.c.h.b16 %v1453
    %v1519 = vunpack.c.l.b16 %v1454
    %v1520 = vunpack.c.h.b16 %v1454
    %v1521 = vunpack.c.l.b16 %v1455
    %v1522 = vunpack.c.h.b16 %v1455
    %v1523 = vunpack.c.l.b16 %v1456
    %v1524 = vunpack.c.h.b16 %v1456
    %v1525 = vunpack.c.l.b16 %v1457
    %v1526 = vunpack.c.h.b16 %v1457
    %v1527 = vunpack.c.l.b16 %v1458
    %v1528 = vunpack.c.h.b16 %v1458
    %v1529 = vunpack.c.l.b16 %v1459
    %v1530 = vunpack.c.h.b16 %v1459
    %v1531 = vunpack.c.l.b16 %v1460
    %v1532 = vunpack.c.h.b16 %v1460
    %v1533 = vunpack.c.l.b16 %v1461
    %v1534 = vunpack.c.h.b16 %v1461
    %v1535 = vunpack.c.l.b16 %v1462
    %v1536 = vunpack.c.h.b16 %v1462
    %v1537 = vunpack.c.l.b16 %v1463
    %v1538 = vunpack.c.h.b16 %v1463
    %v1539 = vunpack.c.l.b16 %v1464
    %v1540 = vunpack.c.h.b16 %v1464
    %v1541 = vunpack.c.l.b16 %v1465
    %v1542 = vunpack.c.h.b16 %v1465
    %v1543 = vunpack.c.l.b16 %v1466
    %v1544 = vunpack.c.h.b16 %v1466
    %v1545 = vunpack.c.l.b16 %v1467
    %v1546 = vunpack.c.h.b16 %v1467
    %v1547 = vunpack.c.l.b16 %v1468
    %v1548 = vunpack.c.h.b16 %v1468
    %v1549 = vunpack.c.l.b16 %v1469
    %v1550 = vunpack.c.h.b16 %v1469
    %v1551 = vunpack.c.l.b16 %v1470
    %v1552 = vunpack.c.h.b16 %v1470
    %v1553 = vunpack.c.l.b16 %v1471
    %v1554 = vunpack.c.h.b16 %v1471
    %v1555 = vunpack.c.l.b16 %v1472
    %v1556 = vunpack.c.h.b16 %v1472
    %v1557 = vunpack.c.l.b16 %v1473
    %v1558 = vunpack.c.h.b16 %v1473
    %v1559 = vunpack.c.l.b16 %v1474
    %v1560 = vunpack.c.h.b16 %v1474
    %v1561 = vunpack.c.l.b16 %v1475
    %v1562 = vunpack.c.h.b16 %v1475
    %v1563 = vunpack.c.l.b16 %v1476
    %v1564 = vunpack.c.h.b16 %v1476
    %v1565 = vunpack.c.l.b16 %v1477
    %v1566 = vunpack.c.h.b16 %v1477
    %v1567 = vunpack.c.l.b16 %v1478
    %v1568 = vunpack.c.h.b16 %v1478
    %v1569 = vunpack.c.l.b16 %v1479
    %v1570 = vunpack.c.h.b16 %v1479
    %v1571 = vunpack.c.l.b16 %v1480
    %v1572 = vunpack.c.h.b16 %v1480
    %v1573 = vunpack.c.l.b16 %v1481
    %v1574 = vunpack.c.h.b16 %v1481
    %v1575 = vunpack.c.l.b16 %v1482
    %v1576 = vunpack.c.h.b16 %v1482
    %v1577 = vunpack.c.l.b16 %v1483
    %v1578 = vunpack.c.h.b16 %v1483
    %v1579 = vunpack.c.l.b16 %v1484
    %v1580 = vunpack.c.h.b16 %v1484
    %v1581 = vpack.c.b16 %v1521, %v1517
    %v1582 = vpack.c.b16 %v1522, %v1518
    %v1583 = vpack.c.b16 %v1523, %v1519
    %v1584 = vpack.c.b16 %v1524, %v1520
    %v1585 = vpack.c.b16 %v1529, %v1525
    %v1586 = vpack.c.b16 %v1530, %v1526
    %v1587 = vpack.c.b16 %v1531, %v1527
    %v1588 = vpack.c.b16 %v1532, %v1528
    %v1589 = vpack.c.b16 %v1537, %v1533
    %v1590 = vpack.c.b16 %v1538, %v1534
    %v1591 = vpack.c.b16 %v1539, %v1535
    %v1592 = vpack.c.b16 %v1540, %v1536
    %v1593 = vpack.c.b16 %v1545, %v1541
    %v1594 = vpack.c.b16 %v1546, %v1542
    %v1595 = vpack.c.b16 %v1547, %v1543
    %v1596 = vpack.c.b16 %v1548, %v1544
    %v1597 = vpack.c.b16 %v1553, %v1549
    %v1598 = vpack.c.b16 %v1554, %v1550
    %v1599 = vpack.c.b16 %v1555, %v1551
    %v1600 = vpack.c.b16 %v1556, %v1552
    %v1601 = vpack.c.b16 %v1561, %v1557
    %v1602 = vpack.c.b16 %v1562, %v1558
    %v1603 = vpack.c.b16 %v1563, %v1559
    %v1604 = vpack.c.b16 %v1564, %v1560
    %v1605 = vpack.c.b16 %v1569, %v1565
    %v1606 = vpack.c.b16 %v1570, %v1566
    %v1607 = vpack.c.b16 %v1571, %v1567
    %v1608 = vpack.c.b16 %v1572, %v1568
    %v1609 = vpack.c.b16 %v1577, %v1573
    %v1610 = vpack.c.b16 %v1578, %v1574
    %v1611 = vpack.c.b16 %v1579, %v1575
    %v1612 = vpack.c.b16 %v1580, %v1576
    %1645 = vmatprep.subr.bf16.mxu0 %v1582
    %1646 = vmatpush1.bf16.msra.mxu0 %v1581
    %1647 = vmatprep.subr.bf16.mxu0 %v1586
    %1648 = vmatpush1.bf16.msra.mxu0 %v1585
    %1649 = vmatprep.subr.bf16.mxu0 %v1590
    %1650 = vmatpush1.bf16.msra.mxu0 %v1589
    %1651 = vmatprep.subr.bf16.mxu0 %v1594
    %1652 = vmatpush1.bf16.msra.mxu0 %v1593
    %1653 = vmatprep.subr.bf16.mxu0 %v1598
    %1654 = vmatpush1.bf16.msra.mxu0 %v1597
    %1655 = vmatprep.subr.bf16.mxu0 %v1602
    %1656 = vmatpush1.bf16.msra.mxu0 %v1601
    %1657 = vmatprep.subr.bf16.mxu0 %v1606
    %1658 = vmatpush1.bf16.msra.mxu0 %v1605
    %1659 = vmatprep.subr.bf16.mxu0 %v1610
    %1660 = vmatpush1.bf16.msra.mxu0 %v1609
    %1661 = vmatprep.subr.bf16.mxu0 0
    %1662 = vmatpush1.bf16.msra.mxu0 0
    %1663 = vmatprep.subr.bf16.mxu0 0
    %1664 = vmatpush1.bf16.msra.mxu0 0
    %1665 = vmatprep.subr.bf16.mxu0 0
    %1666 = vmatpush1.bf16.msra.mxu0 0
    %1667 = vmatprep.subr.bf16.mxu0 0
    %1668 = vmatpush1.bf16.msra.mxu0 0
    %1669 = vmatprep.subr.bf16.mxu0 0
    %1670 = vmatpush1.bf16.msra.mxu0 0
    %1671 = vmatprep.subr.bf16.mxu0 0
    %1672 = vmatpush1.bf16.msra.mxu0 0
    %1673 = vmatprep.subr.bf16.mxu0 0
    %1674 = vmatpush1.bf16.msra.mxu0 0
    %1675 = vmatprep.subr.bf16.mxu0 0
    %1676 = vmatpush1.bf16.msra.mxu0 0
    %1677 = vmatprep.mubr.bf16.mxu0 0
    %1678 = vmatmul.mubr.bf16.gmra.mrb[0].mxu0 %v1452
    %v1679 = vpop.f32.mrb[0].mxu0
    %v1680 = vadd.f32 0.0, %v1679
    %v1681 = vpop.f32.mrb[0].mxu0
    %v1682 = vadd.f32 0.0, %v1681
    %v1683 = vpop.f32.mrb[0].mxu0
    %v1684 = vadd.f32 0.0, %v1683
    %v1685 = vpop.f32.mrb[0].mxu0
    %v1686 = vadd.f32 0.0, %v1685
    %1687 = vdwg.mxu0
    %1688 = vmatprep.subr.bf16.mxu0 %v1584
    %1689 = vmatpush1.bf16.msra.mxu0 %v1583
    %1690 = vmatprep.subr.bf16.mxu0 %v1588
    %1691 = vmatpush1.bf16.msra.mxu0 %v1587
    %1692 = vmatprep.subr.bf16.mxu0 %v1592
    %1693 = vmatpush1.bf16.msra.mxu0 %v1591
    %1694 = vmatprep.subr.bf16.mxu0 %v1596
    %1695 = vmatpush1.bf16.msra.mxu0 %v1595
    %1696 = vmatprep.subr.bf16.mxu0 %v1600
    %1697 = vmatpush1.bf16.msra.mxu0 %v1599
    %1698 = vmatprep.subr.bf16.mxu0 %v1604
    %1699 = vmatpush1.bf16.msra.mxu0 %v1603
    %1700 = vmatprep.subr.bf16.mxu0 %v1608
    %1701 = vmatpush1.bf16.msra.mxu0 %v1607
    %1702 = vmatprep.subr.bf16.mxu0 %v1612
    %1703 = vmatpush1.bf16.msra.mxu0 %v1611
    %1704 = vmatprep.subr.bf16.mxu0 0
    %1705 = vmatpush1.bf16.msra.mxu0 0
    %1706 = vmatprep.subr.bf16.mxu0 0
    %1707 = vmatpush1.bf16.msra.mxu0 0
    %1708 = vmatprep.subr.bf16.mxu0 0
    %1709 = vmatpush1.bf16.msra.mxu0 0
    %1710 = vmatprep.subr.bf16.mxu0 0
    %1711 = vmatpush1.bf16.msra.mxu0 0
    %1712 = vmatprep.subr.bf16.mxu0 0
    %1713 = vmatpush1.bf16.msra.mxu0 0
    %1714 = vmatprep.subr.bf16.mxu0 0
    %1715 = vmatpush1.bf16.msra.mxu0 0
    %1716 = vmatprep.subr.bf16.mxu0 0
    %1717 = vmatpush1.bf16.msra.mxu0 0
    %1718 = vmatprep.subr.bf16.mxu0 0
    %1719 = vmatpush1.bf16.msra.mxu0 0
    %1720 = vmatprep.mubr.bf16.mxu0 0
    %1721 = vmatmul.mubr.bf16.gmra.mrb[0].mxu0 %v1452
    %v1722 = vpop.f32.mrb[0].mxu0
    %v1723 = vadd.f32 0.0, %v1722
    %v1724 = vpop.f32.mrb[0].mxu0
    %v1725 = vadd.f32 0.0, %v1724
    %v1726 = vpop.f32.mrb[0].mxu0
    %v1727 = vadd.f32 0.0, %v1726
    %v1728 = vpop.f32.mrb[0].mxu0
    %v1729 = vadd.f32 0.0, %v1728
    %1730 = vdwg.mxu0
    %v1731 = vadd.f32 %v1444, %v1680
    %v1732 = vadd.f32 %v1445, %v1682
    %v1733 = vadd.f32 %v1446, %v1723
    %v1734 = vadd.f32 %v1447, %v1725
    %v1735 = vadd.f32 %v1448, %v1684
    %v1736 = vadd.f32 %v1449, %v1686
    %v1737 = vadd.f32 %v1450, %v1727
    %v1738 = vadd.f32 %v1451, %v1729
    %v1739 = vxor.u32 %v1731, 2147483648
    %v1740 = vxor.u32 %v1735, 2147483648
    %v1741 = vmul.f32 %v1739, 1.442695
    %v1742 = vpow.pop %v1741
    %v1743 = vmul.f32 %v1740, 1.442695
    %v1744 = vpow.pop %v1743
    %v1745 = vadd.f32 %v1742, 1.0
    %v1746 = vadd.f32 %v1744, 1.0
    %v1747 = vrcp.pop %v1745
    %v1748 = vmul.f32 1.0, %v1747
    %v1749 = vrcp.pop %v1746
    %v1750 = vmul.f32 1.0, %v1749
    %v1751 = vxor.u32 %v1732, 2147483648
    %v1752 = vxor.u32 %v1736, 2147483648
    %v1753 = vmul.f32 %v1751, 1.442695
    %v1754 = vpow.pop %v1753
    %v1755 = vmul.f32 %v1752, 1.442695
    %v1756 = vpow.pop %v1755
    %v1757 = vadd.f32 %v1754, 1.0
    %v1758 = vadd.f32 %v1756, 1.0
    %v1759 = vrcp.pop %v1757
    %v1760 = vmul.f32 1.0, %v1759
    %v1761 = vrcp.pop %v1758
    %v1762 = vmul.f32 1.0, %v1761
    %v1763 = vxor.u32 %v1733, 2147483648
    %v1764 = vxor.u32 %v1737, 2147483648
    %v1765 = vmul.f32 %v1763, 1.442695
    %v1766 = vpow.pop %v1765
    %v1767 = vmul.f32 %v1764, 1.442695
    %v1768 = vpow.pop %v1767
    %v1769 = vadd.f32 %v1766, 1.0
    %v1770 = vadd.f32 %v1768, 1.0
    %v1771 = vrcp.pop %v1769
    %v1772 = vmul.f32 1.0, %v1771
    %v1773 = vrcp.pop %v1770
    %v1774 = vmul.f32 1.0, %v1773
    %v1775 = vtanh.pop %v1734
    %v1776 = vtanh.pop %v1738
    %v1777 = vmul.f32 %v1748, %v1434
    %v1778 = vmul.f32 %v1750, %v1435
    %v1779 = vmul.f32 %v1760, %v1775
    %v1780 = vmul.f32 %v1762, %v1776
    %v1781 = vadd.f32 %v1777, %v1779
    %v1782 = vadd.f32 %v1778, %v1780
    %v1783 = vtanh.pop %v1781
    %v1784 = vtanh.pop %v1782
    %v1785 = vmul.f32 %v1772, %v1783
    %v1786 = vmul.f32 %v1774, %v1784
    %s1787 = scalar_lea.vmem [#allocation9], 64
    %1788 = vst [vmem:[%s1787] sm:$0xff] %v1785
    %1789 = vst [vmem:[%s1787 + $0x8] sm:$0xff] %v1786
    %s1790 = scalar_lea.vmem [#allocation4], 320
    %v1791 = vld [vmem:[%s1790] sm:$0xff]
    %v1792 = vld [vmem:[%s1790 + $0x8] sm:$0xff]
    %v1793 = vld [vmem:[%s1790 + $0x10] sm:$0xff]
    %v1794 = vld [vmem:[%s1790 + $0x18] sm:$0xff]
    %v1795 = vld [vmem:[%s1790 + $0x20] sm:$0xff]
    %v1796 = vld [vmem:[%s1790 + $0x28] sm:$0xff]
    %v1797 = vld [vmem:[%s1790 + $0x30] sm:$0xff]
    %v1798 = vld [vmem:[%s1790 + $0x38] sm:$0xff]
    %v1799 = vpack.c.bf16 %v1786, %v1785
    %v1800 = vld [vmem:[#allocation7] sm:$0xff]
    %v1801 = vld [vmem:[#allocation7 + $0x8] sm:$0xff]
    %v1802 = vld [vmem:[#allocation7 + $0x10] sm:$0xff]
    %v1803 = vld [vmem:[#allocation7 + $0x18] sm:$0xff]
    %v1804 = vld [vmem:[#allocation7 + $0x20] sm:$0xff]
    %v1805 = vld [vmem:[#allocation7 + $0x28] sm:$0xff]
    %v1806 = vld [vmem:[#allocation7 + $0x30] sm:$0xff]
    %v1807 = vld [vmem:[#allocation7 + $0x38] sm:$0xff]
    %v1808 = vld [vmem:[#allocation7 + $0x40] sm:$0xff]
    %v1809 = vld [vmem:[#allocation7 + $0x48] sm:$0xff]
    %v1810 = vld [vmem:[#allocation7 + $0x50] sm:$0xff]
    %v1811 = vld [vmem:[#allocation7 + $0x58] sm:$0xff]
    %v1812 = vld [vmem:[#allocation7 + $0x60] sm:$0xff]
    %v1813 = vld [vmem:[#allocation7 + $0x68] sm:$0xff]
    %v1814 = vld [vmem:[#allocation7 + $0x70] sm:$0xff]
    %v1815 = vld [vmem:[#allocation7 + $0x78] sm:$0xff]
    %v1816 = vld [vmem:[#allocation7 + $0x80] sm:$0xff]
    %v1817 = vld [vmem:[#allocation7 + $0x88] sm:$0xff]
    %v1818 = vld [vmem:[#allocation7 + $0x90] sm:$0xff]
    %v1819 = vld [vmem:[#allocation7 + $0x98] sm:$0xff]
    %v1820 = vld [vmem:[#allocation7 + $0xa0] sm:$0xff]
    %v1821 = vld [vmem:[#allocation7 + $0xa8] sm:$0xff]
    %v1822 = vld [vmem:[#allocation7 + $0xb0] sm:$0xff]
    %v1823 = vld [vmem:[#allocation7 + $0xb8] sm:$0xff]
    %v1824 = vld [vmem:[#allocation7 + $0xc0] sm:$0xff]
    %v1825 = vld [vmem:[#allocation7 + $0xc8] sm:$0xff]
    %v1826 = vld [vmem:[#allocation7 + $0xd0] sm:$0xff]
    %v1827 = vld [vmem:[#allocation7 + $0xd8] sm:$0xff]
    %v1828 = vld [vmem:[#allocation7 + $0xe0] sm:$0xff]
    %v1829 = vld [vmem:[#allocation7 + $0xe8] sm:$0xff]
    %v1830 = vld [vmem:[#allocation7 + $0xf0] sm:$0xff]
    %v1831 = vld [vmem:[#allocation7 + $0xf8] sm:$0xff]
    %v1864 = vunpack.c.l.b16 %v1800
    %v1865 = vunpack.c.h.b16 %v1800
    %v1866 = vunpack.c.l.b16 %v1801
    %v1867 = vunpack.c.h.b16 %v1801
    %v1868 = vunpack.c.l.b16 %v1802
    %v1869 = vunpack.c.h.b16 %v1802
    %v1870 = vunpack.c.l.b16 %v1803
    %v1871 = vunpack.c.h.b16 %v1803
    %v1872 = vunpack.c.l.b16 %v1804
    %v1873 = vunpack.c.h.b16 %v1804
    %v1874 = vunpack.c.l.b16 %v1805
    %v1875 = vunpack.c.h.b16 %v1805
    %v1876 = vunpack.c.l.b16 %v1806
    %v1877 = vunpack.c.h.b16 %v1806
    %v1878 = vunpack.c.l.b16 %v1807
    %v1879 = vunpack.c.h.b16 %v1807
    %v1880 = vunpack.c.l.b16 %v1808
    %v1881 = vunpack.c.h.b16 %v1808
    %v1882 = vunpack.c.l.b16 %v1809
    %v1883 = vunpack.c.h.b16 %v1809
    %v1884 = vunpack.c.l.b16 %v1810
    %v1885 = vunpack.c.h.b16 %v1810
    %v1886 = vunpack.c.l.b16 %v1811
    %v1887 = vunpack.c.h.b16 %v1811
    %v1888 = vunpack.c.l.b16 %v1812
    %v1889 = vunpack.c.h.b16 %v1812
    %v1890 = vunpack.c.l.b16 %v1813
    %v1891 = vunpack.c.h.b16 %v1813
    %v1892 = vunpack.c.l.b16 %v1814
    %v1893 = vunpack.c.h.b16 %v1814
    %v1894 = vunpack.c.l.b16 %v1815
    %v1895 = vunpack.c.h.b16 %v1815
    %v1896 = vunpack.c.l.b16 %v1816
    %v1897 = vunpack.c.h.b16 %v1816
    %v1898 = vunpack.c.l.b16 %v1817
    %v1899 = vunpack.c.h.b16 %v1817
    %v1900 = vunpack.c.l.b16 %v1818
    %v1901 = vunpack.c.h.b16 %v1818
    %v1902 = vunpack.c.l.b16 %v1819
    %v1903 = vunpack.c.h.b16 %v1819
    %v1904 = vunpack.c.l.b16 %v1820
    %v1905 = vunpack.c.h.b16 %v1820
    %v1906 = vunpack.c.l.b16 %v1821
    %v1907 = vunpack.c.h.b16 %v1821
    %v1908 = vunpack.c.l.b16 %v1822
    %v1909 = vunpack.c.h.b16 %v1822
    %v1910 = vunpack.c.l.b16 %v1823
    %v1911 = vunpack.c.h.b16 %v1823
    %v1912 = vunpack.c.l.b16 %v1824
    %v1913 = vunpack.c.h.b16 %v1824
    %v1914 = vunpack.c.l.b16 %v1825
    %v1915 = vunpack.c.h.b16 %v1825
    %v1916 = vunpack.c.l.b16 %v1826
    %v1917 = vunpack.c.h.b16 %v1826
    %v1918 = vunpack.c.l.b16 %v1827
    %v1919 = vunpack.c.h.b16 %v1827
    %v1920 = vunpack.c.l.b16 %v1828
    %v1921 = vunpack.c.h.b16 %v1828
    %v1922 = vunpack.c.l.b16 %v1829
    %v1923 = vunpack.c.h.b16 %v1829
    %v1924 = vunpack.c.l.b16 %v1830
    %v1925 = vunpack.c.h.b16 %v1830
    %v1926 = vunpack.c.l.b16 %v1831
    %v1927 = vunpack.c.h.b16 %v1831
    %v1928 = vpack.c.b16 %v1868, %v1864
    %v1929 = vpack.c.b16 %v1869, %v1865
    %v1930 = vpack.c.b16 %v1870, %v1866
    %v1931 = vpack.c.b16 %v1871, %v1867
    %v1932 = vpack.c.b16 %v1876, %v1872
    %v1933 = vpack.c.b16 %v1877, %v1873
    %v1934 = vpack.c.b16 %v1878, %v1874
    %v1935 = vpack.c.b16 %v1879, %v1875
    %v1936 = vpack.c.b16 %v1884, %v1880
    %v1937 = vpack.c.b16 %v1885, %v1881
    %v1938 = vpack.c.b16 %v1886, %v1882
    %v1939 = vpack.c.b16 %v1887, %v1883
    %v1940 = vpack.c.b16 %v1892, %v1888
    %v1941 = vpack.c.b16 %v1893, %v1889
    %v1942 = vpack.c.b16 %v1894, %v1890
    %v1943 = vpack.c.b16 %v1895, %v1891
    %v1944 = vpack.c.b16 %v1900, %v1896
    %v1945 = vpack.c.b16 %v1901, %v1897
    %v1946 = vpack.c.b16 %v1902, %v1898
    %v1947 = vpack.c.b16 %v1903, %v1899
    %v1948 = vpack.c.b16 %v1908, %v1904
    %v1949 = vpack.c.b16 %v1909, %v1905
    %v1950 = vpack.c.b16 %v1910, %v1906
    %v1951 = vpack.c.b16 %v1911, %v1907
    %v1952 = vpack.c.b16 %v1916, %v1912
    %v1953 = vpack.c.b16 %v1917, %v1913
    %v1954 = vpack.c.b16 %v1918, %v1914
    %v1955 = vpack.c.b16 %v1919, %v1915
    %v1956 = vpack.c.b16 %v1924, %v1920
    %v1957 = vpack.c.b16 %v1925, %v1921
    %v1958 = vpack.c.b16 %v1926, %v1922
    %v1959 = vpack.c.b16 %v1927, %v1923
    %1992 = vmatprep.subr.bf16.mxu0 %v1929
    %1993 = vmatpush1.bf16.msra.mxu0 %v1928
    %1994 = vmatprep.subr.bf16.mxu0 %v1933
    %1995 = vmatpush1.bf16.msra.mxu0 %v1932
    %1996 = vmatprep.subr.bf16.mxu0 %v1937
    %1997 = vmatpush1.bf16.msra.mxu0 %v1936
    %1998 = vmatprep.subr.bf16.mxu0 %v1941
    %1999 = vmatpush1.bf16.msra.mxu0 %v1940
    %2000 = vmatprep.subr.bf16.mxu0 %v1945
    %2001 = vmatpush1.bf16.msra.mxu0 %v1944
    %2002 = vmatprep.subr.bf16.mxu0 %v1949
    %2003 = vmatpush1.bf16.msra.mxu0 %v1948
    %2004 = vmatprep.subr.bf16.mxu0 %v1953
    %2005 = vmatpush1.bf16.msra.mxu0 %v1952
    %2006 = vmatprep.subr.bf16.mxu0 %v1957
    %2007 = vmatpush1.bf16.msra.mxu0 %v1956
    %2008 = vmatprep.subr.bf16.mxu0 0
    %2009 = vmatpush1.bf16.msra.mxu0 0
    %2010 = vmatprep.subr.bf16.mxu0 0
    %2011 = vmatpush1.bf16.msra.mxu0 0
    %2012 = vmatprep.subr.bf16.mxu0 0
    %2013 = vmatpush1.bf16.msra.mxu0 0
    %2014 = vmatprep.subr.bf16.mxu0 0
    %2015 = vmatpush1.bf16.msra.mxu0 0
    %2016 = vmatprep.subr.bf16.mxu0 0
    %2017 = vmatpush1.bf16.msra.mxu0 0
    %2018 = vmatprep.subr.bf16.mxu0 0
    %2019 = vmatpush1.bf16.msra.mxu0 0
    %2020 = vmatprep.subr.bf16.mxu0 0
    %2021 = vmatpush1.bf16.msra.mxu0 0
    %2022 = vmatprep.subr.bf16.mxu0 0
    %2023 = vmatpush1.bf16.msra.mxu0 0
    %2024 = vmatprep.mubr.bf16.mxu0 0
    %2025 = vmatmul.mubr.bf16.gmra.mrb[0].mxu0 %v1799
    %v2026 = vpop.f32.mrb[0].mxu0
    %v2027 = vadd.f32 0.0, %v2026
    %v2028 = vpop.f32.mrb[0].mxu0
    %v2029 = vadd.f32 0.0, %v2028
    %v2030 = vpop.f32.mrb[0].mxu0
    %v2031 = vadd.f32 0.0, %v2030
    %v2032 = vpop.f32.mrb[0].mxu0
    %v2033 = vadd.f32 0.0, %v2032
    %2034 = vdwg.mxu0
    %2035 = vmatprep.subr.bf16.mxu0 %v1931
    %2036 = vmatpush1.bf16.msra.mxu0 %v1930
    %2037 = vmatprep.subr.bf16.mxu0 %v1935
    %2038 = vmatpush1.bf16.msra.mxu0 %v1934
    %2039 = vmatprep.subr.bf16.mxu0 %v1939
    %2040 = vmatpush1.bf16.msra.mxu0 %v1938
    %2041 = vmatprep.subr.bf16.mxu0 %v1943
    %2042 = vmatpush1.bf16.msra.mxu0 %v1942
    %2043 = vmatprep.subr.bf16.mxu0 %v1947
    %2044 = vmatpush1.bf16.msra.mxu0 %v1946
    %2045 = vmatprep.subr.bf16.mxu0 %v1951
    %2046 = vmatpush1.bf16.msra.mxu0 %v1950
    %2047 = vmatprep.subr.bf16.mxu0 %v1955
    %2048 = vmatpush1.bf16.msra.mxu0 %v1954
    %2049 = vmatprep.subr.bf16.mxu0 %v1959
    %2050 = vmatpush1.bf16.msra.mxu0 %v1958
    %2051 = vmatprep.subr.bf16.mxu0 0
    %2052 = vmatpush1.bf16.msra.mxu0 0
    %2053 = vmatprep.subr.bf16.mxu0 0
    %2054 = vmatpush1.bf16.msra.mxu0 0
    %2055 = vmatprep.subr.bf16.mxu0 0
    %2056 = vmatpush1.bf16.msra.mxu0 0
    %2057 = vmatprep.subr.bf16.mxu0 0
    %2058 = vmatpush1.bf16.msra.mxu0 0
    %2059 = vmatprep.subr.bf16.mxu0 0
    %2060 = vmatpush1.bf16.msra.mxu0 0
    %2061 = vmatprep.subr.bf16.mxu0 0
    %2062 = vmatpush1.bf16.msra.mxu0 0
    %2063 = vmatprep.subr.bf16.mxu0 0
    %2064 = vmatpush1.bf16.msra.mxu0 0
    %2065 = vmatprep.subr.bf16.mxu0 0
    %2066 = vmatpush1.bf16.msra.mxu0 0
    %2067 = vmatprep.mubr.bf16.mxu0 0
    %2068 = vmatmul.mubr.bf16.gmra.mrb[0].mxu0 %v1799
    %v2069 = vpop.f32.mrb[0].mxu0
    %v2070 = vadd.f32 0.0, %v2069
    %v2071 = vpop.f32.mrb[0].mxu0
    %v2072 = vadd.f32 0.0, %v2071
    %v2073 = vpop.f32.mrb[0].mxu0
    %v2074 = vadd.f32 0.0, %v2073
    %v2075 = vpop.f32.mrb[0].mxu0
    %v2076 = vadd.f32 0.0, %v2075
    %2077 = vdwg.mxu0
    %v2078 = vadd.f32 %v1791, %v2027
    %v2079 = vadd.f32 %v1792, %v2029
    %v2080 = vadd.f32 %v1793, %v2070
    %v2081 = vadd.f32 %v1794, %v2072
    %v2082 = vadd.f32 %v1795, %v2031
    %v2083 = vadd.f32 %v1796, %v2033
    %v2084 = vadd.f32 %v1797, %v2074
    %v2085 = vadd.f32 %v1798, %v2076
    %v2086 = vxor.u32 %v2078, 2147483648
    %v2087 = vxor.u32 %v2082, 2147483648
    %v2088 = vmul.f32 %v2086, 1.442695
    %v2089 = vpow.pop %v2088
    %v2090 = vmul.f32 %v2087, 1.442695
    %v2091 = vpow.pop %v2090
    %v2092 = vadd.f32 %v2089, 1.0
    %v2093 = vadd.f32 %v2091, 1.0
    %v2094 = vrcp.pop %v2092
    %v2095 = vmul.f32 1.0, %v2094
    %v2096 = vrcp.pop %v2093
    %v2097 = vmul.f32 1.0, %v2096
    %v2098 = vxor.u32 %v2079, 2147483648
    %v2099 = vxor.u32 %v2083, 2147483648
    %v2100 = vmul.f32 %v2098, 1.442695
    %v2101 = vpow.pop %v2100
    %v2102 = vmul.f32 %v2099, 1.442695
    %v2103 = vpow.pop %v2102
    %v2104 = vadd.f32 %v2101, 1.0
    %v2105 = vadd.f32 %v2103, 1.0
    %v2106 = vrcp.pop %v2104
    %v2107 = vmul.f32 1.0, %v2106
    %v2108 = vrcp.pop %v2105
    %v2109 = vmul.f32 1.0, %v2108
    %v2110 = vxor.u32 %v2080, 2147483648
    %v2111 = vxor.u32 %v2084, 2147483648
    %v2112 = vmul.f32 %v2110, 1.442695
    %v2113 = vpow.pop %v2112
    %v2114 = vmul.f32 %v2111, 1.442695
    %v2115 = vpow.pop %v2114
    %v2116 = vadd.f32 %v2113, 1.0
    %v2117 = vadd.f32 %v2115, 1.0
    %v2118 = vrcp.pop %v2116
    %v2119 = vmul.f32 1.0, %v2118
    %v2120 = vrcp.pop %v2117
    %v2121 = vmul.f32 1.0, %v2120
    %v2122 = vtanh.pop %v2081
    %v2123 = vtanh.pop %v2085
    %v2124 = vmul.f32 %v2095, %v1781
    %v2125 = vmul.f32 %v2097, %v1782
    %v2126 = vmul.f32 %v2107, %v2122
    %v2127 = vmul.f32 %v2109, %v2123
    %v2128 = vadd.f32 %v2124, %v2126
    %v2129 = vadd.f32 %v2125, %v2127
    %v2130 = vtanh.pop %v2128
    %v2131 = vtanh.pop %v2129
    %v2132 = vmul.f32 %v2119, %v2130
    %v2133 = vmul.f32 %v2121, %v2131
    %s2134 = scalar_lea.vmem [#allocation9], 80
    %2135 = vst [vmem:[%s2134] sm:$0xff] %v2132
    %2136 = vst [vmem:[%s2134 + $0x8] sm:$0xff] %v2133
    %s2137 = scalar_lea.vmem [#allocation4], 384
    %v2138 = vld [vmem:[%s2137] sm:$0xff]
    %v2139 = vld [vmem:[%s2137 + $0x8] sm:$0xff]
    %v2140 = vld [vmem:[%s2137 + $0x10] sm:$0xff]
    %v2141 = vld [vmem:[%s2137 + $0x18] sm:$0xff]
    %v2142 = vld [vmem:[%s2137 + $0x20] sm:$0xff]
    %v2143 = vld [vmem:[%s2137 + $0x28] sm:$0xff]
    %v2144 = vld [vmem:[%s2137 + $0x30] sm:$0xff]
    %v2145 = vld [vmem:[%s2137 + $0x38] sm:$0xff]
    %v2146 = vpack.c.bf16 %v2133, %v2132
    %v2147 = vld [vmem:[#allocation7] sm:$0xff]
    %v2148 = vld [vmem:[#allocation7 + $0x8] sm:$0xff]
    %v2149 = vld [vmem:[#allocation7 + $0x10] sm:$0xff]
    %v2150 = vld [vmem:[#allocation7 + $0x18] sm:$0xff]
    %v2151 = vld [vmem:[#allocation7 + $0x20] sm:$0xff]
    %v2152 = vld [vmem:[#allocation7 + $0x28] sm:$0xff]
    %v2153 = vld [vmem:[#allocation7 + $0x30] sm:$0xff]
    %v2154 = vld [vmem:[#allocation7 + $0x38] sm:$0xff]
    %v2155 = vld [vmem:[#allocation7 + $0x40] sm:$0xff]
    %v2156 = vld [vmem:[#allocation7 + $0x48] sm:$0xff]
    %v2157 = vld [vmem:[#allocation7 + $0x50] sm:$0xff]
    %v2158 = vld [vmem:[#allocation7 + $0x58] sm:$0xff]
    %v2159 = vld [vmem:[#allocation7 + $0x60] sm:$0xff]
    %v2160 = vld [vmem:[#allocation7 + $0x68] sm:$0xff]
    %v2161 = vld [vmem:[#allocation7 + $0x70] sm:$0xff]
    %v2162 = vld [vmem:[#allocation7 + $0x78] sm:$0xff]
    %v2163 = vld [vmem:[#allocation7 + $0x80] sm:$0xff]
    %v2164 = vld [vmem:[#allocation7 + $0x88] sm:$0xff]
    %v2165 = vld [vmem:[#allocation7 + $0x90] sm:$0xff]
    %v2166 = vld [vmem:[#allocation7 + $0x98] sm:$0xff]
    %v2167 = vld [vmem:[#allocation7 + $0xa0] sm:$0xff]
    %v2168 = vld [vmem:[#allocation7 + $0xa8] sm:$0xff]
    %v2169 = vld [vmem:[#allocation7 + $0xb0] sm:$0xff]
    %v2170 = vld [vmem:[#allocation7 + $0xb8] sm:$0xff]
    %v2171 = vld [vmem:[#allocation7 + $0xc0] sm:$0xff]
    %v2172 = vld [vmem:[#allocation7 + $0xc8] sm:$0xff]
    %v2173 = vld [vmem:[#allocation7 + $0xd0] sm:$0xff]
    %v2174 = vld [vmem:[#allocation7 + $0xd8] sm:$0xff]
    %v2175 = vld [vmem:[#allocation7 + $0xe0] sm:$0xff]
    %v2176 = vld [vmem:[#allocation7 + $0xe8] sm:$0xff]
    %v2177 = vld [vmem:[#allocation7 + $0xf0] sm:$0xff]
    %v2178 = vld [vmem:[#allocation7 + $0xf8] sm:$0xff]
    %v2211 = vunpack.c.l.b16 %v2147
    %v2212 = vunpack.c.h.b16 %v2147
    %v2213 = vunpack.c.l.b16 %v2148
    %v2214 = vunpack.c.h.b16 %v2148
    %v2215 = vunpack.c.l.b16 %v2149
    %v2216 = vunpack.c.h.b16 %v2149
    %v2217 = vunpack.c.l.b16 %v2150
    %v2218 = vunpack.c.h.b16 %v2150
    %v2219 = vunpack.c.l.b16 %v2151
    %v2220 = vunpack.c.h.b16 %v2151
    %v2221 = vunpack.c.l.b16 %v2152
    %v2222 = vunpack.c.h.b16 %v2152
    %v2223 = vunpack.c.l.b16 %v2153
    %v2224 = vunpack.c.h.b16 %v2153
    %v2225 = vunpack.c.l.b16 %v2154
    %v2226 = vunpack.c.h.b16 %v2154
    %v2227 = vunpack.c.l.b16 %v2155
    %v2228 = vunpack.c.h.b16 %v2155
    %v2229 = vunpack.c.l.b16 %v2156
    %v2230 = vunpack.c.h.b16 %v2156
    %v2231 = vunpack.c.l.b16 %v2157
    %v2232 = vunpack.c.h.b16 %v2157
    %v2233 = vunpack.c.l.b16 %v2158
    %v2234 = vunpack.c.h.b16 %v2158
    %v2235 = vunpack.c.l.b16 %v2159
    %v2236 = vunpack.c.h.b16 %v2159
    %v2237 = vunpack.c.l.b16 %v2160
    %v2238 = vunpack.c.h.b16 %v2160
    %v2239 = vunpack.c.l.b16 %v2161
    %v2240 = vunpack.c.h.b16 %v2161
    %v2241 = vunpack.c.l.b16 %v2162
    %v2242 = vunpack.c.h.b16 %v2162
    %v2243 = vunpack.c.l.b16 %v2163
    %v2244 = vunpack.c.h.b16 %v2163
    %v2245 = vunpack.c.l.b16 %v2164
    %v2246 = vunpack.c.h.b16 %v2164
    %v2247 = vunpack.c.l.b16 %v2165
    %v2248 = vunpack.c.h.b16 %v2165
    %v2249 = vunpack.c.l.b16 %v2166
    %v2250 = vunpack.c.h.b16 %v2166
    %v2251 = vunpack.c.l.b16 %v2167
    %v2252 = vunpack.c.h.b16 %v2167
    %v2253 = vunpack.c.l.b16 %v2168
    %v2254 = vunpack.c.h.b16 %v2168
    %v2255 = vunpack.c.l.b16 %v2169
    %v2256 = vunpack.c.h.b16 %v2169
    %v2257 = vunpack.c.l.b16 %v2170
    %v2258 = vunpack.c.h.b16 %v2170
    %v2259 = vunpack.c.l.b16 %v2171
    %v2260 = vunpack.c.h.b16 %v2171
    %v2261 = vunpack.c.l.b16 %v2172
    %v2262 = vunpack.c.h.b16 %v2172
    %v2263 = vunpack.c.l.b16 %v2173
    %v2264 = vunpack.c.h.b16 %v2173
    %v2265 = vunpack.c.l.b16 %v2174
    %v2266 = vunpack.c.h.b16 %v2174
    %v2267 = vunpack.c.l.b16 %v2175
    %v2268 = vunpack.c.h.b16 %v2175
    %v2269 = vunpack.c.l.b16 %v2176
    %v2270 = vunpack.c.h.b16 %v2176
    %v2271 = vunpack.c.l.b16 %v2177
    %v2272 = vunpack.c.h.b16 %v2177
    %v2273 = vunpack.c.l.b16 %v2178
    %v2274 = vunpack.c.h.b16 %v2178
    %v2275 = vpack.c.b16 %v2215, %v2211
    %v2276 = vpack.c.b16 %v2216, %v2212
    %v2277 = vpack.c.b16 %v2217, %v2213
    %v2278 = vpack.c.b16 %v2218, %v2214
    %v2279 = vpack.c.b16 %v2223, %v2219
    %v2280 = vpack.c.b16 %v2224, %v2220
    %v2281 = vpack.c.b16 %v2225, %v2221
    %v2282 = vpack.c.b16 %v2226, %v2222
    %v2283 = vpack.c.b16 %v2231, %v2227
    %v2284 = vpack.c.b16 %v2232, %v2228
    %v2285 = vpack.c.b16 %v2233, %v2229
    %v2286 = vpack.c.b16 %v2234, %v2230
    %v2287 = vpack.c.b16 %v2239, %v2235
    %v2288 = vpack.c.b16 %v2240, %v2236
    %v2289 = vpack.c.b16 %v2241, %v2237
    %v2290 = vpack.c.b16 %v2242, %v2238
    %v2291 = vpack.c.b16 %v2247, %v2243
    %v2292 = vpack.c.b16 %v2248, %v2244
    %v2293 = vpack.c.b16 %v2249, %v2245
    %v2294 = vpack.c.b16 %v2250, %v2246
    %v2295 = vpack.c.b16 %v2255, %v2251
    %v2296 = vpack.c.b16 %v2256, %v2252
    %v2297 = vpack.c.b16 %v2257, %v2253
    %v2298 = vpack.c.b16 %v2258, %v2254
    %v2299 = vpack.c.b16 %v2263, %v2259
    %v2300 = vpack.c.b16 %v2264, %v2260
    %v2301 = vpack.c.b16 %v2265, %v2261
    %v2302 = vpack.c.b16 %v2266, %v2262
    %v2303 = vpack.c.b16 %v2271, %v2267
    %v2304 = vpack.c.b16 %v2272, %v2268
    %v2305 = vpack.c.b16 %v2273, %v2269
    %v2306 = vpack.c.b16 %v2274, %v2270
    %2339 = vmatprep.subr.bf16.mxu0 %v2276
    %2340 = vmatpush1.bf16.msra.mxu0 %v2275
    %2341 = vmatprep.subr.bf16.mxu0 %v2280
    %2342 = vmatpush1.bf16.msra.mxu0 %v2279
    %2343 = vmatprep.subr.bf16.mxu0 %v2284
    %2344 = vmatpush1.bf16.msra.mxu0 %v2283
    %2345 = vmatprep.subr.bf16.mxu0 %v2288
    %2346 = vmatpush1.bf16.msra.mxu0 %v2287
    %2347 = vmatprep.subr.bf16.mxu0 %v2292
    %2348 = vmatpush1.bf16.msra.mxu0 %v2291
    %2349 = vmatprep.subr.bf16.mxu0 %v2296
    %2350 = vmatpush1.bf16.msra.mxu0 %v2295
    %2351 = vmatprep.subr.bf16.mxu0 %v2300
    %2352 = vmatpush1.bf16.msra.mxu0 %v2299
    %2353 = vmatprep.subr.bf16.mxu0 %v2304
    %2354 = vmatpush1.bf16.msra.mxu0 %v2303
    %2355 = vmatprep.subr.bf16.mxu0 0
    %2356 = vmatpush1.bf16.msra.mxu0 0
    %2357 = vmatprep.subr.bf16.mxu0 0
    %2358 = vmatpush1.bf16.msra.mxu0 0
    %2359 = vmatprep.subr.bf16.mxu0 0
    %2360 = vmatpush1.bf16.msra.mxu0 0
    %2361 = vmatprep.subr.bf16.mxu0 0
    %2362 = vmatpush1.bf16.msra.mxu0 0
    %2363 = vmatprep.subr.bf16.mxu0 0
    %2364 = vmatpush1.bf16.msra.mxu0 0
    %2365 = vmatprep.subr.bf16.mxu0 0
    %2366 = vmatpush1.bf16.msra.mxu0 0
    %2367 = vmatprep.subr.bf16.mxu0 0
    %2368 = vmatpush1.bf16.msra.mxu0 0
    %2369 = vmatprep.subr.bf16.mxu0 0
    %2370 = vmatpush1.bf16.msra.mxu0 0
    %2371 = vmatprep.mubr.bf16.mxu0 0
    %2372 = vmatmul.mubr.bf16.gmra.mrb[0].mxu0 %v2146
    %v2373 = vpop.f32.mrb[0].mxu0
    %v2374 = vadd.f32 0.0, %v2373
    %v2375 = vpop.f32.mrb[0].mxu0
    %v2376 = vadd.f32 0.0, %v2375
    %v2377 = vpop.f32.mrb[0].mxu0
    %v2378 = vadd.f32 0.0, %v2377
    %v2379 = vpop.f32.mrb[0].mxu0
    %v2380 = vadd.f32 0.0, %v2379
    %2381 = vdwg.mxu0
    %2382 = vmatprep.subr.bf16.mxu0 %v2278
    %2383 = vmatpush1.bf16.msra.mxu0 %v2277
    %2384 = vmatprep.subr.bf16.mxu0 %v2282
    %2385 = vmatpush1.bf16.msra.mxu0 %v2281
    %2386 = vmatprep.subr.bf16.mxu0 %v2286
    %2387 = vmatpush1.bf16.msra.mxu0 %v2285
    %2388 = vmatprep.subr.bf16.mxu0 %v2290
    %2389 = vmatpush1.bf16.msra.mxu0 %v2289
    %2390 = vmatprep.subr.bf16.mxu0 %v2294
    %2391 = vmatpush1.bf16.msra.mxu0 %v2293
    %2392 = vmatprep.subr.bf16.mxu0 %v2298
    %2393 = vmatpush1.bf16.msra.mxu0 %v2297
    %2394 = vmatprep.subr.bf16.mxu0 %v2302
    %2395 = vmatpush1.bf16.msra.mxu0 %v2301
    %2396 = vmatprep.subr.bf16.mxu0 %v2306
    %2397 = vmatpush1.bf16.msra.mxu0 %v2305
    %2398 = vmatprep.subr.bf16.mxu0 0
    %2399 = vmatpush1.bf16.msra.mxu0 0
    %2400 = vmatprep.subr.bf16.mxu0 0
    %2401 = vmatpush1.bf16.msra.mxu0 0
    %2402 = vmatprep.subr.bf16.mxu0 0
    %2403 = vmatpush1.bf16.msra.mxu0 0
    %2404 = vmatprep.subr.bf16.mxu0 0
    %2405 = vmatpush1.bf16.msra.mxu0 0
    %2406 = vmatprep.subr.bf16.mxu0 0
    %2407 = vmatpush1.bf16.msra.mxu0 0
    %2408 = vmatprep.subr.bf16.mxu0 0
    %2409 = vmatpush1.bf16.msra.mxu0 0
    %2410 = vmatprep.subr.bf16.mxu0 0
    %2411 = vmatpush1.bf16.msra.mxu0 0
    %2412 = vmatprep.subr.bf16.mxu0 0
    %2413 = vmatpush1.bf16.msra.mxu0 0
    %2414 = vmatprep.mubr.bf16.mxu0 0
    %2415 = vmatmul.mubr.bf16.gmra.mrb[0].mxu0 %v2146
    %v2416 = vpop.f32.mrb[0].mxu0
    %v2417 = vadd.f32 0.0, %v2416
    %v2418 = vpop.f32.mrb[0].mxu0
    %v2419 = vadd.f32 0.0, %v2418
    %v2420 = vpop.f32.mrb[0].mxu0
    %v2421 = vadd.f32 0.0, %v2420
    %v2422 = vpop.f32.mrb[0].mxu0
    %v2423 = vadd.f32 0.0, %v2422
    %2424 = vdwg.mxu0
    %v2425 = vadd.f32 %v2138, %v2374
    %v2426 = vadd.f32 %v2139, %v2376
    %v2427 = vadd.f32 %v2140, %v2417
    %v2428 = vadd.f32 %v2141, %v2419
    %v2429 = vadd.f32 %v2142, %v2378
    %v2430 = vadd.f32 %v2143, %v2380
    %v2431 = vadd.f32 %v2144, %v2421
    %v2432 = vadd.f32 %v2145, %v2423
    %v2433 = vxor.u32 %v2425, 2147483648
    %v2434 = vxor.u32 %v2429, 2147483648
    %v2435 = vmul.f32 %v2433, 1.442695
    %v2436 = vpow.pop %v2435
    %v2437 = vmul.f32 %v2434, 1.442695
    %v2438 = vpow.pop %v2437
    %v2439 = vadd.f32 %v2436, 1.0
    %v2440 = vadd.f32 %v2438, 1.0
    %v2441 = vrcp.pop %v2439
    %v2442 = vmul.f32 1.0, %v2441
    %v2443 = vrcp.pop %v2440
    %v2444 = vmul.f32 1.0, %v2443
    %v2445 = vxor.u32 %v2426, 2147483648
    %v2446 = vxor.u32 %v2430, 2147483648
    %v2447 = vmul.f32 %v2445, 1.442695
    %v2448 = vpow.pop %v2447
    %v2449 = vmul.f32 %v2446, 1.442695
    %v2450 = vpow.pop %v2449
    %v2451 = vadd.f32 %v2448, 1.0
    %v2452 = vadd.f32 %v2450, 1.0
    %v2453 = vrcp.pop %v2451
    %v2454 = vmul.f32 1.0, %v2453
    %v2455 = vrcp.pop %v2452
    %v2456 = vmul.f32 1.0, %v2455
    %v2457 = vxor.u32 %v2427, 2147483648
    %v2458 = vxor.u32 %v2431, 2147483648
    %v2459 = vmul.f32 %v2457, 1.442695
    %v2460 = vpow.pop %v2459
    %v2461 = vmul.f32 %v2458, 1.442695
    %v2462 = vpow.pop %v2461
    %v2463 = vadd.f32 %v2460, 1.0
    %v2464 = vadd.f32 %v2462, 1.0
    %v2465 = vrcp.pop %v2463
    %v2466 = vmul.f32 1.0, %v2465
    %v2467 = vrcp.pop %v2464
    %v2468 = vmul.f32 1.0, %v2467
    %v2469 = vtanh.pop %v2428
    %v2470 = vtanh.pop %v2432
    %v2471 = vmul.f32 %v2442, %v2128
    %v2472 = vmul.f32 %v2444, %v2129
    %v2473 = vmul.f32 %v2454, %v2469
    %v2474 = vmul.f32 %v2456, %v2470
    %v2475 = vadd.f32 %v2471, %v2473
    %v2476 = vadd.f32 %v2472, %v2474
    %v2477 = vtanh.pop %v2475
    %v2478 = vtanh.pop %v2476
    %v2479 = vmul.f32 %v2466, %v2477
    %v2480 = vmul.f32 %v2468, %v2478
    %s2481 = scalar_lea.vmem [#allocation9], 96
    %2482 = vst [vmem:[%s2481] sm:$0xff] %v2479
    %2483 = vst [vmem:[%s2481 + $0x8] sm:$0xff] %v2480
    %s2484 = scalar_lea.vmem [#allocation4], 448
    %v2485 = vld [vmem:[%s2484] sm:$0xff]
    %v2486 = vld [vmem:[%s2484 + $0x8] sm:$0xff]
    %v2487 = vld [vmem:[%s2484 + $0x10] sm:$0xff]
    %v2488 = vld [vmem:[%s2484 + $0x18] sm:$0xff]
    %v2489 = vld [vmem:[%s2484 + $0x20] sm:$0xff]
    %v2490 = vld [vmem:[%s2484 + $0x28] sm:$0xff]
    %v2491 = vld [vmem:[%s2484 + $0x30] sm:$0xff]
    %v2492 = vld [vmem:[%s2484 + $0x38] sm:$0xff]
    %v2493 = vpack.c.bf16 %v2480, %v2479
    %v2494 = vld [vmem:[#allocation7] sm:$0xff]
    %v2495 = vld [vmem:[#allocation7 + $0x8] sm:$0xff]
    %v2496 = vld [vmem:[#allocation7 + $0x10] sm:$0xff]
    %v2497 = vld [vmem:[#allocation7 + $0x18] sm:$0xff]
    %v2498 = vld [vmem:[#allocation7 + $0x20] sm:$0xff]
    %v2499 = vld [vmem:[#allocation7 + $0x28] sm:$0xff]
    %v2500 = vld [vmem:[#allocation7 + $0x30] sm:$0xff]
    %v2501 = vld [vmem:[#allocation7 + $0x38] sm:$0xff]
    %v2502 = vld [vmem:[#allocation7 + $0x40] sm:$0xff]
    %v2503 = vld [vmem:[#allocation7 + $0x48] sm:$0xff]
    %v2504 = vld [vmem:[#allocation7 + $0x50] sm:$0xff]
    %v2505 = vld [vmem:[#allocation7 + $0x58] sm:$0xff]
    %v2506 = vld [vmem:[#allocation7 + $0x60] sm:$0xff]
    %v2507 = vld [vmem:[#allocation7 + $0x68] sm:$0xff]
    %v2508 = vld [vmem:[#allocation7 + $0x70] sm:$0xff]
    %v2509 = vld [vmem:[#allocation7 + $0x78] sm:$0xff]
    %v2510 = vld [vmem:[#allocation7 + $0x80] sm:$0xff]
    %v2511 = vld [vmem:[#allocation7 + $0x88] sm:$0xff]
    %v2512 = vld [vmem:[#allocation7 + $0x90] sm:$0xff]
    %v2513 = vld [vmem:[#allocation7 + $0x98] sm:$0xff]
    %v2514 = vld [vmem:[#allocation7 + $0xa0] sm:$0xff]
    %v2515 = vld [vmem:[#allocation7 + $0xa8] sm:$0xff]
    %v2516 = vld [vmem:[#allocation7 + $0xb0] sm:$0xff]
    %v2517 = vld [vmem:[#allocation7 + $0xb8] sm:$0xff]
    %v2518 = vld [vmem:[#allocation7 + $0xc0] sm:$0xff]
    %v2519 = vld [vmem:[#allocation7 + $0xc8] sm:$0xff]
    %v2520 = vld [vmem:[#allocation7 + $0xd0] sm:$0xff]
    %v2521 = vld [vmem:[#allocation7 + $0xd8] sm:$0xff]
    %v2522 = vld [vmem:[#allocation7 + $0xe0] sm:$0xff]
    %v2523 = vld [vmem:[#allocation7 + $0xe8] sm:$0xff]
    %v2524 = vld [vmem:[#allocation7 + $0xf0] sm:$0xff]
    %v2525 = vld [vmem:[#allocation7 + $0xf8] sm:$0xff]
    %v2558 = vunpack.c.l.b16 %v2494
    %v2559 = vunpack.c.h.b16 %v2494
    %v2560 = vunpack.c.l.b16 %v2495
    %v2561 = vunpack.c.h.b16 %v2495
    %v2562 = vunpack.c.l.b16 %v2496
    %v2563 = vunpack.c.h.b16 %v2496
    %v2564 = vunpack.c.l.b16 %v2497
    %v2565 = vunpack.c.h.b16 %v2497
    %v2566 = vunpack.c.l.b16 %v2498
    %v2567 = vunpack.c.h.b16 %v2498
    %v2568 = vunpack.c.l.b16 %v2499
    %v2569 = vunpack.c.h.b16 %v2499
    %v2570 = vunpack.c.l.b16 %v2500
    %v2571 = vunpack.c.h.b16 %v2500
    %v2572 = vunpack.c.l.b16 %v2501
    %v2573 = vunpack.c.h.b16 %v2501
    %v2574 = vunpack.c.l.b16 %v2502
    %v2575 = vunpack.c.h.b16 %v2502
    %v2576 = vunpack.c.l.b16 %v2503
    %v2577 = vunpack.c.h.b16 %v2503
    %v2578 = vunpack.c.l.b16 %v2504
    %v2579 = vunpack.c.h.b16 %v2504
    %v2580 = vunpack.c.l.b16 %v2505
    %v2581 = vunpack.c.h.b16 %v2505
    %v2582 = vunpack.c.l.b16 %v2506
    %v2583 = vunpack.c.h.b16 %v2506
    %v2584 = vunpack.c.l.b16 %v2507
    %v2585 = vunpack.c.h.b16 %v2507
    %v2586 = vunpack.c.l.b16 %v2508
    %v2587 = vunpack.c.h.b16 %v2508
    %v2588 = vunpack.c.l.b16 %v2509
    %v2589 = vunpack.c.h.b16 %v2509
    %v2590 = vunpack.c.l.b16 %v2510
    %v2591 = vunpack.c.h.b16 %v2510
    %v2592 = vunpack.c.l.b16 %v2511
    %v2593 = vunpack.c.h.b16 %v2511
    %v2594 = vunpack.c.l.b16 %v2512
    %v2595 = vunpack.c.h.b16 %v2512
    %v2596 = vunpack.c.l.b16 %v2513
    %v2597 = vunpack.c.h.b16 %v2513
    %v2598 = vunpack.c.l.b16 %v2514
    %v2599 = vunpack.c.h.b16 %v2514
    %v2600 = vunpack.c.l.b16 %v2515
    %v2601 = vunpack.c.h.b16 %v2515
    %v2602 = vunpack.c.l.b16 %v2516
    %v2603 = vunpack.c.h.b16 %v2516
    %v2604 = vunpack.c.l.b16 %v2517
    %v2605 = vunpack.c.h.b16 %v2517
    %v2606 = vunpack.c.l.b16 %v2518
    %v2607 = vunpack.c.h.b16 %v2518
    %v2608 = vunpack.c.l.b16 %v2519
    %v2609 = vunpack.c.h.b16 %v2519
    %v2610 = vunpack.c.l.b16 %v2520
    %v2611 = vunpack.c.h.b16 %v2520
    %v2612 = vunpack.c.l.b16 %v2521
    %v2613 = vunpack.c.h.b16 %v2521
    %v2614 = vunpack.c.l.b16 %v2522
    %v2615 = vunpack.c.h.b16 %v2522
    %v2616 = vunpack.c.l.b16 %v2523
    %v2617 = vunpack.c.h.b16 %v2523
    %v2618 = vunpack.c.l.b16 %v2524
    %v2619 = vunpack.c.h.b16 %v2524
    %v2620 = vunpack.c.l.b16 %v2525
    %v2621 = vunpack.c.h.b16 %v2525
    %v2622 = vpack.c.b16 %v2562, %v2558
    %v2623 = vpack.c.b16 %v2563, %v2559
    %v2624 = vpack.c.b16 %v2564, %v2560
    %v2625 = vpack.c.b16 %v2565, %v2561
    %v2626 = vpack.c.b16 %v2570, %v2566
    %v2627 = vpack.c.b16 %v2571, %v2567
    %v2628 = vpack.c.b16 %v2572, %v2568
    %v2629 = vpack.c.b16 %v2573, %v2569
    %v2630 = vpack.c.b16 %v2578, %v2574
    %v2631 = vpack.c.b16 %v2579, %v2575
    %v2632 = vpack.c.b16 %v2580, %v2576
    %v2633 = vpack.c.b16 %v2581, %v2577
    %v2634 = vpack.c.b16 %v2586, %v2582
    %v2635 = vpack.c.b16 %v2587, %v2583
    %v2636 = vpack.c.b16 %v2588, %v2584
    %v2637 = vpack.c.b16 %v2589, %v2585
    %v2638 = vpack.c.b16 %v2594, %v2590
    %v2639 = vpack.c.b16 %v2595, %v2591
    %v2640 = vpack.c.b16 %v2596, %v2592
    %v2641 = vpack.c.b16 %v2597, %v2593
    %v2642 = vpack.c.b16 %v2602, %v2598
    %v2643 = vpack.c.b16 %v2603, %v2599
    %v2644 = vpack.c.b16 %v2604, %v2600
    %v2645 = vpack.c.b16 %v2605, %v2601
    %v2646 = vpack.c.b16 %v2610, %v2606
    %v2647 = vpack.c.b16 %v2611, %v2607
    %v2648 = vpack.c.b16 %v2612, %v2608
    %v2649 = vpack.c.b16 %v2613, %v2609
    %v2650 = vpack.c.b16 %v2618, %v2614
    %v2651 = vpack.c.b16 %v2619, %v2615
    %v2652 = vpack.c.b16 %v2620, %v2616
    %v2653 = vpack.c.b16 %v2621, %v2617
    %2686 = vmatprep.subr.bf16.mxu0 %v2623
    %2687 = vmatpush1.bf16.msra.mxu0 %v2622
    %2688 = vmatprep.subr.bf16.mxu0 %v2627
    %2689 = vmatpush1.bf16.msra.mxu0 %v2626
    %2690 = vmatprep.subr.bf16.mxu0 %v2631
    %2691 = vmatpush1.bf16.msra.mxu0 %v2630
    %2692 = vmatprep.subr.bf16.mxu0 %v2635
    %2693 = vmatpush1.bf16.msra.mxu0 %v2634
    %2694 = vmatprep.subr.bf16.mxu0 %v2639
    %2695 = vmatpush1.bf16.msra.mxu0 %v2638
    %2696 = vmatprep.subr.bf16.mxu0 %v2643
    %2697 = vmatpush1.bf16.msra.mxu0 %v2642
    %2698 = vmatprep.subr.bf16.mxu0 %v2647
    %2699 = vmatpush1.bf16.msra.mxu0 %v2646
    %2700 = vmatprep.subr.bf16.mxu0 %v2651
    %2701 = vmatpush1.bf16.msra.mxu0 %v2650
    %2702 = vmatprep.subr.bf16.mxu0 0
    %2703 = vmatpush1.bf16.msra.mxu0 0
    %2704 = vmatprep.subr.bf16.mxu0 0
    %2705 = vmatpush1.bf16.msra.mxu0 0
    %2706 = vmatprep.subr.bf16.mxu0 0
    %2707 = vmatpush1.bf16.msra.mxu0 0
    %2708 = vmatprep.subr.bf16.mxu0 0
    %2709 = vmatpush1.bf16.msra.mxu0 0
    %2710 = vmatprep.subr.bf16.mxu0 0
    %2711 = vmatpush1.bf16.msra.mxu0 0
    %2712 = vmatprep.subr.bf16.mxu0 0
    %2713 = vmatpush1.bf16.msra.mxu0 0
    %2714 = vmatprep.subr.bf16.mxu0 0
    %2715 = vmatpush1.bf16.msra.mxu0 0
    %2716 = vmatprep.subr.bf16.mxu0 0
    %2717 = vmatpush1.bf16.msra.mxu0 0
    %2718 = vmatprep.mubr.bf16.mxu0 0
    %2719 = vmatmul.mubr.bf16.gmra.mrb[0].mxu0 %v2493
    %v2720 = vpop.f32.mrb[0].mxu0
    %v2721 = vadd.f32 0.0, %v2720
    %v2722 = vpop.f32.mrb[0].mxu0
    %v2723 = vadd.f32 0.0, %v2722
    %v2724 = vpop.f32.mrb[0].mxu0
    %v2725 = vadd.f32 0.0, %v2724
    %v2726 = vpop.f32.mrb[0].mxu0
    %v2727 = vadd.f32 0.0, %v2726
    %2728 = vdwg.mxu0
    %2729 = vmatprep.subr.bf16.mxu0 %v2625
    %2730 = vmatpush1.bf16.msra.mxu0 %v2624
    %2731 = vmatprep.subr.bf16.mxu0 %v2629
    %2732 = vmatpush1.bf16.msra.mxu0 %v2628
    %2733 = vmatprep.subr.bf16.mxu0 %v2633
    %2734 = vmatpush1.bf16.msra.mxu0 %v2632
    %2735 = vmatprep.subr.bf16.mxu0 %v2637
    %2736 = vmatpush1.bf16.msra.mxu0 %v2636
    %2737 = vmatprep.subr.bf16.mxu0 %v2641
    %2738 = vmatpush1.bf16.msra.mxu0 %v2640
    %2739 = vmatprep.subr.bf16.mxu0 %v2645
    %2740 = vmatpush1.bf16.msra.mxu0 %v2644
    %2741 = vmatprep.subr.bf16.mxu0 %v2649
    %2742 = vmatpush1.bf16.msra.mxu0 %v2648
    %2743 = vmatprep.subr.bf16.mxu0 %v2653
    %2744 = vmatpush1.bf16.msra.mxu0 %v2652
    %2745 = vmatprep.subr.bf16.mxu0 0
    %2746 = vmatpush1.bf16.msra.mxu0 0
    %2747 = vmatprep.subr.bf16.mxu0 0
    %2748 = vmatpush1.bf16.msra.mxu0 0
    %2749 = vmatprep.subr.bf16.mxu0 0
    %2750 = vmatpush1.bf16.msra.mxu0 0
    %2751 = vmatprep.subr.bf16.mxu0 0
    %2752 = vmatpush1.bf16.msra.mxu0 0
    %2753 = vmatprep.subr.bf16.mxu0 0
    %2754 = vmatpush1.bf16.msra.mxu0 0
    %2755 = vmatprep.subr.bf16.mxu0 0
    %2756 = vmatpush1.bf16.msra.mxu0 0
    %2757 = vmatprep.subr.bf16.mxu0 0
    %2758 = vmatpush1.bf16.msra.mxu0 0
    %2759 = vmatprep.subr.bf16.mxu0 0
    %2760 = vmatpush1.bf16.msra.mxu0 0
    %2761 = vmatprep.mubr.bf16.mxu0 0
    %2762 = vmatmul.mubr.bf16.gmra.mrb[0].mxu0 %v2493
    %v2763 = vpop.f32.mrb[0].mxu0
    %v2764 = vadd.f32 0.0, %v2763
    %v2765 = vpop.f32.mrb[0].mxu0
    %v2766 = vadd.f32 0.0, %v2765
    %v2767 = vpop.f32.mrb[0].mxu0
    %v2768 = vadd.f32 0.0, %v2767
    %v2769 = vpop.f32.mrb[0].mxu0
    %v2770 = vadd.f32 0.0, %v2769
    %2771 = vdwg.mxu0
    %v2772 = vadd.f32 %v2485, %v2721
    %v2773 = vadd.f32 %v2486, %v2723
    %v2774 = vadd.f32 %v2487, %v2764
    %v2775 = vadd.f32 %v2488, %v2766
    %v2776 = vadd.f32 %v2489, %v2725
    %v2777 = vadd.f32 %v2490, %v2727
    %v2778 = vadd.f32 %v2491, %v2768
    %v2779 = vadd.f32 %v2492, %v2770
    %v2780 = vxor.u32 %v2772, 2147483648
    %v2781 = vxor.u32 %v2776, 2147483648
    %v2782 = vmul.f32 %v2780, 1.442695
    %v2783 = vpow.pop %v2782
    %v2784 = vmul.f32 %v2781, 1.442695
    %v2785 = vpow.pop %v2784
    %v2786 = vadd.f32 %v2783, 1.0
    %v2787 = vadd.f32 %v2785, 1.0
    %v2788 = vrcp.pop %v2786
    %v2789 = vmul.f32 1.0, %v2788
    %v2790 = vrcp.pop %v2787
    %v2791 = vmul.f32 1.0, %v2790
    %v2792 = vxor.u32 %v2773, 2147483648
    %v2793 = vxor.u32 %v2777, 2147483648
    %v2794 = vmul.f32 %v2792, 1.442695
    %v2795 = vpow.pop %v2794
    %v2796 = vmul.f32 %v2793, 1.442695
    %v2797 = vpow.pop %v2796
    %v2798 = vadd.f32 %v2795, 1.0
    %v2799 = vadd.f32 %v2797, 1.0
    %v2800 = vrcp.pop %v2798
    %v2801 = vmul.f32 1.0, %v2800
    %v2802 = vrcp.pop %v2799
    %v2803 = vmul.f32 1.0, %v2802
    %v2804 = vxor.u32 %v2774, 2147483648
    %v2805 = vxor.u32 %v2778, 2147483648
    %v2806 = vmul.f32 %v2804, 1.442695
    %v2807 = vpow.pop %v2806
    %v2808 = vmul.f32 %v2805, 1.442695
    %v2809 = vpow.pop %v2808
    %v2810 = vadd.f32 %v2807, 1.0
    %v2811 = vadd.f32 %v2809, 1.0
    %v2812 = vrcp.pop %v2810
    %v2813 = vmul.f32 1.0, %v2812
    %v2814 = vrcp.pop %v2811
    %v2815 = vmul.f32 1.0, %v2814
    %v2816 = vtanh.pop %v2775
    %v2817 = vtanh.pop %v2779
    %v2818 = vmul.f32 %v2789, %v2475
    %v2819 = vmul.f32 %v2791, %v2476
    %v2820 = vmul.f32 %v2801, %v2816
    %v2821 = vmul.f32 %v2803, %v2817
    %v2822 = vadd.f32 %v2818, %v2820
    %v2823 = vadd.f32 %v2819, %v2821
    %v2824 = vtanh.pop %v2822
    %v2825 = vtanh.pop %v2823
    %v2826 = vmul.f32 %v2813, %v2824
    %v2827 = vmul.f32 %v2815, %v2825
    %s2828 = scalar_lea.vmem [#allocation9], 112
    %2829 = vst [vmem:[%s2828] sm:$0xff] %v2826
    %2830 = vst [vmem:[%s2828 + $0x8] sm:$0xff] %v2827
    %s2831 = scalar_lea.vmem [#allocation4], 512
    %v2832 = vld [vmem:[%s2831] sm:$0xff]
    %v2833 = vld [vmem:[%s2831 + $0x8] sm:$0xff]
    %v2834 = vld [vmem:[%s2831 + $0x10] sm:$0xff]
    %v2835 = vld [vmem:[%s2831 + $0x18] sm:$0xff]
    %v2836 = vld [vmem:[%s2831 + $0x20] sm:$0xff]
    %v2837 = vld [vmem:[%s2831 + $0x28] sm:$0xff]
    %v2838 = vld [vmem:[%s2831 + $0x30] sm:$0xff]
    %v2839 = vld [vmem:[%s2831 + $0x38] sm:$0xff]
    %v2840 = vpack.c.bf16 %v2827, %v2826
    %v2841 = vld [vmem:[#allocation7] sm:$0xff]
    %v2842 = vld [vmem:[#allocation7 + $0x8] sm:$0xff]
    %v2843 = vld [vmem:[#allocation7 + $0x10] sm:$0xff]
    %v2844 = vld [vmem:[#allocation7 + $0x18] sm:$0xff]
    %v2845 = vld [vmem:[#allocation7 + $0x20] sm:$0xff]
    %v2846 = vld [vmem:[#allocation7 + $0x28] sm:$0xff]
    %v2847 = vld [vmem:[#allocation7 + $0x30] sm:$0xff]
    %v2848 = vld [vmem:[#allocation7 + $0x38] sm:$0xff]
    %v2849 = vld [vmem:[#allocation7 + $0x40] sm:$0xff]
    %v2850 = vld [vmem:[#allocation7 + $0x48] sm:$0xff]
    %v2851 = vld [vmem:[#allocation7 + $0x50] sm:$0xff]
    %v2852 = vld [vmem:[#allocation7 + $0x58] sm:$0xff]
    %v2853 = vld [vmem:[#allocation7 + $0x60] sm:$0xff]
    %v2854 = vld [vmem:[#allocation7 + $0x68] sm:$0xff]
    %v2855 = vld [vmem:[#allocation7 + $0x70] sm:$0xff]
    %v2856 = vld [vmem:[#allocation7 + $0x78] sm:$0xff]
    %v2857 = vld [vmem:[#allocation7 + $0x80] sm:$0xff]
    %v2858 = vld [vmem:[#allocation7 + $0x88] sm:$0xff]
    %v2859 = vld [vmem:[#allocation7 + $0x90] sm:$0xff]
    %v2860 = vld [vmem:[#allocation7 + $0x98] sm:$0xff]
    %v2861 = vld [vmem:[#allocation7 + $0xa0] sm:$0xff]
    %v2862 = vld [vmem:[#allocation7 + $0xa8] sm:$0xff]
    %v2863 = vld [vmem:[#allocation7 + $0xb0] sm:$0xff]
    %v2864 = vld [vmem:[#allocation7 + $0xb8] sm:$0xff]
    %v2865 = vld [vmem:[#allocation7 + $0xc0] sm:$0xff]
    %v2866 = vld [vmem:[#allocation7 + $0xc8] sm:$0xff]
    %v2867 = vld [vmem:[#allocation7 + $0xd0] sm:$0xff]
    %v2868 = vld [vmem:[#allocation7 + $0xd8] sm:$0xff]
    %v2869 = vld [vmem:[#allocation7 + $0xe0] sm:$0xff]
    %v2870 = vld [vmem:[#allocation7 + $0xe8] sm:$0xff]
    %v2871 = vld [vmem:[#allocation7 + $0xf0] sm:$0xff]
    %v2872 = vld [vmem:[#allocation7 + $0xf8] sm:$0xff]
    %v2905 = vunpack.c.l.b16 %v2841
    %v2906 = vunpack.c.h.b16 %v2841
    %v2907 = vunpack.c.l.b16 %v2842
    %v2908 = vunpack.c.h.b16 %v2842
    %v2909 = vunpack.c.l.b16 %v2843
    %v2910 = vunpack.c.h.b16 %v2843
    %v2911 = vunpack.c.l.b16 %v2844
    %v2912 = vunpack.c.h.b16 %v2844
    %v2913 = vunpack.c.l.b16 %v2845
    %v2914 = vunpack.c.h.b16 %v2845
    %v2915 = vunpack.c.l.b16 %v2846
    %v2916 = vunpack.c.h.b16 %v2846
    %v2917 = vunpack.c.l.b16 %v2847
    %v2918 = vunpack.c.h.b16 %v2847
    %v2919 = vunpack.c.l.b16 %v2848
    %v2920 = vunpack.c.h.b16 %v2848
    %v2921 = vunpack.c.l.b16 %v2849
    %v2922 = vunpack.c.h.b16 %v2849
    %v2923 = vunpack.c.l.b16 %v2850
    %v2924 = vunpack.c.h.b16 %v2850
    %v2925 = vunpack.c.l.b16 %v2851
    %v2926 = vunpack.c.h.b16 %v2851
    %v2927 = vunpack.c.l.b16 %v2852
    %v2928 = vunpack.c.h.b16 %v2852
    %v2929 = vunpack.c.l.b16 %v2853
    %v2930 = vunpack.c.h.b16 %v2853
    %v2931 = vunpack.c.l.b16 %v2854
    %v2932 = vunpack.c.h.b16 %v2854
    %v2933 = vunpack.c.l.b16 %v2855
    %v2934 = vunpack.c.h.b16 %v2855
    %v2935 = vunpack.c.l.b16 %v2856
    %v2936 = vunpack.c.h.b16 %v2856
    %v2937 = vunpack.c.l.b16 %v2857
    %v2938 = vunpack.c.h.b16 %v2857
    %v2939 = vunpack.c.l.b16 %v2858
    %v2940 = vunpack.c.h.b16 %v2858
    %v2941 = vunpack.c.l.b16 %v2859
    %v2942 = vunpack.c.h.b16 %v2859
    %v2943 = vunpack.c.l.b16 %v2860
    %v2944 = vunpack.c.h.b16 %v2860
    %v2945 = vunpack.c.l.b16 %v2861
    %v2946 = vunpack.c.h.b16 %v2861
    %v2947 = vunpack.c.l.b16 %v2862
    %v2948 = vunpack.c.h.b16 %v2862
    %v2949 = vunpack.c.l.b16 %v2863
    %v2950 = vunpack.c.h.b16 %v2863
    %v2951 = vunpack.c.l.b16 %v2864
    %v2952 = vunpack.c.h.b16 %v2864
    %v2953 = vunpack.c.l.b16 %v2865
    %v2954 = vunpack.c.h.b16 %v2865
    %v2955 = vunpack.c.l.b16 %v2866
    %v2956 = vunpack.c.h.b16 %v2866
    %v2957 = vunpack.c.l.b16 %v2867
    %v2958 = vunpack.c.h.b16 %v2867
    %v2959 = vunpack.c.l.b16 %v2868
    %v2960 = vunpack.c.h.b16 %v2868
    %v2961 = vunpack.c.l.b16 %v2869
    %v2962 = vunpack.c.h.b16 %v2869
    %v2963 = vunpack.c.l.b16 %v2870
    %v2964 = vunpack.c.h.b16 %v2870
    %v2965 = vunpack.c.l.b16 %v2871
    %v2966 = vunpack.c.h.b16 %v2871
    %v2967 = vunpack.c.l.b16 %v2872
    %v2968 = vunpack.c.h.b16 %v2872
    %v2969 = vpack.c.b16 %v2909, %v2905
    %v2970 = vpack.c.b16 %v2910, %v2906
    %v2971 = vpack.c.b16 %v2911, %v2907
    %v2972 = vpack.c.b16 %v2912, %v2908
    %v2973 = vpack.c.b16 %v2917, %v2913
    %v2974 = vpack.c.b16 %v2918, %v2914
    %v2975 = vpack.c.b16 %v2919, %v2915
    %v2976 = vpack.c.b16 %v2920, %v2916
    %v2977 = vpack.c.b16 %v2925, %v2921
    %v2978 = vpack.c.b16 %v2926, %v2922
    %v2979 = vpack.c.b16 %v2927, %v2923
    %v2980 = vpack.c.b16 %v2928, %v2924
    %v2981 = vpack.c.b16 %v2933, %v2929
    %v2982 = vpack.c.b16 %v2934, %v2930
    %v2983 = vpack.c.b16 %v2935, %v2931
    %v2984 = vpack.c.b16 %v2936, %v2932
    %v2985 = vpack.c.b16 %v2941, %v2937
    %v2986 = vpack.c.b16 %v2942, %v2938
    %v2987 = vpack.c.b16 %v2943, %v2939
    %v2988 = vpack.c.b16 %v2944, %v2940
    %v2989 = vpack.c.b16 %v2949, %v2945
    %v2990 = vpack.c.b16 %v2950, %v2946
    %v2991 = vpack.c.b16 %v2951, %v2947
    %v2992 = vpack.c.b16 %v2952, %v2948
    %v2993 = vpack.c.b16 %v2957, %v2953
    %v2994 = vpack.c.b16 %v2958, %v2954
    %v2995 = vpack.c.b16 %v2959, %v2955
    %v2996 = vpack.c.b16 %v2960, %v2956
    %v2997 = vpack.c.b16 %v2965, %v2961
    %v2998 = vpack.c.b16 %v2966, %v2962
    %v2999 = vpack.c.b16 %v2967, %v2963
    %v3000 = vpack.c.b16 %v2968, %v2964
    %3033 = vmatprep.subr.bf16.mxu0 %v2970
    %3034 = vmatpush1.bf16.msra.mxu0 %v2969
    %3035 = vmatprep.subr.bf16.mxu0 %v2974
    %3036 = vmatpush1.bf16.msra.mxu0 %v2973
    %3037 = vmatprep.subr.bf16.mxu0 %v2978
    %3038 = vmatpush1.bf16.msra.mxu0 %v2977
    %3039 = vmatprep.subr.bf16.mxu0 %v2982
    %3040 = vmatpush1.bf16.msra.mxu0 %v2981
    %3041 = vmatprep.subr.bf16.mxu0 %v2986
    %3042 = vmatpush1.bf16.msra.mxu0 %v2985
    %3043 = vmatprep.subr.bf16.mxu0 %v2990
    %3044 = vmatpush1.bf16.msra.mxu0 %v2989
    %3045 = vmatprep.subr.bf16.mxu0 %v2994
    %3046 = vmatpush1.bf16.msra.mxu0 %v2993
    %3047 = vmatprep.subr.bf16.mxu0 %v2998
    %3048 = vmatpush1.bf16.msra.mxu0 %v2997
    %3049 = vmatprep.subr.bf16.mxu0 0
    %3050 = vmatpush1.bf16.msra.mxu0 0
    %3051 = vmatprep.subr.bf16.mxu0 0
    %3052 = vmatpush1.bf16.msra.mxu0 0
    %3053 = vmatprep.subr.bf16.mxu0 0
    %3054 = vmatpush1.bf16.msra.mxu0 0
    %3055 = vmatprep.subr.bf16.mxu0 0
    %3056 = vmatpush1.bf16.msra.mxu0 0
    %3057 = vmatprep.subr.bf16.mxu0 0
    %3058 = vmatpush1.bf16.msra.mxu0 0
    %3059 = vmatprep.subr.bf16.mxu0 0
    %3060 = vmatpush1.bf16.msra.mxu0 0
    %3061 = vmatprep.subr.bf16.mxu0 0
    %3062 = vmatpush1.bf16.msra.mxu0 0
    %3063 = vmatprep.subr.bf16.mxu0 0
    %3064 = vmatpush1.bf16.msra.mxu0 0
    %3065 = vmatprep.mubr.bf16.mxu0 0
    %3066 = vmatmul.mubr.bf16.gmra.mrb[0].mxu0 %v2840
    %v3067 = vpop.f32.mrb[0].mxu0
    %v3068 = vadd.f32 0.0, %v3067
    %v3069 = vpop.f32.mrb[0].mxu0
    %v3070 = vadd.f32 0.0, %v3069
    %v3071 = vpop.f32.mrb[0].mxu0
    %v3072 = vadd.f32 0.0, %v3071
    %v3073 = vpop.f32.mrb[0].mxu0
    %v3074 = vadd.f32 0.0, %v3073
    %3075 = vdwg.mxu0
    %3076 = vmatprep.subr.bf16.mxu0 %v2972
    %3077 = vmatpush1.bf16.msra.mxu0 %v2971
    %3078 = vmatprep.subr.bf16.mxu0 %v2976
    %3079 = vmatpush1.bf16.msra.mxu0 %v2975
    %3080 = vmatprep.subr.bf16.mxu0 %v2980
    %3081 = vmatpush1.bf16.msra.mxu0 %v2979
    %3082 = vmatprep.subr.bf16.mxu0 %v2984
    %3083 = vmatpush1.bf16.msra.mxu0 %v2983
    %3084 = vmatprep.subr.bf16.mxu0 %v2988
    %3085 = vmatpush1.bf16.msra.mxu0 %v2987
    %3086 = vmatprep.subr.bf16.mxu0 %v2992
    %3087 = vmatpush1.bf16.msra.mxu0 %v2991
    %3088 = vmatprep.subr.bf16.mxu0 %v2996
    %3089 = vmatpush1.bf16.msra.mxu0 %v2995
    %3090 = vmatprep.subr.bf16.mxu0 %v3000
    %3091 = vmatpush1.bf16.msra.mxu0 %v2999
    %3092 = vmatprep.subr.bf16.mxu0 0
    %3093 = vmatpush1.bf16.msra.mxu0 0
    %3094 = vmatprep.subr.bf16.mxu0 0
    %3095 = vmatpush1.bf16.msra.mxu0 0
    %3096 = vmatprep.subr.bf16.mxu0 0
    %3097 = vmatpush1.bf16.msra.mxu0 0
    %3098 = vmatprep.subr.bf16.mxu0 0
    %3099 = vmatpush1.bf16.msra.mxu0 0
    %3100 = vmatprep.subr.bf16.mxu0 0
    %3101 = vmatpush1.bf16.msra.mxu0 0
    %3102 = vmatprep.subr.bf16.mxu0 0
    %3103 = vmatpush1.bf16.msra.mxu0 0
    %3104 = vmatprep.subr.bf16.mxu0 0
    %3105 = vmatpush1.bf16.msra.mxu0 0
    %3106 = vmatprep.subr.bf16.mxu0 0
    %3107 = vmatpush1.bf16.msra.mxu0 0
    %3108 = vmatprep.mubr.bf16.mxu0 0
    %3109 = vmatmul.mubr.bf16.gmra.mrb[0].mxu0 %v2840
    %v3110 = vpop.f32.mrb[0].mxu0
    %v3111 = vadd.f32 0.0, %v3110
    %v3112 = vpop.f32.mrb[0].mxu0
    %v3113 = vadd.f32 0.0, %v3112
    %v3114 = vpop.f32.mrb[0].mxu0
    %v3115 = vadd.f32 0.0, %v3114
    %v3116 = vpop.f32.mrb[0].mxu0
    %v3117 = vadd.f32 0.0, %v3116
    %3118 = vdwg.mxu0
    %v3119 = vadd.f32 %v2832, %v3068
    %v3120 = vadd.f32 %v2833, %v3070
    %v3121 = vadd.f32 %v2834, %v3111
    %v3122 = vadd.f32 %v2835, %v3113
    %v3123 = vadd.f32 %v2836, %v3072
    %v3124 = vadd.f32 %v2837, %v3074
    %v3125 = vadd.f32 %v2838, %v3115
    %v3126 = vadd.f32 %v2839, %v3117
    %v3127 = vxor.u32 %v3119, 2147483648
    %v3128 = vxor.u32 %v3123, 2147483648
    %v3129 = vmul.f32 %v3127, 1.442695
    %v3130 = vpow.pop %v3129
    %v3131 = vmul.f32 %v3128, 1.442695
    %v3132 = vpow.pop %v3131
    %v3133 = vadd.f32 %v3130, 1.0
    %v3134 = vadd.f32 %v3132, 1.0
    %v3135 = vrcp.pop %v3133
    %v3136 = vmul.f32 1.0, %v3135
    %v3137 = vrcp.pop %v3134
    %v3138 = vmul.f32 1.0, %v3137
    %v3139 = vxor.u32 %v3120, 2147483648
    %v3140 = vxor.u32 %v3124, 2147483648
    %v3141 = vmul.f32 %v3139, 1.442695
    %v3142 = vpow.pop %v3141
    %v3143 = vmul.f32 %v3140, 1.442695
    %v3144 = vpow.pop %v3143
    %v3145 = vadd.f32 %v3142, 1.0
    %v3146 = vadd.f32 %v3144, 1.0
    %v3147 = vrcp.pop %v3145
    %v3148 = vmul.f32 1.0, %v3147
    %v3149 = vrcp.pop %v3146
    %v3150 = vmul.f32 1.0, %v3149
    %v3151 = vxor.u32 %v3121, 2147483648
    %v3152 = vxor.u32 %v3125, 2147483648
    %v3153 = vmul.f32 %v3151, 1.442695
    %v3154 = vpow.pop %v3153
    %v3155 = vmul.f32 %v3152, 1.442695
    %v3156 = vpow.pop %v3155
    %v3157 = vadd.f32 %v3154, 1.0
    %v3158 = vadd.f32 %v3156, 1.0
    %v3159 = vrcp.pop %v3157
    %v3160 = vmul.f32 1.0, %v3159
    %v3161 = vrcp.pop %v3158
    %v3162 = vmul.f32 1.0, %v3161
    %v3163 = vtanh.pop %v3122
    %v3164 = vtanh.pop %v3126
    %v3165 = vmul.f32 %v3136, %v2822
    %v3166 = vmul.f32 %v3138, %v2823
    %v3167 = vmul.f32 %v3148, %v3163
    %v3168 = vmul.f32 %v3150, %v3164
    %v3169 = vadd.f32 %v3165, %v3167
    %v3170 = vadd.f32 %v3166, %v3168
    %v3171 = vtanh.pop %v3169
    %v3172 = vtanh.pop %v3170
    %v3173 = vmul.f32 %v3160, %v3171
    %v3174 = vmul.f32 %v3162, %v3172
    %s3175 = scalar_lea.vmem [#allocation9], 128
    %3176 = vst [vmem:[%s3175] sm:$0xff] %v3173
    %3177 = vst [vmem:[%s3175 + $0x8] sm:$0xff] %v3174
    %s3178 = scalar_lea.vmem [#allocation4], 576
    %v3179 = vld [vmem:[%s3178] sm:$0xff]
    %v3180 = vld [vmem:[%s3178 + $0x8] sm:$0xff]
    %v3181 = vld [vmem:[%s3178 + $0x10] sm:$0xff]
    %v3182 = vld [vmem:[%s3178 + $0x18] sm:$0xff]
    %v3183 = vld [vmem:[%s3178 + $0x20] sm:$0xff]
    %v3184 = vld [vmem:[%s3178 + $0x28] sm:$0xff]
    %v3185 = vld [vmem:[%s3178 + $0x30] sm:$0xff]
    %v3186 = vld [vmem:[%s3178 + $0x38] sm:$0xff]
    %v3187 = vpack.c.bf16 %v3174, %v3173
    %v3188 = vld [vmem:[#allocation7] sm:$0xff]
    %v3189 = vld [vmem:[#allocation7 + $0x8] sm:$0xff]
    %v3190 = vld [vmem:[#allocation7 + $0x10] sm:$0xff]
    %v3191 = vld [vmem:[#allocation7 + $0x18] sm:$0xff]
    %v3192 = vld [vmem:[#allocation7 + $0x20] sm:$0xff]
    %v3193 = vld [vmem:[#allocation7 + $0x28] sm:$0xff]
    %v3194 = vld [vmem:[#allocation7 + $0x30] sm:$0xff]
    %v3195 = vld [vmem:[#allocation7 + $0x38] sm:$0xff]
    %v3196 = vld [vmem:[#allocation7 + $0x40] sm:$0xff]
    %v3197 = vld [vmem:[#allocation7 + $0x48] sm:$0xff]
    %v3198 = vld [vmem:[#allocation7 + $0x50] sm:$0xff]
    %v3199 = vld [vmem:[#allocation7 + $0x58] sm:$0xff]
    %v3200 = vld [vmem:[#allocation7 + $0x60] sm:$0xff]
    %v3201 = vld [vmem:[#allocation7 + $0x68] sm:$0xff]
    %v3202 = vld [vmem:[#allocation7 + $0x70] sm:$0xff]
    %v3203 = vld [vmem:[#allocation7 + $0x78] sm:$0xff]
    %v3204 = vld [vmem:[#allocation7 + $0x80] sm:$0xff]
    %v3205 = vld [vmem:[#allocation7 + $0x88] sm:$0xff]
    %v3206 = vld [vmem:[#allocation7 + $0x90] sm:$0xff]
    %v3207 = vld [vmem:[#allocation7 + $0x98] sm:$0xff]
    %v3208 = vld [vmem:[#allocation7 + $0xa0] sm:$0xff]
    %v3209 = vld [vmem:[#allocation7 + $0xa8] sm:$0xff]
    %v3210 = vld [vmem:[#allocation7 + $0xb0] sm:$0xff]
    %v3211 = vld [vmem:[#allocation7 + $0xb8] sm:$0xff]
    %v3212 = vld [vmem:[#allocation7 + $0xc0] sm:$0xff]
    %v3213 = vld [vmem:[#allocation7 + $0xc8] sm:$0xff]
    %v3214 = vld [vmem:[#allocation7 + $0xd0] sm:$0xff]
    %v3215 = vld [vmem:[#allocation7 + $0xd8] sm:$0xff]
    %v3216 = vld [vmem:[#allocation7 + $0xe0] sm:$0xff]
    %v3217 = vld [vmem:[#allocation7 + $0xe8] sm:$0xff]
    %v3218 = vld [vmem:[#allocation7 + $0xf0] sm:$0xff]
    %v3219 = vld [vmem:[#allocation7 + $0xf8] sm:$0xff]
    %v3252 = vunpack.c.l.b16 %v3188
    %v3253 = vunpack.c.h.b16 %v3188
    %v3254 = vunpack.c.l.b16 %v3189
    %v3255 = vunpack.c.h.b16 %v3189
    %v3256 = vunpack.c.l.b16 %v3190
    %v3257 = vunpack.c.h.b16 %v3190
    %v3258 = vunpack.c.l.b16 %v3191
    %v3259 = vunpack.c.h.b16 %v3191
    %v3260 = vunpack.c.l.b16 %v3192
    %v3261 = vunpack.c.h.b16 %v3192
    %v3262 = vunpack.c.l.b16 %v3193
    %v3263 = vunpack.c.h.b16 %v3193
    %v3264 = vunpack.c.l.b16 %v3194
    %v3265 = vunpack.c.h.b16 %v3194
    %v3266 = vunpack.c.l.b16 %v3195
    %v3267 = vunpack.c.h.b16 %v3195
    %v3268 = vunpack.c.l.b16 %v3196
    %v3269 = vunpack.c.h.b16 %v3196
    %v3270 = vunpack.c.l.b16 %v3197
    %v3271 = vunpack.c.h.b16 %v3197
    %v3272 = vunpack.c.l.b16 %v3198
    %v3273 = vunpack.c.h.b16 %v3198
    %v3274 = vunpack.c.l.b16 %v3199
    %v3275 = vunpack.c.h.b16 %v3199
    %v3276 = vunpack.c.l.b16 %v3200
    %v3277 = vunpack.c.h.b16 %v3200
    %v3278 = vunpack.c.l.b16 %v3201
    %v3279 = vunpack.c.h.b16 %v3201
    %v3280 = vunpack.c.l.b16 %v3202
    %v3281 = vunpack.c.h.b16 %v3202
    %v3282 = vunpack.c.l.b16 %v3203
    %v3283 = vunpack.c.h.b16 %v3203
    %v3284 = vunpack.c.l.b16 %v3204
    %v3285 = vunpack.c.h.b16 %v3204
    %v3286 = vunpack.c.l.b16 %v3205
    %v3287 = vunpack.c.h.b16 %v3205
    %v3288 = vunpack.c.l.b16 %v3206
    %v3289 = vunpack.c.h.b16 %v3206
    %v3290 = vunpack.c.l.b16 %v3207
    %v3291 = vunpack.c.h.b16 %v3207
    %v3292 = vunpack.c.l.b16 %v3208
    %v3293 = vunpack.c.h.b16 %v3208
    %v3294 = vunpack.c.l.b16 %v3209
    %v3295 = vunpack.c.h.b16 %v3209
    %v3296 = vunpack.c.l.b16 %v3210
    %v3297 = vunpack.c.h.b16 %v3210
    %v3298 = vunpack.c.l.b16 %v3211
    %v3299 = vunpack.c.h.b16 %v3211
    %v3300 = vunpack.c.l.b16 %v3212
    %v3301 = vunpack.c.h.b16 %v3212
    %v3302 = vunpack.c.l.b16 %v3213
    %v3303 = vunpack.c.h.b16 %v3213
    %v3304 = vunpack.c.l.b16 %v3214
    %v3305 = vunpack.c.h.b16 %v3214
    %v3306 = vunpack.c.l.b16 %v3215
    %v3307 = vunpack.c.h.b16 %v3215
    %v3308 = vunpack.c.l.b16 %v3216
    %v3309 = vunpack.c.h.b16 %v3216
    %v3310 = vunpack.c.l.b16 %v3217
    %v3311 = vunpack.c.h.b16 %v3217
    %v3312 = vunpack.c.l.b16 %v3218
    %v3313 = vunpack.c.h.b16 %v3218
    %v3314 = vunpack.c.l.b16 %v3219
    %v3315 = vunpack.c.h.b16 %v3219
    %v3316 = vpack.c.b16 %v3256, %v3252
    %v3317 = vpack.c.b16 %v3257, %v3253
    %v3318 = vpack.c.b16 %v3258, %v3254
    %v3319 = vpack.c.b16 %v3259, %v3255
    %v3320 = vpack.c.b16 %v3264, %v3260
    %v3321 = vpack.c.b16 %v3265, %v3261
    %v3322 = vpack.c.b16 %v3266, %v3262
    %v3323 = vpack.c.b16 %v3267, %v3263
    %v3324 = vpack.c.b16 %v3272, %v3268
    %v3325 = vpack.c.b16 %v3273, %v3269
    %v3326 = vpack.c.b16 %v3274, %v3270
    %v3327 = vpack.c.b16 %v3275, %v3271
    %v3328 = vpack.c.b16 %v3280, %v3276
    %v3329 = vpack.c.b16 %v3281, %v3277
    %v3330 = vpack.c.b16 %v3282, %v3278
    %v3331 = vpack.c.b16 %v3283, %v3279
    %v3332 = vpack.c.b16 %v3288, %v3284
    %v3333 = vpack.c.b16 %v3289, %v3285
    %v3334 = vpack.c.b16 %v3290, %v3286
    %v3335 = vpack.c.b16 %v3291, %v3287
    %v3336 = vpack.c.b16 %v3296, %v3292
    %v3337 = vpack.c.b16 %v3297, %v3293
    %v3338 = vpack.c.b16 %v3298, %v3294
    %v3339 = vpack.c.b16 %v3299, %v3295
    %v3340 = vpack.c.b16 %v3304, %v3300
    %v3341 = vpack.c.b16 %v3305, %v3301
    %v3342 = vpack.c.b16 %v3306, %v3302
    %v3343 = vpack.c.b16 %v3307, %v3303
    %v3344 = vpack.c.b16 %v3312, %v3308
    %v3345 = vpack.c.b16 %v3313, %v3309
    %v3346 = vpack.c.b16 %v3314, %v3310
    %v3347 = vpack.c.b16 %v3315, %v3311
    %3380 = vmatprep.subr.bf16.mxu0 %v3317
    %3381 = vmatpush1.bf16.msra.mxu0 %v3316
    %3382 = vmatprep.subr.bf16.mxu0 %v3321
    %3383 = vmatpush1.bf16.msra.mxu0 %v3320
    %3384 = vmatprep.subr.bf16.mxu0 %v3325
    %3385 = vmatpush1.bf16.msra.mxu0 %v3324
    %3386 = vmatprep.subr.bf16.mxu0 %v3329
    %3387 = vmatpush1.bf16.msra.mxu0 %v3328
    %3388 = vmatprep.subr.bf16.mxu0 %v3333
    %3389 = vmatpush1.bf16.msra.mxu0 %v3332
    %3390 = vmatprep.subr.bf16.mxu0 %v3337
    %3391 = vmatpush1.bf16.msra.mxu0 %v3336
    %3392 = vmatprep.subr.bf16.mxu0 %v3341
    %3393 = vmatpush1.bf16.msra.mxu0 %v3340
    %3394 = vmatprep.subr.bf16.mxu0 %v3345
    %3395 = vmatpush1.bf16.msra.mxu0 %v3344
    %3396 = vmatprep.subr.bf16.mxu0 0
    %3397 = vmatpush1.bf16.msra.mxu0 0
    %3398 = vmatprep.subr.bf16.mxu0 0
    %3399 = vmatpush1.bf16.msra.mxu0 0
    %3400 = vmatprep.subr.bf16.mxu0 0
    %3401 = vmatpush1.bf16.msra.mxu0 0
    %3402 = vmatprep.subr.bf16.mxu0 0
    %3403 = vmatpush1.bf16.msra.mxu0 0
    %3404 = vmatprep.subr.bf16.mxu0 0
    %3405 = vmatpush1.bf16.msra.mxu0 0
    %3406 = vmatprep.subr.bf16.mxu0 0
    %3407 = vmatpush1.bf16.msra.mxu0 0
    %3408 = vmatprep.subr.bf16.mxu0 0
    %3409 = vmatpush1.bf16.msra.mxu0 0
    %3410 = vmatprep.subr.bf16.mxu0 0
    %3411 = vmatpush1.bf16.msra.mxu0 0
    %3412 = vmatprep.mubr.bf16.mxu0 0
    %3413 = vmatmul.mubr.bf16.gmra.mrb[0].mxu0 %v3187
    %v3414 = vpop.f32.mrb[0].mxu0
    %v3415 = vadd.f32 0.0, %v3414
    %v3416 = vpop.f32.mrb[0].mxu0
    %v3417 = vadd.f32 0.0, %v3416
    %v3418 = vpop.f32.mrb[0].mxu0
    %v3419 = vadd.f32 0.0, %v3418
    %v3420 = vpop.f32.mrb[0].mxu0
    %v3421 = vadd.f32 0.0, %v3420
    %3422 = vdwg.mxu0
    %3423 = vmatprep.subr.bf16.mxu0 %v3319
    %3424 = vmatpush1.bf16.msra.mxu0 %v3318
    %3425 = vmatprep.subr.bf16.mxu0 %v3323
    %3426 = vmatpush1.bf16.msra.mxu0 %v3322
    %3427 = vmatprep.subr.bf16.mxu0 %v3327
    %3428 = vmatpush1.bf16.msra.mxu0 %v3326
    %3429 = vmatprep.subr.bf16.mxu0 %v3331
    %3430 = vmatpush1.bf16.msra.mxu0 %v3330
    %3431 = vmatprep.subr.bf16.mxu0 %v3335
    %3432 = vmatpush1.bf16.msra.mxu0 %v3334
    %3433 = vmatprep.subr.bf16.mxu0 %v3339
    %3434 = vmatpush1.bf16.msra.mxu0 %v3338
    %3435 = vmatprep.subr.bf16.mxu0 %v3343
    %3436 = vmatpush1.bf16.msra.mxu0 %v3342
    %3437 = vmatprep.subr.bf16.mxu0 %v3347
    %3438 = vmatpush1.bf16.msra.mxu0 %v3346
    %3439 = vmatprep.subr.bf16.mxu0 0
    %3440 = vmatpush1.bf16.msra.mxu0 0
    %3441 = vmatprep.subr.bf16.mxu0 0
    %3442 = vmatpush1.bf16.msra.mxu0 0
    %3443 = vmatprep.subr.bf16.mxu0 0
    %3444 = vmatpush1.bf16.msra.mxu0 0
    %3445 = vmatprep.subr.bf16.mxu0 0
    %3446 = vmatpush1.bf16.msra.mxu0 0
    %3447 = vmatprep.subr.bf16.mxu0 0
    %3448 = vmatpush1.bf16.msra.mxu0 0
    %3449 = vmatprep.subr.bf16.mxu0 0
    %3450 = vmatpush1.bf16.msra.mxu0 0
    %3451 = vmatprep.subr.bf16.mxu0 0
    %3452 = vmatpush1.bf16.msra.mxu0 0
    %3453 = vmatprep.subr.bf16.mxu0 0
    %3454 = vmatpush1.bf16.msra.mxu0 0
    %3455 = vmatprep.mubr.bf16.mxu0 0
    %3456 = vmatmul.mubr.bf16.gmra.mrb[0].mxu0 %v3187
    %v3457 = vpop.f32.mrb[0].mxu0
    %v3458 = vadd.f32 0.0, %v3457
    %v3459 = vpop.f32.mrb[0].mxu0
    %v3460 = vadd.f32 0.0, %v3459
    %v3461 = vpop.f32.mrb[0].mxu0
    %v3462 = vadd.f32 0.0, %v3461
    %v3463 = vpop.f32.mrb[0].mxu0
    %v3464 = vadd.f32 0.0, %v3463
    %3465 = vdwg.mxu0
    %v3466 = vadd.f32 %v3179, %v3415
    %v3467 = vadd.f32 %v3180, %v3417
    %v3468 = vadd.f32 %v3181, %v3458
    %v3469 = vadd.f32 %v3182, %v3460
    %v3470 = vadd.f32 %v3183, %v3419
    %v3471 = vadd.f32 %v3184, %v3421
    %v3472 = vadd.f32 %v3185, %v3462
    %v3473 = vadd.f32 %v3186, %v3464
    %v3474 = vxor.u32 %v3466, 2147483648
    %v3475 = vxor.u32 %v3470, 2147483648
    %v3476 = vmul.f32 %v3474, 1.442695
    %v3477 = vpow.pop %v3476
    %v3478 = vmul.f32 %v3475, 1.442695
    %v3479 = vpow.pop %v3478
    %v3480 = vadd.f32 %v3477, 1.0
    %v3481 = vadd.f32 %v3479, 1.0
    %v3482 = vrcp.pop %v3480
    %v3483 = vmul.f32 1.0, %v3482
    %v3484 = vrcp.pop %v3481
    %v3485 = vmul.f32 1.0, %v3484
    %v3486 = vxor.u32 %v3467, 2147483648
    %v3487 = vxor.u32 %v3471, 2147483648
    %v3488 = vmul.f32 %v3486, 1.442695
    %v3489 = vpow.pop %v3488
    %v3490 = vmul.f32 %v3487, 1.442695
    %v3491 = vpow.pop %v3490
    %v3492 = vadd.f32 %v3489, 1.0
    %v3493 = vadd.f32 %v3491, 1.0
    %v3494 = vrcp.pop %v3492
    %v3495 = vmul.f32 1.0, %v3494
    %v3496 = vrcp.pop %v3493
    %v3497 = vmul.f32 1.0, %v3496
    %v3498 = vxor.u32 %v3468, 2147483648
    %v3499 = vxor.u32 %v3472, 2147483648
    %v3500 = vmul.f32 %v3498, 1.442695
    %v3501 = vpow.pop %v3500
    %v3502 = vmul.f32 %v3499, 1.442695
    %v3503 = vpow.pop %v3502
    %v3504 = vadd.f32 %v3501, 1.0
    %v3505 = vadd.f32 %v3503, 1.0
    %v3506 = vrcp.pop %v3504
    %v3507 = vmul.f32 1.0, %v3506
    %v3508 = vrcp.pop %v3505
    %v3509 = vmul.f32 1.0, %v3508
    %v3510 = vtanh.pop %v3469
    %v3511 = vtanh.pop %v3473
    %v3512 = vmul.f32 %v3483, %v3169
    %v3513 = vmul.f32 %v3485, %v3170
    %v3514 = vmul.f32 %v3495, %v3510
    %v3515 = vmul.f32 %v3497, %v3511
    %v3516 = vadd.f32 %v3512, %v3514
    %v3517 = vadd.f32 %v3513, %v3515
    %v3518 = vtanh.pop %v3516
    %v3519 = vtanh.pop %v3517
    %v3520 = vmul.f32 %v3507, %v3518
    %v3521 = vmul.f32 %v3509, %v3519
    %s3522 = scalar_lea.vmem [#allocation9], 144
    %3523 = vst [vmem:[%s3522] sm:$0xff] %v3520
    %3524 = vst [vmem:[%s3522 + $0x8] sm:$0xff] %v3521
    %s3525 = scalar_lea.vmem [#allocation4], 640
    %v3526 = vld [vmem:[%s3525] sm:$0xff]
    %v3527 = vld [vmem:[%s3525 + $0x8] sm:$0xff]
    %v3528 = vld [vmem:[%s3525 + $0x10] sm:$0xff]
    %v3529 = vld [vmem:[%s3525 + $0x18] sm:$0xff]
    %v3530 = vld [vmem:[%s3525 + $0x20] sm:$0xff]
    %v3531 = vld [vmem:[%s3525 + $0x28] sm:$0xff]
    %v3532 = vld [vmem:[%s3525 + $0x30] sm:$0xff]
    %v3533 = vld [vmem:[%s3525 + $0x38] sm:$0xff]
    %v3534 = vpack.c.bf16 %v3521, %v3520
    %v3535 = vld [vmem:[#allocation7] sm:$0xff]
    %v3536 = vld [vmem:[#allocation7 + $0x8] sm:$0xff]
    %v3537 = vld [vmem:[#allocation7 + $0x10] sm:$0xff]
    %v3538 = vld [vmem:[#allocation7 + $0x18] sm:$0xff]
    %v3539 = vld [vmem:[#allocation7 + $0x20] sm:$0xff]
    %v3540 = vld [vmem:[#allocation7 + $0x28] sm:$0xff]
    %v3541 = vld [vmem:[#allocation7 + $0x30] sm:$0xff]
    %v3542 = vld [vmem:[#allocation7 + $0x38] sm:$0xff]
    %v3543 = vld [vmem:[#allocation7 + $0x40] sm:$0xff]
    %v3544 = vld [vmem:[#allocation7 + $0x48] sm:$0xff]
    %v3545 = vld [vmem:[#allocation7 + $0x50] sm:$0xff]
    %v3546 = vld [vmem:[#allocation7 + $0x58] sm:$0xff]
    %v3547 = vld [vmem:[#allocation7 + $0x60] sm:$0xff]
    %v3548 = vld [vmem:[#allocation7 + $0x68] sm:$0xff]
    %v3549 = vld [vmem:[#allocation7 + $0x70] sm:$0xff]
    %v3550 = vld [vmem:[#allocation7 + $0x78] sm:$0xff]
    %v3551 = vld [vmem:[#allocation7 + $0x80] sm:$0xff]
    %v3552 = vld [vmem:[#allocation7 + $0x88] sm:$0xff]
    %v3553 = vld [vmem:[#allocation7 + $0x90] sm:$0xff]
    %v3554 = vld [vmem:[#allocation7 + $0x98] sm:$0xff]
    %v3555 = vld [vmem:[#allocation7 + $0xa0] sm:$0xff]
    %v3556 = vld [vmem:[#allocation7 + $0xa8] sm:$0xff]
    %v3557 = vld [vmem:[#allocation7 + $0xb0] sm:$0xff]
    %v3558 = vld [vmem:[#allocation7 + $0xb8] sm:$0xff]
    %v3559 = vld [vmem:[#allocation7 + $0xc0] sm:$0xff]
    %v3560 = vld [vmem:[#allocation7 + $0xc8] sm:$0xff]
    %v3561 = vld [vmem:[#allocation7 + $0xd0] sm:$0xff]
    %v3562 = vld [vmem:[#allocation7 + $0xd8] sm:$0xff]
    %v3563 = vld [vmem:[#allocation7 + $0xe0] sm:$0xff]
    %v3564 = vld [vmem:[#allocation7 + $0xe8] sm:$0xff]
    %v3565 = vld [vmem:[#allocation7 + $0xf0] sm:$0xff]
    %v3566 = vld [vmem:[#allocation7 + $0xf8] sm:$0xff]
    %v3599 = vunpack.c.l.b16 %v3535
    %v3600 = vunpack.c.h.b16 %v3535
    %v3601 = vunpack.c.l.b16 %v3536
    %v3602 = vunpack.c.h.b16 %v3536
    %v3603 = vunpack.c.l.b16 %v3537
    %v3604 = vunpack.c.h.b16 %v3537
    %v3605 = vunpack.c.l.b16 %v3538
    %v3606 = vunpack.c.h.b16 %v3538
    %v3607 = vunpack.c.l.b16 %v3539
    %v3608 = vunpack.c.h.b16 %v3539
    %v3609 = vunpack.c.l.b16 %v3540
    %v3610 = vunpack.c.h.b16 %v3540
    %v3611 = vunpack.c.l.b16 %v3541
    %v3612 = vunpack.c.h.b16 %v3541
    %v3613 = vunpack.c.l.b16 %v3542
    %v3614 = vunpack.c.h.b16 %v3542
    %v3615 = vunpack.c.l.b16 %v3543
    %v3616 = vunpack.c.h.b16 %v3543
    %v3617 = vunpack.c.l.b16 %v3544
    %v3618 = vunpack.c.h.b16 %v3544
    %v3619 = vunpack.c.l.b16 %v3545
    %v3620 = vunpack.c.h.b16 %v3545
    %v3621 = vunpack.c.l.b16 %v3546
    %v3622 = vunpack.c.h.b16 %v3546
    %v3623 = vunpack.c.l.b16 %v3547
    %v3624 = vunpack.c.h.b16 %v3547
    %v3625 = vunpack.c.l.b16 %v3548
    %v3626 = vunpack.c.h.b16 %v3548
    %v3627 = vunpack.c.l.b16 %v3549
    %v3628 = vunpack.c.h.b16 %v3549
    %v3629 = vunpack.c.l.b16 %v3550
    %v3630 = vunpack.c.h.b16 %v3550
    %v3631 = vunpack.c.l.b16 %v3551
    %v3632 = vunpack.c.h.b16 %v3551
    %v3633 = vunpack.c.l.b16 %v3552
    %v3634 = vunpack.c.h.b16 %v3552
    %v3635 = vunpack.c.l.b16 %v3553
    %v3636 = vunpack.c.h.b16 %v3553
    %v3637 = vunpack.c.l.b16 %v3554
    %v3638 = vunpack.c.h.b16 %v3554
    %v3639 = vunpack.c.l.b16 %v3555
    %v3640 = vunpack.c.h.b16 %v3555
    %v3641 = vunpack.c.l.b16 %v3556
    %v3642 = vunpack.c.h.b16 %v3556
    %v3643 = vunpack.c.l.b16 %v3557
    %v3644 = vunpack.c.h.b16 %v3557
    %v3645 = vunpack.c.l.b16 %v3558
    %v3646 = vunpack.c.h.b16 %v3558
    %v3647 = vunpack.c.l.b16 %v3559
    %v3648 = vunpack.c.h.b16 %v3559
    %v3649 = vunpack.c.l.b16 %v3560
    %v3650 = vunpack.c.h.b16 %v3560
    %v3651 = vunpack.c.l.b16 %v3561
    %v3652 = vunpack.c.h.b16 %v3561
    %v3653 = vunpack.c.l.b16 %v3562
    %v3654 = vunpack.c.h.b16 %v3562
    %v3655 = vunpack.c.l.b16 %v3563
    %v3656 = vunpack.c.h.b16 %v3563
    %v3657 = vunpack.c.l.b16 %v3564
    %v3658 = vunpack.c.h.b16 %v3564
    %v3659 = vunpack.c.l.b16 %v3565
    %v3660 = vunpack.c.h.b16 %v3565
    %v3661 = vunpack.c.l.b16 %v3566
    %v3662 = vunpack.c.h.b16 %v3566
    %v3663 = vpack.c.b16 %v3603, %v3599
    %v3664 = vpack.c.b16 %v3604, %v3600
    %v3665 = vpack.c.b16 %v3605, %v3601
    %v3666 = vpack.c.b16 %v3606, %v3602
    %v3667 = vpack.c.b16 %v3611, %v3607
    %v3668 = vpack.c.b16 %v3612, %v3608
    %v3669 = vpack.c.b16 %v3613, %v3609
    %v3670 = vpack.c.b16 %v3614, %v3610
    %v3671 = vpack.c.b16 %v3619, %v3615
    %v3672 = vpack.c.b16 %v3620, %v3616
    %v3673 = vpack.c.b16 %v3621, %v3617
    %v3674 = vpack.c.b16 %v3622, %v3618
    %v3675 = vpack.c.b16 %v3627, %v3623
    %v3676 = vpack.c.b16 %v3628, %v3624
    %v3677 = vpack.c.b16 %v3629, %v3625
    %v3678 = vpack.c.b16 %v3630, %v3626
    %v3679 = vpack.c.b16 %v3635, %v3631
    %v3680 = vpack.c.b16 %v3636, %v3632
    %v3681 = vpack.c.b16 %v3637, %v3633
    %v3682 = vpack.c.b16 %v3638, %v3634
    %v3683 = vpack.c.b16 %v3643, %v3639
    %v3684 = vpack.c.b16 %v3644, %v3640
    %v3685 = vpack.c.b16 %v3645, %v3641
    %v3686 = vpack.c.b16 %v3646, %v3642
    %v3687 = vpack.c.b16 %v3651, %v3647
    %v3688 = vpack.c.b16 %v3652, %v3648
    %v3689 = vpack.c.b16 %v3653, %v3649
    %v3690 = vpack.c.b16 %v3654, %v3650
    %v3691 = vpack.c.b16 %v3659, %v3655
    %v3692 = vpack.c.b16 %v3660, %v3656
    %v3693 = vpack.c.b16 %v3661, %v3657
    %v3694 = vpack.c.b16 %v3662, %v3658
    %3727 = vmatprep.subr.bf16.mxu0 %v3664
    %3728 = vmatpush1.bf16.msra.mxu0 %v3663
    %3729 = vmatprep.subr.bf16.mxu0 %v3668
    %3730 = vmatpush1.bf16.msra.mxu0 %v3667
    %3731 = vmatprep.subr.bf16.mxu0 %v3672
    %3732 = vmatpush1.bf16.msra.mxu0 %v3671
    %3733 = vmatprep.subr.bf16.mxu0 %v3676
    %3734 = vmatpush1.bf16.msra.mxu0 %v3675
    %3735 = vmatprep.subr.bf16.mxu0 %v3680
    %3736 = vmatpush1.bf16.msra.mxu0 %v3679
    %3737 = vmatprep.subr.bf16.mxu0 %v3684
    %3738 = vmatpush1.bf16.msra.mxu0 %v3683
    %3739 = vmatprep.subr.bf16.mxu0 %v3688
    %3740 = vmatpush1.bf16.msra.mxu0 %v3687
    %3741 = vmatprep.subr.bf16.mxu0 %v3692
    %3742 = vmatpush1.bf16.msra.mxu0 %v3691
    %3743 = vmatprep.subr.bf16.mxu0 0
    %3744 = vmatpush1.bf16.msra.mxu0 0
    %3745 = vmatprep.subr.bf16.mxu0 0
    %3746 = vmatpush1.bf16.msra.mxu0 0
    %3747 = vmatprep.subr.bf16.mxu0 0
    %3748 = vmatpush1.bf16.msra.mxu0 0
    %3749 = vmatprep.subr.bf16.mxu0 0
    %3750 = vmatpush1.bf16.msra.mxu0 0
    %3751 = vmatprep.subr.bf16.mxu0 0
    %3752 = vmatpush1.bf16.msra.mxu0 0
    %3753 = vmatprep.subr.bf16.mxu0 0
    %3754 = vmatpush1.bf16.msra.mxu0 0
    %3755 = vmatprep.subr.bf16.mxu0 0
    %3756 = vmatpush1.bf16.msra.mxu0 0
    %3757 = vmatprep.subr.bf16.mxu0 0
    %3758 = vmatpush1.bf16.msra.mxu0 0
    %3759 = vmatprep.mubr.bf16.mxu0 0
    %3760 = vmatmul.mubr.bf16.gmra.mrb[0].mxu0 %v3534
    %v3761 = vpop.f32.mrb[0].mxu0
    %v3762 = vadd.f32 0.0, %v3761
    %v3763 = vpop.f32.mrb[0].mxu0
    %v3764 = vadd.f32 0.0, %v3763
    %v3765 = vpop.f32.mrb[0].mxu0
    %v3766 = vadd.f32 0.0, %v3765
    %v3767 = vpop.f32.mrb[0].mxu0
    %v3768 = vadd.f32 0.0, %v3767
    %3769 = vdwg.mxu0
    %3770 = vmatprep.subr.bf16.mxu0 %v3666
    %3771 = vmatpush1.bf16.msra.mxu0 %v3665
    %3772 = vmatprep.subr.bf16.mxu0 %v3670
    %3773 = vmatpush1.bf16.msra.mxu0 %v3669
    %3774 = vmatprep.subr.bf16.mxu0 %v3674
    %3775 = vmatpush1.bf16.msra.mxu0 %v3673
    %3776 = vmatprep.subr.bf16.mxu0 %v3678
    %3777 = vmatpush1.bf16.msra.mxu0 %v3677
    %3778 = vmatprep.subr.bf16.mxu0 %v3682
    %3779 = vmatpush1.bf16.msra.mxu0 %v3681
    %3780 = vmatprep.subr.bf16.mxu0 %v3686
    %3781 = vmatpush1.bf16.msra.mxu0 %v3685
    %3782 = vmatprep.subr.bf16.mxu0 %v3690
    %3783 = vmatpush1.bf16.msra.mxu0 %v3689
    %3784 = vmatprep.subr.bf16.mxu0 %v3694
    %3785 = vmatpush1.bf16.msra.mxu0 %v3693
    %3786 = vmatprep.subr.bf16.mxu0 0
    %3787 = vmatpush1.bf16.msra.mxu0 0
    %3788 = vmatprep.subr.bf16.mxu0 0
    %3789 = vmatpush1.bf16.msra.mxu0 0
    %3790 = vmatprep.subr.bf16.mxu0 0
    %3791 = vmatpush1.bf16.msra.mxu0 0
    %3792 = vmatprep.subr.bf16.mxu0 0
    %3793 = vmatpush1.bf16.msra.mxu0 0
    %3794 = vmatprep.subr.bf16.mxu0 0
    %3795 = vmatpush1.bf16.msra.mxu0 0
    %3796 = vmatprep.subr.bf16.mxu0 0
    %3797 = vmatpush1.bf16.msra.mxu0 0
    %3798 = vmatprep.subr.bf16.mxu0 0
    %3799 = vmatpush1.bf16.msra.mxu0 0
    %3800 = vmatprep.subr.bf16.mxu0 0
    %3801 = vmatpush1.bf16.msra.mxu0 0
    %3802 = vmatprep.mubr.bf16.mxu0 0
    %3803 = vmatmul.mubr.bf16.gmra.mrb[0].mxu0 %v3534
    %v3804 = vpop.f32.mrb[0].mxu0
    %v3805 = vadd.f32 0.0, %v3804
    %v3806 = vpop.f32.mrb[0].mxu0
    %v3807 = vadd.f32 0.0, %v3806
    %v3808 = vpop.f32.mrb[0].mxu0
    %v3809 = vadd.f32 0.0, %v3808
    %v3810 = vpop.f32.mrb[0].mxu0
    %v3811 = vadd.f32 0.0, %v3810
    %3812 = vdwg.mxu0
    %v3813 = vadd.f32 %v3526, %v3762
    %v3814 = vadd.f32 %v3527, %v3764
    %v3815 = vadd.f32 %v3528, %v3805
    %v3816 = vadd.f32 %v3529, %v3807
    %v3817 = vadd.f32 %v3530, %v3766
    %v3818 = vadd.f32 %v3531, %v3768
    %v3819 = vadd.f32 %v3532, %v3809
    %v3820 = vadd.f32 %v3533, %v3811
    %v3821 = vxor.u32 %v3813, 2147483648
    %v3822 = vxor.u32 %v3817, 2147483648
    %v3823 = vmul.f32 %v3821, 1.442695
    %v3824 = vpow.pop %v3823
    %v3825 = vmul.f32 %v3822, 1.442695
    %v3826 = vpow.pop %v3825
    %v3827 = vadd.f32 %v3824, 1.0
    %v3828 = vadd.f32 %v3826, 1.0
    %v3829 = vrcp.pop %v3827
    %v3830 = vmul.f32 1.0, %v3829
    %v3831 = vrcp.pop %v3828
    %v3832 = vmul.f32 1.0, %v3831
    %v3833 = vxor.u32 %v3814, 2147483648
    %v3834 = vxor.u32 %v3818, 2147483648
    %v3835 = vmul.f32 %v3833, 1.442695
    %v3836 = vpow.pop %v3835
    %v3837 = vmul.f32 %v3834, 1.442695
    %v3838 = vpow.pop %v3837
    %v3839 = vadd.f32 %v3836, 1.0
    %v3840 = vadd.f32 %v3838, 1.0
    %v3841 = vrcp.pop %v3839
    %v3842 = vmul.f32 1.0, %v3841
    %v3843 = vrcp.pop %v3840
    %v3844 = vmul.f32 1.0, %v3843
    %v3845 = vxor.u32 %v3815, 2147483648
    %v3846 = vxor.u32 %v3819, 2147483648
    %v3847 = vmul.f32 %v3845, 1.442695
    %v3848 = vpow.pop %v3847
    %v3849 = vmul.f32 %v3846, 1.442695
    %v3850 = vpow.pop %v3849
    %v3851 = vadd.f32 %v3848, 1.0
    %v3852 = vadd.f32 %v3850, 1.0
    %v3853 = vrcp.pop %v3851
    %v3854 = vmul.f32 1.0, %v3853
    %v3855 = vrcp.pop %v3852
    %v3856 = vmul.f32 1.0, %v3855
    %v3857 = vtanh.pop %v3816
    %v3858 = vtanh.pop %v3820
    %v3859 = vmul.f32 %v3830, %v3516
    %v3860 = vmul.f32 %v3832, %v3517
    %v3861 = vmul.f32 %v3842, %v3857
    %v3862 = vmul.f32 %v3844, %v3858
    %v3863 = vadd.f32 %v3859, %v3861
    %v3864 = vadd.f32 %v3860, %v3862
    %v3865 = vtanh.pop %v3863
    %v3866 = vtanh.pop %v3864
    %v3867 = vmul.f32 %v3854, %v3865
    %v3868 = vmul.f32 %v3856, %v3866
    %s3869 = scalar_lea.vmem [#allocation9], 160
    %3870 = vst [vmem:[%s3869] sm:$0xff] %v3867
    %3871 = vst [vmem:[%s3869 + $0x8] sm:$0xff] %v3868
    %s3872 = scalar_lea.vmem [#allocation4], 704
    %v3873 = vld [vmem:[%s3872] sm:$0xff]
    %v3874 = vld [vmem:[%s3872 + $0x8] sm:$0xff]
    %v3875 = vld [vmem:[%s3872 + $0x10] sm:$0xff]
    %v3876 = vld [vmem:[%s3872 + $0x18] sm:$0xff]
    %v3877 = vld [vmem:[%s3872 + $0x20] sm:$0xff]
    %v3878 = vld [vmem:[%s3872 + $0x28] sm:$0xff]
    %v3879 = vld [vmem:[%s3872 + $0x30] sm:$0xff]
    %v3880 = vld [vmem:[%s3872 + $0x38] sm:$0xff]
    %v3881 = vpack.c.bf16 %v3868, %v3867
    %v3882 = vld [vmem:[#allocation7] sm:$0xff]
    %v3883 = vld [vmem:[#allocation7 + $0x8] sm:$0xff]
    %v3884 = vld [vmem:[#allocation7 + $0x10] sm:$0xff]
    %v3885 = vld [vmem:[#allocation7 + $0x18] sm:$0xff]
    %v3886 = vld [vmem:[#allocation7 + $0x20] sm:$0xff]
    %v3887 = vld [vmem:[#allocation7 + $0x28] sm:$0xff]
    %v3888 = vld [vmem:[#allocation7 + $0x30] sm:$0xff]
    %v3889 = vld [vmem:[#allocation7 + $0x38] sm:$0xff]
    %v3890 = vld [vmem:[#allocation7 + $0x40] sm:$0xff]
    %v3891 = vld [vmem:[#allocation7 + $0x48] sm:$0xff]
    %v3892 = vld [vmem:[#allocation7 + $0x50] sm:$0xff]
    %v3893 = vld [vmem:[#allocation7 + $0x58] sm:$0xff]
    %v3894 = vld [vmem:[#allocation7 + $0x60] sm:$0xff]
    %v3895 = vld [vmem:[#allocation7 + $0x68] sm:$0xff]
    %v3896 = vld [vmem:[#allocation7 + $0x70] sm:$0xff]
    %v3897 = vld [vmem:[#allocation7 + $0x78] sm:$0xff]
    %v3898 = vld [vmem:[#allocation7 + $0x80] sm:$0xff]
    %v3899 = vld [vmem:[#allocation7 + $0x88] sm:$0xff]
    %v3900 = vld [vmem:[#allocation7 + $0x90] sm:$0xff]
    %v3901 = vld [vmem:[#allocation7 + $0x98] sm:$0xff]
    %v3902 = vld [vmem:[#allocation7 + $0xa0] sm:$0xff]
    %v3903 = vld [vmem:[#allocation7 + $0xa8] sm:$0xff]
    %v3904 = vld [vmem:[#allocation7 + $0xb0] sm:$0xff]
    %v3905 = vld [vmem:[#allocation7 + $0xb8] sm:$0xff]
    %v3906 = vld [vmem:[#allocation7 + $0xc0] sm:$0xff]
    %v3907 = vld [vmem:[#allocation7 + $0xc8] sm:$0xff]
    %v3908 = vld [vmem:[#allocation7 + $0xd0] sm:$0xff]
    %v3909 = vld [vmem:[#allocation7 + $0xd8] sm:$0xff]
    %v3910 = vld [vmem:[#allocation7 + $0xe0] sm:$0xff]
    %v3911 = vld [vmem:[#allocation7 + $0xe8] sm:$0xff]
    %v3912 = vld [vmem:[#allocation7 + $0xf0] sm:$0xff]
    %v3913 = vld [vmem:[#allocation7 + $0xf8] sm:$0xff]
    %v3946 = vunpack.c.l.b16 %v3882
    %v3947 = vunpack.c.h.b16 %v3882
    %v3948 = vunpack.c.l.b16 %v3883
    %v3949 = vunpack.c.h.b16 %v3883
    %v3950 = vunpack.c.l.b16 %v3884
    %v3951 = vunpack.c.h.b16 %v3884
    %v3952 = vunpack.c.l.b16 %v3885
    %v3953 = vunpack.c.h.b16 %v3885
    %v3954 = vunpack.c.l.b16 %v3886
    %v3955 = vunpack.c.h.b16 %v3886
    %v3956 = vunpack.c.l.b16 %v3887
    %v3957 = vunpack.c.h.b16 %v3887
    %v3958 = vunpack.c.l.b16 %v3888
    %v3959 = vunpack.c.h.b16 %v3888
    %v3960 = vunpack.c.l.b16 %v3889
    %v3961 = vunpack.c.h.b16 %v3889
    %v3962 = vunpack.c.l.b16 %v3890
    %v3963 = vunpack.c.h.b16 %v3890
    %v3964 = vunpack.c.l.b16 %v3891
    %v3965 = vunpack.c.h.b16 %v3891
    %v3966 = vunpack.c.l.b16 %v3892
    %v3967 = vunpack.c.h.b16 %v3892
    %v3968 = vunpack.c.l.b16 %v3893
    %v3969 = vunpack.c.h.b16 %v3893
    %v3970 = vunpack.c.l.b16 %v3894
    %v3971 = vunpack.c.h.b16 %v3894
    %v3972 = vunpack.c.l.b16 %v3895
    %v3973 = vunpack.c.h.b16 %v3895
    %v3974 = vunpack.c.l.b16 %v3896
    %v3975 = vunpack.c.h.b16 %v3896
    %v3976 = vunpack.c.l.b16 %v3897
    %v3977 = vunpack.c.h.b16 %v3897
    %v3978 = vunpack.c.l.b16 %v3898
    %v3979 = vunpack.c.h.b16 %v3898
    %v3980 = vunpack.c.l.b16 %v3899
    %v3981 = vunpack.c.h.b16 %v3899
    %v3982 = vunpack.c.l.b16 %v3900
    %v3983 = vunpack.c.h.b16 %v3900
    %v3984 = vunpack.c.l.b16 %v3901
    %v3985 = vunpack.c.h.b16 %v3901
    %v3986 = vunpack.c.l.b16 %v3902
    %v3987 = vunpack.c.h.b16 %v3902
    %v3988 = vunpack.c.l.b16 %v3903
    %v3989 = vunpack.c.h.b16 %v3903
    %v3990 = vunpack.c.l.b16 %v3904
    %v3991 = vunpack.c.h.b16 %v3904
    %v3992 = vunpack.c.l.b16 %v3905
    %v3993 = vunpack.c.h.b16 %v3905
    %v3994 = vunpack.c.l.b16 %v3906
    %v3995 = vunpack.c.h.b16 %v3906
    %v3996 = vunpack.c.l.b16 %v3907
    %v3997 = vunpack.c.h.b16 %v3907
    %v3998 = vunpack.c.l.b16 %v3908
    %v3999 = vunpack.c.h.b16 %v3908
    %v4000 = vunpack.c.l.b16 %v3909
    %v4001 = vunpack.c.h.b16 %v3909
    %v4002 = vunpack.c.l.b16 %v3910
    %v4003 = vunpack.c.h.b16 %v3910
    %v4004 = vunpack.c.l.b16 %v3911
    %v4005 = vunpack.c.h.b16 %v3911
    %v4006 = vunpack.c.l.b16 %v3912
    %v4007 = vunpack.c.h.b16 %v3912
    %v4008 = vunpack.c.l.b16 %v3913
    %v4009 = vunpack.c.h.b16 %v3913
    %v4010 = vpack.c.b16 %v3950, %v3946
    %v4011 = vpack.c.b16 %v3951, %v3947
    %v4012 = vpack.c.b16 %v3952, %v3948
    %v4013 = vpack.c.b16 %v3953, %v3949
    %v4014 = vpack.c.b16 %v3958, %v3954
    %v4015 = vpack.c.b16 %v3959, %v3955
    %v4016 = vpack.c.b16 %v3960, %v3956
    %v4017 = vpack.c.b16 %v3961, %v3957
    %v4018 = vpack.c.b16 %v3966, %v3962
    %v4019 = vpack.c.b16 %v3967, %v3963
    %v4020 = vpack.c.b16 %v3968, %v3964
    %v4021 = vpack.c.b16 %v3969, %v3965
    %v4022 = vpack.c.b16 %v3974, %v3970
    %v4023 = vpack.c.b16 %v3975, %v3971
    %v4024 = vpack.c.b16 %v3976, %v3972
    %v4025 = vpack.c.b16 %v3977, %v3973
    %v4026 = vpack.c.b16 %v3982, %v3978
    %v4027 = vpack.c.b16 %v3983, %v3979
    %v4028 = vpack.c.b16 %v3984, %v3980
    %v4029 = vpack.c.b16 %v3985, %v3981
    %v4030 = vpack.c.b16 %v3990, %v3986
    %v4031 = vpack.c.b16 %v3991, %v3987
    %v4032 = vpack.c.b16 %v3992, %v3988
    %v4033 = vpack.c.b16 %v3993, %v3989
    %v4034 = vpack.c.b16 %v3998, %v3994
    %v4035 = vpack.c.b16 %v3999, %v3995
    %v4036 = vpack.c.b16 %v4000, %v3996
    %v4037 = vpack.c.b16 %v4001, %v3997
    %v4038 = vpack.c.b16 %v4006, %v4002
    %v4039 = vpack.c.b16 %v4007, %v4003
    %v4040 = vpack.c.b16 %v4008, %v4004
    %v4041 = vpack.c.b16 %v4009, %v4005
    %4074 = vmatprep.subr.bf16.mxu0 %v4011
    %4075 = vmatpush1.bf16.msra.mxu0 %v4010
    %4076 = vmatprep.subr.bf16.mxu0 %v4015
    %4077 = vmatpush1.bf16.msra.mxu0 %v4014
    %4078 = vmatprep.subr.bf16.mxu0 %v4019
    %4079 = vmatpush1.bf16.msra.mxu0 %v4018
    %4080 = vmatprep.subr.bf16.mxu0 %v4023
    %4081 = vmatpush1.bf16.msra.mxu0 %v4022
    %4082 = vmatprep.subr.bf16.mxu0 %v4027
    %4083 = vmatpush1.bf16.msra.mxu0 %v4026
    %4084 = vmatprep.subr.bf16.mxu0 %v4031
    %4085 = vmatpush1.bf16.msra.mxu0 %v4030
    %4086 = vmatprep.subr.bf16.mxu0 %v4035
    %4087 = vmatpush1.bf16.msra.mxu0 %v4034
    %4088 = vmatprep.subr.bf16.mxu0 %v4039
    %4089 = vmatpush1.bf16.msra.mxu0 %v4038
    %4090 = vmatprep.subr.bf16.mxu0 0
    %4091 = vmatpush1.bf16.msra.mxu0 0
    %4092 = vmatprep.subr.bf16.mxu0 0
    %4093 = vmatpush1.bf16.msra.mxu0 0
    %4094 = vmatprep.subr.bf16.mxu0 0
    %4095 = vmatpush1.bf16.msra.mxu0 0
    %4096 = vmatprep.subr.bf16.mxu0 0
    %4097 = vmatpush1.bf16.msra.mxu0 0
    %4098 = vmatprep.subr.bf16.mxu0 0
    %4099 = vmatpush1.bf16.msra.mxu0 0
    %4100 = vmatprep.subr.bf16.mxu0 0
    %4101 = vmatpush1.bf16.msra.mxu0 0
    %4102 = vmatprep.subr.bf16.mxu0 0
    %4103 = vmatpush1.bf16.msra.mxu0 0
    %4104 = vmatprep.subr.bf16.mxu0 0
    %4105 = vmatpush1.bf16.msra.mxu0 0
    %4106 = vmatprep.mubr.bf16.mxu0 0
    %4107 = vmatmul.mubr.bf16.gmra.mrb[0].mxu0 %v3881
    %v4108 = vpop.f32.mrb[0].mxu0
    %v4109 = vadd.f32 0.0, %v4108
    %v4110 = vpop.f32.mrb[0].mxu0
    %v4111 = vadd.f32 0.0, %v4110
    %v4112 = vpop.f32.mrb[0].mxu0
    %v4113 = vadd.f32 0.0, %v4112
    %v4114 = vpop.f32.mrb[0].mxu0
    %v4115 = vadd.f32 0.0, %v4114
    %4116 = vdwg.mxu0
    %4117 = vmatprep.subr.bf16.mxu0 %v4013
    %4118 = vmatpush1.bf16.msra.mxu0 %v4012
    %4119 = vmatprep.subr.bf16.mxu0 %v4017
    %4120 = vmatpush1.bf16.msra.mxu0 %v4016
    %4121 = vmatprep.subr.bf16.mxu0 %v4021
    %4122 = vmatpush1.bf16.msra.mxu0 %v4020
    %4123 = vmatprep.subr.bf16.mxu0 %v4025
    %4124 = vmatpush1.bf16.msra.mxu0 %v4024
    %4125 = vmatprep.subr.bf16.mxu0 %v4029
    %4126 = vmatpush1.bf16.msra.mxu0 %v4028
    %4127 = vmatprep.subr.bf16.mxu0 %v4033
    %4128 = vmatpush1.bf16.msra.mxu0 %v4032
    %4129 = vmatprep.subr.bf16.mxu0 %v4037
    %4130 = vmatpush1.bf16.msra.mxu0 %v4036
    %4131 = vmatprep.subr.bf16.mxu0 %v4041
    %4132 = vmatpush1.bf16.msra.mxu0 %v4040
    %4133 = vmatprep.subr.bf16.mxu0 0
    %4134 = vmatpush1.bf16.msra.mxu0 0
    %4135 = vmatprep.subr.bf16.mxu0 0
    %4136 = vmatpush1.bf16.msra.mxu0 0
    %4137 = vmatprep.subr.bf16.mxu0 0
    %4138 = vmatpush1.bf16.msra.mxu0 0
    %4139 = vmatprep.subr.bf16.mxu0 0
    %4140 = vmatpush1.bf16.msra.mxu0 0
    %4141 = vmatprep.subr.bf16.mxu0 0
    %4142 = vmatpush1.bf16.msra.mxu0 0
    %4143 = vmatprep.subr.bf16.mxu0 0
    %4144 = vmatpush1.bf16.msra.mxu0 0
    %4145 = vmatprep.subr.bf16.mxu0 0
    %4146 = vmatpush1.bf16.msra.mxu0 0
    %4147 = vmatprep.subr.bf16.mxu0 0
    %4148 = vmatpush1.bf16.msra.mxu0 0
    %4149 = vmatprep.mubr.bf16.mxu0 0
    %4150 = vmatmul.mubr.bf16.gmra.mrb[0].mxu0 %v3881
    %v4151 = vpop.f32.mrb[0].mxu0
    %v4152 = vadd.f32 0.0, %v4151
    %v4153 = vpop.f32.mrb[0].mxu0
    %v4154 = vadd.f32 0.0, %v4153
    %v4155 = vpop.f32.mrb[0].mxu0
    %v4156 = vadd.f32 0.0, %v4155
    %v4157 = vpop.f32.mrb[0].mxu0
    %v4158 = vadd.f32 0.0, %v4157
    %4159 = vdwg.mxu0
    %v4160 = vadd.f32 %v3873, %v4109
    %v4161 = vadd.f32 %v3874, %v4111
    %v4162 = vadd.f32 %v3875, %v4152
    %v4163 = vadd.f32 %v3876, %v4154
    %v4164 = vadd.f32 %v3877, %v4113
    %v4165 = vadd.f32 %v3878, %v4115
    %v4166 = vadd.f32 %v3879, %v4156
    %v4167 = vadd.f32 %v3880, %v4158
    %v4168 = vxor.u32 %v4160, 2147483648
    %v4169 = vxor.u32 %v4164, 2147483648
    %v4170 = vmul.f32 %v4168, 1.442695
    %v4171 = vpow.pop %v4170
    %v4172 = vmul.f32 %v4169, 1.442695
    %v4173 = vpow.pop %v4172
    %v4174 = vadd.f32 %v4171, 1.0
    %v4175 = vadd.f32 %v4173, 1.0
    %v4176 = vrcp.pop %v4174
    %v4177 = vmul.f32 1.0, %v4176
    %v4178 = vrcp.pop %v4175
    %v4179 = vmul.f32 1.0, %v4178
    %v4180 = vxor.u32 %v4161, 2147483648
    %v4181 = vxor.u32 %v4165, 2147483648
    %v4182 = vmul.f32 %v4180, 1.442695
    %v4183 = vpow.pop %v4182
    %v4184 = vmul.f32 %v4181, 1.442695
    %v4185 = vpow.pop %v4184
    %v4186 = vadd.f32 %v4183, 1.0
    %v4187 = vadd.f32 %v4185, 1.0
    %v4188 = vrcp.pop %v4186
    %v4189 = vmul.f32 1.0, %v4188
    %v4190 = vrcp.pop %v4187
    %v4191 = vmul.f32 1.0, %v4190
    %v4192 = vxor.u32 %v4162, 2147483648
    %v4193 = vxor.u32 %v4166, 2147483648
    %v4194 = vmul.f32 %v4192, 1.442695
    %v4195 = vpow.pop %v4194
    %v4196 = vmul.f32 %v4193, 1.442695
    %v4197 = vpow.pop %v4196
    %v4198 = vadd.f32 %v4195, 1.0
    %v4199 = vadd.f32 %v4197, 1.0
    %v4200 = vrcp.pop %v4198
    %v4201 = vmul.f32 1.0, %v4200
    %v4202 = vrcp.pop %v4199
    %v4203 = vmul.f32 1.0, %v4202
    %v4204 = vtanh.pop %v4163
    %v4205 = vtanh.pop %v4167
    %v4206 = vmul.f32 %v4177, %v3863
    %v4207 = vmul.f32 %v4179, %v3864
    %v4208 = vmul.f32 %v4189, %v4204
    %v4209 = vmul.f32 %v4191, %v4205
    %v4210 = vadd.f32 %v4206, %v4208
    %v4211 = vadd.f32 %v4207, %v4209
    %v4212 = vtanh.pop %v4210
    %v4213 = vtanh.pop %v4211
    %v4214 = vmul.f32 %v4201, %v4212
    %v4215 = vmul.f32 %v4203, %v4213
    %s4216 = scalar_lea.vmem [#allocation9], 176
    %4217 = vst [vmem:[%s4216] sm:$0xff] %v4214
    %4218 = vst [vmem:[%s4216 + $0x8] sm:$0xff] %v4215
    %s4219 = scalar_lea.vmem [#allocation4], 768
    %v4220 = vld [vmem:[%s4219] sm:$0xff]
    %v4221 = vld [vmem:[%s4219 + $0x8] sm:$0xff]
    %v4222 = vld [vmem:[%s4219 + $0x10] sm:$0xff]
    %v4223 = vld [vmem:[%s4219 + $0x18] sm:$0xff]
    %v4224 = vld [vmem:[%s4219 + $0x20] sm:$0xff]
    %v4225 = vld [vmem:[%s4219 + $0x28] sm:$0xff]
    %v4226 = vld [vmem:[%s4219 + $0x30] sm:$0xff]
    %v4227 = vld [vmem:[%s4219 + $0x38] sm:$0xff]
    %v4228 = vpack.c.bf16 %v4215, %v4214
    %v4229 = vld [vmem:[#allocation7] sm:$0xff]
    %v4230 = vld [vmem:[#allocation7 + $0x8] sm:$0xff]
    %v4231 = vld [vmem:[#allocation7 + $0x10] sm:$0xff]
    %v4232 = vld [vmem:[#allocation7 + $0x18] sm:$0xff]
    %v4233 = vld [vmem:[#allocation7 + $0x20] sm:$0xff]
    %v4234 = vld [vmem:[#allocation7 + $0x28] sm:$0xff]
    %v4235 = vld [vmem:[#allocation7 + $0x30] sm:$0xff]
    %v4236 = vld [vmem:[#allocation7 + $0x38] sm:$0xff]
    %v4237 = vld [vmem:[#allocation7 + $0x40] sm:$0xff]
    %v4238 = vld [vmem:[#allocation7 + $0x48] sm:$0xff]
    %v4239 = vld [vmem:[#allocation7 + $0x50] sm:$0xff]
    %v4240 = vld [vmem:[#allocation7 + $0x58] sm:$0xff]
    %v4241 = vld [vmem:[#allocation7 + $0x60] sm:$0xff]
    %v4242 = vld [vmem:[#allocation7 + $0x68] sm:$0xff]
    %v4243 = vld [vmem:[#allocation7 + $0x70] sm:$0xff]
    %v4244 = vld [vmem:[#allocation7 + $0x78] sm:$0xff]
    %v4245 = vld [vmem:[#allocation7 + $0x80] sm:$0xff]
    %v4246 = vld [vmem:[#allocation7 + $0x88] sm:$0xff]
    %v4247 = vld [vmem:[#allocation7 + $0x90] sm:$0xff]
    %v4248 = vld [vmem:[#allocation7 + $0x98] sm:$0xff]
    %v4249 = vld [vmem:[#allocation7 + $0xa0] sm:$0xff]
    %v4250 = vld [vmem:[#allocation7 + $0xa8] sm:$0xff]
    %v4251 = vld [vmem:[#allocation7 + $0xb0] sm:$0xff]
    %v4252 = vld [vmem:[#allocation7 + $0xb8] sm:$0xff]
    %v4253 = vld [vmem:[#allocation7 + $0xc0] sm:$0xff]
    %v4254 = vld [vmem:[#allocation7 + $0xc8] sm:$0xff]
    %v4255 = vld [vmem:[#allocation7 + $0xd0] sm:$0xff]
    %v4256 = vld [vmem:[#allocation7 + $0xd8] sm:$0xff]
    %v4257 = vld [vmem:[#allocation7 + $0xe0] sm:$0xff]
    %v4258 = vld [vmem:[#allocation7 + $0xe8] sm:$0xff]
    %v4259 = vld [vmem:[#allocation7 + $0xf0] sm:$0xff]
    %v4260 = vld [vmem:[#allocation7 + $0xf8] sm:$0xff]
    %v4293 = vunpack.c.l.b16 %v4229
    %v4294 = vunpack.c.h.b16 %v4229
    %v4295 = vunpack.c.l.b16 %v4230
    %v4296 = vunpack.c.h.b16 %v4230
    %v4297 = vunpack.c.l.b16 %v4231
    %v4298 = vunpack.c.h.b16 %v4231
    %v4299 = vunpack.c.l.b16 %v4232
    %v4300 = vunpack.c.h.b16 %v4232
    %v4301 = vunpack.c.l.b16 %v4233
    %v4302 = vunpack.c.h.b16 %v4233
    %v4303 = vunpack.c.l.b16 %v4234
    %v4304 = vunpack.c.h.b16 %v4234
    %v4305 = vunpack.c.l.b16 %v4235
    %v4306 = vunpack.c.h.b16 %v4235
    %v4307 = vunpack.c.l.b16 %v4236
    %v4308 = vunpack.c.h.b16 %v4236
    %v4309 = vunpack.c.l.b16 %v4237
    %v4310 = vunpack.c.h.b16 %v4237
    %v4311 = vunpack.c.l.b16 %v4238
    %v4312 = vunpack.c.h.b16 %v4238
    %v4313 = vunpack.c.l.b16 %v4239
    %v4314 = vunpack.c.h.b16 %v4239
    %v4315 = vunpack.c.l.b16 %v4240
    %v4316 = vunpack.c.h.b16 %v4240
    %v4317 = vunpack.c.l.b16 %v4241
    %v4318 = vunpack.c.h.b16 %v4241
    %v4319 = vunpack.c.l.b16 %v4242
    %v4320 = vunpack.c.h.b16 %v4242
    %v4321 = vunpack.c.l.b16 %v4243
    %v4322 = vunpack.c.h.b16 %v4243
    %v4323 = vunpack.c.l.b16 %v4244
    %v4324 = vunpack.c.h.b16 %v4244
    %v4325 = vunpack.c.l.b16 %v4245
    %v4326 = vunpack.c.h.b16 %v4245
    %v4327 = vunpack.c.l.b16 %v4246
    %v4328 = vunpack.c.h.b16 %v4246
    %v4329 = vunpack.c.l.b16 %v4247
    %v4330 = vunpack.c.h.b16 %v4247
    %v4331 = vunpack.c.l.b16 %v4248
    %v4332 = vunpack.c.h.b16 %v4248
    %v4333 = vunpack.c.l.b16 %v4249
    %v4334 = vunpack.c.h.b16 %v4249
    %v4335 = vunpack.c.l.b16 %v4250
    %v4336 = vunpack.c.h.b16 %v4250
    %v4337 = vunpack.c.l.b16 %v4251
    %v4338 = vunpack.c.h.b16 %v4251
    %v4339 = vunpack.c.l.b16 %v4252
    %v4340 = vunpack.c.h.b16 %v4252
    %v4341 = vunpack.c.l.b16 %v4253
    %v4342 = vunpack.c.h.b16 %v4253
    %v4343 = vunpack.c.l.b16 %v4254
    %v4344 = vunpack.c.h.b16 %v4254
    %v4345 = vunpack.c.l.b16 %v4255
    %v4346 = vunpack.c.h.b16 %v4255
    %v4347 = vunpack.c.l.b16 %v4256
    %v4348 = vunpack.c.h.b16 %v4256
    %v4349 = vunpack.c.l.b16 %v4257
    %v4350 = vunpack.c.h.b16 %v4257
    %v4351 = vunpack.c.l.b16 %v4258
    %v4352 = vunpack.c.h.b16 %v4258
    %v4353 = vunpack.c.l.b16 %v4259
    %v4354 = vunpack.c.h.b16 %v4259
    %v4355 = vunpack.c.l.b16 %v4260
    %v4356 = vunpack.c.h.b16 %v4260
    %v4357 = vpack.c.b16 %v4297, %v4293
    %v4358 = vpack.c.b16 %v4298, %v4294
    %v4359 = vpack.c.b16 %v4299, %v4295
    %v4360 = vpack.c.b16 %v4300, %v4296
    %v4361 = vpack.c.b16 %v4305, %v4301
    %v4362 = vpack.c.b16 %v4306, %v4302
    %v4363 = vpack.c.b16 %v4307, %v4303
    %v4364 = vpack.c.b16 %v4308, %v4304
    %v4365 = vpack.c.b16 %v4313, %v4309
    %v4366 = vpack.c.b16 %v4314, %v4310
    %v4367 = vpack.c.b16 %v4315, %v4311
    %v4368 = vpack.c.b16 %v4316, %v4312
    %v4369 = vpack.c.b16 %v4321, %v4317
    %v4370 = vpack.c.b16 %v4322, %v4318
    %v4371 = vpack.c.b16 %v4323, %v4319
    %v4372 = vpack.c.b16 %v4324, %v4320
    %v4373 = vpack.c.b16 %v4329, %v4325
    %v4374 = vpack.c.b16 %v4330, %v4326
    %v4375 = vpack.c.b16 %v4331, %v4327
    %v4376 = vpack.c.b16 %v4332, %v4328
    %v4377 = vpack.c.b16 %v4337, %v4333
    %v4378 = vpack.c.b16 %v4338, %v4334
    %v4379 = vpack.c.b16 %v4339, %v4335
    %v4380 = vpack.c.b16 %v4340, %v4336
    %v4381 = vpack.c.b16 %v4345, %v4341
    %v4382 = vpack.c.b16 %v4346, %v4342
    %v4383 = vpack.c.b16 %v4347, %v4343
    %v4384 = vpack.c.b16 %v4348, %v4344
    %v4385 = vpack.c.b16 %v4353, %v4349
    %v4386 = vpack.c.b16 %v4354, %v4350
    %v4387 = vpack.c.b16 %v4355, %v4351
    %v4388 = vpack.c.b16 %v4356, %v4352
    %4421 = vmatprep.subr.bf16.mxu0 %v4358
    %4422 = vmatpush1.bf16.msra.mxu0 %v4357
    %4423 = vmatprep.subr.bf16.mxu0 %v4362
    %4424 = vmatpush1.bf16.msra.mxu0 %v4361
    %4425 = vmatprep.subr.bf16.mxu0 %v4366
    %4426 = vmatpush1.bf16.msra.mxu0 %v4365
    %4427 = vmatprep.subr.bf16.mxu0 %v4370
    %4428 = vmatpush1.bf16.msra.mxu0 %v4369
    %4429 = vmatprep.subr.bf16.mxu0 %v4374
    %4430 = vmatpush1.bf16.msra.mxu0 %v4373
    %4431 = vmatprep.subr.bf16.mxu0 %v4378
    %4432 = vmatpush1.bf16.msra.mxu0 %v4377
    %4433 = vmatprep.subr.bf16.mxu0 %v4382
    %4434 = vmatpush1.bf16.msra.mxu0 %v4381
    %4435 = vmatprep.subr.bf16.mxu0 %v4386
    %4436 = vmatpush1.bf16.msra.mxu0 %v4385
    %4437 = vmatprep.subr.bf16.mxu0 0
    %4438 = vmatpush1.bf16.msra.mxu0 0
    %4439 = vmatprep.subr.bf16.mxu0 0
    %4440 = vmatpush1.bf16.msra.mxu0 0
    %4441 = vmatprep.subr.bf16.mxu0 0
    %4442 = vmatpush1.bf16.msra.mxu0 0
    %4443 = vmatprep.subr.bf16.mxu0 0
    %4444 = vmatpush1.bf16.msra.mxu0 0
    %4445 = vmatprep.subr.bf16.mxu0 0
    %4446 = vmatpush1.bf16.msra.mxu0 0
    %4447 = vmatprep.subr.bf16.mxu0 0
    %4448 = vmatpush1.bf16.msra.mxu0 0
    %4449 = vmatprep.subr.bf16.mxu0 0
    %4450 = vmatpush1.bf16.msra.mxu0 0
    %4451 = vmatprep.subr.bf16.mxu0 0
    %4452 = vmatpush1.bf16.msra.mxu0 0
    %4453 = vmatprep.mubr.bf16.mxu0 0
    %4454 = vmatmul.mubr.bf16.gmra.mrb[0].mxu0 %v4228
    %v4455 = vpop.f32.mrb[0].mxu0
    %v4456 = vadd.f32 0.0, %v4455
    %v4457 = vpop.f32.mrb[0].mxu0
    %v4458 = vadd.f32 0.0, %v4457
    %v4459 = vpop.f32.mrb[0].mxu0
    %v4460 = vadd.f32 0.0, %v4459
    %v4461 = vpop.f32.mrb[0].mxu0
    %v4462 = vadd.f32 0.0, %v4461
    %4463 = vdwg.mxu0
    %4464 = vmatprep.subr.bf16.mxu0 %v4360
    %4465 = vmatpush1.bf16.msra.mxu0 %v4359
    %4466 = vmatprep.subr.bf16.mxu0 %v4364
    %4467 = vmatpush1.bf16.msra.mxu0 %v4363
    %4468 = vmatprep.subr.bf16.mxu0 %v4368
    %4469 = vmatpush1.bf16.msra.mxu0 %v4367
    %4470 = vmatprep.subr.bf16.mxu0 %v4372
    %4471 = vmatpush1.bf16.msra.mxu0 %v4371
    %4472 = vmatprep.subr.bf16.mxu0 %v4376
    %4473 = vmatpush1.bf16.msra.mxu0 %v4375
    %4474 = vmatprep.subr.bf16.mxu0 %v4380
    %4475 = vmatpush1.bf16.msra.mxu0 %v4379
    %4476 = vmatprep.subr.bf16.mxu0 %v4384
    %4477 = vmatpush1.bf16.msra.mxu0 %v4383
    %4478 = vmatprep.subr.bf16.mxu0 %v4388
    %4479 = vmatpush1.bf16.msra.mxu0 %v4387
    %4480 = vmatprep.subr.bf16.mxu0 0
    %4481 = vmatpush1.bf16.msra.mxu0 0
    %4482 = vmatprep.subr.bf16.mxu0 0
    %4483 = vmatpush1.bf16.msra.mxu0 0
    %4484 = vmatprep.subr.bf16.mxu0 0
    %4485 = vmatpush1.bf16.msra.mxu0 0
    %4486 = vmatprep.subr.bf16.mxu0 0
    %4487 = vmatpush1.bf16.msra.mxu0 0
    %4488 = vmatprep.subr.bf16.mxu0 0
    %4489 = vmatpush1.bf16.msra.mxu0 0
    %4490 = vmatprep.subr.bf16.mxu0 0
    %4491 = vmatpush1.bf16.msra.mxu0 0
    %4492 = vmatprep.subr.bf16.mxu0 0
    %4493 = vmatpush1.bf16.msra.mxu0 0
    %4494 = vmatprep.subr.bf16.mxu0 0
    %4495 = vmatpush1.bf16.msra.mxu0 0
    %4496 = vmatprep.mubr.bf16.mxu0 0
    %4497 = vmatmul.mubr.bf16.gmra.mrb[0].mxu0 %v4228
    %v4498 = vpop.f32.mrb[0].mxu0
    %v4499 = vadd.f32 0.0, %v4498
    %v4500 = vpop.f32.mrb[0].mxu0
    %v4501 = vadd.f32 0.0, %v4500
    %v4502 = vpop.f32.mrb[0].mxu0
    %v4503 = vadd.f32 0.0, %v4502
    %v4504 = vpop.f32.mrb[0].mxu0
    %v4505 = vadd.f32 0.0, %v4504
    %4506 = vdwg.mxu0
    %v4507 = vadd.f32 %v4220, %v4456
    %v4508 = vadd.f32 %v4221, %v4458
    %v4509 = vadd.f32 %v4222, %v4499
    %v4510 = vadd.f32 %v4223, %v4501
    %v4511 = vadd.f32 %v4224, %v4460
    %v4512 = vadd.f32 %v4225, %v4462
    %v4513 = vadd.f32 %v4226, %v4503
    %v4514 = vadd.f32 %v4227, %v4505
    %v4515 = vxor.u32 %v4507, 2147483648
    %v4516 = vxor.u32 %v4511, 2147483648
    %v4517 = vmul.f32 %v4515, 1.442695
    %v4518 = vpow.pop %v4517
    %v4519 = vmul.f32 %v4516, 1.442695
    %v4520 = vpow.pop %v4519
    %v4521 = vadd.f32 %v4518, 1.0
    %v4522 = vadd.f32 %v4520, 1.0
    %v4523 = vrcp.pop %v4521
    %v4524 = vmul.f32 1.0, %v4523
    %v4525 = vrcp.pop %v4522
    %v4526 = vmul.f32 1.0, %v4525
    %v4527 = vxor.u32 %v4508, 2147483648
    %v4528 = vxor.u32 %v4512, 2147483648
    %v4529 = vmul.f32 %v4527, 1.442695
    %v4530 = vpow.pop %v4529
    %v4531 = vmul.f32 %v4528, 1.442695
    %v4532 = vpow.pop %v4531
    %v4533 = vadd.f32 %v4530, 1.0
    %v4534 = vadd.f32 %v4532, 1.0
    %v4535 = vrcp.pop %v4533
    %v4536 = vmul.f32 1.0, %v4535
    %v4537 = vrcp.pop %v4534
    %v4538 = vmul.f32 1.0, %v4537
    %v4539 = vxor.u32 %v4509, 2147483648
    %v4540 = vxor.u32 %v4513, 2147483648
    %v4541 = vmul.f32 %v4539, 1.442695
    %v4542 = vpow.pop %v4541
    %v4543 = vmul.f32 %v4540, 1.442695
    %v4544 = vpow.pop %v4543
    %v4545 = vadd.f32 %v4542, 1.0
    %v4546 = vadd.f32 %v4544, 1.0
    %v4547 = vrcp.pop %v4545
    %v4548 = vmul.f32 1.0, %v4547
    %v4549 = vrcp.pop %v4546
    %v4550 = vmul.f32 1.0, %v4549
    %v4551 = vtanh.pop %v4510
    %v4552 = vtanh.pop %v4514
    %v4553 = vmul.f32 %v4524, %v4210
    %v4554 = vmul.f32 %v4526, %v4211
    %v4555 = vmul.f32 %v4536, %v4551
    %v4556 = vmul.f32 %v4538, %v4552
    %v4557 = vadd.f32 %v4553, %v4555
    %v4558 = vadd.f32 %v4554, %v4556
    %v4559 = vtanh.pop %v4557
    %v4560 = vtanh.pop %v4558
    %v4561 = vmul.f32 %v4548, %v4559
    %v4562 = vmul.f32 %v4550, %v4560
    %s4563 = scalar_lea.vmem [#allocation9], 192
    %4564 = vst [vmem:[%s4563] sm:$0xff] %v4561
    %4565 = vst [vmem:[%s4563 + $0x8] sm:$0xff] %v4562
    %s4566 = scalar_lea.vmem [#allocation4], 832
    %v4567 = vld [vmem:[%s4566] sm:$0xff]
    %v4568 = vld [vmem:[%s4566 + $0x8] sm:$0xff]
    %v4569 = vld [vmem:[%s4566 + $0x10] sm:$0xff]
    %v4570 = vld [vmem:[%s4566 + $0x18] sm:$0xff]
    %v4571 = vld [vmem:[%s4566 + $0x20] sm:$0xff]
    %v4572 = vld [vmem:[%s4566 + $0x28] sm:$0xff]
    %v4573 = vld [vmem:[%s4566 + $0x30] sm:$0xff]
    %v4574 = vld [vmem:[%s4566 + $0x38] sm:$0xff]
    %v4575 = vpack.c.bf16 %v4562, %v4561
    %v4576 = vld [vmem:[#allocation7] sm:$0xff]
    %v4577 = vld [vmem:[#allocation7 + $0x8] sm:$0xff]
    %v4578 = vld [vmem:[#allocation7 + $0x10] sm:$0xff]
    %v4579 = vld [vmem:[#allocation7 + $0x18] sm:$0xff]
    %v4580 = vld [vmem:[#allocation7 + $0x20] sm:$0xff]
    %v4581 = vld [vmem:[#allocation7 + $0x28] sm:$0xff]
    %v4582 = vld [vmem:[#allocation7 + $0x30] sm:$0xff]
    %v4583 = vld [vmem:[#allocation7 + $0x38] sm:$0xff]
    %v4584 = vld [vmem:[#allocation7 + $0x40] sm:$0xff]
    %v4585 = vld [vmem:[#allocation7 + $0x48] sm:$0xff]
    %v4586 = vld [vmem:[#allocation7 + $0x50] sm:$0xff]
    %v4587 = vld [vmem:[#allocation7 + $0x58] sm:$0xff]
    %v4588 = vld [vmem:[#allocation7 + $0x60] sm:$0xff]
    %v4589 = vld [vmem:[#allocation7 + $0x68] sm:$0xff]
    %v4590 = vld [vmem:[#allocation7 + $0x70] sm:$0xff]
    %v4591 = vld [vmem:[#allocation7 + $0x78] sm:$0xff]
    %v4592 = vld [vmem:[#allocation7 + $0x80] sm:$0xff]
    %v4593 = vld [vmem:[#allocation7 + $0x88] sm:$0xff]
    %v4594 = vld [vmem:[#allocation7 + $0x90] sm:$0xff]
    %v4595 = vld [vmem:[#allocation7 + $0x98] sm:$0xff]
    %v4596 = vld [vmem:[#allocation7 + $0xa0] sm:$0xff]
    %v4597 = vld [vmem:[#allocation7 + $0xa8] sm:$0xff]
    %v4598 = vld [vmem:[#allocation7 + $0xb0] sm:$0xff]
    %v4599 = vld [vmem:[#allocation7 + $0xb8] sm:$0xff]
    %v4600 = vld [vmem:[#allocation7 + $0xc0] sm:$0xff]
    %v4601 = vld [vmem:[#allocation7 + $0xc8] sm:$0xff]
    %v4602 = vld [vmem:[#allocation7 + $0xd0] sm:$0xff]
    %v4603 = vld [vmem:[#allocation7 + $0xd8] sm:$0xff]
    %v4604 = vld [vmem:[#allocation7 + $0xe0] sm:$0xff]
    %v4605 = vld [vmem:[#allocation7 + $0xe8] sm:$0xff]
    %v4606 = vld [vmem:[#allocation7 + $0xf0] sm:$0xff]
    %v4607 = vld [vmem:[#allocation7 + $0xf8] sm:$0xff]
    %v4640 = vunpack.c.l.b16 %v4576
    %v4641 = vunpack.c.h.b16 %v4576
    %v4642 = vunpack.c.l.b16 %v4577
    %v4643 = vunpack.c.h.b16 %v4577
    %v4644 = vunpack.c.l.b16 %v4578
    %v4645 = vunpack.c.h.b16 %v4578
    %v4646 = vunpack.c.l.b16 %v4579
    %v4647 = vunpack.c.h.b16 %v4579
    %v4648 = vunpack.c.l.b16 %v4580
    %v4649 = vunpack.c.h.b16 %v4580
    %v4650 = vunpack.c.l.b16 %v4581
    %v4651 = vunpack.c.h.b16 %v4581
    %v4652 = vunpack.c.l.b16 %v4582
    %v4653 = vunpack.c.h.b16 %v4582
    %v4654 = vunpack.c.l.b16 %v4583
    %v4655 = vunpack.c.h.b16 %v4583
    %v4656 = vunpack.c.l.b16 %v4584
    %v4657 = vunpack.c.h.b16 %v4584
    %v4658 = vunpack.c.l.b16 %v4585
    %v4659 = vunpack.c.h.b16 %v4585
    %v4660 = vunpack.c.l.b16 %v4586
    %v4661 = vunpack.c.h.b16 %v4586
    %v4662 = vunpack.c.l.b16 %v4587
    %v4663 = vunpack.c.h.b16 %v4587
    %v4664 = vunpack.c.l.b16 %v4588
    %v4665 = vunpack.c.h.b16 %v4588
    %v4666 = vunpack.c.l.b16 %v4589
    %v4667 = vunpack.c.h.b16 %v4589
    %v4668 = vunpack.c.l.b16 %v4590
    %v4669 = vunpack.c.h.b16 %v4590
    %v4670 = vunpack.c.l.b16 %v4591
    %v4671 = vunpack.c.h.b16 %v4591
    %v4672 = vunpack.c.l.b16 %v4592
    %v4673 = vunpack.c.h.b16 %v4592
    %v4674 = vunpack.c.l.b16 %v4593
    %v4675 = vunpack.c.h.b16 %v4593
    %v4676 = vunpack.c.l.b16 %v4594
    %v4677 = vunpack.c.h.b16 %v4594
    %v4678 = vunpack.c.l.b16 %v4595
    %v4679 = vunpack.c.h.b16 %v4595
    %v4680 = vunpack.c.l.b16 %v4596
    %v4681 = vunpack.c.h.b16 %v4596
    %v4682 = vunpack.c.l.b16 %v4597
    %v4683 = vunpack.c.h.b16 %v4597
    %v4684 = vunpack.c.l.b16 %v4598
    %v4685 = vunpack.c.h.b16 %v4598
    %v4686 = vunpack.c.l.b16 %v4599
    %v4687 = vunpack.c.h.b16 %v4599
    %v4688 = vunpack.c.l.b16 %v4600
    %v4689 = vunpack.c.h.b16 %v4600
    %v4690 = vunpack.c.l.b16 %v4601
    %v4691 = vunpack.c.h.b16 %v4601
    %v4692 = vunpack.c.l.b16 %v4602
    %v4693 = vunpack.c.h.b16 %v4602
    %v4694 = vunpack.c.l.b16 %v4603
    %v4695 = vunpack.c.h.b16 %v4603
    %v4696 = vunpack.c.l.b16 %v4604
    %v4697 = vunpack.c.h.b16 %v4604
    %v4698 = vunpack.c.l.b16 %v4605
    %v4699 = vunpack.c.h.b16 %v4605
    %v4700 = vunpack.c.l.b16 %v4606
    %v4701 = vunpack.c.h.b16 %v4606
    %v4702 = vunpack.c.l.b16 %v4607
    %v4703 = vunpack.c.h.b16 %v4607
    %v4704 = vpack.c.b16 %v4644, %v4640
    %v4705 = vpack.c.b16 %v4645, %v4641
    %v4706 = vpack.c.b16 %v4646, %v4642
    %v4707 = vpack.c.b16 %v4647, %v4643
    %v4708 = vpack.c.b16 %v4652, %v4648
    %v4709 = vpack.c.b16 %v4653, %v4649
    %v4710 = vpack.c.b16 %v4654, %v4650
    %v4711 = vpack.c.b16 %v4655, %v4651
    %v4712 = vpack.c.b16 %v4660, %v4656
    %v4713 = vpack.c.b16 %v4661, %v4657
    %v4714 = vpack.c.b16 %v4662, %v4658
    %v4715 = vpack.c.b16 %v4663, %v4659
    %v4716 = vpack.c.b16 %v4668, %v4664
    %v4717 = vpack.c.b16 %v4669, %v4665
    %v4718 = vpack.c.b16 %v4670, %v4666
    %v4719 = vpack.c.b16 %v4671, %v4667
    %v4720 = vpack.c.b16 %v4676, %v4672
    %v4721 = vpack.c.b16 %v4677, %v4673
    %v4722 = vpack.c.b16 %v4678, %v4674
    %v4723 = vpack.c.b16 %v4679, %v4675
    %v4724 = vpack.c.b16 %v4684, %v4680
    %v4725 = vpack.c.b16 %v4685, %v4681
    %v4726 = vpack.c.b16 %v4686, %v4682
    %v4727 = vpack.c.b16 %v4687, %v4683
    %v4728 = vpack.c.b16 %v4692, %v4688
    %v4729 = vpack.c.b16 %v4693, %v4689
    %v4730 = vpack.c.b16 %v4694, %v4690
    %v4731 = vpack.c.b16 %v4695, %v4691
    %v4732 = vpack.c.b16 %v4700, %v4696
    %v4733 = vpack.c.b16 %v4701, %v4697
    %v4734 = vpack.c.b16 %v4702, %v4698
    %v4735 = vpack.c.b16 %v4703, %v4699
    %4768 = vmatprep.subr.bf16.mxu0 %v4705
    %4769 = vmatpush1.bf16.msra.mxu0 %v4704
    %4770 = vmatprep.subr.bf16.mxu0 %v4709
    %4771 = vmatpush1.bf16.msra.mxu0 %v4708
    %4772 = vmatprep.subr.bf16.mxu0 %v4713
    %4773 = vmatpush1.bf16.msra.mxu0 %v4712
    %4774 = vmatprep.subr.bf16.mxu0 %v4717
    %4775 = vmatpush1.bf16.msra.mxu0 %v4716
    %4776 = vmatprep.subr.bf16.mxu0 %v4721
    %4777 = vmatpush1.bf16.msra.mxu0 %v4720
    %4778 = vmatprep.subr.bf16.mxu0 %v4725
    %4779 = vmatpush1.bf16.msra.mxu0 %v4724
    %4780 = vmatprep.subr.bf16.mxu0 %v4729
    %4781 = vmatpush1.bf16.msra.mxu0 %v4728
    %4782 = vmatprep.subr.bf16.mxu0 %v4733
    %4783 = vmatpush1.bf16.msra.mxu0 %v4732
    %4784 = vmatprep.subr.bf16.mxu0 0
    %4785 = vmatpush1.bf16.msra.mxu0 0
    %4786 = vmatprep.subr.bf16.mxu0 0
    %4787 = vmatpush1.bf16.msra.mxu0 0
    %4788 = vmatprep.subr.bf16.mxu0 0
    %4789 = vmatpush1.bf16.msra.mxu0 0
    %4790 = vmatprep.subr.bf16.mxu0 0
    %4791 = vmatpush1.bf16.msra.mxu0 0
    %4792 = vmatprep.subr.bf16.mxu0 0
    %4793 = vmatpush1.bf16.msra.mxu0 0
    %4794 = vmatprep.subr.bf16.mxu0 0
    %4795 = vmatpush1.bf16.msra.mxu0 0
    %4796 = vmatprep.subr.bf16.mxu0 0
    %4797 = vmatpush1.bf16.msra.mxu0 0
    %4798 = vmatprep.subr.bf16.mxu0 0
    %4799 = vmatpush1.bf16.msra.mxu0 0
    %4800 = vmatprep.mubr.bf16.mxu0 0
    %4801 = vmatmul.mubr.bf16.gmra.mrb[0].mxu0 %v4575
    %v4802 = vpop.f32.mrb[0].mxu0
    %v4803 = vadd.f32 0.0, %v4802
    %v4804 = vpop.f32.mrb[0].mxu0
    %v4805 = vadd.f32 0.0, %v4804
    %v4806 = vpop.f32.mrb[0].mxu0
    %v4807 = vadd.f32 0.0, %v4806
    %v4808 = vpop.f32.mrb[0].mxu0
    %v4809 = vadd.f32 0.0, %v4808
    %4810 = vdwg.mxu0
    %4811 = vmatprep.subr.bf16.mxu0 %v4707
    %4812 = vmatpush1.bf16.msra.mxu0 %v4706
    %4813 = vmatprep.subr.bf16.mxu0 %v4711
    %4814 = vmatpush1.bf16.msra.mxu0 %v4710
    %4815 = vmatprep.subr.bf16.mxu0 %v4715
    %4816 = vmatpush1.bf16.msra.mxu0 %v4714
    %4817 = vmatprep.subr.bf16.mxu0 %v4719
    %4818 = vmatpush1.bf16.msra.mxu0 %v4718
    %4819 = vmatprep.subr.bf16.mxu0 %v4723
    %4820 = vmatpush1.bf16.msra.mxu0 %v4722
    %4821 = vmatprep.subr.bf16.mxu0 %v4727
    %4822 = vmatpush1.bf16.msra.mxu0 %v4726
    %4823 = vmatprep.subr.bf16.mxu0 %v4731
    %4824 = vmatpush1.bf16.msra.mxu0 %v4730
    %4825 = vmatprep.subr.bf16.mxu0 %v4735
    %4826 = vmatpush1.bf16.msra.mxu0 %v4734
    %4827 = vmatprep.subr.bf16.mxu0 0
    %4828 = vmatpush1.bf16.msra.mxu0 0
    %4829 = vmatprep.subr.bf16.mxu0 0
    %4830 = vmatpush1.bf16.msra.mxu0 0
    %4831 = vmatprep.subr.bf16.mxu0 0
    %4832 = vmatpush1.bf16.msra.mxu0 0
    %4833 = vmatprep.subr.bf16.mxu0 0
    %4834 = vmatpush1.bf16.msra.mxu0 0
    %4835 = vmatprep.subr.bf16.mxu0 0
    %4836 = vmatpush1.bf16.msra.mxu0 0
    %4837 = vmatprep.subr.bf16.mxu0 0
    %4838 = vmatpush1.bf16.msra.mxu0 0
    %4839 = vmatprep.subr.bf16.mxu0 0
    %4840 = vmatpush1.bf16.msra.mxu0 0
    %4841 = vmatprep.subr.bf16.mxu0 0
    %4842 = vmatpush1.bf16.msra.mxu0 0
    %4843 = vmatprep.mubr.bf16.mxu0 0
    %4844 = vmatmul.mubr.bf16.gmra.mrb[0].mxu0 %v4575
    %v4845 = vpop.f32.mrb[0].mxu0
    %v4846 = vadd.f32 0.0, %v4845
    %v4847 = vpop.f32.mrb[0].mxu0
    %v4848 = vadd.f32 0.0, %v4847
    %v4849 = vpop.f32.mrb[0].mxu0
    %v4850 = vadd.f32 0.0, %v4849
    %v4851 = vpop.f32.mrb[0].mxu0
    %v4852 = vadd.f32 0.0, %v4851
    %4853 = vdwg.mxu0
    %v4854 = vadd.f32 %v4567, %v4803
    %v4855 = vadd.f32 %v4568, %v4805
    %v4856 = vadd.f32 %v4569, %v4846
    %v4857 = vadd.f32 %v4570, %v4848
    %v4858 = vadd.f32 %v4571, %v4807
    %v4859 = vadd.f32 %v4572, %v4809
    %v4860 = vadd.f32 %v4573, %v4850
    %v4861 = vadd.f32 %v4574, %v4852
    %v4862 = vxor.u32 %v4854, 2147483648
    %v4863 = vxor.u32 %v4858, 2147483648
    %v4864 = vmul.f32 %v4862, 1.442695
    %v4865 = vpow.pop %v4864
    %v4866 = vmul.f32 %v4863, 1.442695
    %v4867 = vpow.pop %v4866
    %v4868 = vadd.f32 %v4865, 1.0
    %v4869 = vadd.f32 %v4867, 1.0
    %v4870 = vrcp.pop %v4868
    %v4871 = vmul.f32 1.0, %v4870
    %v4872 = vrcp.pop %v4869
    %v4873 = vmul.f32 1.0, %v4872
    %v4874 = vxor.u32 %v4855, 2147483648
    %v4875 = vxor.u32 %v4859, 2147483648
    %v4876 = vmul.f32 %v4874, 1.442695
    %v4877 = vpow.pop %v4876
    %v4878 = vmul.f32 %v4875, 1.442695
    %v4879 = vpow.pop %v4878
    %v4880 = vadd.f32 %v4877, 1.0
    %v4881 = vadd.f32 %v4879, 1.0
    %v4882 = vrcp.pop %v4880
    %v4883 = vmul.f32 1.0, %v4882
    %v4884 = vrcp.pop %v4881
    %v4885 = vmul.f32 1.0, %v4884
    %v4886 = vxor.u32 %v4856, 2147483648
    %v4887 = vxor.u32 %v4860, 2147483648
    %v4888 = vmul.f32 %v4886, 1.442695
    %v4889 = vpow.pop %v4888
    %v4890 = vmul.f32 %v4887, 1.442695
    %v4891 = vpow.pop %v4890
    %v4892 = vadd.f32 %v4889, 1.0
    %v4893 = vadd.f32 %v4891, 1.0
    %v4894 = vrcp.pop %v4892
    %v4895 = vmul.f32 1.0, %v4894
    %v4896 = vrcp.pop %v4893
    %v4897 = vmul.f32 1.0, %v4896
    %v4898 = vtanh.pop %v4857
    %v4899 = vtanh.pop %v4861
    %v4900 = vmul.f32 %v4871, %v4557
    %v4901 = vmul.f32 %v4873, %v4558
    %v4902 = vmul.f32 %v4883, %v4898
    %v4903 = vmul.f32 %v4885, %v4899
    %v4904 = vadd.f32 %v4900, %v4902
    %v4905 = vadd.f32 %v4901, %v4903
    %v4906 = vtanh.pop %v4904
    %v4907 = vtanh.pop %v4905
    %v4908 = vmul.f32 %v4895, %v4906
    %v4909 = vmul.f32 %v4897, %v4907
    %s4910 = scalar_lea.vmem [#allocation9], 208
    %4911 = vst [vmem:[%s4910] sm:$0xff] %v4908
    %4912 = vst [vmem:[%s4910 + $0x8] sm:$0xff] %v4909
    %s4913 = scalar_lea.vmem [#allocation4], 896
    %v4914 = vld [vmem:[%s4913] sm:$0xff]
    %v4915 = vld [vmem:[%s4913 + $0x8] sm:$0xff]
    %v4916 = vld [vmem:[%s4913 + $0x10] sm:$0xff]
    %v4917 = vld [vmem:[%s4913 + $0x18] sm:$0xff]
    %v4918 = vld [vmem:[%s4913 + $0x20] sm:$0xff]
    %v4919 = vld [vmem:[%s4913 + $0x28] sm:$0xff]
    %v4920 = vld [vmem:[%s4913 + $0x30] sm:$0xff]
    %v4921 = vld [vmem:[%s4913 + $0x38] sm:$0xff]
    %v4922 = vpack.c.bf16 %v4909, %v4908
    %v4923 = vld [vmem:[#allocation7] sm:$0xff]
    %v4924 = vld [vmem:[#allocation7 + $0x8] sm:$0xff]
    %v4925 = vld [vmem:[#allocation7 + $0x10] sm:$0xff]
    %v4926 = vld [vmem:[#allocation7 + $0x18] sm:$0xff]
    %v4927 = vld [vmem:[#allocation7 + $0x20] sm:$0xff]
    %v4928 = vld [vmem:[#allocation7 + $0x28] sm:$0xff]
    %v4929 = vld [vmem:[#allocation7 + $0x30] sm:$0xff]
    %v4930 = vld [vmem:[#allocation7 + $0x38] sm:$0xff]
    %v4931 = vld [vmem:[#allocation7 + $0x40] sm:$0xff]
    %v4932 = vld [vmem:[#allocation7 + $0x48] sm:$0xff]
    %v4933 = vld [vmem:[#allocation7 + $0x50] sm:$0xff]
    %v4934 = vld [vmem:[#allocation7 + $0x58] sm:$0xff]
    %v4935 = vld [vmem:[#allocation7 + $0x60] sm:$0xff]
    %v4936 = vld [vmem:[#allocation7 + $0x68] sm:$0xff]
    %v4937 = vld [vmem:[#allocation7 + $0x70] sm:$0xff]
    %v4938 = vld [vmem:[#allocation7 + $0x78] sm:$0xff]
    %v4939 = vld [vmem:[#allocation7 + $0x80] sm:$0xff]
    %v4940 = vld [vmem:[#allocation7 + $0x88] sm:$0xff]
    %v4941 = vld [vmem:[#allocation7 + $0x90] sm:$0xff]
    %v4942 = vld [vmem:[#allocation7 + $0x98] sm:$0xff]
    %v4943 = vld [vmem:[#allocation7 + $0xa0] sm:$0xff]
    %v4944 = vld [vmem:[#allocation7 + $0xa8] sm:$0xff]
    %v4945 = vld [vmem:[#allocation7 + $0xb0] sm:$0xff]
    %v4946 = vld [vmem:[#allocation7 + $0xb8] sm:$0xff]
    %v4947 = vld [vmem:[#allocation7 + $0xc0] sm:$0xff]
    %v4948 = vld [vmem:[#allocation7 + $0xc8] sm:$0xff]
    %v4949 = vld [vmem:[#allocation7 + $0xd0] sm:$0xff]
    %v4950 = vld [vmem:[#allocation7 + $0xd8] sm:$0xff]
    %v4951 = vld [vmem:[#allocation7 + $0xe0] sm:$0xff]
    %v4952 = vld [vmem:[#allocation7 + $0xe8] sm:$0xff]
    %v4953 = vld [vmem:[#allocation7 + $0xf0] sm:$0xff]
    %v4954 = vld [vmem:[#allocation7 + $0xf8] sm:$0xff]
    %v4987 = vunpack.c.l.b16 %v4923
    %v4988 = vunpack.c.h.b16 %v4923
    %v4989 = vunpack.c.l.b16 %v4924
    %v4990 = vunpack.c.h.b16 %v4924
    %v4991 = vunpack.c.l.b16 %v4925
    %v4992 = vunpack.c.h.b16 %v4925
    %v4993 = vunpack.c.l.b16 %v4926
    %v4994 = vunpack.c.h.b16 %v4926
    %v4995 = vunpack.c.l.b16 %v4927
    %v4996 = vunpack.c.h.b16 %v4927
    %v4997 = vunpack.c.l.b16 %v4928
    %v4998 = vunpack.c.h.b16 %v4928
    %v4999 = vunpack.c.l.b16 %v4929
    %v5000 = vunpack.c.h.b16 %v4929
    %v5001 = vunpack.c.l.b16 %v4930
    %v5002 = vunpack.c.h.b16 %v4930
    %v5003 = vunpack.c.l.b16 %v4931
    %v5004 = vunpack.c.h.b16 %v4931
    %v5005 = vunpack.c.l.b16 %v4932
    %v5006 = vunpack.c.h.b16 %v4932
    %v5007 = vunpack.c.l.b16 %v4933
    %v5008 = vunpack.c.h.b16 %v4933
    %v5009 = vunpack.c.l.b16 %v4934
    %v5010 = vunpack.c.h.b16 %v4934
    %v5011 = vunpack.c.l.b16 %v4935
    %v5012 = vunpack.c.h.b16 %v4935
    %v5013 = vunpack.c.l.b16 %v4936
    %v5014 = vunpack.c.h.b16 %v4936
    %v5015 = vunpack.c.l.b16 %v4937
    %v5016 = vunpack.c.h.b16 %v4937
    %v5017 = vunpack.c.l.b16 %v4938
    %v5018 = vunpack.c.h.b16 %v4938
    %v5019 = vunpack.c.l.b16 %v4939
    %v5020 = vunpack.c.h.b16 %v4939
    %v5021 = vunpack.c.l.b16 %v4940
    %v5022 = vunpack.c.h.b16 %v4940
    %v5023 = vunpack.c.l.b16 %v4941
    %v5024 = vunpack.c.h.b16 %v4941
    %v5025 = vunpack.c.l.b16 %v4942
    %v5026 = vunpack.c.h.b16 %v4942
    %v5027 = vunpack.c.l.b16 %v4943
    %v5028 = vunpack.c.h.b16 %v4943
    %v5029 = vunpack.c.l.b16 %v4944
    %v5030 = vunpack.c.h.b16 %v4944
    %v5031 = vunpack.c.l.b16 %v4945
    %v5032 = vunpack.c.h.b16 %v4945
    %v5033 = vunpack.c.l.b16 %v4946
    %v5034 = vunpack.c.h.b16 %v4946
    %v5035 = vunpack.c.l.b16 %v4947
    %v5036 = vunpack.c.h.b16 %v4947
    %v5037 = vunpack.c.l.b16 %v4948
    %v5038 = vunpack.c.h.b16 %v4948
    %v5039 = vunpack.c.l.b16 %v4949
    %v5040 = vunpack.c.h.b16 %v4949
    %v5041 = vunpack.c.l.b16 %v4950
    %v5042 = vunpack.c.h.b16 %v4950
    %v5043 = vunpack.c.l.b16 %v4951
    %v5044 = vunpack.c.h.b16 %v4951
    %v5045 = vunpack.c.l.b16 %v4952
    %v5046 = vunpack.c.h.b16 %v4952
    %v5047 = vunpack.c.l.b16 %v4953
    %v5048 = vunpack.c.h.b16 %v4953
    %v5049 = vunpack.c.l.b16 %v4954
    %v5050 = vunpack.c.h.b16 %v4954
    %v5051 = vpack.c.b16 %v4991, %v4987
    %v5052 = vpack.c.b16 %v4992, %v4988
    %v5053 = vpack.c.b16 %v4993, %v4989
    %v5054 = vpack.c.b16 %v4994, %v4990
    %v5055 = vpack.c.b16 %v4999, %v4995
    %v5056 = vpack.c.b16 %v5000, %v4996
    %v5057 = vpack.c.b16 %v5001, %v4997
    %v5058 = vpack.c.b16 %v5002, %v4998
    %v5059 = vpack.c.b16 %v5007, %v5003
    %v5060 = vpack.c.b16 %v5008, %v5004
    %v5061 = vpack.c.b16 %v5009, %v5005
    %v5062 = vpack.c.b16 %v5010, %v5006
    %v5063 = vpack.c.b16 %v5015, %v5011
    %v5064 = vpack.c.b16 %v5016, %v5012
    %v5065 = vpack.c.b16 %v5017, %v5013
    %v5066 = vpack.c.b16 %v5018, %v5014
    %v5067 = vpack.c.b16 %v5023, %v5019
    %v5068 = vpack.c.b16 %v5024, %v5020
    %v5069 = vpack.c.b16 %v5025, %v5021
    %v5070 = vpack.c.b16 %v5026, %v5022
    %v5071 = vpack.c.b16 %v5031, %v5027
    %v5072 = vpack.c.b16 %v5032, %v5028
    %v5073 = vpack.c.b16 %v5033, %v5029
    %v5074 = vpack.c.b16 %v5034, %v5030
    %v5075 = vpack.c.b16 %v5039, %v5035
    %v5076 = vpack.c.b16 %v5040, %v5036
    %v5077 = vpack.c.b16 %v5041, %v5037
    %v5078 = vpack.c.b16 %v5042, %v5038
    %v5079 = vpack.c.b16 %v5047, %v5043
    %v5080 = vpack.c.b16 %v5048, %v5044
    %v5081 = vpack.c.b16 %v5049, %v5045
    %v5082 = vpack.c.b16 %v5050, %v5046
    %5115 = vmatprep.subr.bf16.mxu0 %v5052
    %5116 = vmatpush1.bf16.msra.mxu0 %v5051
    %5117 = vmatprep.subr.bf16.mxu0 %v5056
    %5118 = vmatpush1.bf16.msra.mxu0 %v5055
    %5119 = vmatprep.subr.bf16.mxu0 %v5060
    %5120 = vmatpush1.bf16.msra.mxu0 %v5059
    %5121 = vmatprep.subr.bf16.mxu0 %v5064
    %5122 = vmatpush1.bf16.msra.mxu0 %v5063
    %5123 = vmatprep.subr.bf16.mxu0 %v5068
    %5124 = vmatpush1.bf16.msra.mxu0 %v5067
    %5125 = vmatprep.subr.bf16.mxu0 %v5072
    %5126 = vmatpush1.bf16.msra.mxu0 %v5071
    %5127 = vmatprep.subr.bf16.mxu0 %v5076
    %5128 = vmatpush1.bf16.msra.mxu0 %v5075
    %5129 = vmatprep.subr.bf16.mxu0 %v5080
    %5130 = vmatpush1.bf16.msra.mxu0 %v5079
    %5131 = vmatprep.subr.bf16.mxu0 0
    %5132 = vmatpush1.bf16.msra.mxu0 0
    %5133 = vmatprep.subr.bf16.mxu0 0
    %5134 = vmatpush1.bf16.msra.mxu0 0
    %5135 = vmatprep.subr.bf16.mxu0 0
    %5136 = vmatpush1.bf16.msra.mxu0 0
    %5137 = vmatprep.subr.bf16.mxu0 0
    %5138 = vmatpush1.bf16.msra.mxu0 0
    %5139 = vmatprep.subr.bf16.mxu0 0
    %5140 = vmatpush1.bf16.msra.mxu0 0
    %5141 = vmatprep.subr.bf16.mxu0 0
    %5142 = vmatpush1.bf16.msra.mxu0 0
    %5143 = vmatprep.subr.bf16.mxu0 0
    %5144 = vmatpush1.bf16.msra.mxu0 0
    %5145 = vmatprep.subr.bf16.mxu0 0
    %5146 = vmatpush1.bf16.msra.mxu0 0
    %5147 = vmatprep.mubr.bf16.mxu0 0
    %5148 = vmatmul.mubr.bf16.gmra.mrb[0].mxu0 %v4922
    %v5149 = vpop.f32.mrb[0].mxu0
    %v5150 = vadd.f32 0.0, %v5149
    %v5151 = vpop.f32.mrb[0].mxu0
    %v5152 = vadd.f32 0.0, %v5151
    %v5153 = vpop.f32.mrb[0].mxu0
    %v5154 = vadd.f32 0.0, %v5153
    %v5155 = vpop.f32.mrb[0].mxu0
    %v5156 = vadd.f32 0.0, %v5155
    %5157 = vdwg.mxu0
    %5158 = vmatprep.subr.bf16.mxu0 %v5054
    %5159 = vmatpush1.bf16.msra.mxu0 %v5053
    %5160 = vmatprep.subr.bf16.mxu0 %v5058
    %5161 = vmatpush1.bf16.msra.mxu0 %v5057
    %5162 = vmatprep.subr.bf16.mxu0 %v5062
    %5163 = vmatpush1.bf16.msra.mxu0 %v5061
    %5164 = vmatprep.subr.bf16.mxu0 %v5066
    %5165 = vmatpush1.bf16.msra.mxu0 %v5065
    %5166 = vmatprep.subr.bf16.mxu0 %v5070
    %5167 = vmatpush1.bf16.msra.mxu0 %v5069
    %5168 = vmatprep.subr.bf16.mxu0 %v5074
    %5169 = vmatpush1.bf16.msra.mxu0 %v5073
    %5170 = vmatprep.subr.bf16.mxu0 %v5078
    %5171 = vmatpush1.bf16.msra.mxu0 %v5077
    %5172 = vmatprep.subr.bf16.mxu0 %v5082
    %5173 = vmatpush1.bf16.msra.mxu0 %v5081
    %5174 = vmatprep.subr.bf16.mxu0 0
    %5175 = vmatpush1.bf16.msra.mxu0 0
    %5176 = vmatprep.subr.bf16.mxu0 0
    %5177 = vmatpush1.bf16.msra.mxu0 0
    %5178 = vmatprep.subr.bf16.mxu0 0
    %5179 = vmatpush1.bf16.msra.mxu0 0
    %5180 = vmatprep.subr.bf16.mxu0 0
    %5181 = vmatpush1.bf16.msra.mxu0 0
    %5182 = vmatprep.subr.bf16.mxu0 0
    %5183 = vmatpush1.bf16.msra.mxu0 0
    %5184 = vmatprep.subr.bf16.mxu0 0
    %5185 = vmatpush1.bf16.msra.mxu0 0
    %5186 = vmatprep.subr.bf16.mxu0 0
    %5187 = vmatpush1.bf16.msra.mxu0 0
    %5188 = vmatprep.subr.bf16.mxu0 0
    %5189 = vmatpush1.bf16.msra.mxu0 0
    %5190 = vmatprep.mubr.bf16.mxu0 0
    %5191 = vmatmul.mubr.bf16.gmra.mrb[0].mxu0 %v4922
    %v5192 = vpop.f32.mrb[0].mxu0
    %v5193 = vadd.f32 0.0, %v5192
    %v5194 = vpop.f32.mrb[0].mxu0
    %v5195 = vadd.f32 0.0, %v5194
    %v5196 = vpop.f32.mrb[0].mxu0
    %v5197 = vadd.f32 0.0, %v5196
    %v5198 = vpop.f32.mrb[0].mxu0
    %v5199 = vadd.f32 0.0, %v5198
    %5200 = vdwg.mxu0
    %v5201 = vadd.f32 %v4914, %v5150
    %v5202 = vadd.f32 %v4915, %v5152
    %v5203 = vadd.f32 %v4916, %v5193
    %v5204 = vadd.f32 %v4917, %v5195
    %v5205 = vadd.f32 %v4918, %v5154
    %v5206 = vadd.f32 %v4919, %v5156
    %v5207 = vadd.f32 %v4920, %v5197
    %v5208 = vadd.f32 %v4921, %v5199
    %v5209 = vxor.u32 %v5201, 2147483648
    %v5210 = vxor.u32 %v5205, 2147483648
    %v5211 = vmul.f32 %v5209, 1.442695
    %v5212 = vpow.pop %v5211
    %v5213 = vmul.f32 %v5210, 1.442695
    %v5214 = vpow.pop %v5213
    %v5215 = vadd.f32 %v5212, 1.0
    %v5216 = vadd.f32 %v5214, 1.0
    %v5217 = vrcp.pop %v5215
    %v5218 = vmul.f32 1.0, %v5217
    %v5219 = vrcp.pop %v5216
    %v5220 = vmul.f32 1.0, %v5219
    %v5221 = vxor.u32 %v5202, 2147483648
    %v5222 = vxor.u32 %v5206, 2147483648
    %v5223 = vmul.f32 %v5221, 1.442695
    %v5224 = vpow.pop %v5223
    %v5225 = vmul.f32 %v5222, 1.442695
    %v5226 = vpow.pop %v5225
    %v5227 = vadd.f32 %v5224, 1.0
    %v5228 = vadd.f32 %v5226, 1.0
    %v5229 = vrcp.pop %v5227
    %v5230 = vmul.f32 1.0, %v5229
    %v5231 = vrcp.pop %v5228
    %v5232 = vmul.f32 1.0, %v5231
    %v5233 = vxor.u32 %v5203, 2147483648
    %v5234 = vxor.u32 %v5207, 2147483648
    %v5235 = vmul.f32 %v5233, 1.442695
    %v5236 = vpow.pop %v5235
    %v5237 = vmul.f32 %v5234, 1.442695
    %v5238 = vpow.pop %v5237
    %v5239 = vadd.f32 %v5236, 1.0
    %v5240 = vadd.f32 %v5238, 1.0
    %v5241 = vrcp.pop %v5239
    %v5242 = vmul.f32 1.0, %v5241
    %v5243 = vrcp.pop %v5240
    %v5244 = vmul.f32 1.0, %v5243
    %v5245 = vtanh.pop %v5204
    %v5246 = vtanh.pop %v5208
    %v5247 = vmul.f32 %v5218, %v4904
    %v5248 = vmul.f32 %v5220, %v4905
    %v5249 = vmul.f32 %v5230, %v5245
    %v5250 = vmul.f32 %v5232, %v5246
    %v5251 = vadd.f32 %v5247, %v5249
    %v5252 = vadd.f32 %v5248, %v5250
    %v5253 = vtanh.pop %v5251
    %v5254 = vtanh.pop %v5252
    %v5255 = vmul.f32 %v5242, %v5253
    %v5256 = vmul.f32 %v5244, %v5254
    %s5257 = scalar_lea.vmem [#allocation9], 224
    %5258 = vst [vmem:[%s5257] sm:$0xff] %v5255
    %5259 = vst [vmem:[%s5257 + $0x8] sm:$0xff] %v5256
    %s5260 = scalar_lea.vmem [#allocation4], 960
    %v5261 = vld [vmem:[%s5260] sm:$0xff]
    %v5262 = vld [vmem:[%s5260 + $0x8] sm:$0xff]
    %v5263 = vld [vmem:[%s5260 + $0x10] sm:$0xff]
    %v5264 = vld [vmem:[%s5260 + $0x18] sm:$0xff]
    %v5265 = vld [vmem:[%s5260 + $0x20] sm:$0xff]
    %v5266 = vld [vmem:[%s5260 + $0x28] sm:$0xff]
    %v5267 = vld [vmem:[%s5260 + $0x30] sm:$0xff]
    %v5268 = vld [vmem:[%s5260 + $0x38] sm:$0xff]
    %v5269 = vpack.c.bf16 %v5256, %v5255
    %v5270 = vld [vmem:[#allocation7] sm:$0xff]
    %v5271 = vld [vmem:[#allocation7 + $0x8] sm:$0xff]
    %v5272 = vld [vmem:[#allocation7 + $0x10] sm:$0xff]
    %v5273 = vld [vmem:[#allocation7 + $0x18] sm:$0xff]
    %v5274 = vld [vmem:[#allocation7 + $0x20] sm:$0xff]
    %v5275 = vld [vmem:[#allocation7 + $0x28] sm:$0xff]
    %v5276 = vld [vmem:[#allocation7 + $0x30] sm:$0xff]
    %v5277 = vld [vmem:[#allocation7 + $0x38] sm:$0xff]
    %v5278 = vld [vmem:[#allocation7 + $0x40] sm:$0xff]
    %v5279 = vld [vmem:[#allocation7 + $0x48] sm:$0xff]
    %v5280 = vld [vmem:[#allocation7 + $0x50] sm:$0xff]
    %v5281 = vld [vmem:[#allocation7 + $0x58] sm:$0xff]
    %v5282 = vld [vmem:[#allocation7 + $0x60] sm:$0xff]
    %v5283 = vld [vmem:[#allocation7 + $0x68] sm:$0xff]
    %v5284 = vld [vmem:[#allocation7 + $0x70] sm:$0xff]
    %v5285 = vld [vmem:[#allocation7 + $0x78] sm:$0xff]
    %v5286 = vld [vmem:[#allocation7 + $0x80] sm:$0xff]
    %v5287 = vld [vmem:[#allocation7 + $0x88] sm:$0xff]
    %v5288 = vld [vmem:[#allocation7 + $0x90] sm:$0xff]
    %v5289 = vld [vmem:[#allocation7 + $0x98] sm:$0xff]
    %v5290 = vld [vmem:[#allocation7 + $0xa0] sm:$0xff]
    %v5291 = vld [vmem:[#allocation7 + $0xa8] sm:$0xff]
    %v5292 = vld [vmem:[#allocation7 + $0xb0] sm:$0xff]
    %v5293 = vld [vmem:[#allocation7 + $0xb8] sm:$0xff]
    %v5294 = vld [vmem:[#allocation7 + $0xc0] sm:$0xff]
    %v5295 = vld [vmem:[#allocation7 + $0xc8] sm:$0xff]
    %v5296 = vld [vmem:[#allocation7 + $0xd0] sm:$0xff]
    %v5297 = vld [vmem:[#allocation7 + $0xd8] sm:$0xff]
    %v5298 = vld [vmem:[#allocation7 + $0xe0] sm:$0xff]
    %v5299 = vld [vmem:[#allocation7 + $0xe8] sm:$0xff]
    %v5300 = vld [vmem:[#allocation7 + $0xf0] sm:$0xff]
    %v5301 = vld [vmem:[#allocation7 + $0xf8] sm:$0xff]
    %v5334 = vunpack.c.l.b16 %v5270
    %v5335 = vunpack.c.h.b16 %v5270
    %v5336 = vunpack.c.l.b16 %v5271
    %v5337 = vunpack.c.h.b16 %v5271
    %v5338 = vunpack.c.l.b16 %v5272
    %v5339 = vunpack.c.h.b16 %v5272
    %v5340 = vunpack.c.l.b16 %v5273
    %v5341 = vunpack.c.h.b16 %v5273
    %v5342 = vunpack.c.l.b16 %v5274
    %v5343 = vunpack.c.h.b16 %v5274
    %v5344 = vunpack.c.l.b16 %v5275
    %v5345 = vunpack.c.h.b16 %v5275
    %v5346 = vunpack.c.l.b16 %v5276
    %v5347 = vunpack.c.h.b16 %v5276
    %v5348 = vunpack.c.l.b16 %v5277
    %v5349 = vunpack.c.h.b16 %v5277
    %v5350 = vunpack.c.l.b16 %v5278
    %v5351 = vunpack.c.h.b16 %v5278
    %v5352 = vunpack.c.l.b16 %v5279
    %v5353 = vunpack.c.h.b16 %v5279
    %v5354 = vunpack.c.l.b16 %v5280
    %v5355 = vunpack.c.h.b16 %v5280
    %v5356 = vunpack.c.l.b16 %v5281
    %v5357 = vunpack.c.h.b16 %v5281
    %v5358 = vunpack.c.l.b16 %v5282
    %v5359 = vunpack.c.h.b16 %v5282
    %v5360 = vunpack.c.l.b16 %v5283
    %v5361 = vunpack.c.h.b16 %v5283
    %v5362 = vunpack.c.l.b16 %v5284
    %v5363 = vunpack.c.h.b16 %v5284
    %v5364 = vunpack.c.l.b16 %v5285
    %v5365 = vunpack.c.h.b16 %v5285
    %v5366 = vunpack.c.l.b16 %v5286
    %v5367 = vunpack.c.h.b16 %v5286
    %v5368 = vunpack.c.l.b16 %v5287
    %v5369 = vunpack.c.h.b16 %v5287
    %v5370 = vunpack.c.l.b16 %v5288
    %v5371 = vunpack.c.h.b16 %v5288
    %v5372 = vunpack.c.l.b16 %v5289
    %v5373 = vunpack.c.h.b16 %v5289
    %v5374 = vunpack.c.l.b16 %v5290
    %v5375 = vunpack.c.h.b16 %v5290
    %v5376 = vunpack.c.l.b16 %v5291
    %v5377 = vunpack.c.h.b16 %v5291
    %v5378 = vunpack.c.l.b16 %v5292
    %v5379 = vunpack.c.h.b16 %v5292
    %v5380 = vunpack.c.l.b16 %v5293
    %v5381 = vunpack.c.h.b16 %v5293
    %v5382 = vunpack.c.l.b16 %v5294
    %v5383 = vunpack.c.h.b16 %v5294
    %v5384 = vunpack.c.l.b16 %v5295
    %v5385 = vunpack.c.h.b16 %v5295
    %v5386 = vunpack.c.l.b16 %v5296
    %v5387 = vunpack.c.h.b16 %v5296
    %v5388 = vunpack.c.l.b16 %v5297
    %v5389 = vunpack.c.h.b16 %v5297
    %v5390 = vunpack.c.l.b16 %v5298
    %v5391 = vunpack.c.h.b16 %v5298
    %v5392 = vunpack.c.l.b16 %v5299
    %v5393 = vunpack.c.h.b16 %v5299
    %v5394 = vunpack.c.l.b16 %v5300
    %v5395 = vunpack.c.h.b16 %v5300
    %v5396 = vunpack.c.l.b16 %v5301
    %v5397 = vunpack.c.h.b16 %v5301
    %v5398 = vpack.c.b16 %v5338, %v5334
    %v5399 = vpack.c.b16 %v5339, %v5335
    %v5400 = vpack.c.b16 %v5340, %v5336
    %v5401 = vpack.c.b16 %v5341, %v5337
    %v5402 = vpack.c.b16 %v5346, %v5342
    %v5403 = vpack.c.b16 %v5347, %v5343
    %v5404 = vpack.c.b16 %v5348, %v5344
    %v5405 = vpack.c.b16 %v5349, %v5345
    %v5406 = vpack.c.b16 %v5354, %v5350
    %v5407 = vpack.c.b16 %v5355, %v5351
    %v5408 = vpack.c.b16 %v5356, %v5352
    %v5409 = vpack.c.b16 %v5357, %v5353
    %v5410 = vpack.c.b16 %v5362, %v5358
    %v5411 = vpack.c.b16 %v5363, %v5359
    %v5412 = vpack.c.b16 %v5364, %v5360
    %v5413 = vpack.c.b16 %v5365, %v5361
    %v5414 = vpack.c.b16 %v5370, %v5366
    %v5415 = vpack.c.b16 %v5371, %v5367
    %v5416 = vpack.c.b16 %v5372, %v5368
    %v5417 = vpack.c.b16 %v5373, %v5369
    %v5418 = vpack.c.b16 %v5378, %v5374
    %v5419 = vpack.c.b16 %v5379, %v5375
    %v5420 = vpack.c.b16 %v5380, %v5376
    %v5421 = vpack.c.b16 %v5381, %v5377
    %v5422 = vpack.c.b16 %v5386, %v5382
    %v5423 = vpack.c.b16 %v5387, %v5383
    %v5424 = vpack.c.b16 %v5388, %v5384
    %v5425 = vpack.c.b16 %v5389, %v5385
    %v5426 = vpack.c.b16 %v5394, %v5390
    %v5427 = vpack.c.b16 %v5395, %v5391
    %v5428 = vpack.c.b16 %v5396, %v5392
    %v5429 = vpack.c.b16 %v5397, %v5393
    %5462 = vmatprep.subr.bf16.mxu0 %v5399
    %5463 = vmatpush1.bf16.msra.mxu0 %v5398
    %5464 = vmatprep.subr.bf16.mxu0 %v5403
    %5465 = vmatpush1.bf16.msra.mxu0 %v5402
    %5466 = vmatprep.subr.bf16.mxu0 %v5407
    %5467 = vmatpush1.bf16.msra.mxu0 %v5406
    %5468 = vmatprep.subr.bf16.mxu0 %v5411
    %5469 = vmatpush1.bf16.msra.mxu0 %v5410
    %5470 = vmatprep.subr.bf16.mxu0 %v5415
    %5471 = vmatpush1.bf16.msra.mxu0 %v5414
    %5472 = vmatprep.subr.bf16.mxu0 %v5419
    %5473 = vmatpush1.bf16.msra.mxu0 %v5418
    %5474 = vmatprep.subr.bf16.mxu0 %v5423
    %5475 = vmatpush1.bf16.msra.mxu0 %v5422
    %5476 = vmatprep.subr.bf16.mxu0 %v5427
    %5477 = vmatpush1.bf16.msra.mxu0 %v5426
    %5478 = vmatprep.subr.bf16.mxu0 0
    %5479 = vmatpush1.bf16.msra.mxu0 0
    %5480 = vmatprep.subr.bf16.mxu0 0
    %5481 = vmatpush1.bf16.msra.mxu0 0
    %5482 = vmatprep.subr.bf16.mxu0 0
    %5483 = vmatpush1.bf16.msra.mxu0 0
    %5484 = vmatprep.subr.bf16.mxu0 0
    %5485 = vmatpush1.bf16.msra.mxu0 0
    %5486 = vmatprep.subr.bf16.mxu0 0
    %5487 = vmatpush1.bf16.msra.mxu0 0
    %5488 = vmatprep.subr.bf16.mxu0 0
    %5489 = vmatpush1.bf16.msra.mxu0 0
    %5490 = vmatprep.subr.bf16.mxu0 0
    %5491 = vmatpush1.bf16.msra.mxu0 0
    %5492 = vmatprep.subr.bf16.mxu0 0
    %5493 = vmatpush1.bf16.msra.mxu0 0
    %5494 = vmatprep.mubr.bf16.mxu0 0
    %5495 = vmatmul.mubr.bf16.gmra.mrb[0].mxu0 %v5269
    %v5496 = vpop.f32.mrb[0].mxu0
    %v5497 = vadd.f32 0.0, %v5496
    %v5498 = vpop.f32.mrb[0].mxu0
    %v5499 = vadd.f32 0.0, %v5498
    %v5500 = vpop.f32.mrb[0].mxu0
    %v5501 = vadd.f32 0.0, %v5500
    %v5502 = vpop.f32.mrb[0].mxu0
    %v5503 = vadd.f32 0.0, %v5502
    %5504 = vdwg.mxu0
    %5505 = vmatprep.subr.bf16.mxu0 %v5401
    %5506 = vmatpush1.bf16.msra.mxu0 %v5400
    %5507 = vmatprep.subr.bf16.mxu0 %v5405
    %5508 = vmatpush1.bf16.msra.mxu0 %v5404
    %5509 = vmatprep.subr.bf16.mxu0 %v5409
    %5510 = vmatpush1.bf16.msra.mxu0 %v5408
    %5511 = vmatprep.subr.bf16.mxu0 %v5413
    %5512 = vmatpush1.bf16.msra.mxu0 %v5412
    %5513 = vmatprep.subr.bf16.mxu0 %v5417
    %5514 = vmatpush1.bf16.msra.mxu0 %v5416
    %5515 = vmatprep.subr.bf16.mxu0 %v5421
    %5516 = vmatpush1.bf16.msra.mxu0 %v5420
    %5517 = vmatprep.subr.bf16.mxu0 %v5425
    %5518 = vmatpush1.bf16.msra.mxu0 %v5424
    %5519 = vmatprep.subr.bf16.mxu0 %v5429
    %5520 = vmatpush1.bf16.msra.mxu0 %v5428
    %5521 = vmatprep.subr.bf16.mxu0 0
    %5522 = vmatpush1.bf16.msra.mxu0 0
    %5523 = vmatprep.subr.bf16.mxu0 0
    %5524 = vmatpush1.bf16.msra.mxu0 0
    %5525 = vmatprep.subr.bf16.mxu0 0
    %5526 = vmatpush1.bf16.msra.mxu0 0
    %5527 = vmatprep.subr.bf16.mxu0 0
    %5528 = vmatpush1.bf16.msra.mxu0 0
    %5529 = vmatprep.subr.bf16.mxu0 0
    %5530 = vmatpush1.bf16.msra.mxu0 0
    %5531 = vmatprep.subr.bf16.mxu0 0
    %5532 = vmatpush1.bf16.msra.mxu0 0
    %5533 = vmatprep.subr.bf16.mxu0 0
    %5534 = vmatpush1.bf16.msra.mxu0 0
    %5535 = vmatprep.subr.bf16.mxu0 0
    %5536 = vmatpush1.bf16.msra.mxu0 0
    %5537 = vmatprep.mubr.bf16.mxu0 0
    %5538 = vmatmul.mubr.bf16.gmra.mrb[0].mxu0 %v5269
    %v5539 = vpop.f32.mrb[0].mxu0
    %v5540 = vadd.f32 0.0, %v5539
    %v5541 = vpop.f32.mrb[0].mxu0
    %v5542 = vadd.f32 0.0, %v5541
    %v5543 = vpop.f32.mrb[0].mxu0
    %v5544 = vadd.f32 0.0, %v5543
    %v5545 = vpop.f32.mrb[0].mxu0
    %v5546 = vadd.f32 0.0, %v5545
    %5547 = vdwg.mxu0
    %v5548 = vadd.f32 %v5261, %v5497
    %v5549 = vadd.f32 %v5262, %v5499
    %v5550 = vadd.f32 %v5263, %v5540
    %v5551 = vadd.f32 %v5264, %v5542
    %v5552 = vadd.f32 %v5265, %v5501
    %v5553 = vadd.f32 %v5266, %v5503
    %v5554 = vadd.f32 %v5267, %v5544
    %v5555 = vadd.f32 %v5268, %v5546
    %v5556 = vxor.u32 %v5548, 2147483648
    %v5557 = vxor.u32 %v5552, 2147483648
    %v5558 = vmul.f32 %v5556, 1.442695
    %v5559 = vpow.pop %v5558
    %v5560 = vmul.f32 %v5557, 1.442695
    %v5561 = vpow.pop %v5560
    %v5562 = vadd.f32 %v5559, 1.0
    %v5563 = vadd.f32 %v5561, 1.0
    %v5564 = vrcp.pop %v5562
    %v5565 = vmul.f32 1.0, %v5564
    %v5566 = vrcp.pop %v5563
    %v5567 = vmul.f32 1.0, %v5566
    %v5568 = vxor.u32 %v5549, 2147483648
    %v5569 = vxor.u32 %v5553, 2147483648
    %v5570 = vmul.f32 %v5568, 1.442695
    %v5571 = vpow.pop %v5570
    %v5572 = vmul.f32 %v5569, 1.442695
    %v5573 = vpow.pop %v5572
    %v5574 = vadd.f32 %v5571, 1.0
    %v5575 = vadd.f32 %v5573, 1.0
    %v5576 = vrcp.pop %v5574
    %v5577 = vmul.f32 1.0, %v5576
    %v5578 = vrcp.pop %v5575
    %v5579 = vmul.f32 1.0, %v5578
    %v5580 = vxor.u32 %v5550, 2147483648
    %v5581 = vxor.u32 %v5554, 2147483648
    %v5582 = vmul.f32 %v5580, 1.442695
    %v5583 = vpow.pop %v5582
    %v5584 = vmul.f32 %v5581, 1.442695
    %v5585 = vpow.pop %v5584
    %v5586 = vadd.f32 %v5583, 1.0
    %v5587 = vadd.f32 %v5585, 1.0
    %v5588 = vrcp.pop %v5586
    %v5589 = vmul.f32 1.0, %v5588
    %v5590 = vrcp.pop %v5587
    %v5591 = vmul.f32 1.0, %v5590
    %v5592 = vtanh.pop %v5551
    %v5593 = vtanh.pop %v5555
    %v5594 = vmul.f32 %v5565, %v5251
    %v5595 = vmul.f32 %v5567, %v5252
    %v5596 = vmul.f32 %v5577, %v5592
    %v5597 = vmul.f32 %v5579, %v5593
    %v5598 = vadd.f32 %v5594, %v5596
    %v5599 = vadd.f32 %v5595, %v5597
    %v5600 = vtanh.pop %v5598
    %v5601 = vtanh.pop %v5599
    %v5602 = vmul.f32 %v5589, %v5600
    %v5603 = vmul.f32 %v5591, %v5601
    %s5604 = scalar_lea.vmem [#allocation9], 240
    %5605 = vst [vmem:[%s5604] sm:$0xff] %v5602
    %5606 = vst [vmem:[%s5604 + $0x8] sm:$0xff] %v5603
    %s5607 = scalar_lea.vmem [#allocation4], 1024
    %v5608 = vld [vmem:[%s5607] sm:$0xff]
    %v5609 = vld [vmem:[%s5607 + $0x8] sm:$0xff]
    %v5610 = vld [vmem:[%s5607 + $0x10] sm:$0xff]
    %v5611 = vld [vmem:[%s5607 + $0x18] sm:$0xff]
    %v5612 = vld [vmem:[%s5607 + $0x20] sm:$0xff]
    %v5613 = vld [vmem:[%s5607 + $0x28] sm:$0xff]
    %v5614 = vld [vmem:[%s5607 + $0x30] sm:$0xff]
    %v5615 = vld [vmem:[%s5607 + $0x38] sm:$0xff]
    %v5616 = vpack.c.bf16 %v5603, %v5602
    %v5617 = vld [vmem:[#allocation7] sm:$0xff]
    %v5618 = vld [vmem:[#allocation7 + $0x8] sm:$0xff]
    %v5619 = vld [vmem:[#allocation7 + $0x10] sm:$0xff]
    %v5620 = vld [vmem:[#allocation7 + $0x18] sm:$0xff]
    %v5621 = vld [vmem:[#allocation7 + $0x20] sm:$0xff]
    %v5622 = vld [vmem:[#allocation7 + $0x28] sm:$0xff]
    %v5623 = vld [vmem:[#allocation7 + $0x30] sm:$0xff]
    %v5624 = vld [vmem:[#allocation7 + $0x38] sm:$0xff]
    %v5625 = vld [vmem:[#allocation7 + $0x40] sm:$0xff]
    %v5626 = vld [vmem:[#allocation7 + $0x48] sm:$0xff]
    %v5627 = vld [vmem:[#allocation7 + $0x50] sm:$0xff]
    %v5628 = vld [vmem:[#allocation7 + $0x58] sm:$0xff]
    %v5629 = vld [vmem:[#allocation7 + $0x60] sm:$0xff]
    %v5630 = vld [vmem:[#allocation7 + $0x68] sm:$0xff]
    %v5631 = vld [vmem:[#allocation7 + $0x70] sm:$0xff]
    %v5632 = vld [vmem:[#allocation7 + $0x78] sm:$0xff]
    %v5633 = vld [vmem:[#allocation7 + $0x80] sm:$0xff]
    %v5634 = vld [vmem:[#allocation7 + $0x88] sm:$0xff]
    %v5635 = vld [vmem:[#allocation7 + $0x90] sm:$0xff]
    %v5636 = vld [vmem:[#allocation7 + $0x98] sm:$0xff]
    %v5637 = vld [vmem:[#allocation7 + $0xa0] sm:$0xff]
    %v5638 = vld [vmem:[#allocation7 + $0xa8] sm:$0xff]
    %v5639 = vld [vmem:[#allocation7 + $0xb0] sm:$0xff]
    %v5640 = vld [vmem:[#allocation7 + $0xb8] sm:$0xff]
    %v5641 = vld [vmem:[#allocation7 + $0xc0] sm:$0xff]
    %v5642 = vld [vmem:[#allocation7 + $0xc8] sm:$0xff]
    %v5643 = vld [vmem:[#allocation7 + $0xd0] sm:$0xff]
    %v5644 = vld [vmem:[#allocation7 + $0xd8] sm:$0xff]
    %v5645 = vld [vmem:[#allocation7 + $0xe0] sm:$0xff]
    %v5646 = vld [vmem:[#allocation7 + $0xe8] sm:$0xff]
    %v5647 = vld [vmem:[#allocation7 + $0xf0] sm:$0xff]
    %v5648 = vld [vmem:[#allocation7 + $0xf8] sm:$0xff]
    %v5681 = vunpack.c.l.b16 %v5617
    %v5682 = vunpack.c.h.b16 %v5617
    %v5683 = vunpack.c.l.b16 %v5618
    %v5684 = vunpack.c.h.b16 %v5618
    %v5685 = vunpack.c.l.b16 %v5619
    %v5686 = vunpack.c.h.b16 %v5619
    %v5687 = vunpack.c.l.b16 %v5620
    %v5688 = vunpack.c.h.b16 %v5620
    %v5689 = vunpack.c.l.b16 %v5621
    %v5690 = vunpack.c.h.b16 %v5621
    %v5691 = vunpack.c.l.b16 %v5622
    %v5692 = vunpack.c.h.b16 %v5622
    %v5693 = vunpack.c.l.b16 %v5623
    %v5694 = vunpack.c.h.b16 %v5623
    %v5695 = vunpack.c.l.b16 %v5624
    %v5696 = vunpack.c.h.b16 %v5624
    %v5697 = vunpack.c.l.b16 %v5625
    %v5698 = vunpack.c.h.b16 %v5625
    %v5699 = vunpack.c.l.b16 %v5626
    %v5700 = vunpack.c.h.b16 %v5626
    %v5701 = vunpack.c.l.b16 %v5627
    %v5702 = vunpack.c.h.b16 %v5627
    %v5703 = vunpack.c.l.b16 %v5628
    %v5704 = vunpack.c.h.b16 %v5628
    %v5705 = vunpack.c.l.b16 %v5629
    %v5706 = vunpack.c.h.b16 %v5629
    %v5707 = vunpack.c.l.b16 %v5630
    %v5708 = vunpack.c.h.b16 %v5630
    %v5709 = vunpack.c.l.b16 %v5631
    %v5710 = vunpack.c.h.b16 %v5631
    %v5711 = vunpack.c.l.b16 %v5632
    %v5712 = vunpack.c.h.b16 %v5632
    %v5713 = vunpack.c.l.b16 %v5633
    %v5714 = vunpack.c.h.b16 %v5633
    %v5715 = vunpack.c.l.b16 %v5634
    %v5716 = vunpack.c.h.b16 %v5634
    %v5717 = vunpack.c.l.b16 %v5635
    %v5718 = vunpack.c.h.b16 %v5635
    %v5719 = vunpack.c.l.b16 %v5636
    %v5720 = vunpack.c.h.b16 %v5636
    %v5721 = vunpack.c.l.b16 %v5637
    %v5722 = vunpack.c.h.b16 %v5637
    %v5723 = vunpack.c.l.b16 %v5638
    %v5724 = vunpack.c.h.b16 %v5638
    %v5725 = vunpack.c.l.b16 %v5639
    %v5726 = vunpack.c.h.b16 %v5639
    %v5727 = vunpack.c.l.b16 %v5640
    %v5728 = vunpack.c.h.b16 %v5640
    %v5729 = vunpack.c.l.b16 %v5641
    %v5730 = vunpack.c.h.b16 %v5641
    %v5731 = vunpack.c.l.b16 %v5642
    %v5732 = vunpack.c.h.b16 %v5642
    %v5733 = vunpack.c.l.b16 %v5643
    %v5734 = vunpack.c.h.b16 %v5643
    %v5735 = vunpack.c.l.b16 %v5644
    %v5736 = vunpack.c.h.b16 %v5644
    %v5737 = vunpack.c.l.b16 %v5645
    %v5738 = vunpack.c.h.b16 %v5645
    %v5739 = vunpack.c.l.b16 %v5646
    %v5740 = vunpack.c.h.b16 %v5646
    %v5741 = vunpack.c.l.b16 %v5647
    %v5742 = vunpack.c.h.b16 %v5647
    %v5743 = vunpack.c.l.b16 %v5648
    %v5744 = vunpack.c.h.b16 %v5648
    %v5745 = vpack.c.b16 %v5685, %v5681
    %v5746 = vpack.c.b16 %v5686, %v5682
    %v5747 = vpack.c.b16 %v5687, %v5683
    %v5748 = vpack.c.b16 %v5688, %v5684
    %v5749 = vpack.c.b16 %v5693, %v5689
    %v5750 = vpack.c.b16 %v5694, %v5690
    %v5751 = vpack.c.b16 %v5695, %v5691
    %v5752 = vpack.c.b16 %v5696, %v5692
    %v5753 = vpack.c.b16 %v5701, %v5697
    %v5754 = vpack.c.b16 %v5702, %v5698
    %v5755 = vpack.c.b16 %v5703, %v5699
    %v5756 = vpack.c.b16 %v5704, %v5700
    %v5757 = vpack.c.b16 %v5709, %v5705
    %v5758 = vpack.c.b16 %v5710, %v5706
    %v5759 = vpack.c.b16 %v5711, %v5707
    %v5760 = vpack.c.b16 %v5712, %v5708
    %v5761 = vpack.c.b16 %v5717, %v5713
    %v5762 = vpack.c.b16 %v5718, %v5714
    %v5763 = vpack.c.b16 %v5719, %v5715
    %v5764 = vpack.c.b16 %v5720, %v5716
    %v5765 = vpack.c.b16 %v5725, %v5721
    %v5766 = vpack.c.b16 %v5726, %v5722
    %v5767 = vpack.c.b16 %v5727, %v5723
    %v5768 = vpack.c.b16 %v5728, %v5724
    %v5769 = vpack.c.b16 %v5733, %v5729
    %v5770 = vpack.c.b16 %v5734, %v5730
    %v5771 = vpack.c.b16 %v5735, %v5731
    %v5772 = vpack.c.b16 %v5736, %v5732
    %v5773 = vpack.c.b16 %v5741, %v5737
    %v5774 = vpack.c.b16 %v5742, %v5738
    %v5775 = vpack.c.b16 %v5743, %v5739
    %v5776 = vpack.c.b16 %v5744, %v5740
    %5809 = vmatprep.subr.bf16.mxu0 %v5746
    %5810 = vmatpush1.bf16.msra.mxu0 %v5745
    %5811 = vmatprep.subr.bf16.mxu0 %v5750
    %5812 = vmatpush1.bf16.msra.mxu0 %v5749
    %5813 = vmatprep.subr.bf16.mxu0 %v5754
    %5814 = vmatpush1.bf16.msra.mxu0 %v5753
    %5815 = vmatprep.subr.bf16.mxu0 %v5758
    %5816 = vmatpush1.bf16.msra.mxu0 %v5757
    %5817 = vmatprep.subr.bf16.mxu0 %v5762
    %5818 = vmatpush1.bf16.msra.mxu0 %v5761
    %5819 = vmatprep.subr.bf16.mxu0 %v5766
    %5820 = vmatpush1.bf16.msra.mxu0 %v5765
    %5821 = vmatprep.subr.bf16.mxu0 %v5770
    %5822 = vmatpush1.bf16.msra.mxu0 %v5769
    %5823 = vmatprep.subr.bf16.mxu0 %v5774
    %5824 = vmatpush1.bf16.msra.mxu0 %v5773
    %5825 = vmatprep.subr.bf16.mxu0 0
    %5826 = vmatpush1.bf16.msra.mxu0 0
    %5827 = vmatprep.subr.bf16.mxu0 0
    %5828 = vmatpush1.bf16.msra.mxu0 0
    %5829 = vmatprep.subr.bf16.mxu0 0
    %5830 = vmatpush1.bf16.msra.mxu0 0
    %5831 = vmatprep.subr.bf16.mxu0 0
    %5832 = vmatpush1.bf16.msra.mxu0 0
    %5833 = vmatprep.subr.bf16.mxu0 0
    %5834 = vmatpush1.bf16.msra.mxu0 0
    %5835 = vmatprep.subr.bf16.mxu0 0
    %5836 = vmatpush1.bf16.msra.mxu0 0
    %5837 = vmatprep.subr.bf16.mxu0 0
    %5838 = vmatpush1.bf16.msra.mxu0 0
    %5839 = vmatprep.subr.bf16.mxu0 0
    %5840 = vmatpush1.bf16.msra.mxu0 0
    %5841 = vmatprep.mubr.bf16.mxu0 0
    %5842 = vmatmul.mubr.bf16.gmra.mrb[0].mxu0 %v5616
    %v5843 = vpop.f32.mrb[0].mxu0
    %v5844 = vadd.f32 0.0, %v5843
    %v5845 = vpop.f32.mrb[0].mxu0
    %v5846 = vadd.f32 0.0, %v5845
    %v5847 = vpop.f32.mrb[0].mxu0
    %v5848 = vadd.f32 0.0, %v5847
    %v5849 = vpop.f32.mrb[0].mxu0
    %v5850 = vadd.f32 0.0, %v5849
    %5851 = vdwg.mxu0
    %5852 = vmatprep.subr.bf16.mxu0 %v5748
    %5853 = vmatpush1.bf16.msra.mxu0 %v5747
    %5854 = vmatprep.subr.bf16.mxu0 %v5752
    %5855 = vmatpush1.bf16.msra.mxu0 %v5751
    %5856 = vmatprep.subr.bf16.mxu0 %v5756
    %5857 = vmatpush1.bf16.msra.mxu0 %v5755
    %5858 = vmatprep.subr.bf16.mxu0 %v5760
    %5859 = vmatpush1.bf16.msra.mxu0 %v5759
    %5860 = vmatprep.subr.bf16.mxu0 %v5764
    %5861 = vmatpush1.bf16.msra.mxu0 %v5763
    %5862 = vmatprep.subr.bf16.mxu0 %v5768
    %5863 = vmatpush1.bf16.msra.mxu0 %v5767
    %5864 = vmatprep.subr.bf16.mxu0 %v5772
    %5865 = vmatpush1.bf16.msra.mxu0 %v5771
    %5866 = vmatprep.subr.bf16.mxu0 %v5776
    %5867 = vmatpush1.bf16.msra.mxu0 %v5775
    %5868 = vmatprep.subr.bf16.mxu0 0
    %5869 = vmatpush1.bf16.msra.mxu0 0
    %5870 = vmatprep.subr.bf16.mxu0 0
    %5871 = vmatpush1.bf16.msra.mxu0 0
    %5872 = vmatprep.subr.bf16.mxu0 0
    %5873 = vmatpush1.bf16.msra.mxu0 0
    %5874 = vmatprep.subr.bf16.mxu0 0
    %5875 = vmatpush1.bf16.msra.mxu0 0
    %5876 = vmatprep.subr.bf16.mxu0 0
    %5877 = vmatpush1.bf16.msra.mxu0 0
    %5878 = vmatprep.subr.bf16.mxu0 0
    %5879 = vmatpush1.bf16.msra.mxu0 0
    %5880 = vmatprep.subr.bf16.mxu0 0
    %5881 = vmatpush1.bf16.msra.mxu0 0
    %5882 = vmatprep.subr.bf16.mxu0 0
    %5883 = vmatpush1.bf16.msra.mxu0 0
    %5884 = vmatprep.mubr.bf16.mxu0 0
    %5885 = vmatmul.mubr.bf16.gmra.mrb[0].mxu0 %v5616
    %v5886 = vpop.f32.mrb[0].mxu0
    %v5887 = vadd.f32 0.0, %v5886
    %v5888 = vpop.f32.mrb[0].mxu0
    %v5889 = vadd.f32 0.0, %v5888
    %v5890 = vpop.f32.mrb[0].mxu0
    %v5891 = vadd.f32 0.0, %v5890
    %v5892 = vpop.f32.mrb[0].mxu0
    %v5893 = vadd.f32 0.0, %v5892
    %5894 = vdwg.mxu0
    %v5895 = vadd.f32 %v5608, %v5844
    %v5896 = vadd.f32 %v5609, %v5846
    %v5897 = vadd.f32 %v5610, %v5887
    %v5898 = vadd.f32 %v5611, %v5889
    %v5899 = vadd.f32 %v5612, %v5848
    %v5900 = vadd.f32 %v5613, %v5850
    %v5901 = vadd.f32 %v5614, %v5891
    %v5902 = vadd.f32 %v5615, %v5893
    %v5903 = vxor.u32 %v5895, 2147483648
    %v5904 = vxor.u32 %v5899, 2147483648
    %v5905 = vmul.f32 %v5903, 1.442695
    %v5906 = vpow.pop %v5905
    %v5907 = vmul.f32 %v5904, 1.442695
    %v5908 = vpow.pop %v5907
    %v5909 = vadd.f32 %v5906, 1.0
    %v5910 = vadd.f32 %v5908, 1.0
    %v5911 = vrcp.pop %v5909
    %v5912 = vmul.f32 1.0, %v5911
    %v5913 = vrcp.pop %v5910
    %v5914 = vmul.f32 1.0, %v5913
    %v5915 = vxor.u32 %v5896, 2147483648
    %v5916 = vxor.u32 %v5900, 2147483648
    %v5917 = vmul.f32 %v5915, 1.442695
    %v5918 = vpow.pop %v5917
    %v5919 = vmul.f32 %v5916, 1.442695
    %v5920 = vpow.pop %v5919
    %v5921 = vadd.f32 %v5918, 1.0
    %v5922 = vadd.f32 %v5920, 1.0
    %v5923 = vrcp.pop %v5921
    %v5924 = vmul.f32 1.0, %v5923
    %v5925 = vrcp.pop %v5922
    %v5926 = vmul.f32 1.0, %v5925
    %v5927 = vxor.u32 %v5897, 2147483648
    %v5928 = vxor.u32 %v5901, 2147483648
    %v5929 = vmul.f32 %v5927, 1.442695
    %v5930 = vpow.pop %v5929
    %v5931 = vmul.f32 %v5928, 1.442695
    %v5932 = vpow.pop %v5931
    %v5933 = vadd.f32 %v5930, 1.0
    %v5934 = vadd.f32 %v5932, 1.0
    %v5935 = vrcp.pop %v5933
    %v5936 = vmul.f32 1.0, %v5935
    %v5937 = vrcp.pop %v5934
    %v5938 = vmul.f32 1.0, %v5937
    %v5939 = vtanh.pop %v5898
    %v5940 = vtanh.pop %v5902
    %v5941 = vmul.f32 %v5912, %v5598
    %v5942 = vmul.f32 %v5914, %v5599
    %v5943 = vmul.f32 %v5924, %v5939
    %v5944 = vmul.f32 %v5926, %v5940
    %v5945 = vadd.f32 %v5941, %v5943
    %v5946 = vadd.f32 %v5942, %v5944
    %v5947 = vtanh.pop %v5945
    %v5948 = vtanh.pop %v5946
    %v5949 = vmul.f32 %v5936, %v5947
    %v5950 = vmul.f32 %v5938, %v5948
    %s5951 = scalar_lea.vmem [#allocation9], 256
    %5952 = vst [vmem:[%s5951] sm:$0xff] %v5949
    %5953 = vst [vmem:[%s5951 + $0x8] sm:$0xff] %v5950
    %s5954 = scalar_lea.vmem [#allocation4], 1088
    %v5955 = vld [vmem:[%s5954] sm:$0xff]
    %v5956 = vld [vmem:[%s5954 + $0x8] sm:$0xff]
    %v5957 = vld [vmem:[%s5954 + $0x10] sm:$0xff]
    %v5958 = vld [vmem:[%s5954 + $0x18] sm:$0xff]
    %v5959 = vld [vmem:[%s5954 + $0x20] sm:$0xff]
    %v5960 = vld [vmem:[%s5954 + $0x28] sm:$0xff]
    %v5961 = vld [vmem:[%s5954 + $0x30] sm:$0xff]
    %v5962 = vld [vmem:[%s5954 + $0x38] sm:$0xff]
    %v5963 = vpack.c.bf16 %v5950, %v5949
    %v5964 = vld [vmem:[#allocation7] sm:$0xff]
    %v5965 = vld [vmem:[#allocation7 + $0x8] sm:$0xff]
    %v5966 = vld [vmem:[#allocation7 + $0x10] sm:$0xff]
    %v5967 = vld [vmem:[#allocation7 + $0x18] sm:$0xff]
    %v5968 = vld [vmem:[#allocation7 + $0x20] sm:$0xff]
    %v5969 = vld [vmem:[#allocation7 + $0x28] sm:$0xff]
    %v5970 = vld [vmem:[#allocation7 + $0x30] sm:$0xff]
    %v5971 = vld [vmem:[#allocation7 + $0x38] sm:$0xff]
    %v5972 = vld [vmem:[#allocation7 + $0x40] sm:$0xff]
    %v5973 = vld [vmem:[#allocation7 + $0x48] sm:$0xff]
    %v5974 = vld [vmem:[#allocation7 + $0x50] sm:$0xff]
    %v5975 = vld [vmem:[#allocation7 + $0x58] sm:$0xff]
    %v5976 = vld [vmem:[#allocation7 + $0x60] sm:$0xff]
    %v5977 = vld [vmem:[#allocation7 + $0x68] sm:$0xff]
    %v5978 = vld [vmem:[#allocation7 + $0x70] sm:$0xff]
    %v5979 = vld [vmem:[#allocation7 + $0x78] sm:$0xff]
    %v5980 = vld [vmem:[#allocation7 + $0x80] sm:$0xff]
    %v5981 = vld [vmem:[#allocation7 + $0x88] sm:$0xff]
    %v5982 = vld [vmem:[#allocation7 + $0x90] sm:$0xff]
    %v5983 = vld [vmem:[#allocation7 + $0x98] sm:$0xff]
    %v5984 = vld [vmem:[#allocation7 + $0xa0] sm:$0xff]
    %v5985 = vld [vmem:[#allocation7 + $0xa8] sm:$0xff]
    %v5986 = vld [vmem:[#allocation7 + $0xb0] sm:$0xff]
    %v5987 = vld [vmem:[#allocation7 + $0xb8] sm:$0xff]
    %v5988 = vld [vmem:[#allocation7 + $0xc0] sm:$0xff]
    %v5989 = vld [vmem:[#allocation7 + $0xc8] sm:$0xff]
    %v5990 = vld [vmem:[#allocation7 + $0xd0] sm:$0xff]
    %v5991 = vld [vmem:[#allocation7 + $0xd8] sm:$0xff]
    %v5992 = vld [vmem:[#allocation7 + $0xe0] sm:$0xff]
    %v5993 = vld [vmem:[#allocation7 + $0xe8] sm:$0xff]
    %v5994 = vld [vmem:[#allocation7 + $0xf0] sm:$0xff]
    %v5995 = vld [vmem:[#allocation7 + $0xf8] sm:$0xff]
    %v6028 = vunpack.c.l.b16 %v5964
    %v6029 = vunpack.c.h.b16 %v5964
    %v6030 = vunpack.c.l.b16 %v5965
    %v6031 = vunpack.c.h.b16 %v5965
    %v6032 = vunpack.c.l.b16 %v5966
    %v6033 = vunpack.c.h.b16 %v5966
    %v6034 = vunpack.c.l.b16 %v5967
    %v6035 = vunpack.c.h.b16 %v5967
    %v6036 = vunpack.c.l.b16 %v5968
    %v6037 = vunpack.c.h.b16 %v5968
    %v6038 = vunpack.c.l.b16 %v5969
    %v6039 = vunpack.c.h.b16 %v5969
    %v6040 = vunpack.c.l.b16 %v5970
    %v6041 = vunpack.c.h.b16 %v5970
    %v6042 = vunpack.c.l.b16 %v5971
    %v6043 = vunpack.c.h.b16 %v5971
    %v6044 = vunpack.c.l.b16 %v5972
    %v6045 = vunpack.c.h.b16 %v5972
    %v6046 = vunpack.c.l.b16 %v5973
    %v6047 = vunpack.c.h.b16 %v5973
    %v6048 = vunpack.c.l.b16 %v5974
    %v6049 = vunpack.c.h.b16 %v5974
    %v6050 = vunpack.c.l.b16 %v5975
    %v6051 = vunpack.c.h.b16 %v5975
    %v6052 = vunpack.c.l.b16 %v5976
    %v6053 = vunpack.c.h.b16 %v5976
    %v6054 = vunpack.c.l.b16 %v5977
    %v6055 = vunpack.c.h.b16 %v5977
    %v6056 = vunpack.c.l.b16 %v5978
    %v6057 = vunpack.c.h.b16 %v5978
    %v6058 = vunpack.c.l.b16 %v5979
    %v6059 = vunpack.c.h.b16 %v5979
    %v6060 = vunpack.c.l.b16 %v5980
    %v6061 = vunpack.c.h.b16 %v5980
    %v6062 = vunpack.c.l.b16 %v5981
    %v6063 = vunpack.c.h.b16 %v5981
    %v6064 = vunpack.c.l.b16 %v5982
    %v6065 = vunpack.c.h.b16 %v5982
    %v6066 = vunpack.c.l.b16 %v5983
    %v6067 = vunpack.c.h.b16 %v5983
    %v6068 = vunpack.c.l.b16 %v5984
    %v6069 = vunpack.c.h.b16 %v5984
    %v6070 = vunpack.c.l.b16 %v5985
    %v6071 = vunpack.c.h.b16 %v5985
    %v6072 = vunpack.c.l.b16 %v5986
    %v6073 = vunpack.c.h.b16 %v5986
    %v6074 = vunpack.c.l.b16 %v5987
    %v6075 = vunpack.c.h.b16 %v5987
    %v6076 = vunpack.c.l.b16 %v5988
    %v6077 = vunpack.c.h.b16 %v5988
    %v6078 = vunpack.c.l.b16 %v5989
    %v6079 = vunpack.c.h.b16 %v5989
    %v6080 = vunpack.c.l.b16 %v5990
    %v6081 = vunpack.c.h.b16 %v5990
    %v6082 = vunpack.c.l.b16 %v5991
    %v6083 = vunpack.c.h.b16 %v5991
    %v6084 = vunpack.c.l.b16 %v5992
    %v6085 = vunpack.c.h.b16 %v5992
    %v6086 = vunpack.c.l.b16 %v5993
    %v6087 = vunpack.c.h.b16 %v5993
    %v6088 = vunpack.c.l.b16 %v5994
    %v6089 = vunpack.c.h.b16 %v5994
    %v6090 = vunpack.c.l.b16 %v5995
    %v6091 = vunpack.c.h.b16 %v5995
    %v6092 = vpack.c.b16 %v6032, %v6028
    %v6093 = vpack.c.b16 %v6033, %v6029
    %v6094 = vpack.c.b16 %v6034, %v6030
    %v6095 = vpack.c.b16 %v6035, %v6031
    %v6096 = vpack.c.b16 %v6040, %v6036
    %v6097 = vpack.c.b16 %v6041, %v6037
    %v6098 = vpack.c.b16 %v6042, %v6038
    %v6099 = vpack.c.b16 %v6043, %v6039
    %v6100 = vpack.c.b16 %v6048, %v6044
    %v6101 = vpack.c.b16 %v6049, %v6045
    %v6102 = vpack.c.b16 %v6050, %v6046
    %v6103 = vpack.c.b16 %v6051, %v6047
    %v6104 = vpack.c.b16 %v6056, %v6052
    %v6105 = vpack.c.b16 %v6057, %v6053
    %v6106 = vpack.c.b16 %v6058, %v6054
    %v6107 = vpack.c.b16 %v6059, %v6055
    %v6108 = vpack.c.b16 %v6064, %v6060
    %v6109 = vpack.c.b16 %v6065, %v6061
    %v6110 = vpack.c.b16 %v6066, %v6062
    %v6111 = vpack.c.b16 %v6067, %v6063
    %v6112 = vpack.c.b16 %v6072, %v6068
    %v6113 = vpack.c.b16 %v6073, %v6069
    %v6114 = vpack.c.b16 %v6074, %v6070
    %v6115 = vpack.c.b16 %v6075, %v6071
    %v6116 = vpack.c.b16 %v6080, %v6076
    %v6117 = vpack.c.b16 %v6081, %v6077
    %v6118 = vpack.c.b16 %v6082, %v6078
    %v6119 = vpack.c.b16 %v6083, %v6079
    %v6120 = vpack.c.b16 %v6088, %v6084
    %v6121 = vpack.c.b16 %v6089, %v6085
    %v6122 = vpack.c.b16 %v6090, %v6086
    %v6123 = vpack.c.b16 %v6091, %v6087
    %6156 = vmatprep.subr.bf16.mxu0 %v6093
    %6157 = vmatpush1.bf16.msra.mxu0 %v6092
    %6158 = vmatprep.subr.bf16.mxu0 %v6097
    %6159 = vmatpush1.bf16.msra.mxu0 %v6096
    %6160 = vmatprep.subr.bf16.mxu0 %v6101
    %6161 = vmatpush1.bf16.msra.mxu0 %v6100
    %6162 = vmatprep.subr.bf16.mxu0 %v6105
    %6163 = vmatpush1.bf16.msra.mxu0 %v6104
    %6164 = vmatprep.subr.bf16.mxu0 %v6109
    %6165 = vmatpush1.bf16.msra.mxu0 %v6108
    %6166 = vmatprep.subr.bf16.mxu0 %v6113
    %6167 = vmatpush1.bf16.msra.mxu0 %v6112
    %6168 = vmatprep.subr.bf16.mxu0 %v6117
    %6169 = vmatpush1.bf16.msra.mxu0 %v6116
    %6170 = vmatprep.subr.bf16.mxu0 %v6121
    %6171 = vmatpush1.bf16.msra.mxu0 %v6120
    %6172 = vmatprep.subr.bf16.mxu0 0
    %6173 = vmatpush1.bf16.msra.mxu0 0
    %6174 = vmatprep.subr.bf16.mxu0 0
    %6175 = vmatpush1.bf16.msra.mxu0 0
    %6176 = vmatprep.subr.bf16.mxu0 0
    %6177 = vmatpush1.bf16.msra.mxu0 0
    %6178 = vmatprep.subr.bf16.mxu0 0
    %6179 = vmatpush1.bf16.msra.mxu0 0
    %6180 = vmatprep.subr.bf16.mxu0 0
    %6181 = vmatpush1.bf16.msra.mxu0 0
    %6182 = vmatprep.subr.bf16.mxu0 0
    %6183 = vmatpush1.bf16.msra.mxu0 0
    %6184 = vmatprep.subr.bf16.mxu0 0
    %6185 = vmatpush1.bf16.msra.mxu0 0
    %6186 = vmatprep.subr.bf16.mxu0 0
    %6187 = vmatpush1.bf16.msra.mxu0 0
    %6188 = vmatprep.mubr.bf16.mxu0 0
    %6189 = vmatmul.mubr.bf16.gmra.mrb[0].mxu0 %v5963
    %v6190 = vpop.f32.mrb[0].mxu0
    %v6191 = vadd.f32 0.0, %v6190
    %v6192 = vpop.f32.mrb[0].mxu0
    %v6193 = vadd.f32 0.0, %v6192
    %v6194 = vpop.f32.mrb[0].mxu0
    %v6195 = vadd.f32 0.0, %v6194
    %v6196 = vpop.f32.mrb[0].mxu0
    %v6197 = vadd.f32 0.0, %v6196
    %6198 = vdwg.mxu0
    %6199 = vmatprep.subr.bf16.mxu0 %v6095
    %6200 = vmatpush1.bf16.msra.mxu0 %v6094
    %6201 = vmatprep.subr.bf16.mxu0 %v6099
    %6202 = vmatpush1.bf16.msra.mxu0 %v6098
    %6203 = vmatprep.subr.bf16.mxu0 %v6103
    %6204 = vmatpush1.bf16.msra.mxu0 %v6102
    %6205 = vmatprep.subr.bf16.mxu0 %v6107
    %6206 = vmatpush1.bf16.msra.mxu0 %v6106
    %6207 = vmatprep.subr.bf16.mxu0 %v6111
    %6208 = vmatpush1.bf16.msra.mxu0 %v6110
    %6209 = vmatprep.subr.bf16.mxu0 %v6115
    %6210 = vmatpush1.bf16.msra.mxu0 %v6114
    %6211 = vmatprep.subr.bf16.mxu0 %v6119
    %6212 = vmatpush1.bf16.msra.mxu0 %v6118
    %6213 = vmatprep.subr.bf16.mxu0 %v6123
    %6214 = vmatpush1.bf16.msra.mxu0 %v6122
    %6215 = vmatprep.subr.bf16.mxu0 0
    %6216 = vmatpush1.bf16.msra.mxu0 0
    %6217 = vmatprep.subr.bf16.mxu0 0
    %6218 = vmatpush1.bf16.msra.mxu0 0
    %6219 = vmatprep.subr.bf16.mxu0 0
    %6220 = vmatpush1.bf16.msra.mxu0 0
    %6221 = vmatprep.subr.bf16.mxu0 0
    %6222 = vmatpush1.bf16.msra.mxu0 0
    %6223 = vmatprep.subr.bf16.mxu0 0
    %6224 = vmatpush1.bf16.msra.mxu0 0
    %6225 = vmatprep.subr.bf16.mxu0 0
    %6226 = vmatpush1.bf16.msra.mxu0 0
    %6227 = vmatprep.subr.bf16.mxu0 0
    %6228 = vmatpush1.bf16.msra.mxu0 0
    %6229 = vmatprep.subr.bf16.mxu0 0
    %6230 = vmatpush1.bf16.msra.mxu0 0
    %6231 = vmatprep.mubr.bf16.mxu0 0
    %6232 = vmatmul.mubr.bf16.gmra.mrb[0].mxu0 %v5963
    %v6233 = vpop.f32.mrb[0].mxu0
    %v6234 = vadd.f32 0.0, %v6233
    %v6235 = vpop.f32.mrb[0].mxu0
    %v6236 = vadd.f32 0.0, %v6235
    %v6237 = vpop.f32.mrb[0].mxu0
    %v6238 = vadd.f32 0.0, %v6237
    %v6239 = vpop.f32.mrb[0].mxu0
    %v6240 = vadd.f32 0.0, %v6239
    %6241 = vdwg.mxu0
    %v6242 = vadd.f32 %v5955, %v6191
    %v6243 = vadd.f32 %v5956, %v6193
    %v6244 = vadd.f32 %v5957, %v6234
    %v6245 = vadd.f32 %v5958, %v6236
    %v6246 = vadd.f32 %v5959, %v6195
    %v6247 = vadd.f32 %v5960, %v6197
    %v6248 = vadd.f32 %v5961, %v6238
    %v6249 = vadd.f32 %v5962, %v6240
    %v6250 = vxor.u32 %v6242, 2147483648
    %v6251 = vxor.u32 %v6246, 2147483648
    %v6252 = vmul.f32 %v6250, 1.442695
    %v6253 = vpow.pop %v6252
    %v6254 = vmul.f32 %v6251, 1.442695
    %v6255 = vpow.pop %v6254
    %v6256 = vadd.f32 %v6253, 1.0
    %v6257 = vadd.f32 %v6255, 1.0
    %v6258 = vrcp.pop %v6256
    %v6259 = vmul.f32 1.0, %v6258
    %v6260 = vrcp.pop %v6257
    %v6261 = vmul.f32 1.0, %v6260
    %v6262 = vxor.u32 %v6243, 2147483648
    %v6263 = vxor.u32 %v6247, 2147483648
    %v6264 = vmul.f32 %v6262, 1.442695
    %v6265 = vpow.pop %v6264
    %v6266 = vmul.f32 %v6263, 1.442695
    %v6267 = vpow.pop %v6266
    %v6268 = vadd.f32 %v6265, 1.0
    %v6269 = vadd.f32 %v6267, 1.0
    %v6270 = vrcp.pop %v6268
    %v6271 = vmul.f32 1.0, %v6270
    %v6272 = vrcp.pop %v6269
    %v6273 = vmul.f32 1.0, %v6272
    %v6274 = vxor.u32 %v6244, 2147483648
    %v6275 = vxor.u32 %v6248, 2147483648
    %v6276 = vmul.f32 %v6274, 1.442695
    %v6277 = vpow.pop %v6276
    %v6278 = vmul.f32 %v6275, 1.442695
    %v6279 = vpow.pop %v6278
    %v6280 = vadd.f32 %v6277, 1.0
    %v6281 = vadd.f32 %v6279, 1.0
    %v6282 = vrcp.pop %v6280
    %v6283 = vmul.f32 1.0, %v6282
    %v6284 = vrcp.pop %v6281
    %v6285 = vmul.f32 1.0, %v6284
    %v6286 = vtanh.pop %v6245
    %v6287 = vtanh.pop %v6249
    %v6288 = vmul.f32 %v6259, %v5945
    %v6289 = vmul.f32 %v6261, %v5946
    %v6290 = vmul.f32 %v6271, %v6286
    %v6291 = vmul.f32 %v6273, %v6287
    %v6292 = vadd.f32 %v6288, %v6290
    %v6293 = vadd.f32 %v6289, %v6291
    %v6294 = vtanh.pop %v6292
    %v6295 = vtanh.pop %v6293
    %v6296 = vmul.f32 %v6283, %v6294
    %v6297 = vmul.f32 %v6285, %v6295
    %s6298 = scalar_lea.vmem [#allocation9], 272
    %6299 = vst [vmem:[%s6298] sm:$0xff] %v6296
    %6300 = vst [vmem:[%s6298 + $0x8] sm:$0xff] %v6297
    %s6301 = scalar_lea.vmem [#allocation4], 1152
    %v6302 = vld [vmem:[%s6301] sm:$0xff]
    %v6303 = vld [vmem:[%s6301 + $0x8] sm:$0xff]
    %v6304 = vld [vmem:[%s6301 + $0x10] sm:$0xff]
    %v6305 = vld [vmem:[%s6301 + $0x18] sm:$0xff]
    %v6306 = vld [vmem:[%s6301 + $0x20] sm:$0xff]
    %v6307 = vld [vmem:[%s6301 + $0x28] sm:$0xff]
    %v6308 = vld [vmem:[%s6301 + $0x30] sm:$0xff]
    %v6309 = vld [vmem:[%s6301 + $0x38] sm:$0xff]
    %v6310 = vpack.c.bf16 %v6297, %v6296
    %v6311 = vld [vmem:[#allocation7] sm:$0xff]
    %v6312 = vld [vmem:[#allocation7 + $0x8] sm:$0xff]
    %v6313 = vld [vmem:[#allocation7 + $0x10] sm:$0xff]
    %v6314 = vld [vmem:[#allocation7 + $0x18] sm:$0xff]
    %v6315 = vld [vmem:[#allocation7 + $0x20] sm:$0xff]
    %v6316 = vld [vmem:[#allocation7 + $0x28] sm:$0xff]
    %v6317 = vld [vmem:[#allocation7 + $0x30] sm:$0xff]
    %v6318 = vld [vmem:[#allocation7 + $0x38] sm:$0xff]
    %v6319 = vld [vmem:[#allocation7 + $0x40] sm:$0xff]
    %v6320 = vld [vmem:[#allocation7 + $0x48] sm:$0xff]
    %v6321 = vld [vmem:[#allocation7 + $0x50] sm:$0xff]
    %v6322 = vld [vmem:[#allocation7 + $0x58] sm:$0xff]
    %v6323 = vld [vmem:[#allocation7 + $0x60] sm:$0xff]
    %v6324 = vld [vmem:[#allocation7 + $0x68] sm:$0xff]
    %v6325 = vld [vmem:[#allocation7 + $0x70] sm:$0xff]
    %v6326 = vld [vmem:[#allocation7 + $0x78] sm:$0xff]
    %v6327 = vld [vmem:[#allocation7 + $0x80] sm:$0xff]
    %v6328 = vld [vmem:[#allocation7 + $0x88] sm:$0xff]
    %v6329 = vld [vmem:[#allocation7 + $0x90] sm:$0xff]
    %v6330 = vld [vmem:[#allocation7 + $0x98] sm:$0xff]
    %v6331 = vld [vmem:[#allocation7 + $0xa0] sm:$0xff]
    %v6332 = vld [vmem:[#allocation7 + $0xa8] sm:$0xff]
    %v6333 = vld [vmem:[#allocation7 + $0xb0] sm:$0xff]
    %v6334 = vld [vmem:[#allocation7 + $0xb8] sm:$0xff]
    %v6335 = vld [vmem:[#allocation7 + $0xc0] sm:$0xff]
    %v6336 = vld [vmem:[#allocation7 + $0xc8] sm:$0xff]
    %v6337 = vld [vmem:[#allocation7 + $0xd0] sm:$0xff]
    %v6338 = vld [vmem:[#allocation7 + $0xd8] sm:$0xff]
    %v6339 = vld [vmem:[#allocation7 + $0xe0] sm:$0xff]
    %v6340 = vld [vmem:[#allocation7 + $0xe8] sm:$0xff]
    %v6341 = vld [vmem:[#allocation7 + $0xf0] sm:$0xff]
    %v6342 = vld [vmem:[#allocation7 + $0xf8] sm:$0xff]
    %v6375 = vunpack.c.l.b16 %v6311
    %v6376 = vunpack.c.h.b16 %v6311
    %v6377 = vunpack.c.l.b16 %v6312
    %v6378 = vunpack.c.h.b16 %v6312
    %v6379 = vunpack.c.l.b16 %v6313
    %v6380 = vunpack.c.h.b16 %v6313
    %v6381 = vunpack.c.l.b16 %v6314
    %v6382 = vunpack.c.h.b16 %v6314
    %v6383 = vunpack.c.l.b16 %v6315
    %v6384 = vunpack.c.h.b16 %v6315
    %v6385 = vunpack.c.l.b16 %v6316
    %v6386 = vunpack.c.h.b16 %v6316
    %v6387 = vunpack.c.l.b16 %v6317
    %v6388 = vunpack.c.h.b16 %v6317
    %v6389 = vunpack.c.l.b16 %v6318
    %v6390 = vunpack.c.h.b16 %v6318
    %v6391 = vunpack.c.l.b16 %v6319
    %v6392 = vunpack.c.h.b16 %v6319
    %v6393 = vunpack.c.l.b16 %v6320
    %v6394 = vunpack.c.h.b16 %v6320
    %v6395 = vunpack.c.l.b16 %v6321
    %v6396 = vunpack.c.h.b16 %v6321
    %v6397 = vunpack.c.l.b16 %v6322
    %v6398 = vunpack.c.h.b16 %v6322
    %v6399 = vunpack.c.l.b16 %v6323
    %v6400 = vunpack.c.h.b16 %v6323
    %v6401 = vunpack.c.l.b16 %v6324
    %v6402 = vunpack.c.h.b16 %v6324
    %v6403 = vunpack.c.l.b16 %v6325
    %v6404 = vunpack.c.h.b16 %v6325
    %v6405 = vunpack.c.l.b16 %v6326
    %v6406 = vunpack.c.h.b16 %v6326
    %v6407 = vunpack.c.l.b16 %v6327
    %v6408 = vunpack.c.h.b16 %v6327
    %v6409 = vunpack.c.l.b16 %v6328
    %v6410 = vunpack.c.h.b16 %v6328
    %v6411 = vunpack.c.l.b16 %v6329
    %v6412 = vunpack.c.h.b16 %v6329
    %v6413 = vunpack.c.l.b16 %v6330
    %v6414 = vunpack.c.h.b16 %v6330
    %v6415 = vunpack.c.l.b16 %v6331
    %v6416 = vunpack.c.h.b16 %v6331
    %v6417 = vunpack.c.l.b16 %v6332
    %v6418 = vunpack.c.h.b16 %v6332
    %v6419 = vunpack.c.l.b16 %v6333
    %v6420 = vunpack.c.h.b16 %v6333
    %v6421 = vunpack.c.l.b16 %v6334
    %v6422 = vunpack.c.h.b16 %v6334
    %v6423 = vunpack.c.l.b16 %v6335
    %v6424 = vunpack.c.h.b16 %v6335
    %v6425 = vunpack.c.l.b16 %v6336
    %v6426 = vunpack.c.h.b16 %v6336
    %v6427 = vunpack.c.l.b16 %v6337
    %v6428 = vunpack.c.h.b16 %v6337
    %v6429 = vunpack.c.l.b16 %v6338
    %v6430 = vunpack.c.h.b16 %v6338
    %v6431 = vunpack.c.l.b16 %v6339
    %v6432 = vunpack.c.h.b16 %v6339
    %v6433 = vunpack.c.l.b16 %v6340
    %v6434 = vunpack.c.h.b16 %v6340
    %v6435 = vunpack.c.l.b16 %v6341
    %v6436 = vunpack.c.h.b16 %v6341
    %v6437 = vunpack.c.l.b16 %v6342
    %v6438 = vunpack.c.h.b16 %v6342
    %v6439 = vpack.c.b16 %v6379, %v6375
    %v6440 = vpack.c.b16 %v6380, %v6376
    %v6441 = vpack.c.b16 %v6381, %v6377
    %v6442 = vpack.c.b16 %v6382, %v6378
    %v6443 = vpack.c.b16 %v6387, %v6383
    %v6444 = vpack.c.b16 %v6388, %v6384
    %v6445 = vpack.c.b16 %v6389, %v6385
    %v6446 = vpack.c.b16 %v6390, %v6386
    %v6447 = vpack.c.b16 %v6395, %v6391
    %v6448 = vpack.c.b16 %v6396, %v6392
    %v6449 = vpack.c.b16 %v6397, %v6393
    %v6450 = vpack.c.b16 %v6398, %v6394
    %v6451 = vpack.c.b16 %v6403, %v6399
    %v6452 = vpack.c.b16 %v6404, %v6400
    %v6453 = vpack.c.b16 %v6405, %v6401
    %v6454 = vpack.c.b16 %v6406, %v6402
    %v6455 = vpack.c.b16 %v6411, %v6407
    %v6456 = vpack.c.b16 %v6412, %v6408
    %v6457 = vpack.c.b16 %v6413, %v6409
    %v6458 = vpack.c.b16 %v6414, %v6410
    %v6459 = vpack.c.b16 %v6419, %v6415
    %v6460 = vpack.c.b16 %v6420, %v6416
    %v6461 = vpack.c.b16 %v6421, %v6417
    %v6462 = vpack.c.b16 %v6422, %v6418
    %v6463 = vpack.c.b16 %v6427, %v6423
    %v6464 = vpack.c.b16 %v6428, %v6424
    %v6465 = vpack.c.b16 %v6429, %v6425
    %v6466 = vpack.c.b16 %v6430, %v6426
    %v6467 = vpack.c.b16 %v6435, %v6431
    %v6468 = vpack.c.b16 %v6436, %v6432
    %v6469 = vpack.c.b16 %v6437, %v6433
    %v6470 = vpack.c.b16 %v6438, %v6434
    %6503 = vmatprep.subr.bf16.mxu0 %v6440
    %6504 = vmatpush1.bf16.msra.mxu0 %v6439
    %6505 = vmatprep.subr.bf16.mxu0 %v6444
    %6506 = vmatpush1.bf16.msra.mxu0 %v6443
    %6507 = vmatprep.subr.bf16.mxu0 %v6448
    %6508 = vmatpush1.bf16.msra.mxu0 %v6447
    %6509 = vmatprep.subr.bf16.mxu0 %v6452
    %6510 = vmatpush1.bf16.msra.mxu0 %v6451
    %6511 = vmatprep.subr.bf16.mxu0 %v6456
    %6512 = vmatpush1.bf16.msra.mxu0 %v6455
    %6513 = vmatprep.subr.bf16.mxu0 %v6460
    %6514 = vmatpush1.bf16.msra.mxu0 %v6459
    %6515 = vmatprep.subr.bf16.mxu0 %v6464
    %6516 = vmatpush1.bf16.msra.mxu0 %v6463
    %6517 = vmatprep.subr.bf16.mxu0 %v6468
    %6518 = vmatpush1.bf16.msra.mxu0 %v6467
    %6519 = vmatprep.subr.bf16.mxu0 0
    %6520 = vmatpush1.bf16.msra.mxu0 0
    %6521 = vmatprep.subr.bf16.mxu0 0
    %6522 = vmatpush1.bf16.msra.mxu0 0
    %6523 = vmatprep.subr.bf16.mxu0 0
    %6524 = vmatpush1.bf16.msra.mxu0 0
    %6525 = vmatprep.subr.bf16.mxu0 0
    %6526 = vmatpush1.bf16.msra.mxu0 0
    %6527 = vmatprep.subr.bf16.mxu0 0
    %6528 = vmatpush1.bf16.msra.mxu0 0
    %6529 = vmatprep.subr.bf16.mxu0 0
    %6530 = vmatpush1.bf16.msra.mxu0 0
    %6531 = vmatprep.subr.bf16.mxu0 0
    %6532 = vmatpush1.bf16.msra.mxu0 0
    %6533 = vmatprep.subr.bf16.mxu0 0
    %6534 = vmatpush1.bf16.msra.mxu0 0
    %6535 = vmatprep.mubr.bf16.mxu0 0
    %6536 = vmatmul.mubr.bf16.gmra.mrb[0].mxu0 %v6310
    %v6537 = vpop.f32.mrb[0].mxu0
    %v6538 = vadd.f32 0.0, %v6537
    %v6539 = vpop.f32.mrb[0].mxu0
    %v6540 = vadd.f32 0.0, %v6539
    %v6541 = vpop.f32.mrb[0].mxu0
    %v6542 = vadd.f32 0.0, %v6541
    %v6543 = vpop.f32.mrb[0].mxu0
    %v6544 = vadd.f32 0.0, %v6543
    %6545 = vdwg.mxu0
    %6546 = vmatprep.subr.bf16.mxu0 %v6442
    %6547 = vmatpush1.bf16.msra.mxu0 %v6441
    %6548 = vmatprep.subr.bf16.mxu0 %v6446
    %6549 = vmatpush1.bf16.msra.mxu0 %v6445
    %6550 = vmatprep.subr.bf16.mxu0 %v6450
    %6551 = vmatpush1.bf16.msra.mxu0 %v6449
    %6552 = vmatprep.subr.bf16.mxu0 %v6454
    %6553 = vmatpush1.bf16.msra.mxu0 %v6453
    %6554 = vmatprep.subr.bf16.mxu0 %v6458
    %6555 = vmatpush1.bf16.msra.mxu0 %v6457
    %6556 = vmatprep.subr.bf16.mxu0 %v6462
    %6557 = vmatpush1.bf16.msra.mxu0 %v6461
    %6558 = vmatprep.subr.bf16.mxu0 %v6466
    %6559 = vmatpush1.bf16.msra.mxu0 %v6465
    %6560 = vmatprep.subr.bf16.mxu0 %v6470
    %6561 = vmatpush1.bf16.msra.mxu0 %v6469
    %6562 = vmatprep.subr.bf16.mxu0 0
    %6563 = vmatpush1.bf16.msra.mxu0 0
    %6564 = vmatprep.subr.bf16.mxu0 0
    %6565 = vmatpush1.bf16.msra.mxu0 0
    %6566 = vmatprep.subr.bf16.mxu0 0
    %6567 = vmatpush1.bf16.msra.mxu0 0
    %6568 = vmatprep.subr.bf16.mxu0 0
    %6569 = vmatpush1.bf16.msra.mxu0 0
    %6570 = vmatprep.subr.bf16.mxu0 0
    %6571 = vmatpush1.bf16.msra.mxu0 0
    %6572 = vmatprep.subr.bf16.mxu0 0
    %6573 = vmatpush1.bf16.msra.mxu0 0
    %6574 = vmatprep.subr.bf16.mxu0 0
    %6575 = vmatpush1.bf16.msra.mxu0 0
    %6576 = vmatprep.subr.bf16.mxu0 0
    %6577 = vmatpush1.bf16.msra.mxu0 0
    %6578 = vmatprep.mubr.bf16.mxu0 0
    %6579 = vmatmul.mubr.bf16.gmra.mrb[0].mxu0 %v6310
    %v6580 = vpop.f32.mrb[0].mxu0
    %v6581 = vadd.f32 0.0, %v6580
    %v6582 = vpop.f32.mrb[0].mxu0
    %v6583 = vadd.f32 0.0, %v6582
    %v6584 = vpop.f32.mrb[0].mxu0
    %v6585 = vadd.f32 0.0, %v6584
    %v6586 = vpop.f32.mrb[0].mxu0
    %v6587 = vadd.f32 0.0, %v6586
    %6588 = vdwg.mxu0
    %v6589 = vadd.f32 %v6302, %v6538
    %v6590 = vadd.f32 %v6303, %v6540
    %v6591 = vadd.f32 %v6304, %v6581
    %v6592 = vadd.f32 %v6305, %v6583
    %v6593 = vadd.f32 %v6306, %v6542
    %v6594 = vadd.f32 %v6307, %v6544
    %v6595 = vadd.f32 %v6308, %v6585
    %v6596 = vadd.f32 %v6309, %v6587
    %v6597 = vxor.u32 %v6589, 2147483648
    %v6598 = vxor.u32 %v6593, 2147483648
    %v6599 = vmul.f32 %v6597, 1.442695
    %v6600 = vpow.pop %v6599
    %v6601 = vmul.f32 %v6598, 1.442695
    %v6602 = vpow.pop %v6601
    %v6603 = vadd.f32 %v6600, 1.0
    %v6604 = vadd.f32 %v6602, 1.0
    %v6605 = vrcp.pop %v6603
    %v6606 = vmul.f32 1.0, %v6605
    %v6607 = vrcp.pop %v6604
    %v6608 = vmul.f32 1.0, %v6607
    %v6609 = vxor.u32 %v6590, 2147483648
    %v6610 = vxor.u32 %v6594, 2147483648
    %v6611 = vmul.f32 %v6609, 1.442695
    %v6612 = vpow.pop %v6611
    %v6613 = vmul.f32 %v6610, 1.442695
    %v6614 = vpow.pop %v6613
    %v6615 = vadd.f32 %v6612, 1.0
    %v6616 = vadd.f32 %v6614, 1.0
    %v6617 = vrcp.pop %v6615
    %v6618 = vmul.f32 1.0, %v6617
    %v6619 = vrcp.pop %v6616
    %v6620 = vmul.f32 1.0, %v6619
    %v6621 = vxor.u32 %v6591, 2147483648
    %v6622 = vxor.u32 %v6595, 2147483648
    %v6623 = vmul.f32 %v6621, 1.442695
    %v6624 = vpow.pop %v6623
    %v6625 = vmul.f32 %v6622, 1.442695
    %v6626 = vpow.pop %v6625
    %v6627 = vadd.f32 %v6624, 1.0
    %v6628 = vadd.f32 %v6626, 1.0
    %v6629 = vrcp.pop %v6627
    %v6630 = vmul.f32 1.0, %v6629
    %v6631 = vrcp.pop %v6628
    %v6632 = vmul.f32 1.0, %v6631
    %v6633 = vtanh.pop %v6592
    %v6634 = vtanh.pop %v6596
    %v6635 = vmul.f32 %v6606, %v6292
    %v6636 = vmul.f32 %v6608, %v6293
    %v6637 = vmul.f32 %v6618, %v6633
    %v6638 = vmul.f32 %v6620, %v6634
    %v6639 = vadd.f32 %v6635, %v6637
    %v6640 = vadd.f32 %v6636, %v6638
    %v6641 = vtanh.pop %v6639
    %v6642 = vtanh.pop %v6640
    %v6643 = vmul.f32 %v6630, %v6641
    %v6644 = vmul.f32 %v6632, %v6642
    %s6645 = scalar_lea.vmem [#allocation9], 288
    %6646 = vst [vmem:[%s6645] sm:$0xff] %v6643
    %6647 = vst [vmem:[%s6645 + $0x8] sm:$0xff] %v6644
    %s6648 = scalar_lea.vmem [#allocation4], 1216
    %v6649 = vld [vmem:[%s6648] sm:$0xff]
    %v6650 = vld [vmem:[%s6648 + $0x8] sm:$0xff]
    %v6651 = vld [vmem:[%s6648 + $0x10] sm:$0xff]
    %v6652 = vld [vmem:[%s6648 + $0x18] sm:$0xff]
    %v6653 = vld [vmem:[%s6648 + $0x20] sm:$0xff]
    %v6654 = vld [vmem:[%s6648 + $0x28] sm:$0xff]
    %v6655 = vld [vmem:[%s6648 + $0x30] sm:$0xff]
    %v6656 = vld [vmem:[%s6648 + $0x38] sm:$0xff]
    %v6657 = vpack.c.bf16 %v6644, %v6643
    %v6658 = vld [vmem:[#allocation7] sm:$0xff]
    %v6659 = vld [vmem:[#allocation7 + $0x8] sm:$0xff]
    %v6660 = vld [vmem:[#allocation7 + $0x10] sm:$0xff]
    %v6661 = vld [vmem:[#allocation7 + $0x18] sm:$0xff]
    %v6662 = vld [vmem:[#allocation7 + $0x20] sm:$0xff]
    %v6663 = vld [vmem:[#allocation7 + $0x28] sm:$0xff]
    %v6664 = vld [vmem:[#allocation7 + $0x30] sm:$0xff]
    %v6665 = vld [vmem:[#allocation7 + $0x38] sm:$0xff]
    %v6666 = vld [vmem:[#allocation7 + $0x40] sm:$0xff]
    %v6667 = vld [vmem:[#allocation7 + $0x48] sm:$0xff]
    %v6668 = vld [vmem:[#allocation7 + $0x50] sm:$0xff]
    %v6669 = vld [vmem:[#allocation7 + $0x58] sm:$0xff]
    %v6670 = vld [vmem:[#allocation7 + $0x60] sm:$0xff]
    %v6671 = vld [vmem:[#allocation7 + $0x68] sm:$0xff]
    %v6672 = vld [vmem:[#allocation7 + $0x70] sm:$0xff]
    %v6673 = vld [vmem:[#allocation7 + $0x78] sm:$0xff]
    %v6674 = vld [vmem:[#allocation7 + $0x80] sm:$0xff]
    %v6675 = vld [vmem:[#allocation7 + $0x88] sm:$0xff]
    %v6676 = vld [vmem:[#allocation7 + $0x90] sm:$0xff]
    %v6677 = vld [vmem:[#allocation7 + $0x98] sm:$0xff]
    %v6678 = vld [vmem:[#allocation7 + $0xa0] sm:$0xff]
    %v6679 = vld [vmem:[#allocation7 + $0xa8] sm:$0xff]
    %v6680 = vld [vmem:[#allocation7 + $0xb0] sm:$0xff]
    %v6681 = vld [vmem:[#allocation7 + $0xb8] sm:$0xff]
    %v6682 = vld [vmem:[#allocation7 + $0xc0] sm:$0xff]
    %v6683 = vld [vmem:[#allocation7 + $0xc8] sm:$0xff]
    %v6684 = vld [vmem:[#allocation7 + $0xd0] sm:$0xff]
    %v6685 = vld [vmem:[#allocation7 + $0xd8] sm:$0xff]
    %v6686 = vld [vmem:[#allocation7 + $0xe0] sm:$0xff]
    %v6687 = vld [vmem:[#allocation7 + $0xe8] sm:$0xff]
    %v6688 = vld [vmem:[#allocation7 + $0xf0] sm:$0xff]
    %v6689 = vld [vmem:[#allocation7 + $0xf8] sm:$0xff]
    %v6722 = vunpack.c.l.b16 %v6658
    %v6723 = vunpack.c.h.b16 %v6658
    %v6724 = vunpack.c.l.b16 %v6659
    %v6725 = vunpack.c.h.b16 %v6659
    %v6726 = vunpack.c.l.b16 %v6660
    %v6727 = vunpack.c.h.b16 %v6660
    %v6728 = vunpack.c.l.b16 %v6661
    %v6729 = vunpack.c.h.b16 %v6661
    %v6730 = vunpack.c.l.b16 %v6662
    %v6731 = vunpack.c.h.b16 %v6662
    %v6732 = vunpack.c.l.b16 %v6663
    %v6733 = vunpack.c.h.b16 %v6663
    %v6734 = vunpack.c.l.b16 %v6664
    %v6735 = vunpack.c.h.b16 %v6664
    %v6736 = vunpack.c.l.b16 %v6665
    %v6737 = vunpack.c.h.b16 %v6665
    %v6738 = vunpack.c.l.b16 %v6666
    %v6739 = vunpack.c.h.b16 %v6666
    %v6740 = vunpack.c.l.b16 %v6667
    %v6741 = vunpack.c.h.b16 %v6667
    %v6742 = vunpack.c.l.b16 %v6668
    %v6743 = vunpack.c.h.b16 %v6668
    %v6744 = vunpack.c.l.b16 %v6669
    %v6745 = vunpack.c.h.b16 %v6669
    %v6746 = vunpack.c.l.b16 %v6670
    %v6747 = vunpack.c.h.b16 %v6670
    %v6748 = vunpack.c.l.b16 %v6671
    %v6749 = vunpack.c.h.b16 %v6671
    %v6750 = vunpack.c.l.b16 %v6672
    %v6751 = vunpack.c.h.b16 %v6672
    %v6752 = vunpack.c.l.b16 %v6673
    %v6753 = vunpack.c.h.b16 %v6673
    %v6754 = vunpack.c.l.b16 %v6674
    %v6755 = vunpack.c.h.b16 %v6674
    %v6756 = vunpack.c.l.b16 %v6675
    %v6757 = vunpack.c.h.b16 %v6675
    %v6758 = vunpack.c.l.b16 %v6676
    %v6759 = vunpack.c.h.b16 %v6676
    %v6760 = vunpack.c.l.b16 %v6677
    %v6761 = vunpack.c.h.b16 %v6677
    %v6762 = vunpack.c.l.b16 %v6678
    %v6763 = vunpack.c.h.b16 %v6678
    %v6764 = vunpack.c.l.b16 %v6679
    %v6765 = vunpack.c.h.b16 %v6679
    %v6766 = vunpack.c.l.b16 %v6680
    %v6767 = vunpack.c.h.b16 %v6680
    %v6768 = vunpack.c.l.b16 %v6681
    %v6769 = vunpack.c.h.b16 %v6681
    %v6770 = vunpack.c.l.b16 %v6682
    %v6771 = vunpack.c.h.b16 %v6682
    %v6772 = vunpack.c.l.b16 %v6683
    %v6773 = vunpack.c.h.b16 %v6683
    %v6774 = vunpack.c.l.b16 %v6684
    %v6775 = vunpack.c.h.b16 %v6684
    %v6776 = vunpack.c.l.b16 %v6685
    %v6777 = vunpack.c.h.b16 %v6685
    %v6778 = vunpack.c.l.b16 %v6686
    %v6779 = vunpack.c.h.b16 %v6686
    %v6780 = vunpack.c.l.b16 %v6687
    %v6781 = vunpack.c.h.b16 %v6687
    %v6782 = vunpack.c.l.b16 %v6688
    %v6783 = vunpack.c.h.b16 %v6688
    %v6784 = vunpack.c.l.b16 %v6689
    %v6785 = vunpack.c.h.b16 %v6689
    %v6786 = vpack.c.b16 %v6726, %v6722
    %v6787 = vpack.c.b16 %v6727, %v6723
    %v6788 = vpack.c.b16 %v6728, %v6724
    %v6789 = vpack.c.b16 %v6729, %v6725
    %v6790 = vpack.c.b16 %v6734, %v6730
    %v6791 = vpack.c.b16 %v6735, %v6731
    %v6792 = vpack.c.b16 %v6736, %v6732
    %v6793 = vpack.c.b16 %v6737, %v6733
    %v6794 = vpack.c.b16 %v6742, %v6738
    %v6795 = vpack.c.b16 %v6743, %v6739
    %v6796 = vpack.c.b16 %v6744, %v6740
    %v6797 = vpack.c.b16 %v6745, %v6741
    %v6798 = vpack.c.b16 %v6750, %v6746
    %v6799 = vpack.c.b16 %v6751, %v6747
    %v6800 = vpack.c.b16 %v6752, %v6748
    %v6801 = vpack.c.b16 %v6753, %v6749
    %v6802 = vpack.c.b16 %v6758, %v6754
    %v6803 = vpack.c.b16 %v6759, %v6755
    %v6804 = vpack.c.b16 %v6760, %v6756
    %v6805 = vpack.c.b16 %v6761, %v6757
    %v6806 = vpack.c.b16 %v6766, %v6762
    %v6807 = vpack.c.b16 %v6767, %v6763
    %v6808 = vpack.c.b16 %v6768, %v6764
    %v6809 = vpack.c.b16 %v6769, %v6765
    %v6810 = vpack.c.b16 %v6774, %v6770
    %v6811 = vpack.c.b16 %v6775, %v6771
    %v6812 = vpack.c.b16 %v6776, %v6772
    %v6813 = vpack.c.b16 %v6777, %v6773
    %v6814 = vpack.c.b16 %v6782, %v6778
    %v6815 = vpack.c.b16 %v6783, %v6779
    %v6816 = vpack.c.b16 %v6784, %v6780
    %v6817 = vpack.c.b16 %v6785, %v6781
    %6850 = vmatprep.subr.bf16.mxu0 %v6787
    %6851 = vmatpush1.bf16.msra.mxu0 %v6786
    %6852 = vmatprep.subr.bf16.mxu0 %v6791
    %6853 = vmatpush1.bf16.msra.mxu0 %v6790
    %6854 = vmatprep.subr.bf16.mxu0 %v6795
    %6855 = vmatpush1.bf16.msra.mxu0 %v6794
    %6856 = vmatprep.subr.bf16.mxu0 %v6799
    %6857 = vmatpush1.bf16.msra.mxu0 %v6798
    %6858 = vmatprep.subr.bf16.mxu0 %v6803
    %6859 = vmatpush1.bf16.msra.mxu0 %v6802
    %6860 = vmatprep.subr.bf16.mxu0 %v6807
    %6861 = vmatpush1.bf16.msra.mxu0 %v6806
    %6862 = vmatprep.subr.bf16.mxu0 %v6811
    %6863 = vmatpush1.bf16.msra.mxu0 %v6810
    %6864 = vmatprep.subr.bf16.mxu0 %v6815
    %6865 = vmatpush1.bf16.msra.mxu0 %v6814
    %6866 = vmatprep.subr.bf16.mxu0 0
    %6867 = vmatpush1.bf16.msra.mxu0 0
    %6868 = vmatprep.subr.bf16.mxu0 0
    %6869 = vmatpush1.bf16.msra.mxu0 0
    %6870 = vmatprep.subr.bf16.mxu0 0
    %6871 = vmatpush1.bf16.msra.mxu0 0
    %6872 = vmatprep.subr.bf16.mxu0 0
    %6873 = vmatpush1.bf16.msra.mxu0 0
    %6874 = vmatprep.subr.bf16.mxu0 0
    %6875 = vmatpush1.bf16.msra.mxu0 0
    %6876 = vmatprep.subr.bf16.mxu0 0
    %6877 = vmatpush1.bf16.msra.mxu0 0
    %6878 = vmatprep.subr.bf16.mxu0 0
    %6879 = vmatpush1.bf16.msra.mxu0 0
    %6880 = vmatprep.subr.bf16.mxu0 0
    %6881 = vmatpush1.bf16.msra.mxu0 0
    %6882 = vmatprep.mubr.bf16.mxu0 0
    %6883 = vmatmul.mubr.bf16.gmra.mrb[0].mxu0 %v6657
    %v6884 = vpop.f32.mrb[0].mxu0
    %v6885 = vadd.f32 0.0, %v6884
    %v6886 = vpop.f32.mrb[0].mxu0
    %v6887 = vadd.f32 0.0, %v6886
    %v6888 = vpop.f32.mrb[0].mxu0
    %v6889 = vadd.f32 0.0, %v6888
    %v6890 = vpop.f32.mrb[0].mxu0
    %v6891 = vadd.f32 0.0, %v6890
    %6892 = vdwg.mxu0
    %6893 = vmatprep.subr.bf16.mxu0 %v6789
    %6894 = vmatpush1.bf16.msra.mxu0 %v6788
    %6895 = vmatprep.subr.bf16.mxu0 %v6793
    %6896 = vmatpush1.bf16.msra.mxu0 %v6792
    %6897 = vmatprep.subr.bf16.mxu0 %v6797
    %6898 = vmatpush1.bf16.msra.mxu0 %v6796
    %6899 = vmatprep.subr.bf16.mxu0 %v6801
    %6900 = vmatpush1.bf16.msra.mxu0 %v6800
    %6901 = vmatprep.subr.bf16.mxu0 %v6805
    %6902 = vmatpush1.bf16.msra.mxu0 %v6804
    %6903 = vmatprep.subr.bf16.mxu0 %v6809
    %6904 = vmatpush1.bf16.msra.mxu0 %v6808
    %6905 = vmatprep.subr.bf16.mxu0 %v6813
    %6906 = vmatpush1.bf16.msra.mxu0 %v6812
    %6907 = vmatprep.subr.bf16.mxu0 %v6817
    %6908 = vmatpush1.bf16.msra.mxu0 %v6816
    %6909 = vmatprep.subr.bf16.mxu0 0
    %6910 = vmatpush1.bf16.msra.mxu0 0
    %6911 = vmatprep.subr.bf16.mxu0 0
    %6912 = vmatpush1.bf16.msra.mxu0 0
    %6913 = vmatprep.subr.bf16.mxu0 0
    %6914 = vmatpush1.bf16.msra.mxu0 0
    %6915 = vmatprep.subr.bf16.mxu0 0
    %6916 = vmatpush1.bf16.msra.mxu0 0
    %6917 = vmatprep.subr.bf16.mxu0 0
    %6918 = vmatpush1.bf16.msra.mxu0 0
    %6919 = vmatprep.subr.bf16.mxu0 0
    %6920 = vmatpush1.bf16.msra.mxu0 0
    %6921 = vmatprep.subr.bf16.mxu0 0
    %6922 = vmatpush1.bf16.msra.mxu0 0
    %6923 = vmatprep.subr.bf16.mxu0 0
    %6924 = vmatpush1.bf16.msra.mxu0 0
    %6925 = vmatprep.mubr.bf16.mxu0 0
    %6926 = vmatmul.mubr.bf16.gmra.mrb[0].mxu0 %v6657
    %v6927 = vpop.f32.mrb[0].mxu0
    %v6928 = vadd.f32 0.0, %v6927
    %v6929 = vpop.f32.mrb[0].mxu0
    %v6930 = vadd.f32 0.0, %v6929
    %v6931 = vpop.f32.mrb[0].mxu0
    %v6932 = vadd.f32 0.0, %v6931
    %v6933 = vpop.f32.mrb[0].mxu0
    %v6934 = vadd.f32 0.0, %v6933
    %6935 = vdwg.mxu0
    %v6936 = vadd.f32 %v6649, %v6885
    %v6937 = vadd.f32 %v6650, %v6887
    %v6938 = vadd.f32 %v6651, %v6928
    %v6939 = vadd.f32 %v6652, %v6930
    %v6940 = vadd.f32 %v6653, %v6889
    %v6941 = vadd.f32 %v6654, %v6891
    %v6942 = vadd.f32 %v6655, %v6932
    %v6943 = vadd.f32 %v6656, %v6934
    %v6944 = vxor.u32 %v6936, 2147483648
    %v6945 = vxor.u32 %v6940, 2147483648
    %v6946 = vmul.f32 %v6944, 1.442695
    %v6947 = vpow.pop %v6946
    %v6948 = vmul.f32 %v6945, 1.442695
    %v6949 = vpow.pop %v6948
    %v6950 = vadd.f32 %v6947, 1.0
    %v6951 = vadd.f32 %v6949, 1.0
    %v6952 = vrcp.pop %v6950
    %v6953 = vmul.f32 1.0, %v6952
    %v6954 = vrcp.pop %v6951
    %v6955 = vmul.f32 1.0, %v6954
    %v6956 = vxor.u32 %v6937, 2147483648
    %v6957 = vxor.u32 %v6941, 2147483648
    %v6958 = vmul.f32 %v6956, 1.442695
    %v6959 = vpow.pop %v6958
    %v6960 = vmul.f32 %v6957, 1.442695
    %v6961 = vpow.pop %v6960
    %v6962 = vadd.f32 %v6959, 1.0
    %v6963 = vadd.f32 %v6961, 1.0
    %v6964 = vrcp.pop %v6962
    %v6965 = vmul.f32 1.0, %v6964
    %v6966 = vrcp.pop %v6963
    %v6967 = vmul.f32 1.0, %v6966
    %v6968 = vxor.u32 %v6938, 2147483648
    %v6969 = vxor.u32 %v6942, 2147483648
    %v6970 = vmul.f32 %v6968, 1.442695
    %v6971 = vpow.pop %v6970
    %v6972 = vmul.f32 %v6969, 1.442695
    %v6973 = vpow.pop %v6972
    %v6974 = vadd.f32 %v6971, 1.0
    %v6975 = vadd.f32 %v6973, 1.0
    %v6976 = vrcp.pop %v6974
    %v6977 = vmul.f32 1.0, %v6976
    %v6978 = vrcp.pop %v6975
    %v6979 = vmul.f32 1.0, %v6978
    %v6980 = vtanh.pop %v6939
    %v6981 = vtanh.pop %v6943
    %v6982 = vmul.f32 %v6953, %v6639
    %v6983 = vmul.f32 %v6955, %v6640
    %v6984 = vmul.f32 %v6965, %v6980
    %v6985 = vmul.f32 %v6967, %v6981
    %v6986 = vadd.f32 %v6982, %v6984
    %v6987 = vadd.f32 %v6983, %v6985
    %v6988 = vtanh.pop %v6986
    %v6989 = vtanh.pop %v6987
    %v6990 = vmul.f32 %v6977, %v6988
    %v6991 = vmul.f32 %v6979, %v6989
    %s6992 = scalar_lea.vmem [#allocation9], 304
    %6993 = vst [vmem:[%s6992] sm:$0xff] %v6990
    %6994 = vst [vmem:[%s6992 + $0x8] sm:$0xff] %v6991
    %s6995 = scalar_lea.vmem [#allocation4], 1280
    %v6996 = vld [vmem:[%s6995] sm:$0xff]
    %v6997 = vld [vmem:[%s6995 + $0x8] sm:$0xff]
    %v6998 = vld [vmem:[%s6995 + $0x10] sm:$0xff]
    %v6999 = vld [vmem:[%s6995 + $0x18] sm:$0xff]
    %v7000 = vld [vmem:[%s6995 + $0x20] sm:$0xff]
    %v7001 = vld [vmem:[%s6995 + $0x28] sm:$0xff]
    %v7002 = vld [vmem:[%s6995 + $0x30] sm:$0xff]
    %v7003 = vld [vmem:[%s6995 + $0x38] sm:$0xff]
    %v7004 = vpack.c.bf16 %v6991, %v6990
    %v7005 = vld [vmem:[#allocation7] sm:$0xff]
    %v7006 = vld [vmem:[#allocation7 + $0x8] sm:$0xff]
    %v7007 = vld [vmem:[#allocation7 + $0x10] sm:$0xff]
    %v7008 = vld [vmem:[#allocation7 + $0x18] sm:$0xff]
    %v7009 = vld [vmem:[#allocation7 + $0x20] sm:$0xff]
    %v7010 = vld [vmem:[#allocation7 + $0x28] sm:$0xff]
    %v7011 = vld [vmem:[#allocation7 + $0x30] sm:$0xff]
    %v7012 = vld [vmem:[#allocation7 + $0x38] sm:$0xff]
    %v7013 = vld [vmem:[#allocation7 + $0x40] sm:$0xff]
    %v7014 = vld [vmem:[#allocation7 + $0x48] sm:$0xff]
    %v7015 = vld [vmem:[#allocation7 + $0x50] sm:$0xff]
    %v7016 = vld [vmem:[#allocation7 + $0x58] sm:$0xff]
    %v7017 = vld [vmem:[#allocation7 + $0x60] sm:$0xff]
    %v7018 = vld [vmem:[#allocation7 + $0x68] sm:$0xff]
    %v7019 = vld [vmem:[#allocation7 + $0x70] sm:$0xff]
    %v7020 = vld [vmem:[#allocation7 + $0x78] sm:$0xff]
    %v7021 = vld [vmem:[#allocation7 + $0x80] sm:$0xff]
    %v7022 = vld [vmem:[#allocation7 + $0x88] sm:$0xff]
    %v7023 = vld [vmem:[#allocation7 + $0x90] sm:$0xff]
    %v7024 = vld [vmem:[#allocation7 + $0x98] sm:$0xff]
    %v7025 = vld [vmem:[#allocation7 + $0xa0] sm:$0xff]
    %v7026 = vld [vmem:[#allocation7 + $0xa8] sm:$0xff]
    %v7027 = vld [vmem:[#allocation7 + $0xb0] sm:$0xff]
    %v7028 = vld [vmem:[#allocation7 + $0xb8] sm:$0xff]
    %v7029 = vld [vmem:[#allocation7 + $0xc0] sm:$0xff]
    %v7030 = vld [vmem:[#allocation7 + $0xc8] sm:$0xff]
    %v7031 = vld [vmem:[#allocation7 + $0xd0] sm:$0xff]
    %v7032 = vld [vmem:[#allocation7 + $0xd8] sm:$0xff]
    %v7033 = vld [vmem:[#allocation7 + $0xe0] sm:$0xff]
    %v7034 = vld [vmem:[#allocation7 + $0xe8] sm:$0xff]
    %v7035 = vld [vmem:[#allocation7 + $0xf0] sm:$0xff]
    %v7036 = vld [vmem:[#allocation7 + $0xf8] sm:$0xff]
    %v7069 = vunpack.c.l.b16 %v7005
    %v7070 = vunpack.c.h.b16 %v7005
    %v7071 = vunpack.c.l.b16 %v7006
    %v7072 = vunpack.c.h.b16 %v7006
    %v7073 = vunpack.c.l.b16 %v7007
    %v7074 = vunpack.c.h.b16 %v7007
    %v7075 = vunpack.c.l.b16 %v7008
    %v7076 = vunpack.c.h.b16 %v7008
    %v7077 = vunpack.c.l.b16 %v7009
    %v7078 = vunpack.c.h.b16 %v7009
    %v7079 = vunpack.c.l.b16 %v7010
    %v7080 = vunpack.c.h.b16 %v7010
    %v7081 = vunpack.c.l.b16 %v7011
    %v7082 = vunpack.c.h.b16 %v7011
    %v7083 = vunpack.c.l.b16 %v7012
    %v7084 = vunpack.c.h.b16 %v7012
    %v7085 = vunpack.c.l.b16 %v7013
    %v7086 = vunpack.c.h.b16 %v7013
    %v7087 = vunpack.c.l.b16 %v7014
    %v7088 = vunpack.c.h.b16 %v7014
    %v7089 = vunpack.c.l.b16 %v7015
    %v7090 = vunpack.c.h.b16 %v7015
    %v7091 = vunpack.c.l.b16 %v7016
    %v7092 = vunpack.c.h.b16 %v7016
    %v7093 = vunpack.c.l.b16 %v7017
    %v7094 = vunpack.c.h.b16 %v7017
    %v7095 = vunpack.c.l.b16 %v7018
    %v7096 = vunpack.c.h.b16 %v7018
    %v7097 = vunpack.c.l.b16 %v7019
    %v7098 = vunpack.c.h.b16 %v7019
    %v7099 = vunpack.c.l.b16 %v7020
    %v7100 = vunpack.c.h.b16 %v7020
    %v7101 = vunpack.c.l.b16 %v7021
    %v7102 = vunpack.c.h.b16 %v7021
    %v7103 = vunpack.c.l.b16 %v7022
    %v7104 = vunpack.c.h.b16 %v7022
    %v7105 = vunpack.c.l.b16 %v7023
    %v7106 = vunpack.c.h.b16 %v7023
    %v7107 = vunpack.c.l.b16 %v7024
    %v7108 = vunpack.c.h.b16 %v7024
    %v7109 = vunpack.c.l.b16 %v7025
    %v7110 = vunpack.c.h.b16 %v7025
    %v7111 = vunpack.c.l.b16 %v7026
    %v7112 = vunpack.c.h.b16 %v7026
    %v7113 = vunpack.c.l.b16 %v7027
    %v7114 = vunpack.c.h.b16 %v7027
    %v7115 = vunpack.c.l.b16 %v7028
    %v7116 = vunpack.c.h.b16 %v7028
    %v7117 = vunpack.c.l.b16 %v7029
    %v7118 = vunpack.c.h.b16 %v7029
    %v7119 = vunpack.c.l.b16 %v7030
    %v7120 = vunpack.c.h.b16 %v7030
    %v7121 = vunpack.c.l.b16 %v7031
    %v7122 = vunpack.c.h.b16 %v7031
    %v7123 = vunpack.c.l.b16 %v7032
    %v7124 = vunpack.c.h.b16 %v7032
    %v7125 = vunpack.c.l.b16 %v7033
    %v7126 = vunpack.c.h.b16 %v7033
    %v7127 = vunpack.c.l.b16 %v7034
    %v7128 = vunpack.c.h.b16 %v7034
    %v7129 = vunpack.c.l.b16 %v7035
    %v7130 = vunpack.c.h.b16 %v7035
    %v7131 = vunpack.c.l.b16 %v7036
    %v7132 = vunpack.c.h.b16 %v7036
    %v7133 = vpack.c.b16 %v7073, %v7069
    %v7134 = vpack.c.b16 %v7074, %v7070
    %v7135 = vpack.c.b16 %v7075, %v7071
    %v7136 = vpack.c.b16 %v7076, %v7072
    %v7137 = vpack.c.b16 %v7081, %v7077
    %v7138 = vpack.c.b16 %v7082, %v7078
    %v7139 = vpack.c.b16 %v7083, %v7079
    %v7140 = vpack.c.b16 %v7084, %v7080
    %v7141 = vpack.c.b16 %v7089, %v7085
    %v7142 = vpack.c.b16 %v7090, %v7086
    %v7143 = vpack.c.b16 %v7091, %v7087
    %v7144 = vpack.c.b16 %v7092, %v7088
    %v7145 = vpack.c.b16 %v7097, %v7093
    %v7146 = vpack.c.b16 %v7098, %v7094
    %v7147 = vpack.c.b16 %v7099, %v7095
    %v7148 = vpack.c.b16 %v7100, %v7096
    %v7149 = vpack.c.b16 %v7105, %v7101
    %v7150 = vpack.c.b16 %v7106, %v7102
    %v7151 = vpack.c.b16 %v7107, %v7103
    %v7152 = vpack.c.b16 %v7108, %v7104
    %v7153 = vpack.c.b16 %v7113, %v7109
    %v7154 = vpack.c.b16 %v7114, %v7110
    %v7155 = vpack.c.b16 %v7115, %v7111
    %v7156 = vpack.c.b16 %v7116, %v7112
    %v7157 = vpack.c.b16 %v7121, %v7117
    %v7158 = vpack.c.b16 %v7122, %v7118
    %v7159 = vpack.c.b16 %v7123, %v7119
    %v7160 = vpack.c.b16 %v7124, %v7120
    %v7161 = vpack.c.b16 %v7129, %v7125
    %v7162 = vpack.c.b16 %v7130, %v7126
    %v7163 = vpack.c.b16 %v7131, %v7127
    %v7164 = vpack.c.b16 %v7132, %v7128
    %7197 = vmatprep.subr.bf16.mxu0 %v7134
    %7198 = vmatpush1.bf16.msra.mxu0 %v7133
    %7199 = vmatprep.subr.bf16.mxu0 %v7138
    %7200 = vmatpush1.bf16.msra.mxu0 %v7137
    %7201 = vmatprep.subr.bf16.mxu0 %v7142
    %7202 = vmatpush1.bf16.msra.mxu0 %v7141
    %7203 = vmatprep.subr.bf16.mxu0 %v7146
    %7204 = vmatpush1.bf16.msra.mxu0 %v7145
    %7205 = vmatprep.subr.bf16.mxu0 %v7150
    %7206 = vmatpush1.bf16.msra.mxu0 %v7149
    %7207 = vmatprep.subr.bf16.mxu0 %v7154
    %7208 = vmatpush1.bf16.msra.mxu0 %v7153
    %7209 = vmatprep.subr.bf16.mxu0 %v7158
    %7210 = vmatpush1.bf16.msra.mxu0 %v7157
    %7211 = vmatprep.subr.bf16.mxu0 %v7162
    %7212 = vmatpush1.bf16.msra.mxu0 %v7161
    %7213 = vmatprep.subr.bf16.mxu0 0
    %7214 = vmatpush1.bf16.msra.mxu0 0
    %7215 = vmatprep.subr.bf16.mxu0 0
    %7216 = vmatpush1.bf16.msra.mxu0 0
    %7217 = vmatprep.subr.bf16.mxu0 0
    %7218 = vmatpush1.bf16.msra.mxu0 0
    %7219 = vmatprep.subr.bf16.mxu0 0
    %7220 = vmatpush1.bf16.msra.mxu0 0
    %7221 = vmatprep.subr.bf16.mxu0 0
    %7222 = vmatpush1.bf16.msra.mxu0 0
    %7223 = vmatprep.subr.bf16.mxu0 0
    %7224 = vmatpush1.bf16.msra.mxu0 0
    %7225 = vmatprep.subr.bf16.mxu0 0
    %7226 = vmatpush1.bf16.msra.mxu0 0
    %7227 = vmatprep.subr.bf16.mxu0 0
    %7228 = vmatpush1.bf16.msra.mxu0 0
    %7229 = vmatprep.mubr.bf16.mxu0 0
    %7230 = vmatmul.mubr.bf16.gmra.mrb[0].mxu0 %v7004
    %v7231 = vpop.f32.mrb[0].mxu0
    %v7232 = vadd.f32 0.0, %v7231
    %v7233 = vpop.f32.mrb[0].mxu0
    %v7234 = vadd.f32 0.0, %v7233
    %v7235 = vpop.f32.mrb[0].mxu0
    %v7236 = vadd.f32 0.0, %v7235
    %v7237 = vpop.f32.mrb[0].mxu0
    %v7238 = vadd.f32 0.0, %v7237
    %7239 = vdwg.mxu0
    %7240 = vmatprep.subr.bf16.mxu0 %v7136
    %7241 = vmatpush1.bf16.msra.mxu0 %v7135
    %7242 = vmatprep.subr.bf16.mxu0 %v7140
    %7243 = vmatpush1.bf16.msra.mxu0 %v7139
    %7244 = vmatprep.subr.bf16.mxu0 %v7144
    %7245 = vmatpush1.bf16.msra.mxu0 %v7143
    %7246 = vmatprep.subr.bf16.mxu0 %v7148
    %7247 = vmatpush1.bf16.msra.mxu0 %v7147
    %7248 = vmatprep.subr.bf16.mxu0 %v7152
    %7249 = vmatpush1.bf16.msra.mxu0 %v7151
    %7250 = vmatprep.subr.bf16.mxu0 %v7156
    %7251 = vmatpush1.bf16.msra.mxu0 %v7155
    %7252 = vmatprep.subr.bf16.mxu0 %v7160
    %7253 = vmatpush1.bf16.msra.mxu0 %v7159
    %7254 = vmatprep.subr.bf16.mxu0 %v7164
    %7255 = vmatpush1.bf16.msra.mxu0 %v7163
    %7256 = vmatprep.subr.bf16.mxu0 0
    %7257 = vmatpush1.bf16.msra.mxu0 0
    %7258 = vmatprep.subr.bf16.mxu0 0
    %7259 = vmatpush1.bf16.msra.mxu0 0
    %7260 = vmatprep.subr.bf16.mxu0 0
    %7261 = vmatpush1.bf16.msra.mxu0 0
    %7262 = vmatprep.subr.bf16.mxu0 0
    %7263 = vmatpush1.bf16.msra.mxu0 0
    %7264 = vmatprep.subr.bf16.mxu0 0
    %7265 = vmatpush1.bf16.msra.mxu0 0
    %7266 = vmatprep.subr.bf16.mxu0 0
    %7267 = vmatpush1.bf16.msra.mxu0 0
    %7268 = vmatprep.subr.bf16.mxu0 0
    %7269 = vmatpush1.bf16.msra.mxu0 0
    %7270 = vmatprep.subr.bf16.mxu0 0
    %7271 = vmatpush1.bf16.msra.mxu0 0
    %7272 = vmatprep.mubr.bf16.mxu0 0
    %7273 = vmatmul.mubr.bf16.gmra.mrb[0].mxu0 %v7004
    %v7274 = vpop.f32.mrb[0].mxu0
    %v7275 = vadd.f32 0.0, %v7274
    %v7276 = vpop.f32.mrb[0].mxu0
    %v7277 = vadd.f32 0.0, %v7276
    %v7278 = vpop.f32.mrb[0].mxu0
    %v7279 = vadd.f32 0.0, %v7278
    %v7280 = vpop.f32.mrb[0].mxu0
    %v7281 = vadd.f32 0.0, %v7280
    %7282 = vdwg.mxu0
    %v7283 = vadd.f32 %v6996, %v7232
    %v7284 = vadd.f32 %v6997, %v7234
    %v7285 = vadd.f32 %v6998, %v7275
    %v7286 = vadd.f32 %v6999, %v7277
    %v7287 = vadd.f32 %v7000, %v7236
    %v7288 = vadd.f32 %v7001, %v7238
    %v7289 = vadd.f32 %v7002, %v7279
    %v7290 = vadd.f32 %v7003, %v7281
    %v7291 = vxor.u32 %v7283, 2147483648
    %v7292 = vxor.u32 %v7287, 2147483648
    %v7293 = vmul.f32 %v7291, 1.442695
    %v7294 = vpow.pop %v7293
    %v7295 = vmul.f32 %v7292, 1.442695
    %v7296 = vpow.pop %v7295
    %v7297 = vadd.f32 %v7294, 1.0
    %v7298 = vadd.f32 %v7296, 1.0
    %v7299 = vrcp.pop %v7297
    %v7300 = vmul.f32 1.0, %v7299
    %v7301 = vrcp.pop %v7298
    %v7302 = vmul.f32 1.0, %v7301
    %v7303 = vxor.u32 %v7284, 2147483648
    %v7304 = vxor.u32 %v7288, 2147483648
    %v7305 = vmul.f32 %v7303, 1.442695
    %v7306 = vpow.pop %v7305
    %v7307 = vmul.f32 %v7304, 1.442695
    %v7308 = vpow.pop %v7307
    %v7309 = vadd.f32 %v7306, 1.0
    %v7310 = vadd.f32 %v7308, 1.0
    %v7311 = vrcp.pop %v7309
    %v7312 = vmul.f32 1.0, %v7311
    %v7313 = vrcp.pop %v7310
    %v7314 = vmul.f32 1.0, %v7313
    %v7315 = vxor.u32 %v7285, 2147483648
    %v7316 = vxor.u32 %v7289, 2147483648
    %v7317 = vmul.f32 %v7315, 1.442695
    %v7318 = vpow.pop %v7317
    %v7319 = vmul.f32 %v7316, 1.442695
    %v7320 = vpow.pop %v7319
    %v7321 = vadd.f32 %v7318, 1.0
    %v7322 = vadd.f32 %v7320, 1.0
    %v7323 = vrcp.pop %v7321
    %v7324 = vmul.f32 1.0, %v7323
    %v7325 = vrcp.pop %v7322
    %v7326 = vmul.f32 1.0, %v7325
    %v7327 = vtanh.pop %v7286
    %v7328 = vtanh.pop %v7290
    %v7329 = vmul.f32 %v7300, %v6986
    %v7330 = vmul.f32 %v7302, %v6987
    %v7331 = vmul.f32 %v7312, %v7327
    %v7332 = vmul.f32 %v7314, %v7328
    %v7333 = vadd.f32 %v7329, %v7331
    %v7334 = vadd.f32 %v7330, %v7332
    %v7335 = vtanh.pop %v7333
    %v7336 = vtanh.pop %v7334
    %v7337 = vmul.f32 %v7324, %v7335
    %v7338 = vmul.f32 %v7326, %v7336
    %s7339 = scalar_lea.vmem [#allocation9], 320
    %7340 = vst [vmem:[%s7339] sm:$0xff] %v7337
    %7341 = vst [vmem:[%s7339 + $0x8] sm:$0xff] %v7338
    %s7342 = scalar_lea.vmem [#allocation4], 1344
    %v7343 = vld [vmem:[%s7342] sm:$0xff]
    %v7344 = vld [vmem:[%s7342 + $0x8] sm:$0xff]
    %v7345 = vld [vmem:[%s7342 + $0x10] sm:$0xff]
    %v7346 = vld [vmem:[%s7342 + $0x18] sm:$0xff]
    %v7347 = vld [vmem:[%s7342 + $0x20] sm:$0xff]
    %v7348 = vld [vmem:[%s7342 + $0x28] sm:$0xff]
    %v7349 = vld [vmem:[%s7342 + $0x30] sm:$0xff]
    %v7350 = vld [vmem:[%s7342 + $0x38] sm:$0xff]
    %v7351 = vpack.c.bf16 %v7338, %v7337
    %v7352 = vld [vmem:[#allocation7] sm:$0xff]
    %v7353 = vld [vmem:[#allocation7 + $0x8] sm:$0xff]
    %v7354 = vld [vmem:[#allocation7 + $0x10] sm:$0xff]
    %v7355 = vld [vmem:[#allocation7 + $0x18] sm:$0xff]
    %v7356 = vld [vmem:[#allocation7 + $0x20] sm:$0xff]
    %v7357 = vld [vmem:[#allocation7 + $0x28] sm:$0xff]
    %v7358 = vld [vmem:[#allocation7 + $0x30] sm:$0xff]
    %v7359 = vld [vmem:[#allocation7 + $0x38] sm:$0xff]
    %v7360 = vld [vmem:[#allocation7 + $0x40] sm:$0xff]
    %v7361 = vld [vmem:[#allocation7 + $0x48] sm:$0xff]
    %v7362 = vld [vmem:[#allocation7 + $0x50] sm:$0xff]
    %v7363 = vld [vmem:[#allocation7 + $0x58] sm:$0xff]
    %v7364 = vld [vmem:[#allocation7 + $0x60] sm:$0xff]
    %v7365 = vld [vmem:[#allocation7 + $0x68] sm:$0xff]
    %v7366 = vld [vmem:[#allocation7 + $0x70] sm:$0xff]
    %v7367 = vld [vmem:[#allocation7 + $0x78] sm:$0xff]
    %v7368 = vld [vmem:[#allocation7 + $0x80] sm:$0xff]
    %v7369 = vld [vmem:[#allocation7 + $0x88] sm:$0xff]
    %v7370 = vld [vmem:[#allocation7 + $0x90] sm:$0xff]
    %v7371 = vld [vmem:[#allocation7 + $0x98] sm:$0xff]
    %v7372 = vld [vmem:[#allocation7 + $0xa0] sm:$0xff]
    %v7373 = vld [vmem:[#allocation7 + $0xa8] sm:$0xff]
    %v7374 = vld [vmem:[#allocation7 + $0xb0] sm:$0xff]
    %v7375 = vld [vmem:[#allocation7 + $0xb8] sm:$0xff]
    %v7376 = vld [vmem:[#allocation7 + $0xc0] sm:$0xff]
    %v7377 = vld [vmem:[#allocation7 + $0xc8] sm:$0xff]
    %v7378 = vld [vmem:[#allocation7 + $0xd0] sm:$0xff]
    %v7379 = vld [vmem:[#allocation7 + $0xd8] sm:$0xff]
    %v7380 = vld [vmem:[#allocation7 + $0xe0] sm:$0xff]
    %v7381 = vld [vmem:[#allocation7 + $0xe8] sm:$0xff]
    %v7382 = vld [vmem:[#allocation7 + $0xf0] sm:$0xff]
    %v7383 = vld [vmem:[#allocation7 + $0xf8] sm:$0xff]
    %v7416 = vunpack.c.l.b16 %v7352
    %v7417 = vunpack.c.h.b16 %v7352
    %v7418 = vunpack.c.l.b16 %v7353
    %v7419 = vunpack.c.h.b16 %v7353
    %v7420 = vunpack.c.l.b16 %v7354
    %v7421 = vunpack.c.h.b16 %v7354
    %v7422 = vunpack.c.l.b16 %v7355
    %v7423 = vunpack.c.h.b16 %v7355
    %v7424 = vunpack.c.l.b16 %v7356
    %v7425 = vunpack.c.h.b16 %v7356
    %v7426 = vunpack.c.l.b16 %v7357
    %v7427 = vunpack.c.h.b16 %v7357
    %v7428 = vunpack.c.l.b16 %v7358
    %v7429 = vunpack.c.h.b16 %v7358
    %v7430 = vunpack.c.l.b16 %v7359
    %v7431 = vunpack.c.h.b16 %v7359
    %v7432 = vunpack.c.l.b16 %v7360
    %v7433 = vunpack.c.h.b16 %v7360
    %v7434 = vunpack.c.l.b16 %v7361
    %v7435 = vunpack.c.h.b16 %v7361
    %v7436 = vunpack.c.l.b16 %v7362
    %v7437 = vunpack.c.h.b16 %v7362
    %v7438 = vunpack.c.l.b16 %v7363
    %v7439 = vunpack.c.h.b16 %v7363
    %v7440 = vunpack.c.l.b16 %v7364
    %v7441 = vunpack.c.h.b16 %v7364
    %v7442 = vunpack.c.l.b16 %v7365
    %v7443 = vunpack.c.h.b16 %v7365
    %v7444 = vunpack.c.l.b16 %v7366
    %v7445 = vunpack.c.h.b16 %v7366
    %v7446 = vunpack.c.l.b16 %v7367
    %v7447 = vunpack.c.h.b16 %v7367
    %v7448 = vunpack.c.l.b16 %v7368
    %v7449 = vunpack.c.h.b16 %v7368
    %v7450 = vunpack.c.l.b16 %v7369
    %v7451 = vunpack.c.h.b16 %v7369
    %v7452 = vunpack.c.l.b16 %v7370
    %v7453 = vunpack.c.h.b16 %v7370
    %v7454 = vunpack.c.l.b16 %v7371
    %v7455 = vunpack.c.h.b16 %v7371
    %v7456 = vunpack.c.l.b16 %v7372
    %v7457 = vunpack.c.h.b16 %v7372
    %v7458 = vunpack.c.l.b16 %v7373
    %v7459 = vunpack.c.h.b16 %v7373
    %v7460 = vunpack.c.l.b16 %v7374
    %v7461 = vunpack.c.h.b16 %v7374
    %v7462 = vunpack.c.l.b16 %v7375
    %v7463 = vunpack.c.h.b16 %v7375
    %v7464 = vunpack.c.l.b16 %v7376
    %v7465 = vunpack.c.h.b16 %v7376
    %v7466 = vunpack.c.l.b16 %v7377
    %v7467 = vunpack.c.h.b16 %v7377
    %v7468 = vunpack.c.l.b16 %v7378
    %v7469 = vunpack.c.h.b16 %v7378
    %v7470 = vunpack.c.l.b16 %v7379
    %v7471 = vunpack.c.h.b16 %v7379
    %v7472 = vunpack.c.l.b16 %v7380
    %v7473 = vunpack.c.h.b16 %v7380
    %v7474 = vunpack.c.l.b16 %v7381
    %v7475 = vunpack.c.h.b16 %v7381
    %v7476 = vunpack.c.l.b16 %v7382
    %v7477 = vunpack.c.h.b16 %v7382
    %v7478 = vunpack.c.l.b16 %v7383
    %v7479 = vunpack.c.h.b16 %v7383
    %v7480 = vpack.c.b16 %v7420, %v7416
    %v7481 = vpack.c.b16 %v7421, %v7417
    %v7482 = vpack.c.b16 %v7422, %v7418
    %v7483 = vpack.c.b16 %v7423, %v7419
    %v7484 = vpack.c.b16 %v7428, %v7424
    %v7485 = vpack.c.b16 %v7429, %v7425
    %v7486 = vpack.c.b16 %v7430, %v7426
    %v7487 = vpack.c.b16 %v7431, %v7427
    %v7488 = vpack.c.b16 %v7436, %v7432
    %v7489 = vpack.c.b16 %v7437, %v7433
    %v7490 = vpack.c.b16 %v7438, %v7434
    %v7491 = vpack.c.b16 %v7439, %v7435
    %v7492 = vpack.c.b16 %v7444, %v7440
    %v7493 = vpack.c.b16 %v7445, %v7441
    %v7494 = vpack.c.b16 %v7446, %v7442
    %v7495 = vpack.c.b16 %v7447, %v7443
    %v7496 = vpack.c.b16 %v7452, %v7448
    %v7497 = vpack.c.b16 %v7453, %v7449
    %v7498 = vpack.c.b16 %v7454, %v7450
    %v7499 = vpack.c.b16 %v7455, %v7451
    %v7500 = vpack.c.b16 %v7460, %v7456
    %v7501 = vpack.c.b16 %v7461, %v7457
    %v7502 = vpack.c.b16 %v7462, %v7458
    %v7503 = vpack.c.b16 %v7463, %v7459
    %v7504 = vpack.c.b16 %v7468, %v7464
    %v7505 = vpack.c.b16 %v7469, %v7465
    %v7506 = vpack.c.b16 %v7470, %v7466
    %v7507 = vpack.c.b16 %v7471, %v7467
    %v7508 = vpack.c.b16 %v7476, %v7472
    %v7509 = vpack.c.b16 %v7477, %v7473
    %v7510 = vpack.c.b16 %v7478, %v7474
    %v7511 = vpack.c.b16 %v7479, %v7475
    %7544 = vmatprep.subr.bf16.mxu0 %v7481
    %7545 = vmatpush1.bf16.msra.mxu0 %v7480
    %7546 = vmatprep.subr.bf16.mxu0 %v7485
    %7547 = vmatpush1.bf16.msra.mxu0 %v7484
    %7548 = vmatprep.subr.bf16.mxu0 %v7489
    %7549 = vmatpush1.bf16.msra.mxu0 %v7488
    %7550 = vmatprep.subr.bf16.mxu0 %v7493
    %7551 = vmatpush1.bf16.msra.mxu0 %v7492
    %7552 = vmatprep.subr.bf16.mxu0 %v7497
    %7553 = vmatpush1.bf16.msra.mxu0 %v7496
    %7554 = vmatprep.subr.bf16.mxu0 %v7501
    %7555 = vmatpush1.bf16.msra.mxu0 %v7500
    %7556 = vmatprep.subr.bf16.mxu0 %v7505
    %7557 = vmatpush1.bf16.msra.mxu0 %v7504
    %7558 = vmatprep.subr.bf16.mxu0 %v7509
    %7559 = vmatpush1.bf16.msra.mxu0 %v7508
    %7560 = vmatprep.subr.bf16.mxu0 0
    %7561 = vmatpush1.bf16.msra.mxu0 0
    %7562 = vmatprep.subr.bf16.mxu0 0
    %7563 = vmatpush1.bf16.msra.mxu0 0
    %7564 = vmatprep.subr.bf16.mxu0 0
    %7565 = vmatpush1.bf16.msra.mxu0 0
    %7566 = vmatprep.subr.bf16.mxu0 0
    %7567 = vmatpush1.bf16.msra.mxu0 0
    %7568 = vmatprep.subr.bf16.mxu0 0
    %7569 = vmatpush1.bf16.msra.mxu0 0
    %7570 = vmatprep.subr.bf16.mxu0 0
    %7571 = vmatpush1.bf16.msra.mxu0 0
    %7572 = vmatprep.subr.bf16.mxu0 0
    %7573 = vmatpush1.bf16.msra.mxu0 0
    %7574 = vmatprep.subr.bf16.mxu0 0
    %7575 = vmatpush1.bf16.msra.mxu0 0
    %7576 = vmatprep.mubr.bf16.mxu0 0
    %7577 = vmatmul.mubr.bf16.gmra.mrb[0].mxu0 %v7351
    %v7578 = vpop.f32.mrb[0].mxu0
    %v7579 = vadd.f32 0.0, %v7578
    %v7580 = vpop.f32.mrb[0].mxu0
    %v7581 = vadd.f32 0.0, %v7580
    %v7582 = vpop.f32.mrb[0].mxu0
    %v7583 = vadd.f32 0.0, %v7582
    %v7584 = vpop.f32.mrb[0].mxu0
    %v7585 = vadd.f32 0.0, %v7584
    %7586 = vdwg.mxu0
    %7587 = vmatprep.subr.bf16.mxu0 %v7483
    %7588 = vmatpush1.bf16.msra.mxu0 %v7482
    %7589 = vmatprep.subr.bf16.mxu0 %v7487
    %7590 = vmatpush1.bf16.msra.mxu0 %v7486
    %7591 = vmatprep.subr.bf16.mxu0 %v7491
    %7592 = vmatpush1.bf16.msra.mxu0 %v7490
    %7593 = vmatprep.subr.bf16.mxu0 %v7495
    %7594 = vmatpush1.bf16.msra.mxu0 %v7494
    %7595 = vmatprep.subr.bf16.mxu0 %v7499
    %7596 = vmatpush1.bf16.msra.mxu0 %v7498
    %7597 = vmatprep.subr.bf16.mxu0 %v7503
    %7598 = vmatpush1.bf16.msra.mxu0 %v7502
    %7599 = vmatprep.subr.bf16.mxu0 %v7507
    %7600 = vmatpush1.bf16.msra.mxu0 %v7506
    %7601 = vmatprep.subr.bf16.mxu0 %v7511
    %7602 = vmatpush1.bf16.msra.mxu0 %v7510
    %7603 = vmatprep.subr.bf16.mxu0 0
    %7604 = vmatpush1.bf16.msra.mxu0 0
    %7605 = vmatprep.subr.bf16.mxu0 0
    %7606 = vmatpush1.bf16.msra.mxu0 0
    %7607 = vmatprep.subr.bf16.mxu0 0
    %7608 = vmatpush1.bf16.msra.mxu0 0
    %7609 = vmatprep.subr.bf16.mxu0 0
    %7610 = vmatpush1.bf16.msra.mxu0 0
    %7611 = vmatprep.subr.bf16.mxu0 0
    %7612 = vmatpush1.bf16.msra.mxu0 0
    %7613 = vmatprep.subr.bf16.mxu0 0
    %7614 = vmatpush1.bf16.msra.mxu0 0
    %7615 = vmatprep.subr.bf16.mxu0 0
    %7616 = vmatpush1.bf16.msra.mxu0 0
    %7617 = vmatprep.subr.bf16.mxu0 0
    %7618 = vmatpush1.bf16.msra.mxu0 0
    %7619 = vmatprep.mubr.bf16.mxu0 0
    %7620 = vmatmul.mubr.bf16.gmra.mrb[0].mxu0 %v7351
    %v7621 = vpop.f32.mrb[0].mxu0
    %v7622 = vadd.f32 0.0, %v7621
    %v7623 = vpop.f32.mrb[0].mxu0
    %v7624 = vadd.f32 0.0, %v7623
    %v7625 = vpop.f32.mrb[0].mxu0
    %v7626 = vadd.f32 0.0, %v7625
    %v7627 = vpop.f32.mrb[0].mxu0
    %v7628 = vadd.f32 0.0, %v7627
    %7629 = vdwg.mxu0
    %v7630 = vadd.f32 %v7343, %v7579
    %v7631 = vadd.f32 %v7344, %v7581
    %v7632 = vadd.f32 %v7345, %v7622
    %v7633 = vadd.f32 %v7346, %v7624
    %v7634 = vadd.f32 %v7347, %v7583
    %v7635 = vadd.f32 %v7348, %v7585
    %v7636 = vadd.f32 %v7349, %v7626
    %v7637 = vadd.f32 %v7350, %v7628
    %v7638 = vxor.u32 %v7630, 2147483648
    %v7639 = vxor.u32 %v7634, 2147483648
    %v7640 = vmul.f32 %v7638, 1.442695
    %v7641 = vpow.pop %v7640
    %v7642 = vmul.f32 %v7639, 1.442695
    %v7643 = vpow.pop %v7642
    %v7644 = vadd.f32 %v7641, 1.0
    %v7645 = vadd.f32 %v7643, 1.0
    %v7646 = vrcp.pop %v7644
    %v7647 = vmul.f32 1.0, %v7646
    %v7648 = vrcp.pop %v7645
    %v7649 = vmul.f32 1.0, %v7648
    %v7650 = vxor.u32 %v7631, 2147483648
    %v7651 = vxor.u32 %v7635, 2147483648
    %v7652 = vmul.f32 %v7650, 1.442695
    %v7653 = vpow.pop %v7652
    %v7654 = vmul.f32 %v7651, 1.442695
    %v7655 = vpow.pop %v7654
    %v7656 = vadd.f32 %v7653, 1.0
    %v7657 = vadd.f32 %v7655, 1.0
    %v7658 = vrcp.pop %v7656
    %v7659 = vmul.f32 1.0, %v7658
    %v7660 = vrcp.pop %v7657
    %v7661 = vmul.f32 1.0, %v7660
    %v7662 = vxor.u32 %v7632, 2147483648
    %v7663 = vxor.u32 %v7636, 2147483648
    %v7664 = vmul.f32 %v7662, 1.442695
    %v7665 = vpow.pop %v7664
    %v7666 = vmul.f32 %v7663, 1.442695
    %v7667 = vpow.pop %v7666
    %v7668 = vadd.f32 %v7665, 1.0
    %v7669 = vadd.f32 %v7667, 1.0
    %v7670 = vrcp.pop %v7668
    %v7671 = vmul.f32 1.0, %v7670
    %v7672 = vrcp.pop %v7669
    %v7673 = vmul.f32 1.0, %v7672
    %v7674 = vtanh.pop %v7633
    %v7675 = vtanh.pop %v7637
    %v7676 = vmul.f32 %v7647, %v7333
    %v7677 = vmul.f32 %v7649, %v7334
    %v7678 = vmul.f32 %v7659, %v7674
    %v7679 = vmul.f32 %v7661, %v7675
    %v7680 = vadd.f32 %v7676, %v7678
    %v7681 = vadd.f32 %v7677, %v7679
    %v7682 = vtanh.pop %v7680
    %v7683 = vtanh.pop %v7681
    %v7684 = vmul.f32 %v7671, %v7682
    %v7685 = vmul.f32 %v7673, %v7683
    %s7686 = scalar_lea.vmem [#allocation9], 336
    %7687 = vst [vmem:[%s7686] sm:$0xff] %v7684
    %7688 = vst [vmem:[%s7686 + $0x8] sm:$0xff] %v7685
    %s7689 = scalar_lea.vmem [#allocation4], 1408
    %v7690 = vld [vmem:[%s7689] sm:$0xff]
    %v7691 = vld [vmem:[%s7689 + $0x8] sm:$0xff]
    %v7692 = vld [vmem:[%s7689 + $0x10] sm:$0xff]
    %v7693 = vld [vmem:[%s7689 + $0x18] sm:$0xff]
    %v7694 = vld [vmem:[%s7689 + $0x20] sm:$0xff]
    %v7695 = vld [vmem:[%s7689 + $0x28] sm:$0xff]
    %v7696 = vld [vmem:[%s7689 + $0x30] sm:$0xff]
    %v7697 = vld [vmem:[%s7689 + $0x38] sm:$0xff]
    %v7698 = vpack.c.bf16 %v7685, %v7684
    %v7699 = vld [vmem:[#allocation7] sm:$0xff]
    %v7700 = vld [vmem:[#allocation7 + $0x8] sm:$0xff]
    %v7701 = vld [vmem:[#allocation7 + $0x10] sm:$0xff]
    %v7702 = vld [vmem:[#allocation7 + $0x18] sm:$0xff]
    %v7703 = vld [vmem:[#allocation7 + $0x20] sm:$0xff]
    %v7704 = vld [vmem:[#allocation7 + $0x28] sm:$0xff]
    %v7705 = vld [vmem:[#allocation7 + $0x30] sm:$0xff]
    %v7706 = vld [vmem:[#allocation7 + $0x38] sm:$0xff]
    %v7707 = vld [vmem:[#allocation7 + $0x40] sm:$0xff]
    %v7708 = vld [vmem:[#allocation7 + $0x48] sm:$0xff]
    %v7709 = vld [vmem:[#allocation7 + $0x50] sm:$0xff]
    %v7710 = vld [vmem:[#allocation7 + $0x58] sm:$0xff]
    %v7711 = vld [vmem:[#allocation7 + $0x60] sm:$0xff]
    %v7712 = vld [vmem:[#allocation7 + $0x68] sm:$0xff]
    %v7713 = vld [vmem:[#allocation7 + $0x70] sm:$0xff]
    %v7714 = vld [vmem:[#allocation7 + $0x78] sm:$0xff]
    %v7715 = vld [vmem:[#allocation7 + $0x80] sm:$0xff]
    %v7716 = vld [vmem:[#allocation7 + $0x88] sm:$0xff]
    %v7717 = vld [vmem:[#allocation7 + $0x90] sm:$0xff]
    %v7718 = vld [vmem:[#allocation7 + $0x98] sm:$0xff]
    %v7719 = vld [vmem:[#allocation7 + $0xa0] sm:$0xff]
    %v7720 = vld [vmem:[#allocation7 + $0xa8] sm:$0xff]
    %v7721 = vld [vmem:[#allocation7 + $0xb0] sm:$0xff]
    %v7722 = vld [vmem:[#allocation7 + $0xb8] sm:$0xff]
    %v7723 = vld [vmem:[#allocation7 + $0xc0] sm:$0xff]
    %v7724 = vld [vmem:[#allocation7 + $0xc8] sm:$0xff]
    %v7725 = vld [vmem:[#allocation7 + $0xd0] sm:$0xff]
    %v7726 = vld [vmem:[#allocation7 + $0xd8] sm:$0xff]
    %v7727 = vld [vmem:[#allocation7 + $0xe0] sm:$0xff]
    %v7728 = vld [vmem:[#allocation7 + $0xe8] sm:$0xff]
    %v7729 = vld [vmem:[#allocation7 + $0xf0] sm:$0xff]
    %v7730 = vld [vmem:[#allocation7 + $0xf8] sm:$0xff]
    %v7763 = vunpack.c.l.b16 %v7699
    %v7764 = vunpack.c.h.b16 %v7699
    %v7765 = vunpack.c.l.b16 %v7700
    %v7766 = vunpack.c.h.b16 %v7700
    %v7767 = vunpack.c.l.b16 %v7701
    %v7768 = vunpack.c.h.b16 %v7701
    %v7769 = vunpack.c.l.b16 %v7702
    %v7770 = vunpack.c.h.b16 %v7702
    %v7771 = vunpack.c.l.b16 %v7703
    %v7772 = vunpack.c.h.b16 %v7703
    %v7773 = vunpack.c.l.b16 %v7704
    %v7774 = vunpack.c.h.b16 %v7704
    %v7775 = vunpack.c.l.b16 %v7705
    %v7776 = vunpack.c.h.b16 %v7705
    %v7777 = vunpack.c.l.b16 %v7706
    %v7778 = vunpack.c.h.b16 %v7706
    %v7779 = vunpack.c.l.b16 %v7707
    %v7780 = vunpack.c.h.b16 %v7707
    %v7781 = vunpack.c.l.b16 %v7708
    %v7782 = vunpack.c.h.b16 %v7708
    %v7783 = vunpack.c.l.b16 %v7709
    %v7784 = vunpack.c.h.b16 %v7709
    %v7785 = vunpack.c.l.b16 %v7710
    %v7786 = vunpack.c.h.b16 %v7710
    %v7787 = vunpack.c.l.b16 %v7711
    %v7788 = vunpack.c.h.b16 %v7711
    %v7789 = vunpack.c.l.b16 %v7712
    %v7790 = vunpack.c.h.b16 %v7712
    %v7791 = vunpack.c.l.b16 %v7713
    %v7792 = vunpack.c.h.b16 %v7713
    %v7793 = vunpack.c.l.b16 %v7714
    %v7794 = vunpack.c.h.b16 %v7714
    %v7795 = vunpack.c.l.b16 %v7715
    %v7796 = vunpack.c.h.b16 %v7715
    %v7797 = vunpack.c.l.b16 %v7716
    %v7798 = vunpack.c.h.b16 %v7716
    %v7799 = vunpack.c.l.b16 %v7717
    %v7800 = vunpack.c.h.b16 %v7717
    %v7801 = vunpack.c.l.b16 %v7718
    %v7802 = vunpack.c.h.b16 %v7718
    %v7803 = vunpack.c.l.b16 %v7719
    %v7804 = vunpack.c.h.b16 %v7719
    %v7805 = vunpack.c.l.b16 %v7720
    %v7806 = vunpack.c.h.b16 %v7720
    %v7807 = vunpack.c.l.b16 %v7721
    %v7808 = vunpack.c.h.b16 %v7721
    %v7809 = vunpack.c.l.b16 %v7722
    %v7810 = vunpack.c.h.b16 %v7722
    %v7811 = vunpack.c.l.b16 %v7723
    %v7812 = vunpack.c.h.b16 %v7723
    %v7813 = vunpack.c.l.b16 %v7724
    %v7814 = vunpack.c.h.b16 %v7724
    %v7815 = vunpack.c.l.b16 %v7725
    %v7816 = vunpack.c.h.b16 %v7725
    %v7817 = vunpack.c.l.b16 %v7726
    %v7818 = vunpack.c.h.b16 %v7726
    %v7819 = vunpack.c.l.b16 %v7727
    %v7820 = vunpack.c.h.b16 %v7727
    %v7821 = vunpack.c.l.b16 %v7728
    %v7822 = vunpack.c.h.b16 %v7728
    %v7823 = vunpack.c.l.b16 %v7729
    %v7824 = vunpack.c.h.b16 %v7729
    %v7825 = vunpack.c.l.b16 %v7730
    %v7826 = vunpack.c.h.b16 %v7730
    %v7827 = vpack.c.b16 %v7767, %v7763
    %v7828 = vpack.c.b16 %v7768, %v7764
    %v7829 = vpack.c.b16 %v7769, %v7765
    %v7830 = vpack.c.b16 %v7770, %v7766
    %v7831 = vpack.c.b16 %v7775, %v7771
    %v7832 = vpack.c.b16 %v7776, %v7772
    %v7833 = vpack.c.b16 %v7777, %v7773
    %v7834 = vpack.c.b16 %v7778, %v7774
    %v7835 = vpack.c.b16 %v7783, %v7779
    %v7836 = vpack.c.b16 %v7784, %v7780
    %v7837 = vpack.c.b16 %v7785, %v7781
    %v7838 = vpack.c.b16 %v7786, %v7782
    %v7839 = vpack.c.b16 %v7791, %v7787
    %v7840 = vpack.c.b16 %v7792, %v7788
    %v7841 = vpack.c.b16 %v7793, %v7789
    %v7842 = vpack.c.b16 %v7794, %v7790
    %v7843 = vpack.c.b16 %v7799, %v7795
    %v7844 = vpack.c.b16 %v7800, %v7796
    %v7845 = vpack.c.b16 %v7801, %v7797
    %v7846 = vpack.c.b16 %v7802, %v7798
    %v7847 = vpack.c.b16 %v7807, %v7803
    %v7848 = vpack.c.b16 %v7808, %v7804
    %v7849 = vpack.c.b16 %v7809, %v7805
    %v7850 = vpack.c.b16 %v7810, %v7806
    %v7851 = vpack.c.b16 %v7815, %v7811
    %v7852 = vpack.c.b16 %v7816, %v7812
    %v7853 = vpack.c.b16 %v7817, %v7813
    %v7854 = vpack.c.b16 %v7818, %v7814
    %v7855 = vpack.c.b16 %v7823, %v7819
    %v7856 = vpack.c.b16 %v7824, %v7820
    %v7857 = vpack.c.b16 %v7825, %v7821
    %v7858 = vpack.c.b16 %v7826, %v7822
    %7891 = vmatprep.subr.bf16.mxu0 %v7828
    %7892 = vmatpush1.bf16.msra.mxu0 %v7827
    %7893 = vmatprep.subr.bf16.mxu0 %v7832
    %7894 = vmatpush1.bf16.msra.mxu0 %v7831
    %7895 = vmatprep.subr.bf16.mxu0 %v7836
    %7896 = vmatpush1.bf16.msra.mxu0 %v7835
    %7897 = vmatprep.subr.bf16.mxu0 %v7840
    %7898 = vmatpush1.bf16.msra.mxu0 %v7839
    %7899 = vmatprep.subr.bf16.mxu0 %v7844
    %7900 = vmatpush1.bf16.msra.mxu0 %v7843
    %7901 = vmatprep.subr.bf16.mxu0 %v7848
    %7902 = vmatpush1.bf16.msra.mxu0 %v7847
    %7903 = vmatprep.subr.bf16.mxu0 %v7852
    %7904 = vmatpush1.bf16.msra.mxu0 %v7851
    %7905 = vmatprep.subr.bf16.mxu0 %v7856
    %7906 = vmatpush1.bf16.msra.mxu0 %v7855
    %7907 = vmatprep.subr.bf16.mxu0 0
    %7908 = vmatpush1.bf16.msra.mxu0 0
    %7909 = vmatprep.subr.bf16.mxu0 0
    %7910 = vmatpush1.bf16.msra.mxu0 0
    %7911 = vmatprep.subr.bf16.mxu0 0
    %7912 = vmatpush1.bf16.msra.mxu0 0
    %7913 = vmatprep.subr.bf16.mxu0 0
    %7914 = vmatpush1.bf16.msra.mxu0 0
    %7915 = vmatprep.subr.bf16.mxu0 0
    %7916 = vmatpush1.bf16.msra.mxu0 0
    %7917 = vmatprep.subr.bf16.mxu0 0
    %7918 = vmatpush1.bf16.msra.mxu0 0
    %7919 = vmatprep.subr.bf16.mxu0 0
    %7920 = vmatpush1.bf16.msra.mxu0 0
    %7921 = vmatprep.subr.bf16.mxu0 0
    %7922 = vmatpush1.bf16.msra.mxu0 0
    %7923 = vmatprep.mubr.bf16.mxu0 0
    %7924 = vmatmul.mubr.bf16.gmra.mrb[0].mxu0 %v7698
    %v7925 = vpop.f32.mrb[0].mxu0
    %v7926 = vadd.f32 0.0, %v7925
    %v7927 = vpop.f32.mrb[0].mxu0
    %v7928 = vadd.f32 0.0, %v7927
    %v7929 = vpop.f32.mrb[0].mxu0
    %v7930 = vadd.f32 0.0, %v7929
    %v7931 = vpop.f32.mrb[0].mxu0
    %v7932 = vadd.f32 0.0, %v7931
    %7933 = vdwg.mxu0
    %7934 = vmatprep.subr.bf16.mxu0 %v7830
    %7935 = vmatpush1.bf16.msra.mxu0 %v7829
    %7936 = vmatprep.subr.bf16.mxu0 %v7834
    %7937 = vmatpush1.bf16.msra.mxu0 %v7833
    %7938 = vmatprep.subr.bf16.mxu0 %v7838
    %7939 = vmatpush1.bf16.msra.mxu0 %v7837
    %7940 = vmatprep.subr.bf16.mxu0 %v7842
    %7941 = vmatpush1.bf16.msra.mxu0 %v7841
    %7942 = vmatprep.subr.bf16.mxu0 %v7846
    %7943 = vmatpush1.bf16.msra.mxu0 %v7845
    %7944 = vmatprep.subr.bf16.mxu0 %v7850
    %7945 = vmatpush1.bf16.msra.mxu0 %v7849
    %7946 = vmatprep.subr.bf16.mxu0 %v7854
    %7947 = vmatpush1.bf16.msra.mxu0 %v7853
    %7948 = vmatprep.subr.bf16.mxu0 %v7858
    %7949 = vmatpush1.bf16.msra.mxu0 %v7857
    %7950 = vmatprep.subr.bf16.mxu0 0
    %7951 = vmatpush1.bf16.msra.mxu0 0
    %7952 = vmatprep.subr.bf16.mxu0 0
    %7953 = vmatpush1.bf16.msra.mxu0 0
    %7954 = vmatprep.subr.bf16.mxu0 0
    %7955 = vmatpush1.bf16.msra.mxu0 0
    %7956 = vmatprep.subr.bf16.mxu0 0
    %7957 = vmatpush1.bf16.msra.mxu0 0
    %7958 = vmatprep.subr.bf16.mxu0 0
    %7959 = vmatpush1.bf16.msra.mxu0 0
    %7960 = vmatprep.subr.bf16.mxu0 0
    %7961 = vmatpush1.bf16.msra.mxu0 0
    %7962 = vmatprep.subr.bf16.mxu0 0
    %7963 = vmatpush1.bf16.msra.mxu0 0
    %7964 = vmatprep.subr.bf16.mxu0 0
    %7965 = vmatpush1.bf16.msra.mxu0 0
    %7966 = vmatprep.mubr.bf16.mxu0 0
    %7967 = vmatmul.mubr.bf16.gmra.mrb[0].mxu0 %v7698
    %v7968 = vpop.f32.mrb[0].mxu0
    %v7969 = vadd.f32 0.0, %v7968
    %v7970 = vpop.f32.mrb[0].mxu0
    %v7971 = vadd.f32 0.0, %v7970
    %v7972 = vpop.f32.mrb[0].mxu0
    %v7973 = vadd.f32 0.0, %v7972
    %v7974 = vpop.f32.mrb[0].mxu0
    %v7975 = vadd.f32 0.0, %v7974
    %7976 = vdwg.mxu0
    %v7977 = vadd.f32 %v7690, %v7926
    %v7978 = vadd.f32 %v7691, %v7928
    %v7979 = vadd.f32 %v7692, %v7969
    %v7980 = vadd.f32 %v7693, %v7971
    %v7981 = vadd.f32 %v7694, %v7930
    %v7982 = vadd.f32 %v7695, %v7932
    %v7983 = vadd.f32 %v7696, %v7973
    %v7984 = vadd.f32 %v7697, %v7975
    %v7985 = vxor.u32 %v7977, 2147483648
    %v7986 = vxor.u32 %v7981, 2147483648
    %v7987 = vmul.f32 %v7985, 1.442695
    %v7988 = vpow.pop %v7987
    %v7989 = vmul.f32 %v7986, 1.442695
    %v7990 = vpow.pop %v7989
    %v7991 = vadd.f32 %v7988, 1.0
    %v7992 = vadd.f32 %v7990, 1.0
    %v7993 = vrcp.pop %v7991
    %v7994 = vmul.f32 1.0, %v7993
    %v7995 = vrcp.pop %v7992
    %v7996 = vmul.f32 1.0, %v7995
    %v7997 = vxor.u32 %v7978, 2147483648
    %v7998 = vxor.u32 %v7982, 2147483648
    %v7999 = vmul.f32 %v7997, 1.442695
    %v8000 = vpow.pop %v7999
    %v8001 = vmul.f32 %v7998, 1.442695
    %v8002 = vpow.pop %v8001
    %v8003 = vadd.f32 %v8000, 1.0
    %v8004 = vadd.f32 %v8002, 1.0
    %v8005 = vrcp.pop %v8003
    %v8006 = vmul.f32 1.0, %v8005
    %v8007 = vrcp.pop %v8004
    %v8008 = vmul.f32 1.0, %v8007
    %v8009 = vxor.u32 %v7979, 2147483648
    %v8010 = vxor.u32 %v7983, 2147483648
    %v8011 = vmul.f32 %v8009, 1.442695
    %v8012 = vpow.pop %v8011
    %v8013 = vmul.f32 %v8010, 1.442695
    %v8014 = vpow.pop %v8013
    %v8015 = vadd.f32 %v8012, 1.0
    %v8016 = vadd.f32 %v8014, 1.0
    %v8017 = vrcp.pop %v8015
    %v8018 = vmul.f32 1.0, %v8017
    %v8019 = vrcp.pop %v8016
    %v8020 = vmul.f32 1.0, %v8019
    %v8021 = vtanh.pop %v7980
    %v8022 = vtanh.pop %v7984
    %v8023 = vmul.f32 %v7994, %v7680
    %v8024 = vmul.f32 %v7996, %v7681
    %v8025 = vmul.f32 %v8006, %v8021
    %v8026 = vmul.f32 %v8008, %v8022
    %v8027 = vadd.f32 %v8023, %v8025
    %v8028 = vadd.f32 %v8024, %v8026
    %v8029 = vtanh.pop %v8027
    %v8030 = vtanh.pop %v8028
    %v8031 = vmul.f32 %v8018, %v8029
    %v8032 = vmul.f32 %v8020, %v8030
    %s8033 = scalar_lea.vmem [#allocation9], 352
    %8034 = vst [vmem:[%s8033] sm:$0xff] %v8031
    %8035 = vst [vmem:[%s8033 + $0x8] sm:$0xff] %v8032
    %s8036 = scalar_lea.vmem [#allocation4], 1472
    %v8037 = vld [vmem:[%s8036] sm:$0xff]
    %v8038 = vld [vmem:[%s8036 + $0x8] sm:$0xff]
    %v8039 = vld [vmem:[%s8036 + $0x10] sm:$0xff]
    %v8040 = vld [vmem:[%s8036 + $0x18] sm:$0xff]
    %v8041 = vld [vmem:[%s8036 + $0x20] sm:$0xff]
    %v8042 = vld [vmem:[%s8036 + $0x28] sm:$0xff]
    %v8043 = vld [vmem:[%s8036 + $0x30] sm:$0xff]
    %v8044 = vld [vmem:[%s8036 + $0x38] sm:$0xff]
    %v8045 = vpack.c.bf16 %v8032, %v8031
    %v8046 = vld [vmem:[#allocation7] sm:$0xff]
    %v8047 = vld [vmem:[#allocation7 + $0x8] sm:$0xff]
    %v8048 = vld [vmem:[#allocation7 + $0x10] sm:$0xff]
    %v8049 = vld [vmem:[#allocation7 + $0x18] sm:$0xff]
    %v8050 = vld [vmem:[#allocation7 + $0x20] sm:$0xff]
    %v8051 = vld [vmem:[#allocation7 + $0x28] sm:$0xff]
    %v8052 = vld [vmem:[#allocation7 + $0x30] sm:$0xff]
    %v8053 = vld [vmem:[#allocation7 + $0x38] sm:$0xff]
    %v8054 = vld [vmem:[#allocation7 + $0x40] sm:$0xff]
    %v8055 = vld [vmem:[#allocation7 + $0x48] sm:$0xff]
    %v8056 = vld [vmem:[#allocation7 + $0x50] sm:$0xff]
    %v8057 = vld [vmem:[#allocation7 + $0x58] sm:$0xff]
    %v8058 = vld [vmem:[#allocation7 + $0x60] sm:$0xff]
    %v8059 = vld [vmem:[#allocation7 + $0x68] sm:$0xff]
    %v8060 = vld [vmem:[#allocation7 + $0x70] sm:$0xff]
    %v8061 = vld [vmem:[#allocation7 + $0x78] sm:$0xff]
    %v8062 = vld [vmem:[#allocation7 + $0x80] sm:$0xff]
    %v8063 = vld [vmem:[#allocation7 + $0x88] sm:$0xff]
    %v8064 = vld [vmem:[#allocation7 + $0x90] sm:$0xff]
    %v8065 = vld [vmem:[#allocation7 + $0x98] sm:$0xff]
    %v8066 = vld [vmem:[#allocation7 + $0xa0] sm:$0xff]
    %v8067 = vld [vmem:[#allocation7 + $0xa8] sm:$0xff]
    %v8068 = vld [vmem:[#allocation7 + $0xb0] sm:$0xff]
    %v8069 = vld [vmem:[#allocation7 + $0xb8] sm:$0xff]
    %v8070 = vld [vmem:[#allocation7 + $0xc0] sm:$0xff]
    %v8071 = vld [vmem:[#allocation7 + $0xc8] sm:$0xff]
    %v8072 = vld [vmem:[#allocation7 + $0xd0] sm:$0xff]
    %v8073 = vld [vmem:[#allocation7 + $0xd8] sm:$0xff]
    %v8074 = vld [vmem:[#allocation7 + $0xe0] sm:$0xff]
    %v8075 = vld [vmem:[#allocation7 + $0xe8] sm:$0xff]
    %v8076 = vld [vmem:[#allocation7 + $0xf0] sm:$0xff]
    %v8077 = vld [vmem:[#allocation7 + $0xf8] sm:$0xff]
    %v8110 = vunpack.c.l.b16 %v8046
    %v8111 = vunpack.c.h.b16 %v8046
    %v8112 = vunpack.c.l.b16 %v8047
    %v8113 = vunpack.c.h.b16 %v8047
    %v8114 = vunpack.c.l.b16 %v8048
    %v8115 = vunpack.c.h.b16 %v8048
    %v8116 = vunpack.c.l.b16 %v8049
    %v8117 = vunpack.c.h.b16 %v8049
    %v8118 = vunpack.c.l.b16 %v8050
    %v8119 = vunpack.c.h.b16 %v8050
    %v8120 = vunpack.c.l.b16 %v8051
    %v8121 = vunpack.c.h.b16 %v8051
    %v8122 = vunpack.c.l.b16 %v8052
    %v8123 = vunpack.c.h.b16 %v8052
    %v8124 = vunpack.c.l.b16 %v8053
    %v8125 = vunpack.c.h.b16 %v8053
    %v8126 = vunpack.c.l.b16 %v8054
    %v8127 = vunpack.c.h.b16 %v8054
    %v8128 = vunpack.c.l.b16 %v8055
    %v8129 = vunpack.c.h.b16 %v8055
    %v8130 = vunpack.c.l.b16 %v8056
    %v8131 = vunpack.c.h.b16 %v8056
    %v8132 = vunpack.c.l.b16 %v8057
    %v8133 = vunpack.c.h.b16 %v8057
    %v8134 = vunpack.c.l.b16 %v8058
    %v8135 = vunpack.c.h.b16 %v8058
    %v8136 = vunpack.c.l.b16 %v8059
    %v8137 = vunpack.c.h.b16 %v8059
    %v8138 = vunpack.c.l.b16 %v8060
    %v8139 = vunpack.c.h.b16 %v8060
    %v8140 = vunpack.c.l.b16 %v8061
    %v8141 = vunpack.c.h.b16 %v8061
    %v8142 = vunpack.c.l.b16 %v8062
    %v8143 = vunpack.c.h.b16 %v8062
    %v8144 = vunpack.c.l.b16 %v8063
    %v8145 = vunpack.c.h.b16 %v8063
    %v8146 = vunpack.c.l.b16 %v8064
    %v8147 = vunpack.c.h.b16 %v8064
    %v8148 = vunpack.c.l.b16 %v8065
    %v8149 = vunpack.c.h.b16 %v8065
    %v8150 = vunpack.c.l.b16 %v8066
    %v8151 = vunpack.c.h.b16 %v8066
    %v8152 = vunpack.c.l.b16 %v8067
    %v8153 = vunpack.c.h.b16 %v8067
    %v8154 = vunpack.c.l.b16 %v8068
    %v8155 = vunpack.c.h.b16 %v8068
    %v8156 = vunpack.c.l.b16 %v8069
    %v8157 = vunpack.c.h.b16 %v8069
    %v8158 = vunpack.c.l.b16 %v8070
    %v8159 = vunpack.c.h.b16 %v8070
    %v8160 = vunpack.c.l.b16 %v8071
    %v8161 = vunpack.c.h.b16 %v8071
    %v8162 = vunpack.c.l.b16 %v8072
    %v8163 = vunpack.c.h.b16 %v8072
    %v8164 = vunpack.c.l.b16 %v8073
    %v8165 = vunpack.c.h.b16 %v8073
    %v8166 = vunpack.c.l.b16 %v8074
    %v8167 = vunpack.c.h.b16 %v8074
    %v8168 = vunpack.c.l.b16 %v8075
    %v8169 = vunpack.c.h.b16 %v8075
    %v8170 = vunpack.c.l.b16 %v8076
    %v8171 = vunpack.c.h.b16 %v8076
    %v8172 = vunpack.c.l.b16 %v8077
    %v8173 = vunpack.c.h.b16 %v8077
    %v8174 = vpack.c.b16 %v8114, %v8110
    %v8175 = vpack.c.b16 %v8115, %v8111
    %v8176 = vpack.c.b16 %v8116, %v8112
    %v8177 = vpack.c.b16 %v8117, %v8113
    %v8178 = vpack.c.b16 %v8122, %v8118
    %v8179 = vpack.c.b16 %v8123, %v8119
    %v8180 = vpack.c.b16 %v8124, %v8120
    %v8181 = vpack.c.b16 %v8125, %v8121
    %v8182 = vpack.c.b16 %v8130, %v8126
    %v8183 = vpack.c.b16 %v8131, %v8127
    %v8184 = vpack.c.b16 %v8132, %v8128
    %v8185 = vpack.c.b16 %v8133, %v8129
    %v8186 = vpack.c.b16 %v8138, %v8134
    %v8187 = vpack.c.b16 %v8139, %v8135
    %v8188 = vpack.c.b16 %v8140, %v8136
    %v8189 = vpack.c.b16 %v8141, %v8137
    %v8190 = vpack.c.b16 %v8146, %v8142
    %v8191 = vpack.c.b16 %v8147, %v8143
    %v8192 = vpack.c.b16 %v8148, %v8144
    %v8193 = vpack.c.b16 %v8149, %v8145
    %v8194 = vpack.c.b16 %v8154, %v8150
    %v8195 = vpack.c.b16 %v8155, %v8151
    %v8196 = vpack.c.b16 %v8156, %v8152
    %v8197 = vpack.c.b16 %v8157, %v8153
    %v8198 = vpack.c.b16 %v8162, %v8158
    %v8199 = vpack.c.b16 %v8163, %v8159
    %v8200 = vpack.c.b16 %v8164, %v8160
    %v8201 = vpack.c.b16 %v8165, %v8161
    %v8202 = vpack.c.b16 %v8170, %v8166
    %v8203 = vpack.c.b16 %v8171, %v8167
    %v8204 = vpack.c.b16 %v8172, %v8168
    %v8205 = vpack.c.b16 %v8173, %v8169
    %8238 = vmatprep.subr.bf16.mxu0 %v8175
    %8239 = vmatpush1.bf16.msra.mxu0 %v8174
    %8240 = vmatprep.subr.bf16.mxu0 %v8179
    %8241 = vmatpush1.bf16.msra.mxu0 %v8178
    %8242 = vmatprep.subr.bf16.mxu0 %v8183
    %8243 = vmatpush1.bf16.msra.mxu0 %v8182
    %8244 = vmatprep.subr.bf16.mxu0 %v8187
    %8245 = vmatpush1.bf16.msra.mxu0 %v8186
    %8246 = vmatprep.subr.bf16.mxu0 %v8191
    %8247 = vmatpush1.bf16.msra.mxu0 %v8190
    %8248 = vmatprep.subr.bf16.mxu0 %v8195
    %8249 = vmatpush1.bf16.msra.mxu0 %v8194
    %8250 = vmatprep.subr.bf16.mxu0 %v8199
    %8251 = vmatpush1.bf16.msra.mxu0 %v8198
    %8252 = vmatprep.subr.bf16.mxu0 %v8203
    %8253 = vmatpush1.bf16.msra.mxu0 %v8202
    %8254 = vmatprep.subr.bf16.mxu0 0
    %8255 = vmatpush1.bf16.msra.mxu0 0
    %8256 = vmatprep.subr.bf16.mxu0 0
    %8257 = vmatpush1.bf16.msra.mxu0 0
    %8258 = vmatprep.subr.bf16.mxu0 0
    %8259 = vmatpush1.bf16.msra.mxu0 0
    %8260 = vmatprep.subr.bf16.mxu0 0
    %8261 = vmatpush1.bf16.msra.mxu0 0
    %8262 = vmatprep.subr.bf16.mxu0 0
    %8263 = vmatpush1.bf16.msra.mxu0 0
    %8264 = vmatprep.subr.bf16.mxu0 0
    %8265 = vmatpush1.bf16.msra.mxu0 0
    %8266 = vmatprep.subr.bf16.mxu0 0
    %8267 = vmatpush1.bf16.msra.mxu0 0
    %8268 = vmatprep.subr.bf16.mxu0 0
    %8269 = vmatpush1.bf16.msra.mxu0 0
    %8270 = vmatprep.mubr.bf16.mxu0 0
    %8271 = vmatmul.mubr.bf16.gmra.mrb[0].mxu0 %v8045
    %v8272 = vpop.f32.mrb[0].mxu0
    %v8273 = vadd.f32 0.0, %v8272
    %v8274 = vpop.f32.mrb[0].mxu0
    %v8275 = vadd.f32 0.0, %v8274
    %v8276 = vpop.f32.mrb[0].mxu0
    %v8277 = vadd.f32 0.0, %v8276
    %v8278 = vpop.f32.mrb[0].mxu0
    %v8279 = vadd.f32 0.0, %v8278
    %8280 = vdwg.mxu0
    %8281 = vmatprep.subr.bf16.mxu0 %v8177
    %8282 = vmatpush1.bf16.msra.mxu0 %v8176
    %8283 = vmatprep.subr.bf16.mxu0 %v8181
    %8284 = vmatpush1.bf16.msra.mxu0 %v8180
    %8285 = vmatprep.subr.bf16.mxu0 %v8185
    %8286 = vmatpush1.bf16.msra.mxu0 %v8184
    %8287 = vmatprep.subr.bf16.mxu0 %v8189
    %8288 = vmatpush1.bf16.msra.mxu0 %v8188
    %8289 = vmatprep.subr.bf16.mxu0 %v8193
    %8290 = vmatpush1.bf16.msra.mxu0 %v8192
    %8291 = vmatprep.subr.bf16.mxu0 %v8197
    %8292 = vmatpush1.bf16.msra.mxu0 %v8196
    %8293 = vmatprep.subr.bf16.mxu0 %v8201
    %8294 = vmatpush1.bf16.msra.mxu0 %v8200
    %8295 = vmatprep.subr.bf16.mxu0 %v8205
    %8296 = vmatpush1.bf16.msra.mxu0 %v8204
    %8297 = vmatprep.subr.bf16.mxu0 0
    %8298 = vmatpush1.bf16.msra.mxu0 0
    %8299 = vmatprep.subr.bf16.mxu0 0
    %8300 = vmatpush1.bf16.msra.mxu0 0
    %8301 = vmatprep.subr.bf16.mxu0 0
    %8302 = vmatpush1.bf16.msra.mxu0 0
    %8303 = vmatprep.subr.bf16.mxu0 0
    %8304 = vmatpush1.bf16.msra.mxu0 0
    %8305 = vmatprep.subr.bf16.mxu0 0
    %8306 = vmatpush1.bf16.msra.mxu0 0
    %8307 = vmatprep.subr.bf16.mxu0 0
    %8308 = vmatpush1.bf16.msra.mxu0 0
    %8309 = vmatprep.subr.bf16.mxu0 0
    %8310 = vmatpush1.bf16.msra.mxu0 0
    %8311 = vmatprep.subr.bf16.mxu0 0
    %8312 = vmatpush1.bf16.msra.mxu0 0
    %8313 = vmatprep.mubr.bf16.mxu0 0
    %8314 = vmatmul.mubr.bf16.gmra.mrb[0].mxu0 %v8045
    %v8315 = vpop.f32.mrb[0].mxu0
    %v8316 = vadd.f32 0.0, %v8315
    %v8317 = vpop.f32.mrb[0].mxu0
    %v8318 = vadd.f32 0.0, %v8317
    %v8319 = vpop.f32.mrb[0].mxu0
    %v8320 = vadd.f32 0.0, %v8319
    %v8321 = vpop.f32.mrb[0].mxu0
    %v8322 = vadd.f32 0.0, %v8321
    %8323 = vdwg.mxu0
    %v8324 = vadd.f32 %v8037, %v8273
    %v8325 = vadd.f32 %v8038, %v8275
    %v8326 = vadd.f32 %v8039, %v8316
    %v8327 = vadd.f32 %v8040, %v8318
    %v8328 = vadd.f32 %v8041, %v8277
    %v8329 = vadd.f32 %v8042, %v8279
    %v8330 = vadd.f32 %v8043, %v8320
    %v8331 = vadd.f32 %v8044, %v8322
    %v8332 = vxor.u32 %v8324, 2147483648
    %v8333 = vxor.u32 %v8328, 2147483648
    %v8334 = vmul.f32 %v8332, 1.442695
    %v8335 = vpow.pop %v8334
    %v8336 = vmul.f32 %v8333, 1.442695
    %v8337 = vpow.pop %v8336
    %v8338 = vadd.f32 %v8335, 1.0
    %v8339 = vadd.f32 %v8337, 1.0
    %v8340 = vrcp.pop %v8338
    %v8341 = vmul.f32 1.0, %v8340
    %v8342 = vrcp.pop %v8339
    %v8343 = vmul.f32 1.0, %v8342
    %v8344 = vxor.u32 %v8325, 2147483648
    %v8345 = vxor.u32 %v8329, 2147483648
    %v8346 = vmul.f32 %v8344, 1.442695
    %v8347 = vpow.pop %v8346
    %v8348 = vmul.f32 %v8345, 1.442695
    %v8349 = vpow.pop %v8348
    %v8350 = vadd.f32 %v8347, 1.0
    %v8351 = vadd.f32 %v8349, 1.0
    %v8352 = vrcp.pop %v8350
    %v8353 = vmul.f32 1.0, %v8352
    %v8354 = vrcp.pop %v8351
    %v8355 = vmul.f32 1.0, %v8354
    %v8356 = vxor.u32 %v8326, 2147483648
    %v8357 = vxor.u32 %v8330, 2147483648
    %v8358 = vmul.f32 %v8356, 1.442695
    %v8359 = vpow.pop %v8358
    %v8360 = vmul.f32 %v8357, 1.442695
    %v8361 = vpow.pop %v8360
    %v8362 = vadd.f32 %v8359, 1.0
    %v8363 = vadd.f32 %v8361, 1.0
    %v8364 = vrcp.pop %v8362
    %v8365 = vmul.f32 1.0, %v8364
    %v8366 = vrcp.pop %v8363
    %v8367 = vmul.f32 1.0, %v8366
    %v8368 = vtanh.pop %v8327
    %v8369 = vtanh.pop %v8331
    %v8370 = vmul.f32 %v8341, %v8027
    %v8371 = vmul.f32 %v8343, %v8028
    %v8372 = vmul.f32 %v8353, %v8368
    %v8373 = vmul.f32 %v8355, %v8369
    %v8374 = vadd.f32 %v8370, %v8372
    %v8375 = vadd.f32 %v8371, %v8373
    %v8376 = vtanh.pop %v8374
    %v8377 = vtanh.pop %v8375
    %v8378 = vmul.f32 %v8365, %v8376
    %v8379 = vmul.f32 %v8367, %v8377
    %s8380 = scalar_lea.vmem [#allocation9], 368
    %8381 = vst [vmem:[%s8380] sm:$0xff] %v8378
    %8382 = vst [vmem:[%s8380 + $0x8] sm:$0xff] %v8379
    %s8383 = scalar_lea.vmem [#allocation4], 1536
    %v8384 = vld [vmem:[%s8383] sm:$0xff]
    %v8385 = vld [vmem:[%s8383 + $0x8] sm:$0xff]
    %v8386 = vld [vmem:[%s8383 + $0x10] sm:$0xff]
    %v8387 = vld [vmem:[%s8383 + $0x18] sm:$0xff]
    %v8388 = vld [vmem:[%s8383 + $0x20] sm:$0xff]
    %v8389 = vld [vmem:[%s8383 + $0x28] sm:$0xff]
    %v8390 = vld [vmem:[%s8383 + $0x30] sm:$0xff]
    %v8391 = vld [vmem:[%s8383 + $0x38] sm:$0xff]
    %v8392 = vpack.c.bf16 %v8379, %v8378
    %v8393 = vld [vmem:[#allocation7] sm:$0xff]
    %v8394 = vld [vmem:[#allocation7 + $0x8] sm:$0xff]
    %v8395 = vld [vmem:[#allocation7 + $0x10] sm:$0xff]
    %v8396 = vld [vmem:[#allocation7 + $0x18] sm:$0xff]
    %v8397 = vld [vmem:[#allocation7 + $0x20] sm:$0xff]
    %v8398 = vld [vmem:[#allocation7 + $0x28] sm:$0xff]
    %v8399 = vld [vmem:[#allocation7 + $0x30] sm:$0xff]
    %v8400 = vld [vmem:[#allocation7 + $0x38] sm:$0xff]
    %v8401 = vld [vmem:[#allocation7 + $0x40] sm:$0xff]
    %v8402 = vld [vmem:[#allocation7 + $0x48] sm:$0xff]
    %v8403 = vld [vmem:[#allocation7 + $0x50] sm:$0xff]
    %v8404 = vld [vmem:[#allocation7 + $0x58] sm:$0xff]
    %v8405 = vld [vmem:[#allocation7 + $0x60] sm:$0xff]
    %v8406 = vld [vmem:[#allocation7 + $0x68] sm:$0xff]
    %v8407 = vld [vmem:[#allocation7 + $0x70] sm:$0xff]
    %v8408 = vld [vmem:[#allocation7 + $0x78] sm:$0xff]
    %v8409 = vld [vmem:[#allocation7 + $0x80] sm:$0xff]
    %v8410 = vld [vmem:[#allocation7 + $0x88] sm:$0xff]
    %v8411 = vld [vmem:[#allocation7 + $0x90] sm:$0xff]
    %v8412 = vld [vmem:[#allocation7 + $0x98] sm:$0xff]
    %v8413 = vld [vmem:[#allocation7 + $0xa0] sm:$0xff]
    %v8414 = vld [vmem:[#allocation7 + $0xa8] sm:$0xff]
    %v8415 = vld [vmem:[#allocation7 + $0xb0] sm:$0xff]
    %v8416 = vld [vmem:[#allocation7 + $0xb8] sm:$0xff]
    %v8417 = vld [vmem:[#allocation7 + $0xc0] sm:$0xff]
    %v8418 = vld [vmem:[#allocation7 + $0xc8] sm:$0xff]
    %v8419 = vld [vmem:[#allocation7 + $0xd0] sm:$0xff]
    %v8420 = vld [vmem:[#allocation7 + $0xd8] sm:$0xff]
    %v8421 = vld [vmem:[#allocation7 + $0xe0] sm:$0xff]
    %v8422 = vld [vmem:[#allocation7 + $0xe8] sm:$0xff]
    %v8423 = vld [vmem:[#allocation7 + $0xf0] sm:$0xff]
    %v8424 = vld [vmem:[#allocation7 + $0xf8] sm:$0xff]
    %v8457 = vunpack.c.l.b16 %v8393
    %v8458 = vunpack.c.h.b16 %v8393
    %v8459 = vunpack.c.l.b16 %v8394
    %v8460 = vunpack.c.h.b16 %v8394
    %v8461 = vunpack.c.l.b16 %v8395
    %v8462 = vunpack.c.h.b16 %v8395
    %v8463 = vunpack.c.l.b16 %v8396
    %v8464 = vunpack.c.h.b16 %v8396
    %v8465 = vunpack.c.l.b16 %v8397
    %v8466 = vunpack.c.h.b16 %v8397
    %v8467 = vunpack.c.l.b16 %v8398
    %v8468 = vunpack.c.h.b16 %v8398
    %v8469 = vunpack.c.l.b16 %v8399
    %v8470 = vunpack.c.h.b16 %v8399
    %v8471 = vunpack.c.l.b16 %v8400
    %v8472 = vunpack.c.h.b16 %v8400
    %v8473 = vunpack.c.l.b16 %v8401
    %v8474 = vunpack.c.h.b16 %v8401
    %v8475 = vunpack.c.l.b16 %v8402
    %v8476 = vunpack.c.h.b16 %v8402
    %v8477 = vunpack.c.l.b16 %v8403
    %v8478 = vunpack.c.h.b16 %v8403
    %v8479 = vunpack.c.l.b16 %v8404
    %v8480 = vunpack.c.h.b16 %v8404
    %v8481 = vunpack.c.l.b16 %v8405
    %v8482 = vunpack.c.h.b16 %v8405
    %v8483 = vunpack.c.l.b16 %v8406
    %v8484 = vunpack.c.h.b16 %v8406
    %v8485 = vunpack.c.l.b16 %v8407
    %v8486 = vunpack.c.h.b16 %v8407
    %v8487 = vunpack.c.l.b16 %v8408
    %v8488 = vunpack.c.h.b16 %v8408
    %v8489 = vunpack.c.l.b16 %v8409
    %v8490 = vunpack.c.h.b16 %v8409
    %v8491 = vunpack.c.l.b16 %v8410
    %v8492 = vunpack.c.h.b16 %v8410
    %v8493 = vunpack.c.l.b16 %v8411
    %v8494 = vunpack.c.h.b16 %v8411
    %v8495 = vunpack.c.l.b16 %v8412
    %v8496 = vunpack.c.h.b16 %v8412
    %v8497 = vunpack.c.l.b16 %v8413
    %v8498 = vunpack.c.h.b16 %v8413
    %v8499 = vunpack.c.l.b16 %v8414
    %v8500 = vunpack.c.h.b16 %v8414
    %v8501 = vunpack.c.l.b16 %v8415
    %v8502 = vunpack.c.h.b16 %v8415
    %v8503 = vunpack.c.l.b16 %v8416
    %v8504 = vunpack.c.h.b16 %v8416
    %v8505 = vunpack.c.l.b16 %v8417
    %v8506 = vunpack.c.h.b16 %v8417
    %v8507 = vunpack.c.l.b16 %v8418
    %v8508 = vunpack.c.h.b16 %v8418
    %v8509 = vunpack.c.l.b16 %v8419
    %v8510 = vunpack.c.h.b16 %v8419
    %v8511 = vunpack.c.l.b16 %v8420
    %v8512 = vunpack.c.h.b16 %v8420
    %v8513 = vunpack.c.l.b16 %v8421
    %v8514 = vunpack.c.h.b16 %v8421
    %v8515 = vunpack.c.l.b16 %v8422
    %v8516 = vunpack.c.h.b16 %v8422
    %v8517 = vunpack.c.l.b16 %v8423
    %v8518 = vunpack.c.h.b16 %v8423
    %v8519 = vunpack.c.l.b16 %v8424
    %v8520 = vunpack.c.h.b16 %v8424
    %v8521 = vpack.c.b16 %v8461, %v8457
    %v8522 = vpack.c.b16 %v8462, %v8458
    %v8523 = vpack.c.b16 %v8463, %v8459
    %v8524 = vpack.c.b16 %v8464, %v8460
    %v8525 = vpack.c.b16 %v8469, %v8465
    %v8526 = vpack.c.b16 %v8470, %v8466
    %v8527 = vpack.c.b16 %v8471, %v8467
    %v8528 = vpack.c.b16 %v8472, %v8468
    %v8529 = vpack.c.b16 %v8477, %v8473
    %v8530 = vpack.c.b16 %v8478, %v8474
    %v8531 = vpack.c.b16 %v8479, %v8475
    %v8532 = vpack.c.b16 %v8480, %v8476
    %v8533 = vpack.c.b16 %v8485, %v8481
    %v8534 = vpack.c.b16 %v8486, %v8482
    %v8535 = vpack.c.b16 %v8487, %v8483
    %v8536 = vpack.c.b16 %v8488, %v8484
    %v8537 = vpack.c.b16 %v8493, %v8489
    %v8538 = vpack.c.b16 %v8494, %v8490
    %v8539 = vpack.c.b16 %v8495, %v8491
    %v8540 = vpack.c.b16 %v8496, %v8492
    %v8541 = vpack.c.b16 %v8501, %v8497
    %v8542 = vpack.c.b16 %v8502, %v8498
    %v8543 = vpack.c.b16 %v8503, %v8499
    %v8544 = vpack.c.b16 %v8504, %v8500
    %v8545 = vpack.c.b16 %v8509, %v8505
    %v8546 = vpack.c.b16 %v8510, %v8506
    %v8547 = vpack.c.b16 %v8511, %v8507
    %v8548 = vpack.c.b16 %v8512, %v8508
    %v8549 = vpack.c.b16 %v8517, %v8513
    %v8550 = vpack.c.b16 %v8518, %v8514
    %v8551 = vpack.c.b16 %v8519, %v8515
    %v8552 = vpack.c.b16 %v8520, %v8516
    %8585 = vmatprep.subr.bf16.mxu0 %v8522
    %8586 = vmatpush1.bf16.msra.mxu0 %v8521
    %8587 = vmatprep.subr.bf16.mxu0 %v8526
    %8588 = vmatpush1.bf16.msra.mxu0 %v8525
    %8589 = vmatprep.subr.bf16.mxu0 %v8530
    %8590 = vmatpush1.bf16.msra.mxu0 %v8529
    %8591 = vmatprep.subr.bf16.mxu0 %v8534
    %8592 = vmatpush1.bf16.msra.mxu0 %v8533
    %8593 = vmatprep.subr.bf16.mxu0 %v8538
    %8594 = vmatpush1.bf16.msra.mxu0 %v8537
    %8595 = vmatprep.subr.bf16.mxu0 %v8542
    %8596 = vmatpush1.bf16.msra.mxu0 %v8541
    %8597 = vmatprep.subr.bf16.mxu0 %v8546
    %8598 = vmatpush1.bf16.msra.mxu0 %v8545
    %8599 = vmatprep.subr.bf16.mxu0 %v8550
    %8600 = vmatpush1.bf16.msra.mxu0 %v8549
    %8601 = vmatprep.subr.bf16.mxu0 0
    %8602 = vmatpush1.bf16.msra.mxu0 0
    %8603 = vmatprep.subr.bf16.mxu0 0
    %8604 = vmatpush1.bf16.msra.mxu0 0
    %8605 = vmatprep.subr.bf16.mxu0 0
    %8606 = vmatpush1.bf16.msra.mxu0 0
    %8607 = vmatprep.subr.bf16.mxu0 0
    %8608 = vmatpush1.bf16.msra.mxu0 0
    %8609 = vmatprep.subr.bf16.mxu0 0
    %8610 = vmatpush1.bf16.msra.mxu0 0
    %8611 = vmatprep.subr.bf16.mxu0 0
    %8612 = vmatpush1.bf16.msra.mxu0 0
    %8613 = vmatprep.subr.bf16.mxu0 0
    %8614 = vmatpush1.bf16.msra.mxu0 0
    %8615 = vmatprep.subr.bf16.mxu0 0
    %8616 = vmatpush1.bf16.msra.mxu0 0
    %8617 = vmatprep.mubr.bf16.mxu0 0
    %8618 = vmatmul.mubr.bf16.gmra.mrb[0].mxu0 %v8392
    %v8619 = vpop.f32.mrb[0].mxu0
    %v8620 = vadd.f32 0.0, %v8619
    %v8621 = vpop.f32.mrb[0].mxu0
    %v8622 = vadd.f32 0.0, %v8621
    %v8623 = vpop.f32.mrb[0].mxu0
    %v8624 = vadd.f32 0.0, %v8623
    %v8625 = vpop.f32.mrb[0].mxu0
    %v8626 = vadd.f32 0.0, %v8625
    %8627 = vdwg.mxu0
    %8628 = vmatprep.subr.bf16.mxu0 %v8524
    %8629 = vmatpush1.bf16.msra.mxu0 %v8523
    %8630 = vmatprep.subr.bf16.mxu0 %v8528
    %8631 = vmatpush1.bf16.msra.mxu0 %v8527
    %8632 = vmatprep.subr.bf16.mxu0 %v8532
    %8633 = vmatpush1.bf16.msra.mxu0 %v8531
    %8634 = vmatprep.subr.bf16.mxu0 %v8536
    %8635 = vmatpush1.bf16.msra.mxu0 %v8535
    %8636 = vmatprep.subr.bf16.mxu0 %v8540
    %8637 = vmatpush1.bf16.msra.mxu0 %v8539
    %8638 = vmatprep.subr.bf16.mxu0 %v8544
    %8639 = vmatpush1.bf16.msra.mxu0 %v8543
    %8640 = vmatprep.subr.bf16.mxu0 %v8548
    %8641 = vmatpush1.bf16.msra.mxu0 %v8547
    %8642 = vmatprep.subr.bf16.mxu0 %v8552
    %8643 = vmatpush1.bf16.msra.mxu0 %v8551
    %8644 = vmatprep.subr.bf16.mxu0 0
    %8645 = vmatpush1.bf16.msra.mxu0 0
    %8646 = vmatprep.subr.bf16.mxu0 0
    %8647 = vmatpush1.bf16.msra.mxu0 0
    %8648 = vmatprep.subr.bf16.mxu0 0
    %8649 = vmatpush1.bf16.msra.mxu0 0
    %8650 = vmatprep.subr.bf16.mxu0 0
    %8651 = vmatpush1.bf16.msra.mxu0 0
    %8652 = vmatprep.subr.bf16.mxu0 0
    %8653 = vmatpush1.bf16.msra.mxu0 0
    %8654 = vmatprep.subr.bf16.mxu0 0
    %8655 = vmatpush1.bf16.msra.mxu0 0
    %8656 = vmatprep.subr.bf16.mxu0 0
    %8657 = vmatpush1.bf16.msra.mxu0 0
    %8658 = vmatprep.subr.bf16.mxu0 0
    %8659 = vmatpush1.bf16.msra.mxu0 0
    %8660 = vmatprep.mubr.bf16.mxu0 0
    %8661 = vmatmul.mubr.bf16.gmra.mrb[0].mxu0 %v8392
    %v8662 = vpop.f32.mrb[0].mxu0
    %v8663 = vadd.f32 0.0, %v8662
    %v8664 = vpop.f32.mrb[0].mxu0
    %v8665 = vadd.f32 0.0, %v8664
    %v8666 = vpop.f32.mrb[0].mxu0
    %v8667 = vadd.f32 0.0, %v8666
    %v8668 = vpop.f32.mrb[0].mxu0
    %v8669 = vadd.f32 0.0, %v8668
    %8670 = vdwg.mxu0
    %v8671 = vadd.f32 %v8384, %v8620
    %v8672 = vadd.f32 %v8385, %v8622
    %v8673 = vadd.f32 %v8386, %v8663
    %v8674 = vadd.f32 %v8387, %v8665
    %v8675 = vadd.f32 %v8388, %v8624
    %v8676 = vadd.f32 %v8389, %v8626
    %v8677 = vadd.f32 %v8390, %v8667
    %v8678 = vadd.f32 %v8391, %v8669
    %v8679 = vxor.u32 %v8671, 2147483648
    %v8680 = vxor.u32 %v8675, 2147483648
    %v8681 = vmul.f32 %v8679, 1.442695
    %v8682 = vpow.pop %v8681
    %v8683 = vmul.f32 %v8680, 1.442695
    %v8684 = vpow.pop %v8683
    %v8685 = vadd.f32 %v8682, 1.0
    %v8686 = vadd.f32 %v8684, 1.0
    %v8687 = vrcp.pop %v8685
    %v8688 = vmul.f32 1.0, %v8687
    %v8689 = vrcp.pop %v8686
    %v8690 = vmul.f32 1.0, %v8689
    %v8691 = vxor.u32 %v8672, 2147483648
    %v8692 = vxor.u32 %v8676, 2147483648
    %v8693 = vmul.f32 %v8691, 1.442695
    %v8694 = vpow.pop %v8693
    %v8695 = vmul.f32 %v8692, 1.442695
    %v8696 = vpow.pop %v8695
    %v8697 = vadd.f32 %v8694, 1.0
    %v8698 = vadd.f32 %v8696, 1.0
    %v8699 = vrcp.pop %v8697
    %v8700 = vmul.f32 1.0, %v8699
    %v8701 = vrcp.pop %v8698
    %v8702 = vmul.f32 1.0, %v8701
    %v8703 = vxor.u32 %v8673, 2147483648
    %v8704 = vxor.u32 %v8677, 2147483648
    %v8705 = vmul.f32 %v8703, 1.442695
    %v8706 = vpow.pop %v8705
    %v8707 = vmul.f32 %v8704, 1.442695
    %v8708 = vpow.pop %v8707
    %v8709 = vadd.f32 %v8706, 1.0
    %v8710 = vadd.f32 %v8708, 1.0
    %v8711 = vrcp.pop %v8709
    %v8712 = vmul.f32 1.0, %v8711
    %v8713 = vrcp.pop %v8710
    %v8714 = vmul.f32 1.0, %v8713
    %v8715 = vtanh.pop %v8674
    %v8716 = vtanh.pop %v8678
    %v8717 = vmul.f32 %v8688, %v8374
    %v8718 = vmul.f32 %v8690, %v8375
    %v8719 = vmul.f32 %v8700, %v8715
    %v8720 = vmul.f32 %v8702, %v8716
    %v8721 = vadd.f32 %v8717, %v8719
    %v8722 = vadd.f32 %v8718, %v8720
    %v8723 = vtanh.pop %v8721
    %v8724 = vtanh.pop %v8722
    %v8725 = vmul.f32 %v8712, %v8723
    %v8726 = vmul.f32 %v8714, %v8724
    %s8727 = scalar_lea.vmem [#allocation9], 384
    %8728 = vst [vmem:[%s8727] sm:$0xff] %v8725
    %8729 = vst [vmem:[%s8727 + $0x8] sm:$0xff] %v8726
    %s8730 = scalar_lea.vmem [#allocation4], 1600
    %v8731 = vld [vmem:[%s8730] sm:$0xff]
    %v8732 = vld [vmem:[%s8730 + $0x8] sm:$0xff]
    %v8733 = vld [vmem:[%s8730 + $0x10] sm:$0xff]
    %v8734 = vld [vmem:[%s8730 + $0x18] sm:$0xff]
    %v8735 = vld [vmem:[%s8730 + $0x20] sm:$0xff]
    %v8736 = vld [vmem:[%s8730 + $0x28] sm:$0xff]
    %v8737 = vld [vmem:[%s8730 + $0x30] sm:$0xff]
    %v8738 = vld [vmem:[%s8730 + $0x38] sm:$0xff]
    %v8739 = vpack.c.bf16 %v8726, %v8725
    %v8740 = vld [vmem:[#allocation7] sm:$0xff]
    %v8741 = vld [vmem:[#allocation7 + $0x8] sm:$0xff]
    %v8742 = vld [vmem:[#allocation7 + $0x10] sm:$0xff]
    %v8743 = vld [vmem:[#allocation7 + $0x18] sm:$0xff]
    %v8744 = vld [vmem:[#allocation7 + $0x20] sm:$0xff]
    %v8745 = vld [vmem:[#allocation7 + $0x28] sm:$0xff]
    %v8746 = vld [vmem:[#allocation7 + $0x30] sm:$0xff]
    %v8747 = vld [vmem:[#allocation7 + $0x38] sm:$0xff]
    %v8748 = vld [vmem:[#allocation7 + $0x40] sm:$0xff]
    %v8749 = vld [vmem:[#allocation7 + $0x48] sm:$0xff]
    %v8750 = vld [vmem:[#allocation7 + $0x50] sm:$0xff]
    %v8751 = vld [vmem:[#allocation7 + $0x58] sm:$0xff]
    %v8752 = vld [vmem:[#allocation7 + $0x60] sm:$0xff]
    %v8753 = vld [vmem:[#allocation7 + $0x68] sm:$0xff]
    %v8754 = vld [vmem:[#allocation7 + $0x70] sm:$0xff]
    %v8755 = vld [vmem:[#allocation7 + $0x78] sm:$0xff]
    %v8756 = vld [vmem:[#allocation7 + $0x80] sm:$0xff]
    %v8757 = vld [vmem:[#allocation7 + $0x88] sm:$0xff]
    %v8758 = vld [vmem:[#allocation7 + $0x90] sm:$0xff]
    %v8759 = vld [vmem:[#allocation7 + $0x98] sm:$0xff]
    %v8760 = vld [vmem:[#allocation7 + $0xa0] sm:$0xff]
    %v8761 = vld [vmem:[#allocation7 + $0xa8] sm:$0xff]
    %v8762 = vld [vmem:[#allocation7 + $0xb0] sm:$0xff]
    %v8763 = vld [vmem:[#allocation7 + $0xb8] sm:$0xff]
    %v8764 = vld [vmem:[#allocation7 + $0xc0] sm:$0xff]
    %v8765 = vld [vmem:[#allocation7 + $0xc8] sm:$0xff]
    %v8766 = vld [vmem:[#allocation7 + $0xd0] sm:$0xff]
    %v8767 = vld [vmem:[#allocation7 + $0xd8] sm:$0xff]
    %v8768 = vld [vmem:[#allocation7 + $0xe0] sm:$0xff]
    %v8769 = vld [vmem:[#allocation7 + $0xe8] sm:$0xff]
    %v8770 = vld [vmem:[#allocation7 + $0xf0] sm:$0xff]
    %v8771 = vld [vmem:[#allocation7 + $0xf8] sm:$0xff]
    %v8804 = vunpack.c.l.b16 %v8740
    %v8805 = vunpack.c.h.b16 %v8740
    %v8806 = vunpack.c.l.b16 %v8741
    %v8807 = vunpack.c.h.b16 %v8741
    %v8808 = vunpack.c.l.b16 %v8742
    %v8809 = vunpack.c.h.b16 %v8742
    %v8810 = vunpack.c.l.b16 %v8743
    %v8811 = vunpack.c.h.b16 %v8743
    %v8812 = vunpack.c.l.b16 %v8744
    %v8813 = vunpack.c.h.b16 %v8744
    %v8814 = vunpack.c.l.b16 %v8745
    %v8815 = vunpack.c.h.b16 %v8745
    %v8816 = vunpack.c.l.b16 %v8746
    %v8817 = vunpack.c.h.b16 %v8746
    %v8818 = vunpack.c.l.b16 %v8747
    %v8819 = vunpack.c.h.b16 %v8747
    %v8820 = vunpack.c.l.b16 %v8748
    %v8821 = vunpack.c.h.b16 %v8748
    %v8822 = vunpack.c.l.b16 %v8749
    %v8823 = vunpack.c.h.b16 %v8749
    %v8824 = vunpack.c.l.b16 %v8750
    %v8825 = vunpack.c.h.b16 %v8750
    %v8826 = vunpack.c.l.b16 %v8751
    %v8827 = vunpack.c.h.b16 %v8751
    %v8828 = vunpack.c.l.b16 %v8752
    %v8829 = vunpack.c.h.b16 %v8752
    %v8830 = vunpack.c.l.b16 %v8753
    %v8831 = vunpack.c.h.b16 %v8753
    %v8832 = vunpack.c.l.b16 %v8754
    %v8833 = vunpack.c.h.b16 %v8754
    %v8834 = vunpack.c.l.b16 %v8755
    %v8835 = vunpack.c.h.b16 %v8755
    %v8836 = vunpack.c.l.b16 %v8756
    %v8837 = vunpack.c.h.b16 %v8756
    %v8838 = vunpack.c.l.b16 %v8757
    %v8839 = vunpack.c.h.b16 %v8757
    %v8840 = vunpack.c.l.b16 %v8758
    %v8841 = vunpack.c.h.b16 %v8758
    %v8842 = vunpack.c.l.b16 %v8759
    %v8843 = vunpack.c.h.b16 %v8759
    %v8844 = vunpack.c.l.b16 %v8760
    %v8845 = vunpack.c.h.b16 %v8760
    %v8846 = vunpack.c.l.b16 %v8761
    %v8847 = vunpack.c.h.b16 %v8761
    %v8848 = vunpack.c.l.b16 %v8762
    %v8849 = vunpack.c.h.b16 %v8762
    %v8850 = vunpack.c.l.b16 %v8763
    %v8851 = vunpack.c.h.b16 %v8763
    %v8852 = vunpack.c.l.b16 %v8764
    %v8853 = vunpack.c.h.b16 %v8764
    %v8854 = vunpack.c.l.b16 %v8765
    %v8855 = vunpack.c.h.b16 %v8765
    %v8856 = vunpack.c.l.b16 %v8766
    %v8857 = vunpack.c.h.b16 %v8766
    %v8858 = vunpack.c.l.b16 %v8767
    %v8859 = vunpack.c.h.b16 %v8767
    %v8860 = vunpack.c.l.b16 %v8768
    %v8861 = vunpack.c.h.b16 %v8768
    %v8862 = vunpack.c.l.b16 %v8769
    %v8863 = vunpack.c.h.b16 %v8769
    %v8864 = vunpack.c.l.b16 %v8770
    %v8865 = vunpack.c.h.b16 %v8770
    %v8866 = vunpack.c.l.b16 %v8771
    %v8867 = vunpack.c.h.b16 %v8771
    %v8868 = vpack.c.b16 %v8808, %v8804
    %v8869 = vpack.c.b16 %v8809, %v8805
    %v8870 = vpack.c.b16 %v8810, %v8806
    %v8871 = vpack.c.b16 %v8811, %v8807
    %v8872 = vpack.c.b16 %v8816, %v8812
    %v8873 = vpack.c.b16 %v8817, %v8813
    %v8874 = vpack.c.b16 %v8818, %v8814
    %v8875 = vpack.c.b16 %v8819, %v8815
    %v8876 = vpack.c.b16 %v8824, %v8820
    %v8877 = vpack.c.b16 %v8825, %v8821
    %v8878 = vpack.c.b16 %v8826, %v8822
    %v8879 = vpack.c.b16 %v8827, %v8823
    %v8880 = vpack.c.b16 %v8832, %v8828
    %v8881 = vpack.c.b16 %v8833, %v8829
    %v8882 = vpack.c.b16 %v8834, %v8830
    %v8883 = vpack.c.b16 %v8835, %v8831
    %v8884 = vpack.c.b16 %v8840, %v8836
    %v8885 = vpack.c.b16 %v8841, %v8837
    %v8886 = vpack.c.b16 %v8842, %v8838
    %v8887 = vpack.c.b16 %v8843, %v8839
    %v8888 = vpack.c.b16 %v8848, %v8844
    %v8889 = vpack.c.b16 %v8849, %v8845
    %v8890 = vpack.c.b16 %v8850, %v8846
    %v8891 = vpack.c.b16 %v8851, %v8847
    %v8892 = vpack.c.b16 %v8856, %v8852
    %v8893 = vpack.c.b16 %v8857, %v8853
    %v8894 = vpack.c.b16 %v8858, %v8854
    %v8895 = vpack.c.b16 %v8859, %v8855
    %v8896 = vpack.c.b16 %v8864, %v8860
    %v8897 = vpack.c.b16 %v8865, %v8861
    %v8898 = vpack.c.b16 %v8866, %v8862
    %v8899 = vpack.c.b16 %v8867, %v8863
    %8932 = vmatprep.subr.bf16.mxu0 %v8869
    %8933 = vmatpush1.bf16.msra.mxu0 %v8868
    %8934 = vmatprep.subr.bf16.mxu0 %v8873
    %8935 = vmatpush1.bf16.msra.mxu0 %v8872
    %8936 = vmatprep.subr.bf16.mxu0 %v8877
    %8937 = vmatpush1.bf16.msra.mxu0 %v8876
    %8938 = vmatprep.subr.bf16.mxu0 %v8881
    %8939 = vmatpush1.bf16.msra.mxu0 %v8880
    %8940 = vmatprep.subr.bf16.mxu0 %v8885
    %8941 = vmatpush1.bf16.msra.mxu0 %v8884
    %8942 = vmatprep.subr.bf16.mxu0 %v8889
    %8943 = vmatpush1.bf16.msra.mxu0 %v8888
    %8944 = vmatprep.subr.bf16.mxu0 %v8893
    %8945 = vmatpush1.bf16.msra.mxu0 %v8892
    %8946 = vmatprep.subr.bf16.mxu0 %v8897
    %8947 = vmatpush1.bf16.msra.mxu0 %v8896
    %8948 = vmatprep.subr.bf16.mxu0 0
    %8949 = vmatpush1.bf16.msra.mxu0 0
    %8950 = vmatprep.subr.bf16.mxu0 0
    %8951 = vmatpush1.bf16.msra.mxu0 0
    %8952 = vmatprep.subr.bf16.mxu0 0
    %8953 = vmatpush1.bf16.msra.mxu0 0
    %8954 = vmatprep.subr.bf16.mxu0 0
    %8955 = vmatpush1.bf16.msra.mxu0 0
    %8956 = vmatprep.subr.bf16.mxu0 0
    %8957 = vmatpush1.bf16.msra.mxu0 0
    %8958 = vmatprep.subr.bf16.mxu0 0
    %8959 = vmatpush1.bf16.msra.mxu0 0
    %8960 = vmatprep.subr.bf16.mxu0 0
    %8961 = vmatpush1.bf16.msra.mxu0 0
    %8962 = vmatprep.subr.bf16.mxu0 0
    %8963 = vmatpush1.bf16.msra.mxu0 0
    %8964 = vmatprep.mubr.bf16.mxu0 0
    %8965 = vmatmul.mubr.bf16.gmra.mrb[0].mxu0 %v8739
    %v8966 = vpop.f32.mrb[0].mxu0
    %v8967 = vadd.f32 0.0, %v8966
    %v8968 = vpop.f32.mrb[0].mxu0
    %v8969 = vadd.f32 0.0, %v8968
    %v8970 = vpop.f32.mrb[0].mxu0
    %v8971 = vadd.f32 0.0, %v8970
    %v8972 = vpop.f32.mrb[0].mxu0
    %v8973 = vadd.f32 0.0, %v8972
    %8974 = vdwg.mxu0
    %8975 = vmatprep.subr.bf16.mxu0 %v8871
    %8976 = vmatpush1.bf16.msra.mxu0 %v8870
    %8977 = vmatprep.subr.bf16.mxu0 %v8875
    %8978 = vmatpush1.bf16.msra.mxu0 %v8874
    %8979 = vmatprep.subr.bf16.mxu0 %v8879
    %8980 = vmatpush1.bf16.msra.mxu0 %v8878
    %8981 = vmatprep.subr.bf16.mxu0 %v8883
    %8982 = vmatpush1.bf16.msra.mxu0 %v8882
    %8983 = vmatprep.subr.bf16.mxu0 %v8887
    %8984 = vmatpush1.bf16.msra.mxu0 %v8886
    %8985 = vmatprep.subr.bf16.mxu0 %v8891
    %8986 = vmatpush1.bf16.msra.mxu0 %v8890
    %8987 = vmatprep.subr.bf16.mxu0 %v8895
    %8988 = vmatpush1.bf16.msra.mxu0 %v8894
    %8989 = vmatprep.subr.bf16.mxu0 %v8899
    %8990 = vmatpush1.bf16.msra.mxu0 %v8898
    %8991 = vmatprep.subr.bf16.mxu0 0
    %8992 = vmatpush1.bf16.msra.mxu0 0
    %8993 = vmatprep.subr.bf16.mxu0 0
    %8994 = vmatpush1.bf16.msra.mxu0 0
    %8995 = vmatprep.subr.bf16.mxu0 0
    %8996 = vmatpush1.bf16.msra.mxu0 0
    %8997 = vmatprep.subr.bf16.mxu0 0
    %8998 = vmatpush1.bf16.msra.mxu0 0
    %8999 = vmatprep.subr.bf16.mxu0 0
    %9000 = vmatpush1.bf16.msra.mxu0 0
    %9001 = vmatprep.subr.bf16.mxu0 0
    %9002 = vmatpush1.bf16.msra.mxu0 0
    %9003 = vmatprep.subr.bf16.mxu0 0
    %9004 = vmatpush1.bf16.msra.mxu0 0
    %9005 = vmatprep.subr.bf16.mxu0 0
    %9006 = vmatpush1.bf16.msra.mxu0 0
    %9007 = vmatprep.mubr.bf16.mxu0 0
    %9008 = vmatmul.mubr.bf16.gmra.mrb[0].mxu0 %v8739
    %v9009 = vpop.f32.mrb[0].mxu0
    %v9010 = vadd.f32 0.0, %v9009
    %v9011 = vpop.f32.mrb[0].mxu0
    %v9012 = vadd.f32 0.0, %v9011
    %v9013 = vpop.f32.mrb[0].mxu0
    %v9014 = vadd.f32 0.0, %v9013
    %v9015 = vpop.f32.mrb[0].mxu0
    %v9016 = vadd.f32 0.0, %v9015
    %9017 = vdwg.mxu0
    %v9018 = vadd.f32 %v8731, %v8967
    %v9019 = vadd.f32 %v8732, %v8969
    %v9020 = vadd.f32 %v8733, %v9010
    %v9021 = vadd.f32 %v8734, %v9012
    %v9022 = vadd.f32 %v8735, %v8971
    %v9023 = vadd.f32 %v8736, %v8973
    %v9024 = vadd.f32 %v8737, %v9014
    %v9025 = vadd.f32 %v8738, %v9016
    %v9026 = vxor.u32 %v9018, 2147483648
    %v9027 = vxor.u32 %v9022, 2147483648
    %v9028 = vmul.f32 %v9026, 1.442695
    %v9029 = vpow.pop %v9028
    %v9030 = vmul.f32 %v9027, 1.442695
    %v9031 = vpow.pop %v9030
    %v9032 = vadd.f32 %v9029, 1.0
    %v9033 = vadd.f32 %v9031, 1.0
    %v9034 = vrcp.pop %v9032
    %v9035 = vmul.f32 1.0, %v9034
    %v9036 = vrcp.pop %v9033
    %v9037 = vmul.f32 1.0, %v9036
    %v9038 = vxor.u32 %v9019, 2147483648
    %v9039 = vxor.u32 %v9023, 2147483648
    %v9040 = vmul.f32 %v9038, 1.442695
    %v9041 = vpow.pop %v9040
    %v9042 = vmul.f32 %v9039, 1.442695
    %v9043 = vpow.pop %v9042
    %v9044 = vadd.f32 %v9041, 1.0
    %v9045 = vadd.f32 %v9043, 1.0
    %v9046 = vrcp.pop %v9044
    %v9047 = vmul.f32 1.0, %v9046
    %v9048 = vrcp.pop %v9045
    %v9049 = vmul.f32 1.0, %v9048
    %v9050 = vxor.u32 %v9020, 2147483648
    %v9051 = vxor.u32 %v9024, 2147483648
    %v9052 = vmul.f32 %v9050, 1.442695
    %v9053 = vpow.pop %v9052
    %v9054 = vmul.f32 %v9051, 1.442695
    %v9055 = vpow.pop %v9054
    %v9056 = vadd.f32 %v9053, 1.0
    %v9057 = vadd.f32 %v9055, 1.0
    %v9058 = vrcp.pop %v9056
    %v9059 = vmul.f32 1.0, %v9058
    %v9060 = vrcp.pop %v9057
    %v9061 = vmul.f32 1.0, %v9060
    %v9062 = vtanh.pop %v9021
    %v9063 = vtanh.pop %v9025
    %v9064 = vmul.f32 %v9035, %v8721
    %v9065 = vmul.f32 %v9037, %v8722
    %v9066 = vmul.f32 %v9047, %v9062
    %v9067 = vmul.f32 %v9049, %v9063
    %v9068 = vadd.f32 %v9064, %v9066
    %v9069 = vadd.f32 %v9065, %v9067
    %v9070 = vtanh.pop %v9068
    %v9071 = vtanh.pop %v9069
    %v9072 = vmul.f32 %v9059, %v9070
    %v9073 = vmul.f32 %v9061, %v9071
    %s9074 = scalar_lea.vmem [#allocation9], 400
    %9075 = vst [vmem:[%s9074] sm:$0xff] %v9072
    %9076 = vst [vmem:[%s9074 + $0x8] sm:$0xff] %v9073
    %s9077 = scalar_lea.vmem [#allocation4], 1664
    %v9078 = vld [vmem:[%s9077] sm:$0xff]
    %v9079 = vld [vmem:[%s9077 + $0x8] sm:$0xff]
    %v9080 = vld [vmem:[%s9077 + $0x10] sm:$0xff]
    %v9081 = vld [vmem:[%s9077 + $0x18] sm:$0xff]
    %v9082 = vld [vmem:[%s9077 + $0x20] sm:$0xff]
    %v9083 = vld [vmem:[%s9077 + $0x28] sm:$0xff]
    %v9084 = vld [vmem:[%s9077 + $0x30] sm:$0xff]
    %v9085 = vld [vmem:[%s9077 + $0x38] sm:$0xff]
    %v9086 = vpack.c.bf16 %v9073, %v9072
    %v9087 = vld [vmem:[#allocation7] sm:$0xff]
    %v9088 = vld [vmem:[#allocation7 + $0x8] sm:$0xff]
    %v9089 = vld [vmem:[#allocation7 + $0x10] sm:$0xff]
    %v9090 = vld [vmem:[#allocation7 + $0x18] sm:$0xff]
    %v9091 = vld [vmem:[#allocation7 + $0x20] sm:$0xff]
    %v9092 = vld [vmem:[#allocation7 + $0x28] sm:$0xff]
    %v9093 = vld [vmem:[#allocation7 + $0x30] sm:$0xff]
    %v9094 = vld [vmem:[#allocation7 + $0x38] sm:$0xff]
    %v9095 = vld [vmem:[#allocation7 + $0x40] sm:$0xff]
    %v9096 = vld [vmem:[#allocation7 + $0x48] sm:$0xff]
    %v9097 = vld [vmem:[#allocation7 + $0x50] sm:$0xff]
    %v9098 = vld [vmem:[#allocation7 + $0x58] sm:$0xff]
    %v9099 = vld [vmem:[#allocation7 + $0x60] sm:$0xff]
    %v9100 = vld [vmem:[#allocation7 + $0x68] sm:$0xff]
    %v9101 = vld [vmem:[#allocation7 + $0x70] sm:$0xff]
    %v9102 = vld [vmem:[#allocation7 + $0x78] sm:$0xff]
    %v9103 = vld [vmem:[#allocation7 + $0x80] sm:$0xff]
    %v9104 = vld [vmem:[#allocation7 + $0x88] sm:$0xff]
    %v9105 = vld [vmem:[#allocation7 + $0x90] sm:$0xff]
    %v9106 = vld [vmem:[#allocation7 + $0x98] sm:$0xff]
    %v9107 = vld [vmem:[#allocation7 + $0xa0] sm:$0xff]
    %v9108 = vld [vmem:[#allocation7 + $0xa8] sm:$0xff]
    %v9109 = vld [vmem:[#allocation7 + $0xb0] sm:$0xff]
    %v9110 = vld [vmem:[#allocation7 + $0xb8] sm:$0xff]
    %v9111 = vld [vmem:[#allocation7 + $0xc0] sm:$0xff]
    %v9112 = vld [vmem:[#allocation7 + $0xc8] sm:$0xff]
    %v9113 = vld [vmem:[#allocation7 + $0xd0] sm:$0xff]
    %v9114 = vld [vmem:[#allocation7 + $0xd8] sm:$0xff]
    %v9115 = vld [vmem:[#allocation7 + $0xe0] sm:$0xff]
    %v9116 = vld [vmem:[#allocation7 + $0xe8] sm:$0xff]
    %v9117 = vld [vmem:[#allocation7 + $0xf0] sm:$0xff]
    %v9118 = vld [vmem:[#allocation7 + $0xf8] sm:$0xff]
    %v9151 = vunpack.c.l.b16 %v9087
    %v9152 = vunpack.c.h.b16 %v9087
    %v9153 = vunpack.c.l.b16 %v9088
    %v9154 = vunpack.c.h.b16 %v9088
    %v9155 = vunpack.c.l.b16 %v9089
    %v9156 = vunpack.c.h.b16 %v9089
    %v9157 = vunpack.c.l.b16 %v9090
    %v9158 = vunpack.c.h.b16 %v9090
    %v9159 = vunpack.c.l.b16 %v9091
    %v9160 = vunpack.c.h.b16 %v9091
    %v9161 = vunpack.c.l.b16 %v9092
    %v9162 = vunpack.c.h.b16 %v9092
    %v9163 = vunpack.c.l.b16 %v9093
    %v9164 = vunpack.c.h.b16 %v9093
    %v9165 = vunpack.c.l.b16 %v9094
    %v9166 = vunpack.c.h.b16 %v9094
    %v9167 = vunpack.c.l.b16 %v9095
    %v9168 = vunpack.c.h.b16 %v9095
    %v9169 = vunpack.c.l.b16 %v9096
    %v9170 = vunpack.c.h.b16 %v9096
    %v9171 = vunpack.c.l.b16 %v9097
    %v9172 = vunpack.c.h.b16 %v9097
    %v9173 = vunpack.c.l.b16 %v9098
    %v9174 = vunpack.c.h.b16 %v9098
    %v9175 = vunpack.c.l.b16 %v9099
    %v9176 = vunpack.c.h.b16 %v9099
    %v9177 = vunpack.c.l.b16 %v9100
    %v9178 = vunpack.c.h.b16 %v9100
    %v9179 = vunpack.c.l.b16 %v9101
    %v9180 = vunpack.c.h.b16 %v9101
    %v9181 = vunpack.c.l.b16 %v9102
    %v9182 = vunpack.c.h.b16 %v9102
    %v9183 = vunpack.c.l.b16 %v9103
    %v9184 = vunpack.c.h.b16 %v9103
    %v9185 = vunpack.c.l.b16 %v9104
    %v9186 = vunpack.c.h.b16 %v9104
    %v9187 = vunpack.c.l.b16 %v9105
    %v9188 = vunpack.c.h.b16 %v9105
    %v9189 = vunpack.c.l.b16 %v9106
    %v9190 = vunpack.c.h.b16 %v9106
    %v9191 = vunpack.c.l.b16 %v9107
    %v9192 = vunpack.c.h.b16 %v9107
    %v9193 = vunpack.c.l.b16 %v9108
    %v9194 = vunpack.c.h.b16 %v9108
    %v9195 = vunpack.c.l.b16 %v9109
    %v9196 = vunpack.c.h.b16 %v9109
    %v9197 = vunpack.c.l.b16 %v9110
    %v9198 = vunpack.c.h.b16 %v9110
    %v9199 = vunpack.c.l.b16 %v9111
    %v9200 = vunpack.c.h.b16 %v9111
    %v9201 = vunpack.c.l.b16 %v9112
    %v9202 = vunpack.c.h.b16 %v9112
    %v9203 = vunpack.c.l.b16 %v9113
    %v9204 = vunpack.c.h.b16 %v9113
    %v9205 = vunpack.c.l.b16 %v9114
    %v9206 = vunpack.c.h.b16 %v9114
    %v9207 = vunpack.c.l.b16 %v9115
    %v9208 = vunpack.c.h.b16 %v9115
    %v9209 = vunpack.c.l.b16 %v9116
    %v9210 = vunpack.c.h.b16 %v9116
    %v9211 = vunpack.c.l.b16 %v9117
    %v9212 = vunpack.c.h.b16 %v9117
    %v9213 = vunpack.c.l.b16 %v9118
    %v9214 = vunpack.c.h.b16 %v9118
    %v9215 = vpack.c.b16 %v9155, %v9151
    %v9216 = vpack.c.b16 %v9156, %v9152
    %v9217 = vpack.c.b16 %v9157, %v9153
    %v9218 = vpack.c.b16 %v9158, %v9154
    %v9219 = vpack.c.b16 %v9163, %v9159
    %v9220 = vpack.c.b16 %v9164, %v9160
    %v9221 = vpack.c.b16 %v9165, %v9161
    %v9222 = vpack.c.b16 %v9166, %v9162
    %v9223 = vpack.c.b16 %v9171, %v9167
    %v9224 = vpack.c.b16 %v9172, %v9168
    %v9225 = vpack.c.b16 %v9173, %v9169
    %v9226 = vpack.c.b16 %v9174, %v9170
    %v9227 = vpack.c.b16 %v9179, %v9175
    %v9228 = vpack.c.b16 %v9180, %v9176
    %v9229 = vpack.c.b16 %v9181, %v9177
    %v9230 = vpack.c.b16 %v9182, %v9178
    %v9231 = vpack.c.b16 %v9187, %v9183
    %v9232 = vpack.c.b16 %v9188, %v9184
    %v9233 = vpack.c.b16 %v9189, %v9185
    %v9234 = vpack.c.b16 %v9190, %v9186
    %v9235 = vpack.c.b16 %v9195, %v9191
    %v9236 = vpack.c.b16 %v9196, %v9192
    %v9237 = vpack.c.b16 %v9197, %v9193
    %v9238 = vpack.c.b16 %v9198, %v9194
    %v9239 = vpack.c.b16 %v9203, %v9199
    %v9240 = vpack.c.b16 %v9204, %v9200
    %v9241 = vpack.c.b16 %v9205, %v9201
    %v9242 = vpack.c.b16 %v9206, %v9202
    %v9243 = vpack.c.b16 %v9211, %v9207
    %v9244 = vpack.c.b16 %v9212, %v9208
    %v9245 = vpack.c.b16 %v9213, %v9209
    %v9246 = vpack.c.b16 %v9214, %v9210
    %9279 = vmatprep.subr.bf16.mxu0 %v9216
    %9280 = vmatpush1.bf16.msra.mxu0 %v9215
    %9281 = vmatprep.subr.bf16.mxu0 %v9220
    %9282 = vmatpush1.bf16.msra.mxu0 %v9219
    %9283 = vmatprep.subr.bf16.mxu0 %v9224
    %9284 = vmatpush1.bf16.msra.mxu0 %v9223
    %9285 = vmatprep.subr.bf16.mxu0 %v9228
    %9286 = vmatpush1.bf16.msra.mxu0 %v9227
    %9287 = vmatprep.subr.bf16.mxu0 %v9232
    %9288 = vmatpush1.bf16.msra.mxu0 %v9231
    %9289 = vmatprep.subr.bf16.mxu0 %v9236
    %9290 = vmatpush1.bf16.msra.mxu0 %v9235
    %9291 = vmatprep.subr.bf16.mxu0 %v9240
    %9292 = vmatpush1.bf16.msra.mxu0 %v9239
    %9293 = vmatprep.subr.bf16.mxu0 %v9244
    %9294 = vmatpush1.bf16.msra.mxu0 %v9243
    %9295 = vmatprep.subr.bf16.mxu0 0
    %9296 = vmatpush1.bf16.msra.mxu0 0
    %9297 = vmatprep.subr.bf16.mxu0 0
    %9298 = vmatpush1.bf16.msra.mxu0 0
    %9299 = vmatprep.subr.bf16.mxu0 0
    %9300 = vmatpush1.bf16.msra.mxu0 0
    %9301 = vmatprep.subr.bf16.mxu0 0
    %9302 = vmatpush1.bf16.msra.mxu0 0
    %9303 = vmatprep.subr.bf16.mxu0 0
    %9304 = vmatpush1.bf16.msra.mxu0 0
    %9305 = vmatprep.subr.bf16.mxu0 0
    %9306 = vmatpush1.bf16.msra.mxu0 0
    %9307 = vmatprep.subr.bf16.mxu0 0
    %9308 = vmatpush1.bf16.msra.mxu0 0
    %9309 = vmatprep.subr.bf16.mxu0 0
    %9310 = vmatpush1.bf16.msra.mxu0 0
    %9311 = vmatprep.mubr.bf16.mxu0 0
    %9312 = vmatmul.mubr.bf16.gmra.mrb[0].mxu0 %v9086
    %v9313 = vpop.f32.mrb[0].mxu0
    %v9314 = vadd.f32 0.0, %v9313
    %v9315 = vpop.f32.mrb[0].mxu0
    %v9316 = vadd.f32 0.0, %v9315
    %v9317 = vpop.f32.mrb[0].mxu0
    %v9318 = vadd.f32 0.0, %v9317
    %v9319 = vpop.f32.mrb[0].mxu0
    %v9320 = vadd.f32 0.0, %v9319
    %9321 = vdwg.mxu0
    %9322 = vmatprep.subr.bf16.mxu0 %v9218
    %9323 = vmatpush1.bf16.msra.mxu0 %v9217
    %9324 = vmatprep.subr.bf16.mxu0 %v9222
    %9325 = vmatpush1.bf16.msra.mxu0 %v9221
    %9326 = vmatprep.subr.bf16.mxu0 %v9226
    %9327 = vmatpush1.bf16.msra.mxu0 %v9225
    %9328 = vmatprep.subr.bf16.mxu0 %v9230
    %9329 = vmatpush1.bf16.msra.mxu0 %v9229
    %9330 = vmatprep.subr.bf16.mxu0 %v9234
    %9331 = vmatpush1.bf16.msra.mxu0 %v9233
    %9332 = vmatprep.subr.bf16.mxu0 %v9238
    %9333 = vmatpush1.bf16.msra.mxu0 %v9237
    %9334 = vmatprep.subr.bf16.mxu0 %v9242
    %9335 = vmatpush1.bf16.msra.mxu0 %v9241
    %9336 = vmatprep.subr.bf16.mxu0 %v9246
    %9337 = vmatpush1.bf16.msra.mxu0 %v9245
    %9338 = vmatprep.subr.bf16.mxu0 0
    %9339 = vmatpush1.bf16.msra.mxu0 0
    %9340 = vmatprep.subr.bf16.mxu0 0
    %9341 = vmatpush1.bf16.msra.mxu0 0
    %9342 = vmatprep.subr.bf16.mxu0 0
    %9343 = vmatpush1.bf16.msra.mxu0 0
    %9344 = vmatprep.subr.bf16.mxu0 0
    %9345 = vmatpush1.bf16.msra.mxu0 0
    %9346 = vmatprep.subr.bf16.mxu0 0
    %9347 = vmatpush1.bf16.msra.mxu0 0
    %9348 = vmatprep.subr.bf16.mxu0 0
    %9349 = vmatpush1.bf16.msra.mxu0 0
    %9350 = vmatprep.subr.bf16.mxu0 0
    %9351 = vmatpush1.bf16.msra.mxu0 0
    %9352 = vmatprep.subr.bf16.mxu0 0
    %9353 = vmatpush1.bf16.msra.mxu0 0
    %9354 = vmatprep.mubr.bf16.mxu0 0
    %9355 = vmatmul.mubr.bf16.gmra.mrb[0].mxu0 %v9086
    %v9356 = vpop.f32.mrb[0].mxu0
    %v9357 = vadd.f32 0.0, %v9356
    %v9358 = vpop.f32.mrb[0].mxu0
    %v9359 = vadd.f32 0.0, %v9358
    %v9360 = vpop.f32.mrb[0].mxu0
    %v9361 = vadd.f32 0.0, %v9360
    %v9362 = vpop.f32.mrb[0].mxu0
    %v9363 = vadd.f32 0.0, %v9362
    %9364 = vdwg.mxu0
    %v9365 = vadd.f32 %v9078, %v9314
    %v9366 = vadd.f32 %v9079, %v9316
    %v9367 = vadd.f32 %v9080, %v9357
    %v9368 = vadd.f32 %v9081, %v9359
    %v9369 = vadd.f32 %v9082, %v9318
    %v9370 = vadd.f32 %v9083, %v9320
    %v9371 = vadd.f32 %v9084, %v9361
    %v9372 = vadd.f32 %v9085, %v9363
    %v9373 = vxor.u32 %v9365, 2147483648
    %v9374 = vxor.u32 %v9369, 2147483648
    %v9375 = vmul.f32 %v9373, 1.442695
    %v9376 = vpow.pop %v9375
    %v9377 = vmul.f32 %v9374, 1.442695
    %v9378 = vpow.pop %v9377
    %v9379 = vadd.f32 %v9376, 1.0
    %v9380 = vadd.f32 %v9378, 1.0
    %v9381 = vrcp.pop %v9379
    %v9382 = vmul.f32 1.0, %v9381
    %v9383 = vrcp.pop %v9380
    %v9384 = vmul.f32 1.0, %v9383
    %v9385 = vxor.u32 %v9366, 2147483648
    %v9386 = vxor.u32 %v9370, 2147483648
    %v9387 = vmul.f32 %v9385, 1.442695
    %v9388 = vpow.pop %v9387
    %v9389 = vmul.f32 %v9386, 1.442695
    %v9390 = vpow.pop %v9389
    %v9391 = vadd.f32 %v9388, 1.0
    %v9392 = vadd.f32 %v9390, 1.0
    %v9393 = vrcp.pop %v9391
    %v9394 = vmul.f32 1.0, %v9393
    %v9395 = vrcp.pop %v9392
    %v9396 = vmul.f32 1.0, %v9395
    %v9397 = vxor.u32 %v9367, 2147483648
    %v9398 = vxor.u32 %v9371, 2147483648
    %v9399 = vmul.f32 %v9397, 1.442695
    %v9400 = vpow.pop %v9399
    %v9401 = vmul.f32 %v9398, 1.442695
    %v9402 = vpow.pop %v9401
    %v9403 = vadd.f32 %v9400, 1.0
    %v9404 = vadd.f32 %v9402, 1.0
    %v9405 = vrcp.pop %v9403
    %v9406 = vmul.f32 1.0, %v9405
    %v9407 = vrcp.pop %v9404
    %v9408 = vmul.f32 1.0, %v9407
    %v9409 = vtanh.pop %v9368
    %v9410 = vtanh.pop %v9372
    %v9411 = vmul.f32 %v9382, %v9068
    %v9412 = vmul.f32 %v9384, %v9069
    %v9413 = vmul.f32 %v9394, %v9409
    %v9414 = vmul.f32 %v9396, %v9410
    %v9415 = vadd.f32 %v9411, %v9413
    %v9416 = vadd.f32 %v9412, %v9414
    %v9417 = vtanh.pop %v9415
    %v9418 = vtanh.pop %v9416
    %v9419 = vmul.f32 %v9406, %v9417
    %v9420 = vmul.f32 %v9408, %v9418
    %s9421 = scalar_lea.vmem [#allocation9], 416
    %9422 = vst [vmem:[%s9421] sm:$0xff] %v9419
    %9423 = vst [vmem:[%s9421 + $0x8] sm:$0xff] %v9420
    %s9424 = scalar_lea.vmem [#allocation4], 1728
    %v9425 = vld [vmem:[%s9424] sm:$0xff]
    %v9426 = vld [vmem:[%s9424 + $0x8] sm:$0xff]
    %v9427 = vld [vmem:[%s9424 + $0x10] sm:$0xff]
    %v9428 = vld [vmem:[%s9424 + $0x18] sm:$0xff]
    %v9429 = vld [vmem:[%s9424 + $0x20] sm:$0xff]
    %v9430 = vld [vmem:[%s9424 + $0x28] sm:$0xff]
    %v9431 = vld [vmem:[%s9424 + $0x30] sm:$0xff]
    %v9432 = vld [vmem:[%s9424 + $0x38] sm:$0xff]
    %v9433 = vpack.c.bf16 %v9420, %v9419
    %v9434 = vld [vmem:[#allocation7] sm:$0xff]
    %v9435 = vld [vmem:[#allocation7 + $0x8] sm:$0xff]
    %v9436 = vld [vmem:[#allocation7 + $0x10] sm:$0xff]
    %v9437 = vld [vmem:[#allocation7 + $0x18] sm:$0xff]
    %v9438 = vld [vmem:[#allocation7 + $0x20] sm:$0xff]
    %v9439 = vld [vmem:[#allocation7 + $0x28] sm:$0xff]
    %v9440 = vld [vmem:[#allocation7 + $0x30] sm:$0xff]
    %v9441 = vld [vmem:[#allocation7 + $0x38] sm:$0xff]
    %v9442 = vld [vmem:[#allocation7 + $0x40] sm:$0xff]
    %v9443 = vld [vmem:[#allocation7 + $0x48] sm:$0xff]
    %v9444 = vld [vmem:[#allocation7 + $0x50] sm:$0xff]
    %v9445 = vld [vmem:[#allocation7 + $0x58] sm:$0xff]
    %v9446 = vld [vmem:[#allocation7 + $0x60] sm:$0xff]
    %v9447 = vld [vmem:[#allocation7 + $0x68] sm:$0xff]
    %v9448 = vld [vmem:[#allocation7 + $0x70] sm:$0xff]
    %v9449 = vld [vmem:[#allocation7 + $0x78] sm:$0xff]
    %v9450 = vld [vmem:[#allocation7 + $0x80] sm:$0xff]
    %v9451 = vld [vmem:[#allocation7 + $0x88] sm:$0xff]
    %v9452 = vld [vmem:[#allocation7 + $0x90] sm:$0xff]
    %v9453 = vld [vmem:[#allocation7 + $0x98] sm:$0xff]
    %v9454 = vld [vmem:[#allocation7 + $0xa0] sm:$0xff]
    %v9455 = vld [vmem:[#allocation7 + $0xa8] sm:$0xff]
    %v9456 = vld [vmem:[#allocation7 + $0xb0] sm:$0xff]
    %v9457 = vld [vmem:[#allocation7 + $0xb8] sm:$0xff]
    %v9458 = vld [vmem:[#allocation7 + $0xc0] sm:$0xff]
    %v9459 = vld [vmem:[#allocation7 + $0xc8] sm:$0xff]
    %v9460 = vld [vmem:[#allocation7 + $0xd0] sm:$0xff]
    %v9461 = vld [vmem:[#allocation7 + $0xd8] sm:$0xff]
    %v9462 = vld [vmem:[#allocation7 + $0xe0] sm:$0xff]
    %v9463 = vld [vmem:[#allocation7 + $0xe8] sm:$0xff]
    %v9464 = vld [vmem:[#allocation7 + $0xf0] sm:$0xff]
    %v9465 = vld [vmem:[#allocation7 + $0xf8] sm:$0xff]
    %v9498 = vunpack.c.l.b16 %v9434
    %v9499 = vunpack.c.h.b16 %v9434
    %v9500 = vunpack.c.l.b16 %v9435
    %v9501 = vunpack.c.h.b16 %v9435
    %v9502 = vunpack.c.l.b16 %v9436
    %v9503 = vunpack.c.h.b16 %v9436
    %v9504 = vunpack.c.l.b16 %v9437
    %v9505 = vunpack.c.h.b16 %v9437
    %v9506 = vunpack.c.l.b16 %v9438
    %v9507 = vunpack.c.h.b16 %v9438
    %v9508 = vunpack.c.l.b16 %v9439
    %v9509 = vunpack.c.h.b16 %v9439
    %v9510 = vunpack.c.l.b16 %v9440
    %v9511 = vunpack.c.h.b16 %v9440
    %v9512 = vunpack.c.l.b16 %v9441
    %v9513 = vunpack.c.h.b16 %v9441
    %v9514 = vunpack.c.l.b16 %v9442
    %v9515 = vunpack.c.h.b16 %v9442
    %v9516 = vunpack.c.l.b16 %v9443
    %v9517 = vunpack.c.h.b16 %v9443
    %v9518 = vunpack.c.l.b16 %v9444
    %v9519 = vunpack.c.h.b16 %v9444
    %v9520 = vunpack.c.l.b16 %v9445
    %v9521 = vunpack.c.h.b16 %v9445
    %v9522 = vunpack.c.l.b16 %v9446
    %v9523 = vunpack.c.h.b16 %v9446
    %v9524 = vunpack.c.l.b16 %v9447
    %v9525 = vunpack.c.h.b16 %v9447
    %v9526 = vunpack.c.l.b16 %v9448
    %v9527 = vunpack.c.h.b16 %v9448
    %v9528 = vunpack.c.l.b16 %v9449
    %v9529 = vunpack.c.h.b16 %v9449
    %v9530 = vunpack.c.l.b16 %v9450
    %v9531 = vunpack.c.h.b16 %v9450
    %v9532 = vunpack.c.l.b16 %v9451
    %v9533 = vunpack.c.h.b16 %v9451
    %v9534 = vunpack.c.l.b16 %v9452
    %v9535 = vunpack.c.h.b16 %v9452
    %v9536 = vunpack.c.l.b16 %v9453
    %v9537 = vunpack.c.h.b16 %v9453
    %v9538 = vunpack.c.l.b16 %v9454
    %v9539 = vunpack.c.h.b16 %v9454
    %v9540 = vunpack.c.l.b16 %v9455
    %v9541 = vunpack.c.h.b16 %v9455
    %v9542 = vunpack.c.l.b16 %v9456
    %v9543 = vunpack.c.h.b16 %v9456
    %v9544 = vunpack.c.l.b16 %v9457
    %v9545 = vunpack.c.h.b16 %v9457
    %v9546 = vunpack.c.l.b16 %v9458
    %v9547 = vunpack.c.h.b16 %v9458
    %v9548 = vunpack.c.l.b16 %v9459
    %v9549 = vunpack.c.h.b16 %v9459
    %v9550 = vunpack.c.l.b16 %v9460
    %v9551 = vunpack.c.h.b16 %v9460
    %v9552 = vunpack.c.l.b16 %v9461
    %v9553 = vunpack.c.h.b16 %v9461
    %v9554 = vunpack.c.l.b16 %v9462
    %v9555 = vunpack.c.h.b16 %v9462
    %v9556 = vunpack.c.l.b16 %v9463
    %v9557 = vunpack.c.h.b16 %v9463
    %v9558 = vunpack.c.l.b16 %v9464
    %v9559 = vunpack.c.h.b16 %v9464
    %v9560 = vunpack.c.l.b16 %v9465
    %v9561 = vunpack.c.h.b16 %v9465
    %v9562 = vpack.c.b16 %v9502, %v9498
    %v9563 = vpack.c.b16 %v9503, %v9499
    %v9564 = vpack.c.b16 %v9504, %v9500
    %v9565 = vpack.c.b16 %v9505, %v9501
    %v9566 = vpack.c.b16 %v9510, %v9506
    %v9567 = vpack.c.b16 %v9511, %v9507
    %v9568 = vpack.c.b16 %v9512, %v9508
    %v9569 = vpack.c.b16 %v9513, %v9509
    %v9570 = vpack.c.b16 %v9518, %v9514
    %v9571 = vpack.c.b16 %v9519, %v9515
    %v9572 = vpack.c.b16 %v9520, %v9516
    %v9573 = vpack.c.b16 %v9521, %v9517
    %v9574 = vpack.c.b16 %v9526, %v9522
    %v9575 = vpack.c.b16 %v9527, %v9523
    %v9576 = vpack.c.b16 %v9528, %v9524
    %v9577 = vpack.c.b16 %v9529, %v9525
    %v9578 = vpack.c.b16 %v9534, %v9530
    %v9579 = vpack.c.b16 %v9535, %v9531
    %v9580 = vpack.c.b16 %v9536, %v9532
    %v9581 = vpack.c.b16 %v9537, %v9533
    %v9582 = vpack.c.b16 %v9542, %v9538
    %v9583 = vpack.c.b16 %v9543, %v9539
    %v9584 = vpack.c.b16 %v9544, %v9540
    %v9585 = vpack.c.b16 %v9545, %v9541
    %v9586 = vpack.c.b16 %v9550, %v9546
    %v9587 = vpack.c.b16 %v9551, %v9547
    %v9588 = vpack.c.b16 %v9552, %v9548
    %v9589 = vpack.c.b16 %v9553, %v9549
    %v9590 = vpack.c.b16 %v9558, %v9554
    %v9591 = vpack.c.b16 %v9559, %v9555
    %v9592 = vpack.c.b16 %v9560, %v9556
    %v9593 = vpack.c.b16 %v9561, %v9557
    %9626 = vmatprep.subr.bf16.mxu0 %v9563
    %9627 = vmatpush1.bf16.msra.mxu0 %v9562
    %9628 = vmatprep.subr.bf16.mxu0 %v9567
    %9629 = vmatpush1.bf16.msra.mxu0 %v9566
    %9630 = vmatprep.subr.bf16.mxu0 %v9571
    %9631 = vmatpush1.bf16.msra.mxu0 %v9570
    %9632 = vmatprep.subr.bf16.mxu0 %v9575
    %9633 = vmatpush1.bf16.msra.mxu0 %v9574
    %9634 = vmatprep.subr.bf16.mxu0 %v9579
    %9635 = vmatpush1.bf16.msra.mxu0 %v9578
    %9636 = vmatprep.subr.bf16.mxu0 %v9583
    %9637 = vmatpush1.bf16.msra.mxu0 %v9582
    %9638 = vmatprep.subr.bf16.mxu0 %v9587
    %9639 = vmatpush1.bf16.msra.mxu0 %v9586
    %9640 = vmatprep.subr.bf16.mxu0 %v9591
    %9641 = vmatpush1.bf16.msra.mxu0 %v9590
    %9642 = vmatprep.subr.bf16.mxu0 0
    %9643 = vmatpush1.bf16.msra.mxu0 0
    %9644 = vmatprep.subr.bf16.mxu0 0
    %9645 = vmatpush1.bf16.msra.mxu0 0
    %9646 = vmatprep.subr.bf16.mxu0 0
    %9647 = vmatpush1.bf16.msra.mxu0 0
    %9648 = vmatprep.subr.bf16.mxu0 0
    %9649 = vmatpush1.bf16.msra.mxu0 0
    %9650 = vmatprep.subr.bf16.mxu0 0
    %9651 = vmatpush1.bf16.msra.mxu0 0
    %9652 = vmatprep.subr.bf16.mxu0 0
    %9653 = vmatpush1.bf16.msra.mxu0 0
    %9654 = vmatprep.subr.bf16.mxu0 0
    %9655 = vmatpush1.bf16.msra.mxu0 0
    %9656 = vmatprep.subr.bf16.mxu0 0
    %9657 = vmatpush1.bf16.msra.mxu0 0
    %9658 = vmatprep.mubr.bf16.mxu0 0
    %9659 = vmatmul.mubr.bf16.gmra.mrb[0].mxu0 %v9433
    %v9660 = vpop.f32.mrb[0].mxu0
    %v9661 = vadd.f32 0.0, %v9660
    %v9662 = vpop.f32.mrb[0].mxu0
    %v9663 = vadd.f32 0.0, %v9662
    %v9664 = vpop.f32.mrb[0].mxu0
    %v9665 = vadd.f32 0.0, %v9664
    %v9666 = vpop.f32.mrb[0].mxu0
    %v9667 = vadd.f32 0.0, %v9666
    %9668 = vdwg.mxu0
    %9669 = vmatprep.subr.bf16.mxu0 %v9565
    %9670 = vmatpush1.bf16.msra.mxu0 %v9564
    %9671 = vmatprep.subr.bf16.mxu0 %v9569
    %9672 = vmatpush1.bf16.msra.mxu0 %v9568
    %9673 = vmatprep.subr.bf16.mxu0 %v9573
    %9674 = vmatpush1.bf16.msra.mxu0 %v9572
    %9675 = vmatprep.subr.bf16.mxu0 %v9577
    %9676 = vmatpush1.bf16.msra.mxu0 %v9576
    %9677 = vmatprep.subr.bf16.mxu0 %v9581
    %9678 = vmatpush1.bf16.msra.mxu0 %v9580
    %9679 = vmatprep.subr.bf16.mxu0 %v9585
    %9680 = vmatpush1.bf16.msra.mxu0 %v9584
    %9681 = vmatprep.subr.bf16.mxu0 %v9589
    %9682 = vmatpush1.bf16.msra.mxu0 %v9588
    %9683 = vmatprep.subr.bf16.mxu0 %v9593
    %9684 = vmatpush1.bf16.msra.mxu0 %v9592
    %9685 = vmatprep.subr.bf16.mxu0 0
    %9686 = vmatpush1.bf16.msra.mxu0 0
    %9687 = vmatprep.subr.bf16.mxu0 0
    %9688 = vmatpush1.bf16.msra.mxu0 0
    %9689 = vmatprep.subr.bf16.mxu0 0
    %9690 = vmatpush1.bf16.msra.mxu0 0
    %9691 = vmatprep.subr.bf16.mxu0 0
    %9692 = vmatpush1.bf16.msra.mxu0 0
    %9693 = vmatprep.subr.bf16.mxu0 0
    %9694 = vmatpush1.bf16.msra.mxu0 0
    %9695 = vmatprep.subr.bf16.mxu0 0
    %9696 = vmatpush1.bf16.msra.mxu0 0
    %9697 = vmatprep.subr.bf16.mxu0 0
    %9698 = vmatpush1.bf16.msra.mxu0 0
    %9699 = vmatprep.subr.bf16.mxu0 0
    %9700 = vmatpush1.bf16.msra.mxu0 0
    %9701 = vmatprep.mubr.bf16.mxu0 0
    %9702 = vmatmul.mubr.bf16.gmra.mrb[0].mxu0 %v9433
    %v9703 = vpop.f32.mrb[0].mxu0
    %v9704 = vadd.f32 0.0, %v9703
    %v9705 = vpop.f32.mrb[0].mxu0
    %v9706 = vadd.f32 0.0, %v9705
    %v9707 = vpop.f32.mrb[0].mxu0
    %v9708 = vadd.f32 0.0, %v9707
    %v9709 = vpop.f32.mrb[0].mxu0
    %v9710 = vadd.f32 0.0, %v9709
    %9711 = vdwg.mxu0
    %v9712 = vadd.f32 %v9425, %v9661
    %v9713 = vadd.f32 %v9426, %v9663
    %v9714 = vadd.f32 %v9427, %v9704
    %v9715 = vadd.f32 %v9428, %v9706
    %v9716 = vadd.f32 %v9429, %v9665
    %v9717 = vadd.f32 %v9430, %v9667
    %v9718 = vadd.f32 %v9431, %v9708
    %v9719 = vadd.f32 %v9432, %v9710
    %v9720 = vxor.u32 %v9712, 2147483648
    %v9721 = vxor.u32 %v9716, 2147483648
    %v9722 = vmul.f32 %v9720, 1.442695
    %v9723 = vpow.pop %v9722
    %v9724 = vmul.f32 %v9721, 1.442695
    %v9725 = vpow.pop %v9724
    %v9726 = vadd.f32 %v9723, 1.0
    %v9727 = vadd.f32 %v9725, 1.0
    %v9728 = vrcp.pop %v9726
    %v9729 = vmul.f32 1.0, %v9728
    %v9730 = vrcp.pop %v9727
    %v9731 = vmul.f32 1.0, %v9730
    %v9732 = vxor.u32 %v9713, 2147483648
    %v9733 = vxor.u32 %v9717, 2147483648
    %v9734 = vmul.f32 %v9732, 1.442695
    %v9735 = vpow.pop %v9734
    %v9736 = vmul.f32 %v9733, 1.442695
    %v9737 = vpow.pop %v9736
    %v9738 = vadd.f32 %v9735, 1.0
    %v9739 = vadd.f32 %v9737, 1.0
    %v9740 = vrcp.pop %v9738
    %v9741 = vmul.f32 1.0, %v9740
    %v9742 = vrcp.pop %v9739
    %v9743 = vmul.f32 1.0, %v9742
    %v9744 = vxor.u32 %v9714, 2147483648
    %v9745 = vxor.u32 %v9718, 2147483648
    %v9746 = vmul.f32 %v9744, 1.442695
    %v9747 = vpow.pop %v9746
    %v9748 = vmul.f32 %v9745, 1.442695
    %v9749 = vpow.pop %v9748
    %v9750 = vadd.f32 %v9747, 1.0
    %v9751 = vadd.f32 %v9749, 1.0
    %v9752 = vrcp.pop %v9750
    %v9753 = vmul.f32 1.0, %v9752
    %v9754 = vrcp.pop %v9751
    %v9755 = vmul.f32 1.0, %v9754
    %v9756 = vtanh.pop %v9715
    %v9757 = vtanh.pop %v9719
    %v9758 = vmul.f32 %v9729, %v9415
    %v9759 = vmul.f32 %v9731, %v9416
    %v9760 = vmul.f32 %v9741, %v9756
    %v9761 = vmul.f32 %v9743, %v9757
    %v9762 = vadd.f32 %v9758, %v9760
    %v9763 = vadd.f32 %v9759, %v9761
    %v9764 = vtanh.pop %v9762
    %v9765 = vtanh.pop %v9763
    %v9766 = vmul.f32 %v9753, %v9764
    %v9767 = vmul.f32 %v9755, %v9765
    %s9768 = scalar_lea.vmem [#allocation9], 432
    %9769 = vst [vmem:[%s9768] sm:$0xff] %v9766
    %9770 = vst [vmem:[%s9768 + $0x8] sm:$0xff] %v9767
    %9771 = vst [vmem:[#allocation2] sm:$0xff] %v9766
    %9772 = vst [vmem:[#allocation2 + $0x8] sm:$0xff] %v9767
    %9773 = vst [vmem:[#allocation3] sm:$0xff] %v9762
    %9774 = vst [vmem:[#allocation3 + $0x8] sm:$0xff] %v9763
    // Predicated region
    $region22: #{tpu_custom_call.1} parent=1 // pred_check
      %p9775 = pneg %p45
    $region23: #{tpu_custom_call.1} parent=1 // pred_check_branch
      %9777 = sbr.rel (%p9775) target = $region25
    $region24: #{tpu_custom_call.1} parent=1 // pred_region
      %9778 = vst [vmem:[#allocation10] sm:$0xff] %v9766
      %9779 = vst [vmem:[#allocation10 + $0x8] sm:$0xff] %v9767
      %9780 = vst [vmem:[#allocation12] sm:$0xff] %v9762
      %9781 = vst [vmem:[#allocation12 + $0x8] sm:$0xff] %v9763
    $region25: #{tpu_custom_call.1} parent=1 // pred_fallthru
      _
    // Predicated region
    $region26: #{tpu_custom_call.1} parent=1 // pred_check
      _
    $region27: #{tpu_custom_call.1} parent=1 // pred_check_branch
      %9783 = sbr.rel (0) target = $region29
    $region28: #{tpu_custom_call.1} parent=1 // pred_region
      %s9785 = ssub.s32 7168, 7168
      %9786 = vsyncadd [#allocation6], %s9785
      %s9787 = sshll.u32 [#allocation9], 4
      %s9788 = int_to_ptr.vmem [resolvable:$true] %s9787
      %9793 = dma.vmem_to_hbm [thread:$0]  %s9788, 7168, %s2, [#allocation6], 128, 128, 8
    $region29: #{tpu_custom_call.1} parent=1 // pred_fallthru
      _
    // Predicated region
    $region30: #{tpu_custom_call.1} parent=1 // pred_check
      _
    $region31: #{tpu_custom_call.1} parent=1 // pred_check_branch
      %9795 = sbr.rel (0) target = $region33
    $region32: #{tpu_custom_call.1} parent=1 // pred_region
      %s9797 = ssub.s32 256, 256
      %9798 = vsyncadd [#allocation11], %s9797
      %s9799 = sshll.u32 [#allocation10], 4
      %s9800 = int_to_ptr.vmem [resolvable:$true] %s9799
      %9805 = dma.vmem_to_hbm [thread:$0]  %s9800, 256, %s3, [#allocation11], 128, 128, 8
    $region33: #{tpu_custom_call.1} parent=1 // pred_fallthru
      _
    // Predicated region
    $region34: #{tpu_custom_call.1} parent=1 // pred_check
      _
    $region35: #{tpu_custom_call.1} parent=1 // pred_check_branch
      %9807 = sbr.rel (0) target = $region37
    $region36: #{tpu_custom_call.1} parent=1 // pred_region
      %s9809 = ssub.s32 256, 256
      %9810 = vsyncadd [#allocation11], %s9809
      %s9811 = sshll.u32 [#allocation12], 4
      %s9812 = int_to_ptr.vmem [resolvable:$true] %s9811
      %9817 = dma.vmem_to_hbm [thread:$0]  %s9812, 256, %s4, [#allocation11], 128, 128, 8
    $region37: #{tpu_custom_call.1} parent=1 // pred_fallthru
      _
    // Predicated region
    $region38: #{tpu_custom_call.1} parent=1 // pred_check
      _
    $region39: #{tpu_custom_call.1} parent=1 // pred_check_branch
      %9819 = sbr.rel (0) target = $region41
    $region40: #{tpu_custom_call.1} parent=1 // pred_region
      %9820 = dma.done [#allocation6], 7168
    $region41: #{tpu_custom_call.1} parent=1 // pred_fallthru
      _
    // Predicated region
    $region42: #{tpu_custom_call.1} parent=1 // pred_check
      _
    $region43: #{tpu_custom_call.1} parent=1 // pred_check_branch
      %9822 = sbr.rel (0) target = $region45
    $region44: #{tpu_custom_call.1} parent=1 // pred_region
      %9823 = dma.done [#allocation11], 256
    $region45: #{tpu_custom_call.1} parent=1 // pred_fallthru
      _
    // Predicated region
    $region46: #{tpu_custom_call.1} parent=1 // pred_check
      _
    $region47: #{tpu_custom_call.1} parent=1 // pred_check_branch
      %9825 = sbr.rel (0) target = $region49
    $region48: #{tpu_custom_call.1} parent=1 // pred_region
      %9826 = dma.done [#allocation11], 256
    $region49: #{tpu_custom_call.1} parent=1 // pred_fallthru
      _
    %9827 = vsyncpa [#allocation5], 1
    %9828 = vsyncpa [#allocation8], 1
    %9829 = vsyncpa [#allocation6], 1
    %9830 = vsyncpa [#allocation11], 1

</llo_original>
